<compile_context>
chip_gen: v7x
topology: tpu7x:2x2x1
jax: 0.10.0
libtpu: 0.0.40
codegen_flags: <defaults>
</compile_context>

<pallas_src>
import functools
import math

import jax
import jax.numpy as jnp
from jax import lax
from jax.experimental import pallas as pl
from jax.experimental.pallas import tpu as pltpu

# ---------------------------------------------------------------------------
# small demo configuration, structurally consistent with the module
# (original: base=64, hidden=512, dim_head=128, LSTM input_size=64, fc_in=1024*512)
# ---------------------------------------------------------------------------
BATCH = 2
IN_CH = 1                       # spectrogram input
INPUT_HW = 32
BASE = 8                        # stem width
PLANE_MULTS = (1, 1, 2, 2, 4, 4, 8, 8)   # 8 layer groups, layers=[2]*8
LAYERS = (2,) * 8
SE_REDUCTION = 4
HIDDEN = 32                     # LSTM hidden size
DIM_HEAD = 16                   # attention dim_head (heads=1)
ATTN_DIM = 2 * HIDDEN           # bidirectional LSTM feature size
BN_EPS = 1e-5

_VMEM = pl.BlockSpec(memory_space=pltpu.MemorySpace.VMEM)


def _pick_tile(dim, candidates):
    """Largest candidate tile that divides dim, else the whole (full-dim block)."""
    for c in candidates:
        if dim >= c and dim % c == 0:
            return c
    return dim


def _apply_act(x, act):
    if act == "relu":
        return jnp.maximum(x, 0.0)
    if act == "sigmoid":
        return jax.nn.sigmoid(x)
    return x


# ---------------------------------------------------------------------------
# generic fused matmul:  o = act(a @ b + bias)
#   grid = (M/tm, N/tn, K/tk), K innermost ("arbitrary"); accumulate into the
#   resident output block (no extra acc scratch); bias + activation on last K step.
# ---------------------------------------------------------------------------
def _matmul_fused_kernel(a_ref, b_ref, bias_ref, o_ref, *, nk, act):
    a = a_ref[...]
    if b_ref.dtype == jnp.bfloat16:          # bf16 weights -> single-pass bf16 MXU
        a = a.astype(jnp.bfloat16)
    part = jnp.dot(a, b_ref[...], preferred_element_type=jnp.float32)
    if nk == 1:
        o_ref[...] = _apply_act(part + bias_ref[...], act)
    else:
        k = pl.program_id(2)

        @pl.when(k == 0)
        def _():
            o_ref[...] = jnp.zeros_like(o_ref)

        o_ref[...] += part

        @pl.when(k == nk - 1)
        def _():
            o_ref[...] = _apply_act(o_ref[...] + bias_ref[...], act)


def pallas_matmul(a, b, bias, act=None):
    m, k = a.shape
    _, n = b.shape
    tm = _pick_tile(m, (512, 256, 128))
    tn = _pick_tile(n, (512, 256, 128))
    tk = _pick_tile(k, (1024, 512, 256))     # big K tiles; falls back to whole-K
    nk = k // tk
    bias2 = bias.reshape(1, n).astype(jnp.float32)
    return pl.pallas_call(
        functools.partial(_matmul_fused_kernel, nk=nk, act=act),
        out_shape=jax.ShapeDtypeStruct((m, n), jnp.float32),
        grid=(m // tm, n // tn, nk),
        in_specs=[
            pl.BlockSpec((tm, tk), lambda i, j, kk: (i, kk)),
            pl.BlockSpec((tk, tn), lambda i, j, kk: (kk, j)),
            pl.BlockSpec((1, tn), lambda i, j, kk: (0, j)),
        ],
        out_specs=pl.BlockSpec((tm, tn), lambda i, j, kk: (i, j)),
        compiler_params=pltpu.CompilerParams(
            dimension_semantics=("parallel", "parallel", "arbitrary")),
    )(a, b, bias2)


# ---------------------------------------------------------------------------
# conv (im2col) + folded-BN + optional ReLU, all in the matmul kernel epilogue
# ---------------------------------------------------------------------------
def conv2d_bn_act(x_nhwc, conv, *, stride, padding, act):
    """conv["w"]: BN-folded (Cout, Cin, KH, KW) bf16; conv["b"]: (Cout,) f32."""
    w = conv["w"]
    cout, cin, kh, kw = w.shape
    wmat = w.reshape(cout, cin * kh * kw).T            # (K, Cout), channel-major
    b, h, wd, _ = x_nhwc.shape
    if kh == 1 and kw == 1 and stride == 1 and padding == 0:
        pm = x_nhwc.reshape(b * h * wd, cin)           # 1x1 conv: no patch op needed
        oh, ow = h, wd
    else:
        patches = lax.conv_general_dilated_patches(
            x_nhwc, (kh, kw), (stride, stride),
            [(padding, padding), (padding, padding)],
            dimension_numbers=("NHWC", "HWIO", "NHWC"))
        _, oh, ow, kdim = patches.shape
        pm = patches.reshape(b * oh * ow, kdim)
    out = pallas_matmul(pm, wmat, conv["b"], act=act)
    return out.reshape(b, oh, ow, cout)


# ---------------------------------------------------------------------------
# maxpool 3x3 / stride 2 / pad 1 — lane-dense 9-way elementwise max kernel
# (the 9 shifted strided views are XLA slice glue; the kernel output is one
#  fully lane-dense row instead of the old (rows, 9)->(rows, 1) masked stores)
# ---------------------------------------------------------------------------
def _max_over_leading_kernel(x_ref, o_ref):
    o_ref[...] = jnp.max(x_ref[...], axis=0, keepdims=True)


def maxpool2d_3x3_s2_p1(x_nhwc):
    b, h, w, c = x_nhwc.shape
    oh = (h + 2 - 3) // 2 + 1
    ow = (w + 2 - 3) // 2 + 1
    xp = jnp.pad(x_nhwc, ((0, 0), (1, 1), (1, 1), (0, 0)),
                 constant_values=jnp.float32(-1e30))
    views = []
    for dh in range(3):
        for dw in range(3):
            v = lax.slice(xp, (0, dh, dw, 0),
                          (b, dh + 2 * oh - 1, dw + 2 * ow - 1, c),
                          (1, 2, 2, 1))
            views.append(v.reshape(b * oh * ow * c))
    stacked = jnp.stack(views, axis=0)                 # (9, B*OH*OW*C)
    out = pl.pallas_call(
        _max_over_leading_kernel,
        out_shape=jax.ShapeDtypeStruct((1, stacked.shape[1]), jnp.float32),
        in_specs=[_VMEM],
        out_specs=_VMEM,
    )(stacked)
    return out.reshape(b, oh, ow, c)


# ---------------------------------------------------------------------------
# SE block tail: (1) squeeze kernel, (2) rescale + residual + ReLU kernel
# ---------------------------------------------------------------------------
def _se_squeeze_kernel(x_ref, w1_ref, w2_ref, o_ref):
    pooled = jnp.mean(x_ref[...], axis=1)                            # (B, C)
    hid = jnp.maximum(
        jnp.dot(pooled, w1_ref[...], preferred_element_type=jnp.float32), 0.0)
    o_ref[...] = jax.nn.sigmoid(
        jnp.dot(hid, w2_ref[...], preferred_element_type=jnp.float32))


def _se_residual_kernel(x_ref, s_ref, res_ref, o_ref):
    o_ref[...] = jnp.maximum(x_ref[...] * s_ref[...] + res_ref[...], 0.0)


def se_block_tail(out_nhwc, residual_nhwc, se):
    b, h, w, c = out_nhwc.shape
    x3 = out_nhwc.reshape(b, h * w, c)
    s = pl.pallas_call(
        _se_squeeze_kernel,
        out_shape=jax.ShapeDtypeStruct((b, c), jnp.float32),
        in_specs=[_VMEM, _VMEM, _VMEM],
        out_specs=_VMEM,
    )(x3, se["fc1"], se["fc2"])
    y = pl.pallas_call(
        _se_residual_kernel,
        out_shape=jax.ShapeDtypeStruct((b, h * w, c), jnp.float32),
        in_specs=[_VMEM, _VMEM, _VMEM],
        out_specs=_VMEM,
    )(x3, s.reshape(b, 1, c), residual_nhwc.reshape(b, h * w, c))
    return y.reshape(b, h, w, c)


def se_basic_block(x_nhwc, blk):
    out = conv2d_bn_act(x_nhwc, blk["conv1"], stride=1, padding=1, act="relu")
    out = conv2d_bn_act(out, blk["conv2"], stride=1, padding=1, act=None)
    residual = x_nhwc
    if "down" in blk:
        residual = conv2d_bn_act(x_nhwc, blk["down"], stride=1, padding=0, act=None)
    return se_block_tail(out, residual, blk["se"])


# ---------------------------------------------------------------------------
# bidirectional LSTM layer: one pallas_call, grid = (direction, time)
# backward direction handled purely via the index_map (no [::-1] copies)
# ---------------------------------------------------------------------------
def _bilstm_kernel(x_ref, wih_ref, whh_ref, b_ref, y_ref, h_scr, c_scr, *, hidden):
    t = pl.program_id(1)

    @pl.when(t == 0)
    def _():
        h_scr[...] = jnp.zeros_like(h_scr)
        c_scr[...] = jnp.zeros_like(c_scr)

    x_t = x_ref[0]                                                   # (N, I)
    gates = (jnp.dot(x_t, wih_ref[0], preferred_element_type=jnp.float32)
             + jnp.dot(h_scr[...], whh_ref[0], preferred_element_type=jnp.float32)
             + b_ref[0])
    i = jax.nn.sigmoid(gates[:, 0 * hidden:1 * hidden])
    f = jax.nn.sigmoid(gates[:, 1 * hidden:2 * hidden])
    g = jnp.tanh(gates[:, 2 * hidden:3 * hidden])
    o = jax.nn.sigmoid(gates[:, 3 * hidden:4 * hidden])
    c = f * c_scr[...] + i * g
    h = o * jnp.tanh(c)
    c_scr[...] = c
    h_scr[...] = h
    y_ref[0, 0] = h


def pallas_bilstm_layer(x, layer):
    """x: (T, N, I); weights stacked over direction (2, ...). Returns (T, N, 2H)."""
    tlen, n, i = x.shape
    hidden = layer["whh"].shape[1]
    tmap = lambda d, t: t + d * (tlen - 1 - 2 * t)     # fwd: t, bwd: T-1-t
    y = pl.pallas_call(
        functools.partial(_bilstm_kernel, hidden=hidden),
        out_shape=jax.ShapeDtypeStruct((2, tlen, n, hidden), jnp.float32),
        grid=(2, tlen),
        in_specs=[
            pl.BlockSpec((1, n, i), lambda d, t: (tmap(d, t), 0, 0)),
            pl.BlockSpec((1, i, 4 * hidden), lambda d, t: (d, 0, 0)),
            pl.BlockSpec((1, hidden, 4 * hidden), lambda d, t: (d, 0, 0)),
            pl.BlockSpec((1, 1, 4 * hidden), lambda d, t: (d, 0, 0)),
        ],
        out_specs=pl.BlockSpec((1, 1, n, hidden),
                               lambda d, t: (d, tmap(d, t), 0, 0)),
        scratch_shapes=[pltpu.VMEM((n, hidden), jnp.float32),
                        pltpu.VMEM((n, hidden), jnp.float32)],
        compiler_params=pltpu.CompilerParams(
            dimension_semantics=("parallel", "arbitrary")),
    )(x, layer["wih"], layer["whh"], layer["b"])
    return jnp.concatenate([y[0], y[1]], axis=-1)


# ---------------------------------------------------------------------------
# single-head attention: qkv projection + softmax(qk^T)v + output projection
# fused into one per-batch kernel ("parallel" batch axis)
# ---------------------------------------------------------------------------
def _attention_kernel(x_ref, wqkv_ref, wo_ref, bo_ref, o_ref, *, dim_head):
    x = x_ref[0]                                                     # (n, dim)
    qkv = jnp.dot(x, wqkv_ref[...], preferred_element_type=jnp.float32)
    q = qkv[:, 0 * dim_head:1 * dim_head]
    k = qkv[:, 1 * dim_head:2 * dim_head]
    v = qkv[:, 2 * dim_head:3 * dim_head]
    s = lax.dot_general(q, k, (((1,), (1,)), ((), ())),
                        preferred_element_type=jnp.float32) * (dim_head ** -0.5)
    m = jnp.max(s, axis=-1, keepdims=True)
    p = jnp.exp(s - m)
    p = p * pl.reciprocal(jnp.sum(p, axis=-1, keepdims=True), approx=True)
    att = jnp.dot(p, v, preferred_element_type=jnp.float32)
    o_ref[0] = jnp.dot(att, wo_ref[...],
                       preferred_element_type=jnp.float32) + bo_ref[...]


def pallas_attention(x, attn):
    b, n, dim = x.shape
    dim_head = attn["wo"].shape[0]
    return pl.pallas_call(
        functools.partial(_attention_kernel, dim_head=dim_head),
        out_shape=jax.ShapeDtypeStruct((b, n, dim), jnp.float32),
        grid=(b,),
        in_specs=[
            pl.BlockSpec((1, n, dim), lambda i: (i, 0, 0)),
            pl.BlockSpec((dim, 3 * dim_head), lambda i: (0, 0)),
            pl.BlockSpec((dim_head, dim), lambda i: (0, 0)),
            pl.BlockSpec((1, dim), lambda i: (0, 0)),
        ],
        out_specs=pl.BlockSpec((1, n, dim), lambda i: (i, 0, 0)),
        compiler_params=pltpu.CompilerParams(
            dimension_semantics=("parallel",)),
    )(x, attn["wqkv"], attn["wo"], attn["bo"])


# ---------------------------------------------------------------------------
# final Linear(fc_in, 1) + Sigmoid: K-tiled dot-reduction, no N padding
# ---------------------------------------------------------------------------
def _fc_sigmoid_kernel(x_ref, w_ref, b_ref, o_ref, acc_ref, *, nk):
    k = pl.program_id(0)

    @pl.when(k == 0)
    def _():
        acc_ref[...] = jnp.zeros_like(acc_ref)

    acc_ref[...] += jnp.sum(x_ref[...] * w_ref[...], axis=-1, keepdims=True)

    @pl.when(k == nk - 1)
    def _():
        o_ref[...] = jax.nn.sigmoid(acc_ref[...] + b_ref[...])


def pallas_fc_sigmoid(x, w, b):
    """x: (B, K); w: (1, K) (torch nn.Linear weight layout); b: (1,)."""
    bsz, kdim = x.shape
    tk = _pick_tile(kdim, (4096, 2048, 1024, 512))
    nk = kdim // tk
    return pl.pallas_call(
        functools.partial(_fc_sigmoid_kernel, nk=nk),
        out_shape=jax.ShapeDtypeStruct((bsz, 1), jnp.float32),
        grid=(nk,),
        in_specs=[
            pl.BlockSpec((bsz, tk), lambda k: (0, k)),
            pl.BlockSpec((1, tk), lambda k: (0, k)),
            pl.BlockSpec((1, 1), lambda k: (0, 0)),
        ],
        out_specs=pl.BlockSpec((bsz, 1), lambda k: (0, 0)),
        scratch_shapes=[pltpu.VMEM((bsz, 1), jnp.float32)],
        compiler_params=pltpu.CompilerParams(
            dimension_semantics=("arbitrary",)),
    )(x, w, b.reshape(1, 1))


# ---------------------------------------------------------------------------
# FluentNetOneModel forward (eval mode), jitted as a whole
# ---------------------------------------------------------------------------
def fluentnet_forward(params, x_nchw):
    # 1) SE-ResNet feature extractor (NHWC internally; conv = im2col + fused matmul)
    x = jnp.transpose(x_nchw.astype(jnp.float32), (0, 2, 3, 1))
    x = conv2d_bn_act(x, params["stem"], stride=2, padding=3, act="relu")
    x = maxpool2d_3x3_s2_p1(x)
    for blk in params["blocks"]:
        x = se_basic_block(x, blk)

    # 2) torch: out.flatten(-2, -1) on NCHW, nn.LSTM(batch_first=False):
    #    dim0 (= batch B) is the time axis, dim1 (= channels C) is the LSTM batch.
    b, h, w, c = x.shape
    out = jnp.transpose(x, (0, 3, 1, 2)).reshape(b, c, h * w)
    for layer in params["lstm"]:
        out = pallas_bilstm_layer(out, layer)
        # TODO(synk): inter-layer LSTM dropout (p=0.2) is identity in eval mode.

    # 3) Attention (heads=1): qkv + softmax + out projection fused per batch element.
    out = pallas_attention(out, params["attn"])

    # 4) flatten(1) + Linear(1024*hidden -> 1) + Sigmoid
    flat = out.reshape(b, -1)
    return pallas_fc_sigmoid(flat, params["fc_w"], params["fc_b"])


# ---------------------------------------------------------------------------
# deterministic parameter initialization (BN folded into conv weights here)
# ---------------------------------------------------------------------------
def init_params(key):
    keys = iter(jax.random.split(key, 256))
    nxt = lambda: next(keys)

    def conv_bn(cout, cin, kh, kw):
        std = math.sqrt(2.0 / (cin * kh * kw))
        w = std * jax.random.normal(nxt(), (cout, cin, kh, kw), jnp.float32)
        # eval-mode BatchNorm (freshly-initialized running stats) folded into conv
        gamma = jnp.ones((cout,), jnp.float32)
        beta = jnp.zeros((cout,), jnp.float32)
        mean = jnp.zeros((cout,), jnp.float32)
        var = jnp.ones((cout,), jnp.float32)
        scale = gamma / jnp.sqrt(var + BN_EPS)
        w_folded = w * scale[:, None, None, None]
        bias = beta - mean * scale
        return {"w": w_folded.astype(jnp.bfloat16), "b": bias}

    def lin(fin, fout):
        std = 1.0 / math.sqrt(fin)
        return std * jax.random.normal(nxt(), (fin, fout), jnp.float32)

    params = {"stem": conv_bn(BASE, IN_CH, 7, 7), "blocks": []}
    inplanes = BASE
    for n_blocks, mult in zip(LAYERS, PLANE_MULTS):
        planes = BASE * mult
        for bi in range(n_blocks):
            # all-stride-1 reconstruction keeps final H*W == 64 == LSTM input_size
            red = max(1, planes // SE_REDUCTION)
            blk = {"conv1": conv_bn(planes, inplanes, 3, 3),
                   "conv2": conv_bn(planes, planes, 3, 3),
                   "se": {"fc1": lin(planes, red), "fc2": lin(red, planes)}}
            if bi == 0 and inplanes != planes:
                blk["down"] = conv_bn(planes, inplanes, 1, 1)
            params["blocks"].append(blk)
            inplanes = planes
    c_final = inplanes

    stem_hw = (INPUT_HW + 2 * 3 - 7) // 2 + 1
    pool_hw = (stem_hw + 2 * 1 - 3) // 2 + 1
    feat_len = pool_hw * pool_hw            # LSTM input_size

    lstm = []
    inp = feat_len
    for _ in range(2):
        std = 1.0 / math.sqrt(HIDDEN)
        lstm.append({
            "wih": std * jax.random.normal(nxt(), (2, inp, 4 * HIDDEN), jnp.float32),
            "whh": std * jax.random.normal(nxt(), (2, HIDDEN, 4 * HIDDEN), jnp.float32),
            "b": std * jax.random.normal(nxt(), (2, 1, 4 * HIDDEN), jnp.float32),
        })
        inp = 2 * HIDDEN
    params["lstm"] = lstm

    params["attn"] = {
        "wqkv": lin(ATTN_DIM, 3 * DIM_HEAD),
        "wo": lin(DIM_HEAD, ATTN_DIM),
        "bo": (1.0 / math.sqrt(DIM_HEAD))
              * jax.random.normal(nxt(), (1, ATTN_DIM), jnp.float32),
    }

    fc_in = ATTN_DIM * c_final
    params["fc_w"] = (1.0 / math.sqrt(fc_in)) * jax.random.normal(
        nxt(), (1, fc_in), jnp.float32)
    params["fc_b"] = (1.0 / math.sqrt(fc_in)) * jax.random.normal(
        nxt(), (1,), jnp.float32)
    return params


if __name__ == "__main__":
    key = jax.random.PRNGKey(0)
    pkey, xkey = jax.random.split(key)
    params = init_params(pkey)
    x = jax.random.normal(xkey, (BATCH, IN_CH, INPUT_HW, INPUT_HW), jnp.float32)

    fwd = jax.jit(fluentnet_forward)
    out = jax.block_until_ready(fwd(params, x))

    assert out.shape == (BATCH, 1), out.shape
    assert bool(jnp.all(jnp.isfinite(out)))
    assert bool(jnp.all((out > 0.0) & (out < 1.0)))
    print("KERNEL_OK")
</pallas_src>

<mosaic_0001>
module attributes {stable_mosaic.version = 11 : i64} {
  func.func @_matmul_fused_kernel(%arg0: i32, %arg1: i32, %arg2: i32, %arg3: memref<512x49xf32, #tpu.memory_space<vmem>>, %arg4: memref<49x8xbf16, #tpu.memory_space<vmem>>, %arg5: memref<1x8xf32, #tpu.memory_space<vmem>>, %arg6: memref<512x8xf32, #tpu.memory_space<vmem>>) attributes {dimension_semantics = [#tpu.dimension_semantics<parallel>, #tpu.dimension_semantics<parallel>, #tpu.dimension_semantics<arbitrary>], iteration_bounds = array<i64: 1, 1, 1>, scalar_prefetch = 0 : i64, scratch_operands = 0 : i64, tpu.core_type = #tpu.core_type<tc>, window_params = [{transform_indices = @transform_0, window_bounds = array<i64: 512, 49>}, {transform_indices = @transform_1, window_bounds = array<i64: 49, 8>}, {transform_indices = @transform_2, window_bounds = array<i64: 1, 8>}, {transform_indices = @transform_3, window_bounds = array<i64: 512, 8>}]} {
    %c0 = arith.constant 0 : index
    %c0_0 = arith.constant 0 : index
    %0 = vector.load %arg3[%c0, %c0_0] : memref<512x49xf32, #tpu.memory_space<vmem>>, vector<512x49xf32>
    %1 = arith.truncf %0 : vector<512x49xf32> to vector<512x49xbf16>
    %c0_1 = arith.constant 0 : index
    %c0_2 = arith.constant 0 : index
    %2 = vector.load %arg4[%c0_1, %c0_2] : memref<49x8xbf16, #tpu.memory_space<vmem>>, vector<49x8xbf16>
    %cst = arith.constant dense<0.000000e+00> : vector<512x8xf32>
    %3 = tpu.matmul %1, %2, %cst {dimension_numbers = #tpu.dot_dimension_numbers<[1], [0], [0], [1], [0, 0, 1, 1], [], []>} : vector<512x49xbf16>, vector<49x8xbf16>, vector<512x8xf32> -> vector<512x8xf32>
    %c0_3 = arith.constant 0 : index
    %c0_4 = arith.constant 0 : index
    %4 = vector.load %arg5[%c0_3, %c0_4] : memref<1x8xf32, #tpu.memory_space<vmem>>, vector<1x8xf32>
    %5 = vector.broadcast %4 : vector<1x8xf32> to vector<512x8xf32>
    %6 = arith.addf %3, %5 : vector<512x8xf32>
    %cst_5 = arith.constant 0.000000e+00 : f32
    %7 = vector.broadcast %cst_5 : f32 to vector<512x8xf32>
    %8 = arith.maximumf %6, %7 : vector<512x8xf32>
    %c0_6 = arith.constant 0 : index
    %c0_7 = arith.constant 0 : index
    %9 = vector.load %arg6[%c0_6, %c0_7] : memref<512x8xf32, #tpu.memory_space<vmem>>, vector<512x8xf32>
    tpu.vector_store %arg6[%c0_6, %c0_7], %8 {strides = array<i32>} : memref<512x8xf32, #tpu.memory_space<vmem>>, vector<512x8xf32>,
    return
  }
  func.func @transform_0(%arg0: i32, %arg1: i32, %arg2: i32) -> (i32, i32) {
    %c0_i32 = arith.constant 0 : i32
    return %arg0, %arg2 : i32, i32
  }
  func.func @transform_1(%arg0: i32, %arg1: i32, %arg2: i32) -> (i32, i32) {
    %c0_i32 = arith.constant 0 : i32
    return %arg2, %arg1 : i32, i32
  }
  func.func @transform_2(%arg0: i32, %arg1: i32, %arg2: i32) -> (i32, i32) {
    %c0_i32 = arith.constant 0 : i32
    %c0_i32_0 = arith.constant 0 : i32
    return %c0_i32, %arg1 : i32, i32
  }
  func.func @transform_3(%arg0: i32, %arg1: i32, %arg2: i32) -> (i32, i32) {
    %c0_i32 = arith.constant 0 : i32
    return %arg0, %arg1 : i32, i32
  }
}

module attributes {stable_mosaic.version = 11 : i64} {
  func.func @_max_over_leading_kernel(%arg0: memref<9x1024xf32, #tpu.memory_space<vmem>>, %arg1: memref<1x1024xf32, #tpu.memory_space<vmem>>) attributes {dimension_semantics = [], scalar_prefetch = 0 : i64, scratch_operands = 0 : i64, tpu.core_type = #tpu.core_type<tc>} {
    %c0 = arith.constant 0 : index
    %c0_0 = arith.constant 0 : index
    %0 = vector.load %arg0[%c0, %c0_0] : memref<9x1024xf32, #tpu.memory_space<vmem>>, vector<9x1024xf32>
    %cst = arith.constant dense<0xFF800000> : vector<1024xf32>
    %1 = vector.multi_reduction <maximumf>, %0, %cst [0] : vector<9x1024xf32> to vector<1024xf32>
    %2 = vector.shape_cast %1 : vector<1024xf32> to vector<1x1024xf32>
    %c0_1 = arith.constant 0 : index
    %c0_2 = arith.constant 0 : index
    %3 = vector.load %arg1[%c0_1, %c0_2] : memref<1x1024xf32, #tpu.memory_space<vmem>>, vector<1x1024xf32>
    tpu.vector_store %arg1[%c0_1, %c0_2], %2 {strides = array<i32>} : memref<1x1024xf32, #tpu.memory_space<vmem>>, vector<1x1024xf32>,
    return
  }
}

module attributes {stable_mosaic.version = 11 : i64} {
  func.func @_matmul_fused_kernel(%arg0: i32, %arg1: i32, %arg2: i32, %arg3: memref<128x72xf32, #tpu.memory_space<vmem>>, %arg4: memref<72x8xbf16, #tpu.memory_space<vmem>>, %arg5: memref<1x8xf32, #tpu.memory_space<vmem>>, %arg6: memref<128x8xf32, #tpu.memory_space<vmem>>) attributes {dimension_semantics = [#tpu.dimension_semantics<parallel>, #tpu.dimension_semantics<parallel>, #tpu.dimension_semantics<arbitrary>], iteration_bounds = array<i64: 1, 1, 1>, scalar_prefetch = 0 : i64, scratch_operands = 0 : i64, tpu.core_type = #tpu.core_type<tc>, window_params = [{transform_indices = @transform_0, window_bounds = array<i64: 128, 72>}, {transform_indices = @transform_1, window_bounds = array<i64: 72, 8>}, {transform_indices = @transform_2, window_bounds = array<i64: 1, 8>}, {transform_indices = @transform_3, window_bounds = array<i64: 128, 8>}]} {
    %c0 = arith.constant 0 : index
    %c0_0 = arith.constant 0 : index
    %0 = vector.load %arg3[%c0, %c0_0] : memref<128x72xf32, #tpu.memory_space<vmem>>, vector<128x72xf32>
    %1 = arith.truncf %0 : vector<128x72xf32> to vector<128x72xbf16>
    %c0_1 = arith.constant 0 : index
    %c0_2 = arith.constant 0 : index
    %2 = vector.load %arg4[%c0_1, %c0_2] : memref<72x8xbf16, #tpu.memory_space<vmem>>, vector<72x8xbf16>
    %cst = arith.constant dense<0.000000e+00> : vector<128x8xf32>
    %3 = tpu.matmul %1, %2, %cst {dimension_numbers = #tpu.dot_dimension_numbers<[1], [0], [0], [1], [0, 0, 1, 1], [], []>} : vector<128x72xbf16>, vector<72x8xbf16>, vector<128x8xf32> -> vector<128x8xf32>
    %c0_3 = arith.constant 0 : index
    %c0_4 = arith.constant 0 : index
    %4 = vector.load %arg5[%c0_3, %c0_4] : memref<1x8xf32, #tpu.memory_space<vmem>>, vector<1x8xf32>
    %5 = vector.broadcast %4 : vector<1x8xf32> to vector<128x8xf32>
    %6 = arith.addf %3, %5 : vector<128x8xf32>
    %cst_5 = arith.constant 0.000000e+00 : f32
    %7 = vector.broadcast %cst_5 : f32 to vector<128x8xf32>
    %8 = arith.maximumf %6, %7 : vector<128x8xf32>
    %c0_6 = arith.constant 0 : index
    %c0_7 = arith.constant 0 : index
    %9 = vector.load %arg6[%c0_6, %c0_7] : memref<128x8xf32, #tpu.memory_space<vmem>>, vector<128x8xf32>
    tpu.vector_store %arg6[%c0_6, %c0_7], %8 {strides = array<i32>} : memref<128x8xf32, #tpu.memory_space<vmem>>, vector<128x8xf32>,
    return
  }
  func.func @transform_0(%arg0: i32, %arg1: i32, %arg2: i32) -> (i32, i32) {
    %c0_i32 = arith.constant 0 : i32
    return %arg0, %arg2 : i32, i32
  }
  func.func @transform_1(%arg0: i32, %arg1: i32, %arg2: i32) -> (i32, i32) {
    %c0_i32 = arith.constant 0 : i32
    return %arg2, %arg1 : i32, i32
  }
  func.func @transform_2(%arg0: i32, %arg1: i32, %arg2: i32) -> (i32, i32) {
    %c0_i32 = arith.constant 0 : i32
    %c0_i32_0 = arith.constant 0 : i32
    return %c0_i32, %arg1 : i32, i32
  }
  func.func @transform_3(%arg0: i32, %arg1: i32, %arg2: i32) -> (i32, i32) {
    %c0_i32 = arith.constant 0 : i32
    return %arg0, %arg1 : i32, i32
  }
}

module attributes {stable_mosaic.version = 11 : i64} {
  func.func @_matmul_fused_kernel(%arg0: i32, %arg1: i32, %arg2: i32, %arg3: memref<128x72xf32, #tpu.memory_space<vmem>>, %arg4: memref<72x8xbf16, #tpu.memory_space<vmem>>, %arg5: memref<1x8xf32, #tpu.memory_space<vmem>>, %arg6: memref<128x8xf32, #tpu.memory_space<vmem>>) attributes {dimension_semantics = [#tpu.dimension_semantics<parallel>, #tpu.dimension_semantics<parallel>, #tpu.dimension_semantics<arbitrary>], iteration_bounds = array<i64: 1, 1, 1>, scalar_prefetch = 0 : i64, scratch_operands = 0 : i64, tpu.core_type = #tpu.core_type<tc>, window_params = [{transform_indices = @transform_0, window_bounds = array<i64: 128, 72>}, {transform_indices = @transform_1, window_bounds = array<i64: 72, 8>}, {transform_indices = @transform_2, window_bounds = array<i64: 1, 8>}, {transform_indices = @transform_3, window_bounds = array<i64: 128, 8>}]} {
    %c0 = arith.constant 0 : index
    %c0_0 = arith.constant 0 : index
    %0 = vector.load %arg3[%c0, %c0_0] : memref<128x72xf32, #tpu.memory_space<vmem>>, vector<128x72xf32>
    %1 = arith.truncf %0 : vector<128x72xf32> to vector<128x72xbf16>
    %c0_1 = arith.constant 0 : index
    %c0_2 = arith.constant 0 : index
    %2 = vector.load %arg4[%c0_1, %c0_2] : memref<72x8xbf16, #tpu.memory_space<vmem>>, vector<72x8xbf16>
    %cst = arith.constant dense<0.000000e+00> : vector<128x8xf32>
    %3 = tpu.matmul %1, %2, %cst {dimension_numbers = #tpu.dot_dimension_numbers<[1], [0], [0], [1], [0, 0, 1, 1], [], []>} : vector<128x72xbf16>, vector<72x8xbf16>, vector<128x8xf32> -> vector<128x8xf32>
    %c0_3 = arith.constant 0 : index
    %c0_4 = arith.constant 0 : index
    %4 = vector.load %arg5[%c0_3, %c0_4] : memref<1x8xf32, #tpu.memory_space<vmem>>, vector<1x8xf32>
    %5 = vector.broadcast %4 : vector<1x8xf32> to vector<128x8xf32>
    %6 = arith.addf %3, %5 : vector<128x8xf32>
    %c0_5 = arith.constant 0 : index
    %c0_6 = arith.constant 0 : index
    %7 = vector.load %arg6[%c0_5, %c0_6] : memref<128x8xf32, #tpu.memory_space<vmem>>, vector<128x8xf32>
    tpu.vector_store %arg6[%c0_5, %c0_6], %6 {strides = array<i32>} : memref<128x8xf32, #tpu.memory_space<vmem>>, vector<128x8xf32>,
    return
  }
  func.func @transform_0(%arg0: i32, %arg1: i32, %arg2: i32) -> (i32, i32) {
    %c0_i32 = arith.constant 0 : i32
    return %arg0, %arg2 : i32, i32
  }
  func.func @transform_1(%arg0: i32, %arg1: i32, %arg2: i32) -> (i32, i32) {
    %c0_i32 = arith.constant 0 : i32
    return %arg2, %arg1 : i32, i32
  }
  func.func @transform_2(%arg0: i32, %arg1: i32, %arg2: i32) -> (i32, i32) {
    %c0_i32 = arith.constant 0 : i32
    %c0_i32_0 = arith.constant 0 : i32
    return %c0_i32, %arg1 : i32, i32
  }
  func.func @transform_3(%arg0: i32, %arg1: i32, %arg2: i32) -> (i32, i32) {
    %c0_i32 = arith.constant 0 : i32
    return %arg0, %arg1 : i32, i32
  }
}

module attributes {stable_mosaic.version = 11 : i64} {
  func.func @_se_squeeze_kernel(%arg0: memref<2x64x8xf32, #tpu.memory_space<vmem>>, %arg1: memref<8x2xf32, #tpu.memory_space<vmem>>, %arg2: memref<2x8xf32, #tpu.memory_space<vmem>>, %arg3: memref<2x8xf32, #tpu.memory_space<vmem>>) attributes {dimension_semantics = [], scalar_prefetch = 0 : i64, scratch_operands = 0 : i64, tpu.core_type = #tpu.core_type<tc>} {
    %c0 = arith.constant 0 : index
    %c0_0 = arith.constant 0 : index
    %c0_1 = arith.constant 0 : index
    %0 = vector.load %arg0[%c0, %c0_0, %c0_1] : memref<2x64x8xf32, #tpu.memory_space<vmem>>, vector<2x64x8xf32>
    %cst = arith.constant dense<0.000000e+00> : vector<2x8xf32>
    %1 = vector.multi_reduction <add>, %0, %cst [1] : vector<2x64x8xf32> to vector<2x8xf32>
    %cst_2 = arith.constant 6.400000e+01 : f32
    %2 = vector.broadcast %cst_2 : f32 to vector<2x8xf32>
    %3 = arith.divf %1, %2 : vector<2x8xf32>
    %c0_3 = arith.constant 0 : index
    %c0_4 = arith.constant 0 : index
    %4 = vector.load %arg1[%c0_3, %c0_4] : memref<8x2xf32, #tpu.memory_space<vmem>>, vector<8x2xf32>
    %cst_5 = arith.constant dense<0.000000e+00> : vector<2x2xf32>
    %5 = tpu.matmul %3, %4, %cst_5 {dimension_numbers = #tpu.dot_dimension_numbers<[1], [0], [0], [1], [0, 0, 1, 1], [], []>} : vector<2x8xf32>, vector<8x2xf32>, vector<2x2xf32> -> vector<2x2xf32>
    %cst_6 = arith.constant 0.000000e+00 : f32
    %6 = vector.broadcast %cst_6 : f32 to vector<2x2xf32>
    %7 = arith.maximumf %5, %6 : vector<2x2xf32>
    %c0_7 = arith.constant 0 : index
    %c0_8 = arith.constant 0 : index
    %8 = vector.load %arg2[%c0_7, %c0_8] : memref<2x8xf32, #tpu.memory_space<vmem>>, vector<2x8xf32>
    %cst_9 = arith.constant dense<0.000000e+00> : vector<2x8xf32>
    %9 = tpu.matmul %7, %8, %cst_9 {dimension_numbers = #tpu.dot_dimension_numbers<[1], [0], [0], [1], [0, 0, 1, 1], [], []>} : vector<2x2xf32>, vector<2x8xf32>, vector<2x8xf32> -> vector<2x8xf32>
    %10 = arith.negf %9 : vector<2x8xf32>
    %11 = math.exp %10 : vector<2x8xf32>
    %cst_10 = arith.constant 1.000000e+00 : f32
    %12 = vector.broadcast %cst_10 : f32 to vector<2x8xf32>
    %13 = arith.addf %12, %11 : vector<2x8xf32>
    %14 = arith.divf %12, %13 : vector<2x8xf32>
    %c0_11 = arith.constant 0 : index
    %c0_12 = arith.constant 0 : index
    %15 = vector.load %arg3[%c0_11, %c0_12] : memref<2x8xf32, #tpu.memory_space<vmem>>, vector<2x8xf32>
    tpu.vector_store %arg3[%c0_11, %c0_12], %14 {strides = array<i32>} : memref<2x8xf32, #tpu.memory_space<vmem>>, vector<2x8xf32>,
    return
  }
}

module attributes {stable_mosaic.version = 11 : i64} {
  func.func @_se_residual_kernel(%arg0: memref<2x64x8xf32, #tpu.memory_space<vmem>>, %arg1: memref<2x1x8xf32, #tpu.memory_space<vmem>>, %arg2: memref<2x64x8xf32, #tpu.memory_space<vmem>>, %arg3: memref<2x64x8xf32, #tpu.memory_space<vmem>>) attributes {dimension_semantics = [], scalar_prefetch = 0 : i64, scratch_operands = 0 : i64, tpu.core_type = #tpu.core_type<tc>} {
    %c0 = arith.constant 0 : index
    %c0_0 = arith.constant 0 : index
    %c0_1 = arith.constant 0 : index
    %0 = vector.load %arg0[%c0, %c0_0, %c0_1] : memref<2x64x8xf32, #tpu.memory_space<vmem>>, vector<2x64x8xf32>
    %c0_2 = arith.constant 0 : index
    %c0_3 = arith.constant 0 : index
    %c0_4 = arith.constant 0 : index
    %1 = vector.load %arg1[%c0_2, %c0_3, %c0_4] : memref<2x1x8xf32, #tpu.memory_space<vmem>>, vector<2x1x8xf32>
    %2 = vector.broadcast %1 : vector<2x1x8xf32> to vector<2x64x8xf32>
    %3 = arith.mulf %0, %2 : vector<2x64x8xf32>
    %c0_5 = arith.constant 0 : index
    %c0_6 = arith.constant 0 : index
    %c0_7 = arith.constant 0 : index
    %4 = vector.load %arg2[%c0_5, %c0_6, %c0_7] : memref<2x64x8xf32, #tpu.memory_space<vmem>>, vector<2x64x8xf32>
    %5 = arith.addf %3, %4 : vector<2x64x8xf32>
    %cst = arith.constant 0.000000e+00 : f32
    %6 = vector.broadcast %cst : f32 to vector<2x64x8xf32>
    %7 = arith.maximumf %5, %6 : vector<2x64x8xf32>
    %c0_8 = arith.constant 0 : index
    %c0_9 = arith.constant 0 : index
    %c0_10 = arith.constant 0 : index
    %8 = vector.load %arg3[%c0_8, %c0_9, %c0_10] : memref<2x64x8xf32, #tpu.memory_space<vmem>>, vector<2x64x8xf32>
    tpu.vector_store %arg3[%c0_8, %c0_9, %c0_10], %7 {strides = array<i32>} : memref<2x64x8xf32, #tpu.memory_space<vmem>>, vector<2x64x8xf32>,
    return
  }
}

module attributes {stable_mosaic.version = 11 : i64} {
  func.func @_matmul_fused_kernel(%arg0: i32, %arg1: i32, %arg2: i32, %arg3: memref<128x72xf32, #tpu.memory_space<vmem>>, %arg4: memref<72x16xbf16, #tpu.memory_space<vmem>>, %arg5: memref<1x16xf32, #tpu.memory_space<vmem>>, %arg6: memref<128x16xf32, #tpu.memory_space<vmem>>) attributes {dimension_semantics = [#tpu.dimension_semantics<parallel>, #tpu.dimension_semantics<parallel>, #tpu.dimension_semantics<arbitrary>], iteration_bounds = array<i64: 1, 1, 1>, scalar_prefetch = 0 : i64, scratch_operands = 0 : i64, tpu.core_type = #tpu.core_type<tc>, window_params = [{transform_indices = @transform_0, window_bounds = array<i64: 128, 72>}, {transform_indices = @transform_1, window_bounds = array<i64: 72, 16>}, {transform_indices = @transform_2, window_bounds = array<i64: 1, 16>}, {transform_indices = @transform_3, window_bounds = array<i64: 128, 16>}]} {
    %c0 = arith.constant 0 : index
    %c0_0 = arith.constant 0 : index
    %0 = vector.load %arg3[%c0, %c0_0] : memref<128x72xf32, #tpu.memory_space<vmem>>, vector<128x72xf32>
    %1 = arith.truncf %0 : vector<128x72xf32> to vector<128x72xbf16>
    %c0_1 = arith.constant 0 : index
    %c0_2 = arith.constant 0 : index
    %2 = vector.load %arg4[%c0_1, %c0_2] : memref<72x16xbf16, #tpu.memory_space<vmem>>, vector<72x16xbf16>
    %cst = arith.constant dense<0.000000e+00> : vector<128x16xf32>
    %3 = tpu.matmul %1, %2, %cst {dimension_numbers = #tpu.dot_dimension_numbers<[1], [0], [0], [1], [0, 0, 1, 1], [], []>} : vector<128x72xbf16>, vector<72x16xbf16>, vector<128x16xf32> -> vector<128x16xf32>
    %c0_3 = arith.constant 0 : index
    %c0_4 = arith.constant 0 : index
    %4 = vector.load %arg5[%c0_3, %c0_4] : memref<1x16xf32, #tpu.memory_space<vmem>>, vector<1x16xf32>
    %5 = vector.broadcast %4 : vector<1x16xf32> to vector<128x16xf32>
    %6 = arith.addf %3, %5 : vector<128x16xf32>
    %cst_5 = arith.constant 0.000000e+00 : f32
    %7 = vector.broadcast %cst_5 : f32 to vector<128x16xf32>
    %8 = arith.maximumf %6, %7 : vector<128x16xf32>
    %c0_6 = arith.constant 0 : index
    %c0_7 = arith.constant 0 : index
    %9 = vector.load %arg6[%c0_6, %c0_7] : memref<128x16xf32, #tpu.memory_space<vmem>>, vector<128x16xf32>
    tpu.vector_store %arg6[%c0_6, %c0_7], %8 {strides = array<i32>} : memref<128x16xf32, #tpu.memory_space<vmem>>, vector<128x16xf32>,
    return
  }
  func.func @transform_0(%arg0: i32, %arg1: i32, %arg2: i32) -> (i32, i32) {
    %c0_i32 = arith.constant 0 : i32
    return %arg0, %arg2 : i32, i32
  }
  func.func @transform_1(%arg0: i32, %arg1: i32, %arg2: i32) -> (i32, i32) {
    %c0_i32 = arith.constant 0 : i32
    return %arg2, %arg1 : i32, i32
  }
  func.func @transform_2(%arg0: i32, %arg1: i32, %arg2: i32) -> (i32, i32) {
    %c0_i32 = arith.constant 0 : i32
    %c0_i32_0 = arith.constant 0 : i32
    return %c0_i32, %arg1 : i32, i32
  }
  func.func @transform_3(%arg0: i32, %arg1: i32, %arg2: i32) -> (i32, i32) {
    %c0_i32 = arith.constant 0 : i32
    return %arg0, %arg1 : i32, i32
  }
}

module attributes {stable_mosaic.version = 11 : i64} {
  func.func @_matmul_fused_kernel(%arg0: i32, %arg1: i32, %arg2: i32, %arg3: memref<128x144xf32, #tpu.memory_space<vmem>>, %arg4: memref<144x16xbf16, #tpu.memory_space<vmem>>, %arg5: memref<1x16xf32, #tpu.memory_space<vmem>>, %arg6: memref<128x16xf32, #tpu.memory_space<vmem>>) attributes {dimension_semantics = [#tpu.dimension_semantics<parallel>, #tpu.dimension_semantics<parallel>, #tpu.dimension_semantics<arbitrary>], iteration_bounds = array<i64: 1, 1, 1>, scalar_prefetch = 0 : i64, scratch_operands = 0 : i64, tpu.core_type = #tpu.core_type<tc>, window_params = [{transform_indices = @transform_0, window_bounds = array<i64: 128, 144>}, {transform_indices = @transform_1, window_bounds = array<i64: 144, 16>}, {transform_indices = @transform_2, window_bounds = array<i64: 1, 16>}, {transform_indices = @transform_3, window_bounds = array<i64: 128, 16>}]} {
    %c0 = arith.constant 0 : index
    %c0_0 = arith.constant 0 : index
    %0 = vector.load %arg3[%c0, %c0_0] : memref<128x144xf32, #tpu.memory_space<vmem>>, vector<128x144xf32>
    %1 = arith.truncf %0 : vector<128x144xf32> to vector<128x144xbf16>
    %c0_1 = arith.constant 0 : index
    %c0_2 = arith.constant 0 : index
    %2 = vector.load %arg4[%c0_1, %c0_2] : memref<144x16xbf16, #tpu.memory_space<vmem>>, vector<144x16xbf16>
    %cst = arith.constant dense<0.000000e+00> : vector<128x16xf32>
    %3 = tpu.matmul %1, %2, %cst {dimension_numbers = #tpu.dot_dimension_numbers<[1], [0], [0], [1], [0, 0, 1, 1], [], []>} : vector<128x144xbf16>, vector<144x16xbf16>, vector<128x16xf32> -> vector<128x16xf32>
    %c0_3 = arith.constant 0 : index
    %c0_4 = arith.constant 0 : index
    %4 = vector.load %arg5[%c0_3, %c0_4] : memref<1x16xf32, #tpu.memory_space<vmem>>, vector<1x16xf32>
    %5 = vector.broadcast %4 : vector<1x16xf32> to vector<128x16xf32>
    %6 = arith.addf %3, %5 : vector<128x16xf32>
    %c0_5 = arith.constant 0 : index
    %c0_6 = arith.constant 0 : index
    %7 = vector.load %arg6[%c0_5, %c0_6] : memref<128x16xf32, #tpu.memory_space<vmem>>, vector<128x16xf32>
    tpu.vector_store %arg6[%c0_5, %c0_6], %6 {strides = array<i32>} : memref<128x16xf32, #tpu.memory_space<vmem>>, vector<128x16xf32>,
    return
  }
  func.func @transform_0(%arg0: i32, %arg1: i32, %arg2: i32) -> (i32, i32) {
    %c0_i32 = arith.constant 0 : i32
    return %arg0, %arg2 : i32, i32
  }
  func.func @transform_1(%arg0: i32, %arg1: i32, %arg2: i32) -> (i32, i32) {
    %c0_i32 = arith.constant 0 : i32
    return %arg2, %arg1 : i32, i32
  }
  func.func @transform_2(%arg0: i32, %arg1: i32, %arg2: i32) -> (i32, i32) {
    %c0_i32 = arith.constant 0 : i32
    %c0_i32_0 = arith.constant 0 : i32
    return %c0_i32, %arg1 : i32, i32
  }
  func.func @transform_3(%arg0: i32, %arg1: i32, %arg2: i32) -> (i32, i32) {
    %c0_i32 = arith.constant 0 : i32
    return %arg0, %arg1 : i32, i32
  }
}

module attributes {stable_mosaic.version = 11 : i64} {
  func.func @_se_squeeze_kernel(%arg0: memref<2x64x16xf32, #tpu.memory_space<vmem>>, %arg1: memref<16x4xf32, #tpu.memory_space<vmem>>, %arg2: memref<4x16xf32, #tpu.memory_space<vmem>>, %arg3: memref<2x16xf32, #tpu.memory_space<vmem>>) attributes {dimension_semantics = [], scalar_prefetch = 0 : i64, scratch_operands = 0 : i64, tpu.core_type = #tpu.core_type<tc>} {
    %c0 = arith.constant 0 : index
    %c0_0 = arith.constant 0 : index
    %c0_1 = arith.constant 0 : index
    %0 = vector.load %arg0[%c0, %c0_0, %c0_1] : memref<2x64x16xf32, #tpu.memory_space<vmem>>, vector<2x64x16xf32>
    %cst = arith.constant dense<0.000000e+00> : vector<2x16xf32>
    %1 = vector.multi_reduction <add>, %0, %cst [1] : vector<2x64x16xf32> to vector<2x16xf32>
    %cst_2 = arith.constant 6.400000e+01 : f32
    %2 = vector.broadcast %cst_2 : f32 to vector<2x16xf32>
    %3 = arith.divf %1, %2 : vector<2x16xf32>
    %c0_3 = arith.constant 0 : index
    %c0_4 = arith.constant 0 : index
    %4 = vector.load %arg1[%c0_3, %c0_4] : memref<16x4xf32, #tpu.memory_space<vmem>>, vector<16x4xf32>
    %cst_5 = arith.constant dense<0.000000e+00> : vector<2x4xf32>
    %5 = tpu.matmul %3, %4, %cst_5 {dimension_numbers = #tpu.dot_dimension_numbers<[1], [0], [0], [1], [0, 0, 1, 1], [], []>} : vector<2x16xf32>, vector<16x4xf32>, vector<2x4xf32> -> vector<2x4xf32>
    %cst_6 = arith.constant 0.000000e+00 : f32
    %6 = vector.broadcast %cst_6 : f32 to vector<2x4xf32>
    %7 = arith.maximumf %5, %6 : vector<2x4xf32>
    %c0_7 = arith.constant 0 : index
    %c0_8 = arith.constant 0 : index
    %8 = vector.load %arg2[%c0_7, %c0_8] : memref<4x16xf32, #tpu.memory_space<vmem>>, vector<4x16xf32>
    %cst_9 = arith.constant dense<0.000000e+00> : vector<2x16xf32>
    %9 = tpu.matmul %7, %8, %cst_9 {dimension_numbers = #tpu.dot_dimension_numbers<[1], [0], [0], [1], [0, 0, 1, 1], [], []>} : vector<2x4xf32>, vector<4x16xf32>, vector<2x16xf32> -> vector<2x16xf32>
    %10 = arith.negf %9 : vector<2x16xf32>
    %11 = math.exp %10 : vector<2x16xf32>
    %cst_10 = arith.constant 1.000000e+00 : f32
    %12 = vector.broadcast %cst_10 : f32 to vector<2x16xf32>
    %13 = arith.addf %12, %11 : vector<2x16xf32>
    %14 = arith.divf %12, %13 : vector<2x16xf32>
    %c0_11 = arith.constant 0 : index
    %c0_12 = arith.constant 0 : index
    %15 = vector.load %arg3[%c0_11, %c0_12] : memref<2x16xf32, #tpu.memory_space<vmem>>, vector<2x16xf32>
    tpu.vector_store %arg3[%c0_11, %c0_12], %14 {strides = array<i32>} : memref<2x16xf32, #tpu.memory_space<vmem>>, vector<2x16xf32>,
    return
  }
}

module attributes {stable_mosaic.version = 11 : i64} {
  func.func @_matmul_fused_kernel(%arg0: i32, %arg1: i32, %arg2: i32, %arg3: memref<128x8xf32, #tpu.memory_space<vmem>>, %arg4: memref<8x16xbf16, #tpu.memory_space<vmem>>, %arg5: memref<1x16xf32, #tpu.memory_space<vmem>>, %arg6: memref<128x16xf32, #tpu.memory_space<vmem>>) attributes {dimension_semantics = [#tpu.dimension_semantics<parallel>, #tpu.dimension_semantics<parallel>, #tpu.dimension_semantics<arbitrary>], iteration_bounds = array<i64: 1, 1, 1>, scalar_prefetch = 0 : i64, scratch_operands = 0 : i64, tpu.core_type = #tpu.core_type<tc>, window_params = [{transform_indices = @transform_0, window_bounds = array<i64: 128, 8>}, {transform_indices = @transform_1, window_bounds = array<i64: 8, 16>}, {transform_indices = @transform_2, window_bounds = array<i64: 1, 16>}, {transform_indices = @transform_3, window_bounds = array<i64: 128, 16>}]} {
    %c0 = arith.constant 0 : index
    %c0_0 = arith.constant 0 : index
    %0 = vector.load %arg3[%c0, %c0_0] : memref<128x8xf32, #tpu.memory_space<vmem>>, vector<128x8xf32>
    %1 = arith.truncf %0 : vector<128x8xf32> to vector<128x8xbf16>
    %c0_1 = arith.constant 0 : index
    %c0_2 = arith.constant 0 : index
    %2 = vector.load %arg4[%c0_1, %c0_2] : memref<8x16xbf16, #tpu.memory_space<vmem>>, vector<8x16xbf16>
    %cst = arith.constant dense<0.000000e+00> : vector<128x16xf32>
    %3 = tpu.matmul %1, %2, %cst {dimension_numbers = #tpu.dot_dimension_numbers<[1], [0], [0], [1], [0, 0, 1, 1], [], []>} : vector<128x8xbf16>, vector<8x16xbf16>, vector<128x16xf32> -> vector<128x16xf32>
    %c0_3 = arith.constant 0 : index
    %c0_4 = arith.constant 0 : index
    %4 = vector.load %arg5[%c0_3, %c0_4] : memref<1x16xf32, #tpu.memory_space<vmem>>, vector<1x16xf32>
    %5 = vector.broadcast %4 : vector<1x16xf32> to vector<128x16xf32>
    %6 = arith.addf %3, %5 : vector<128x16xf32>
    %c0_5 = arith.constant 0 : index
    %c0_6 = arith.constant 0 : index
    %7 = vector.load %arg6[%c0_5, %c0_6] : memref<128x16xf32, #tpu.memory_space<vmem>>, vector<128x16xf32>
    tpu.vector_store %arg6[%c0_5, %c0_6], %6 {strides = array<i32>} : memref<128x16xf32, #tpu.memory_space<vmem>>, vector<128x16xf32>,
    return
  }
  func.func @transform_0(%arg0: i32, %arg1: i32, %arg2: i32) -> (i32, i32) {
    %c0_i32 = arith.constant 0 : i32
    return %arg0, %arg2 : i32, i32
  }
  func.func @transform_1(%arg0: i32, %arg1: i32, %arg2: i32) -> (i32, i32) {
    %c0_i32 = arith.constant 0 : i32
    return %arg2, %arg1 : i32, i32
  }
  func.func @transform_2(%arg0: i32, %arg1: i32, %arg2: i32) -> (i32, i32) {
    %c0_i32 = arith.constant 0 : i32
    %c0_i32_0 = arith.constant 0 : i32
    return %c0_i32, %arg1 : i32, i32
  }
  func.func @transform_3(%arg0: i32, %arg1: i32, %arg2: i32) -> (i32, i32) {
    %c0_i32 = arith.constant 0 : i32
    return %arg0, %arg1 : i32, i32
  }
}

module attributes {stable_mosaic.version = 11 : i64} {
  func.func @_se_residual_kernel(%arg0: memref<2x64x16xf32, #tpu.memory_space<vmem>>, %arg1: memref<2x1x16xf32, #tpu.memory_space<vmem>>, %arg2: memref<2x64x16xf32, #tpu.memory_space<vmem>>, %arg3: memref<2x64x16xf32, #tpu.memory_space<vmem>>) attributes {dimension_semantics = [], scalar_prefetch = 0 : i64, scratch_operands = 0 : i64, tpu.core_type = #tpu.core_type<tc>} {
    %c0 = arith.constant 0 : index
    %c0_0 = arith.constant 0 : index
    %c0_1 = arith.constant 0 : index
    %0 = vector.load %arg0[%c0, %c0_0, %c0_1] : memref<2x64x16xf32, #tpu.memory_space<vmem>>, vector<2x64x16xf32>
    %c0_2 = arith.constant 0 : index
    %c0_3 = arith.constant 0 : index
    %c0_4 = arith.constant 0 : index
    %1 = vector.load %arg1[%c0_2, %c0_3, %c0_4] : memref<2x1x16xf32, #tpu.memory_space<vmem>>, vector<2x1x16xf32>
    %2 = vector.broadcast %1 : vector<2x1x16xf32> to vector<2x64x16xf32>
    %3 = arith.mulf %0, %2 : vector<2x64x16xf32>
    %c0_5 = arith.constant 0 : index
    %c0_6 = arith.constant 0 : index
    %c0_7 = arith.constant 0 : index
    %4 = vector.load %arg2[%c0_5, %c0_6, %c0_7] : memref<2x64x16xf32, #tpu.memory_space<vmem>>, vector<2x64x16xf32>
    %5 = arith.addf %3, %4 : vector<2x64x16xf32>
    %cst = arith.constant 0.000000e+00 : f32
    %6 = vector.broadcast %cst : f32 to vector<2x64x16xf32>
    %7 = arith.maximumf %5, %6 : vector<2x64x16xf32>
    %c0_8 = arith.constant 0 : index
    %c0_9 = arith.constant 0 : index
    %c0_10 = arith.constant 0 : index
    %8 = vector.load %arg3[%c0_8, %c0_9, %c0_10] : memref<2x64x16xf32, #tpu.memory_space<vmem>>, vector<2x64x16xf32>
    tpu.vector_store %arg3[%c0_8, %c0_9, %c0_10], %7 {strides = array<i32>} : memref<2x64x16xf32, #tpu.memory_space<vmem>>, vector<2x64x16xf32>,
    return
  }
}

module attributes {stable_mosaic.version = 11 : i64} {
  func.func @_matmul_fused_kernel(%arg0: i32, %arg1: i32, %arg2: i32, %arg3: memref<128x144xf32, #tpu.memory_space<vmem>>, %arg4: memref<144x16xbf16, #tpu.memory_space<vmem>>, %arg5: memref<1x16xf32, #tpu.memory_space<vmem>>, %arg6: memref<128x16xf32, #tpu.memory_space<vmem>>) attributes {dimension_semantics = [#tpu.dimension_semantics<parallel>, #tpu.dimension_semantics<parallel>, #tpu.dimension_semantics<arbitrary>], iteration_bounds = array<i64: 1, 1, 1>, scalar_prefetch = 0 : i64, scratch_operands = 0 : i64, tpu.core_type = #tpu.core_type<tc>, window_params = [{transform_indices = @transform_0, window_bounds = array<i64: 128, 144>}, {transform_indices = @transform_1, window_bounds = array<i64: 144, 16>}, {transform_indices = @transform_2, window_bounds = array<i64: 1, 16>}, {transform_indices = @transform_3, window_bounds = array<i64: 128, 16>}]} {
    %c0 = arith.constant 0 : index
    %c0_0 = arith.constant 0 : index
    %0 = vector.load %arg3[%c0, %c0_0] : memref<128x144xf32, #tpu.memory_space<vmem>>, vector<128x144xf32>
    %1 = arith.truncf %0 : vector<128x144xf32> to vector<128x144xbf16>
    %c0_1 = arith.constant 0 : index
    %c0_2 = arith.constant 0 : index
    %2 = vector.load %arg4[%c0_1, %c0_2] : memref<144x16xbf16, #tpu.memory_space<vmem>>, vector<144x16xbf16>
    %cst = arith.constant dense<0.000000e+00> : vector<128x16xf32>
    %3 = tpu.matmul %1, %2, %cst {dimension_numbers = #tpu.dot_dimension_numbers<[1], [0], [0], [1], [0, 0, 1, 1], [], []>} : vector<128x144xbf16>, vector<144x16xbf16>, vector<128x16xf32> -> vector<128x16xf32>
    %c0_3 = arith.constant 0 : index
    %c0_4 = arith.constant 0 : index
    %4 = vector.load %arg5[%c0_3, %c0_4] : memref<1x16xf32, #tpu.memory_space<vmem>>, vector<1x16xf32>
    %5 = vector.broadcast %4 : vector<1x16xf32> to vector<128x16xf32>
    %6 = arith.addf %3, %5 : vector<128x16xf32>
    %cst_5 = arith.constant 0.000000e+00 : f32
    %7 = vector.broadcast %cst_5 : f32 to vector<128x16xf32>
    %8 = arith.maximumf %6, %7 : vector<128x16xf32>
    %c0_6 = arith.constant 0 : index
    %c0_7 = arith.constant 0 : index
    %9 = vector.load %arg6[%c0_6, %c0_7] : memref<128x16xf32, #tpu.memory_space<vmem>>, vector<128x16xf32>
    tpu.vector_store %arg6[%c0_6, %c0_7], %8 {strides = array<i32>} : memref<128x16xf32, #tpu.memory_space<vmem>>, vector<128x16xf32>,
    return
  }
  func.func @transform_0(%arg0: i32, %arg1: i32, %arg2: i32) -> (i32, i32) {
    %c0_i32 = arith.constant 0 : i32
    return %arg0, %arg2 : i32, i32
  }
  func.func @transform_1(%arg0: i32, %arg1: i32, %arg2: i32) -> (i32, i32) {
    %c0_i32 = arith.constant 0 : i32
    return %arg2, %arg1 : i32, i32
  }
  func.func @transform_2(%arg0: i32, %arg1: i32, %arg2: i32) -> (i32, i32) {
    %c0_i32 = arith.constant 0 : i32
    %c0_i32_0 = arith.constant 0 : i32
    return %c0_i32, %arg1 : i32, i32
  }
  func.func @transform_3(%arg0: i32, %arg1: i32, %arg2: i32) -> (i32, i32) {
    %c0_i32 = arith.constant 0 : i32
    return %arg0, %arg1 : i32, i32
  }
}

module attributes {stable_mosaic.version = 11 : i64} {
  func.func @_matmul_fused_kernel(%arg0: i32, %arg1: i32, %arg2: i32, %arg3: memref<128x144xf32, #tpu.memory_space<vmem>>, %arg4: memref<144x32xbf16, #tpu.memory_space<vmem>>, %arg5: memref<1x32xf32, #tpu.memory_space<vmem>>, %arg6: memref<128x32xf32, #tpu.memory_space<vmem>>) attributes {dimension_semantics = [#tpu.dimension_semantics<parallel>, #tpu.dimension_semantics<parallel>, #tpu.dimension_semantics<arbitrary>], iteration_bounds = array<i64: 1, 1, 1>, scalar_prefetch = 0 : i64, scratch_operands = 0 : i64, tpu.core_type = #tpu.core_type<tc>, window_params = [{transform_indices = @transform_0, window_bounds = array<i64: 128, 144>}, {transform_indices = @transform_1, window_bounds = array<i64: 144, 32>}, {transform_indices = @transform_2, window_bounds = array<i64: 1, 32>}, {transform_indices = @transform_3, window_bounds = array<i64: 128, 32>}]} {
    %c0 = arith.constant 0 : index
    %c0_0 = arith.constant 0 : index
    %0 = vector.load %arg3[%c0, %c0_0] : memref<128x144xf32, #tpu.memory_space<vmem>>, vector<128x144xf32>
    %1 = arith.truncf %0 : vector<128x144xf32> to vector<128x144xbf16>
    %c0_1 = arith.constant 0 : index
    %c0_2 = arith.constant 0 : index
    %2 = vector.load %arg4[%c0_1, %c0_2] : memref<144x32xbf16, #tpu.memory_space<vmem>>, vector<144x32xbf16>
    %cst = arith.constant dense<0.000000e+00> : vector<128x32xf32>
    %3 = tpu.matmul %1, %2, %cst {dimension_numbers = #tpu.dot_dimension_numbers<[1], [0], [0], [1], [0, 0, 1, 1], [], []>} : vector<128x144xbf16>, vector<144x32xbf16>, vector<128x32xf32> -> vector<128x32xf32>
    %c0_3 = arith.constant 0 : index
    %c0_4 = arith.constant 0 : index
    %4 = vector.load %arg5[%c0_3, %c0_4] : memref<1x32xf32, #tpu.memory_space<vmem>>, vector<1x32xf32>
    %5 = vector.broadcast %4 : vector<1x32xf32> to vector<128x32xf32>
    %6 = arith.addf %3, %5 : vector<128x32xf32>
    %cst_5 = arith.constant 0.000000e+00 : f32
    %7 = vector.broadcast %cst_5 : f32 to vector<128x32xf32>
    %8 = arith.maximumf %6, %7 : vector<128x32xf32>
    %c0_6 = arith.constant 0 : index
    %c0_7 = arith.constant 0 : index
    %9 = vector.load %arg6[%c0_6, %c0_7] : memref<128x32xf32, #tpu.memory_space<vmem>>, vector<128x32xf32>
    tpu.vector_store %arg6[%c0_6, %c0_7], %8 {strides = array<i32>} : memref<128x32xf32, #tpu.memory_space<vmem>>, vector<128x32xf32>,
    return
  }
  func.func @transform_0(%arg0: i32, %arg1: i32, %arg2: i32) -> (i32, i32) {
    %c0_i32 = arith.constant 0 : i32
    return %arg0, %arg2 : i32, i32
  }
  func.func @transform_1(%arg0: i32, %arg1: i32, %arg2: i32) -> (i32, i32) {
    %c0_i32 = arith.constant 0 : i32
    return %arg2, %arg1 : i32, i32
  }
  func.func @transform_2(%arg0: i32, %arg1: i32, %arg2: i32) -> (i32, i32) {
    %c0_i32 = arith.constant 0 : i32
    %c0_i32_0 = arith.constant 0 : i32
    return %c0_i32, %arg1 : i32, i32
  }
  func.func @transform_3(%arg0: i32, %arg1: i32, %arg2: i32) -> (i32, i32) {
    %c0_i32 = arith.constant 0 : i32
    return %arg0, %arg1 : i32, i32
  }
}

module attributes {stable_mosaic.version = 11 : i64} {
  func.func @_matmul_fused_kernel(%arg0: i32, %arg1: i32, %arg2: i32, %arg3: memref<128x288xf32, #tpu.memory_space<vmem>>, %arg4: memref<288x32xbf16, #tpu.memory_space<vmem>>, %arg5: memref<1x32xf32, #tpu.memory_space<vmem>>, %arg6: memref<128x32xf32, #tpu.memory_space<vmem>>) attributes {dimension_semantics = [#tpu.dimension_semantics<parallel>, #tpu.dimension_semantics<parallel>, #tpu.dimension_semantics<arbitrary>], iteration_bounds = array<i64: 1, 1, 1>, scalar_prefetch = 0 : i64, scratch_operands = 0 : i64, tpu.core_type = #tpu.core_type<tc>, window_params = [{transform_indices = @transform_0, window_bounds = array<i64: 128, 288>}, {transform_indices = @transform_1, window_bounds = array<i64: 288, 32>}, {transform_indices = @transform_2, window_bounds = array<i64: 1, 32>}, {transform_indices = @transform_3, window_bounds = array<i64: 128, 32>}]} {
    %c0 = arith.constant 0 : index
    %c0_0 = arith.constant 0 : index
    %0 = vector.load %arg3[%c0, %c0_0] : memref<128x288xf32, #tpu.memory_space<vmem>>, vector<128x288xf32>
    %1 = arith.truncf %0 : vector<128x288xf32> to vector<128x288xbf16>
    %c0_1 = arith.constant 0 : index
    %c0_2 = arith.constant 0 : index
    %2 = vector.load %arg4[%c0_1, %c0_2] : memref<288x32xbf16, #tpu.memory_space<vmem>>, vector<288x32xbf16>
    %cst = arith.constant dense<0.000000e+00> : vector<128x32xf32>
    %3 = tpu.matmul %1, %2, %cst {dimension_numbers = #tpu.dot_dimension_numbers<[1], [0], [0], [1], [0, 0, 1, 1], [], []>} : vector<128x288xbf16>, vector<288x32xbf16>, vector<128x32xf32> -> vector<128x32xf32>
    %c0_3 = arith.constant 0 : index
    %c0_4 = arith.constant 0 : index
    %4 = vector.load %arg5[%c0_3, %c0_4] : memref<1x32xf32, #tpu.memory_space<vmem>>, vector<1x32xf32>
    %5 = vector.broadcast %4 : vector<1x32xf32> to vector<128x32xf32>
    %6 = arith.addf %3, %5 : vector<128x32xf32>
    %c0_5 = arith.constant 0 : index
    %c0_6 = arith.constant 0 : index
    %7 = vector.load %arg6[%c0_5, %c0_6] : memref<128x32xf32, #tpu.memory_space<vmem>>, vector<128x32xf32>
    tpu.vector_store %arg6[%c0_5, %c0_6], %6 {strides = array<i32>} : memref<128x32xf32, #tpu.memory_space<vmem>>, vector<128x32xf32>,
    return
  }
  func.func @transform_0(%arg0: i32, %arg1: i32, %arg2: i32) -> (i32, i32) {
    %c0_i32 = arith.constant 0 : i32
    return %arg0, %arg2 : i32, i32
  }
  func.func @transform_1(%arg0: i32, %arg1: i32, %arg2: i32) -> (i32, i32) {
    %c0_i32 = arith.constant 0 : i32
    return %arg2, %arg1 : i32, i32
  }
  func.func @transform_2(%arg0: i32, %arg1: i32, %arg2: i32) -> (i32, i32) {
    %c0_i32 = arith.constant 0 : i32
    %c0_i32_0 = arith.constant 0 : i32
    return %c0_i32, %arg1 : i32, i32
  }
  func.func @transform_3(%arg0: i32, %arg1: i32, %arg2: i32) -> (i32, i32) {
    %c0_i32 = arith.constant 0 : i32
    return %arg0, %arg1 : i32, i32
  }
}

module attributes {stable_mosaic.version = 11 : i64} {
  func.func @_se_squeeze_kernel(%arg0: memref<2x64x32xf32, #tpu.memory_space<vmem>>, %arg1: memref<32x8xf32, #tpu.memory_space<vmem>>, %arg2: memref<8x32xf32, #tpu.memory_space<vmem>>, %arg3: memref<2x32xf32, #tpu.memory_space<vmem>>) attributes {dimension_semantics = [], scalar_prefetch = 0 : i64, scratch_operands = 0 : i64, tpu.core_type = #tpu.core_type<tc>} {
    %c0 = arith.constant 0 : index
    %c0_0 = arith.constant 0 : index
    %c0_1 = arith.constant 0 : index
    %0 = vector.load %arg0[%c0, %c0_0, %c0_1] : memref<2x64x32xf32, #tpu.memory_space<vmem>>, vector<2x64x32xf32>
    %cst = arith.constant dense<0.000000e+00> : vector<2x32xf32>
    %1 = vector.multi_reduction <add>, %0, %cst [1] : vector<2x64x32xf32> to vector<2x32xf32>
    %cst_2 = arith.constant 6.400000e+01 : f32
    %2 = vector.broadcast %cst_2 : f32 to vector<2x32xf32>
    %3 = arith.divf %1, %2 : vector<2x32xf32>
    %c0_3 = arith.constant 0 : index
    %c0_4 = arith.constant 0 : index
    %4 = vector.load %arg1[%c0_3, %c0_4] : memref<32x8xf32, #tpu.memory_space<vmem>>, vector<32x8xf32>
    %cst_5 = arith.constant dense<0.000000e+00> : vector<2x8xf32>
    %5 = tpu.matmul %3, %4, %cst_5 {dimension_numbers = #tpu.dot_dimension_numbers<[1], [0], [0], [1], [0, 0, 1, 1], [], []>} : vector<2x32xf32>, vector<32x8xf32>, vector<2x8xf32> -> vector<2x8xf32>
    %cst_6 = arith.constant 0.000000e+00 : f32
    %6 = vector.broadcast %cst_6 : f32 to vector<2x8xf32>
    %7 = arith.maximumf %5, %6 : vector<2x8xf32>
    %c0_7 = arith.constant 0 : index
    %c0_8 = arith.constant 0 : index
    %8 = vector.load %arg2[%c0_7, %c0_8] : memref<8x32xf32, #tpu.memory_space<vmem>>, vector<8x32xf32>
    %cst_9 = arith.constant dense<0.000000e+00> : vector<2x32xf32>
    %9 = tpu.matmul %7, %8, %cst_9 {dimension_numbers = #tpu.dot_dimension_numbers<[1], [0], [0], [1], [0, 0, 1, 1], [], []>} : vector<2x8xf32>, vector<8x32xf32>, vector<2x32xf32> -> vector<2x32xf32>
    %10 = arith.negf %9 : vector<2x32xf32>
    %11 = math.exp %10 : vector<2x32xf32>
    %cst_10 = arith.constant 1.000000e+00 : f32
    %12 = vector.broadcast %cst_10 : f32 to vector<2x32xf32>
    %13 = arith.addf %12, %11 : vector<2x32xf32>
    %14 = arith.divf %12, %13 : vector<2x32xf32>
    %c0_11 = arith.constant 0 : index
    %c0_12 = arith.constant 0 : index
    %15 = vector.load %arg3[%c0_11, %c0_12] : memref<2x32xf32, #tpu.memory_space<vmem>>, vector<2x32xf32>
    tpu.vector_store %arg3[%c0_11, %c0_12], %14 {strides = array<i32>} : memref<2x32xf32, #tpu.memory_space<vmem>>, vector<2x32xf32>,
    return
  }
}

module attributes {stable_mosaic.version = 11 : i64} {
  func.func @_se_residual_kernel(%arg0: memref<2x64x32xf32, #tpu.memory_space<vmem>>, %arg1: memref<2x1x32xf32, #tpu.memory_space<vmem>>, %arg2: memref<2x64x32xf32, #tpu.memory_space<vmem>>, %arg3: memref<2x64x32xf32, #tpu.memory_space<vmem>>) attributes {dimension_semantics = [], scalar_prefetch = 0 : i64, scratch_operands = 0 : i64, tpu.core_type = #tpu.core_type<tc>} {
    %c0 = arith.constant 0 : index
    %c0_0 = arith.constant 0 : index
    %c0_1 = arith.constant 0 : index
    %0 = vector.load %arg0[%c0, %c0_0, %c0_1] : memref<2x64x32xf32, #tpu.memory_space<vmem>>, vector<2x64x32xf32>
    %c0_2 = arith.constant 0 : index
    %c0_3 = arith.constant 0 : index
    %c0_4 = arith.constant 0 : index
    %1 = vector.load %arg1[%c0_2, %c0_3, %c0_4] : memref<2x1x32xf32, #tpu.memory_space<vmem>>, vector<2x1x32xf32>
    %2 = vector.broadcast %1 : vector<2x1x32xf32> to vector<2x64x32xf32>
    %3 = arith.mulf %0, %2 : vector<2x64x32xf32>
    %c0_5 = arith.constant 0 : index
    %c0_6 = arith.constant 0 : index
    %c0_7 = arith.constant 0 : index
    %4 = vector.load %arg2[%c0_5, %c0_6, %c0_7] : memref<2x64x32xf32, #tpu.memory_space<vmem>>, vector<2x64x32xf32>
    %5 = arith.addf %3, %4 : vector<2x64x32xf32>
    %cst = arith.constant 0.000000e+00 : f32
    %6 = vector.broadcast %cst : f32 to vector<2x64x32xf32>
    %7 = arith.maximumf %5, %6 : vector<2x64x32xf32>
    %c0_8 = arith.constant 0 : index
    %c0_9 = arith.constant 0 : index
    %c0_10 = arith.constant 0 : index
    %8 = vector.load %arg3[%c0_8, %c0_9, %c0_10] : memref<2x64x32xf32, #tpu.memory_space<vmem>>, vector<2x64x32xf32>
    tpu.vector_store %arg3[%c0_8, %c0_9, %c0_10], %7 {strides = array<i32>} : memref<2x64x32xf32, #tpu.memory_space<vmem>>, vector<2x64x32xf32>,
    return
  }
}

module attributes {stable_mosaic.version = 11 : i64} {
  func.func @_matmul_fused_kernel(%arg0: i32, %arg1: i32, %arg2: i32, %arg3: memref<128x16xf32, #tpu.memory_space<vmem>>, %arg4: memref<16x32xbf16, #tpu.memory_space<vmem>>, %arg5: memref<1x32xf32, #tpu.memory_space<vmem>>, %arg6: memref<128x32xf32, #tpu.memory_space<vmem>>) attributes {dimension_semantics = [#tpu.dimension_semantics<parallel>, #tpu.dimension_semantics<parallel>, #tpu.dimension_semantics<arbitrary>], iteration_bounds = array<i64: 1, 1, 1>, scalar_prefetch = 0 : i64, scratch_operands = 0 : i64, tpu.core_type = #tpu.core_type<tc>, window_params = [{transform_indices = @transform_0, window_bounds = array<i64: 128, 16>}, {transform_indices = @transform_1, window_bounds = array<i64: 16, 32>}, {transform_indices = @transform_2, window_bounds = array<i64: 1, 32>}, {transform_indices = @transform_3, window_bounds = array<i64: 128, 32>}]} {
    %c0 = arith.constant 0 : index
    %c0_0 = arith.constant 0 : index
    %0 = vector.load %arg3[%c0, %c0_0] : memref<128x16xf32, #tpu.memory_space<vmem>>, vector<128x16xf32>
    %1 = arith.truncf %0 : vector<128x16xf32> to vector<128x16xbf16>
    %c0_1 = arith.constant 0 : index
    %c0_2 = arith.constant 0 : index
    %2 = vector.load %arg4[%c0_1, %c0_2] : memref<16x32xbf16, #tpu.memory_space<vmem>>, vector<16x32xbf16>
    %cst = arith.constant dense<0.000000e+00> : vector<128x32xf32>
    %3 = tpu.matmul %1, %2, %cst {dimension_numbers = #tpu.dot_dimension_numbers<[1], [0], [0], [1], [0, 0, 1, 1], [], []>} : vector<128x16xbf16>, vector<16x32xbf16>, vector<128x32xf32> -> vector<128x32xf32>
    %c0_3 = arith.constant 0 : index
    %c0_4 = arith.constant 0 : index
    %4 = vector.load %arg5[%c0_3, %c0_4] : memref<1x32xf32, #tpu.memory_space<vmem>>, vector<1x32xf32>
    %5 = vector.broadcast %4 : vector<1x32xf32> to vector<128x32xf32>
    %6 = arith.addf %3, %5 : vector<128x32xf32>
    %c0_5 = arith.constant 0 : index
    %c0_6 = arith.constant 0 : index
    %7 = vector.load %arg6[%c0_5, %c0_6] : memref<128x32xf32, #tpu.memory_space<vmem>>, vector<128x32xf32>
    tpu.vector_store %arg6[%c0_5, %c0_6], %6 {strides = array<i32>} : memref<128x32xf32, #tpu.memory_space<vmem>>, vector<128x32xf32>,
    return
  }
  func.func @transform_0(%arg0: i32, %arg1: i32, %arg2: i32) -> (i32, i32) {
    %c0_i32 = arith.constant 0 : i32
    return %arg0, %arg2 : i32, i32
  }
  func.func @transform_1(%arg0: i32, %arg1: i32, %arg2: i32) -> (i32, i32) {
    %c0_i32 = arith.constant 0 : i32
    return %arg2, %arg1 : i32, i32
  }
  func.func @transform_2(%arg0: i32, %arg1: i32, %arg2: i32) -> (i32, i32) {
    %c0_i32 = arith.constant 0 : i32
    %c0_i32_0 = arith.constant 0 : i32
    return %c0_i32, %arg1 : i32, i32
  }
  func.func @transform_3(%arg0: i32, %arg1: i32, %arg2: i32) -> (i32, i32) {
    %c0_i32 = arith.constant 0 : i32
    return %arg0, %arg1 : i32, i32
  }
}

module attributes {stable_mosaic.version = 11 : i64} {
  func.func @_matmul_fused_kernel(%arg0: i32, %arg1: i32, %arg2: i32, %arg3: memref<128x288xf32, #tpu.memory_space<vmem>>, %arg4: memref<288x32xbf16, #tpu.memory_space<vmem>>, %arg5: memref<1x32xf32, #tpu.memory_space<vmem>>, %arg6: memref<128x32xf32, #tpu.memory_space<vmem>>) attributes {dimension_semantics = [#tpu.dimension_semantics<parallel>, #tpu.dimension_semantics<parallel>, #tpu.dimension_semantics<arbitrary>], iteration_bounds = array<i64: 1, 1, 1>, scalar_prefetch = 0 : i64, scratch_operands = 0 : i64, tpu.core_type = #tpu.core_type<tc>, window_params = [{transform_indices = @transform_0, window_bounds = array<i64: 128, 288>}, {transform_indices = @transform_1, window_bounds = array<i64: 288, 32>}, {transform_indices = @transform_2, window_bounds = array<i64: 1, 32>}, {transform_indices = @transform_3, window_bounds = array<i64: 128, 32>}]} {
    %c0 = arith.constant 0 : index
    %c0_0 = arith.constant 0 : index
    %0 = vector.load %arg3[%c0, %c0_0] : memref<128x288xf32, #tpu.memory_space<vmem>>, vector<128x288xf32>
    %1 = arith.truncf %0 : vector<128x288xf32> to vector<128x288xbf16>
    %c0_1 = arith.constant 0 : index
    %c0_2 = arith.constant 0 : index
    %2 = vector.load %arg4[%c0_1, %c0_2] : memref<288x32xbf16, #tpu.memory_space<vmem>>, vector<288x32xbf16>
    %cst = arith.constant dense<0.000000e+00> : vector<128x32xf32>
    %3 = tpu.matmul %1, %2, %cst {dimension_numbers = #tpu.dot_dimension_numbers<[1], [0], [0], [1], [0, 0, 1, 1], [], []>} : vector<128x288xbf16>, vector<288x32xbf16>, vector<128x32xf32> -> vector<128x32xf32>
    %c0_3 = arith.constant 0 : index
    %c0_4 = arith.constant 0 : index
    %4 = vector.load %arg5[%c0_3, %c0_4] : memref<1x32xf32, #tpu.memory_space<vmem>>, vector<1x32xf32>
    %5 = vector.broadcast %4 : vector<1x32xf32> to vector<128x32xf32>
    %6 = arith.addf %3, %5 : vector<128x32xf32>
    %cst_5 = arith.constant 0.000000e+00 : f32
    %7 = vector.broadcast %cst_5 : f32 to vector<128x32xf32>
    %8 = arith.maximumf %6, %7 : vector<128x32xf32>
    %c0_6 = arith.constant 0 : index
    %c0_7 = arith.constant 0 : index
    %9 = vector.load %arg6[%c0_6, %c0_7] : memref<128x32xf32, #tpu.memory_space<vmem>>, vector<128x32xf32>
    tpu.vector_store %arg6[%c0_6, %c0_7], %8 {strides = array<i32>} : memref<128x32xf32, #tpu.memory_space<vmem>>, vector<128x32xf32>,
    return
  }
  func.func @transform_0(%arg0: i32, %arg1: i32, %arg2: i32) -> (i32, i32) {
    %c0_i32 = arith.constant 0 : i32
    return %arg0, %arg2 : i32, i32
  }
  func.func @transform_1(%arg0: i32, %arg1: i32, %arg2: i32) -> (i32, i32) {
    %c0_i32 = arith.constant 0 : i32
    return %arg2, %arg1 : i32, i32
  }
  func.func @transform_2(%arg0: i32, %arg1: i32, %arg2: i32) -> (i32, i32) {
    %c0_i32 = arith.constant 0 : i32
    %c0_i32_0 = arith.constant 0 : i32
    return %c0_i32, %arg1 : i32, i32
  }
  func.func @transform_3(%arg0: i32, %arg1: i32, %arg2: i32) -> (i32, i32) {
    %c0_i32 = arith.constant 0 : i32
    return %arg0, %arg1 : i32, i32
  }
}

module attributes {stable_mosaic.version = 11 : i64} {
  func.func @_matmul_fused_kernel(%arg0: i32, %arg1: i32, %arg2: i32, %arg3: memref<128x288xf32, #tpu.memory_space<vmem>>, %arg4: memref<288x64xbf16, #tpu.memory_space<vmem>>, %arg5: memref<1x64xf32, #tpu.memory_space<vmem>>, %arg6: memref<128x64xf32, #tpu.memory_space<vmem>>) attributes {dimension_semantics = [#tpu.dimension_semantics<parallel>, #tpu.dimension_semantics<parallel>, #tpu.dimension_semantics<arbitrary>], iteration_bounds = array<i64: 1, 1, 1>, scalar_prefetch = 0 : i64, scratch_operands = 0 : i64, tpu.core_type = #tpu.core_type<tc>, window_params = [{transform_indices = @transform_0, window_bounds = array<i64: 128, 288>}, {transform_indices = @transform_1, window_bounds = array<i64: 288, 64>}, {transform_indices = @transform_2, window_bounds = array<i64: 1, 64>}, {transform_indices = @transform_3, window_bounds = array<i64: 128, 64>}]} {
    %c0 = arith.constant 0 : index
    %c0_0 = arith.constant 0 : index
    %0 = vector.load %arg3[%c0, %c0_0] : memref<128x288xf32, #tpu.memory_space<vmem>>, vector<128x288xf32>
    %1 = arith.truncf %0 : vector<128x288xf32> to vector<128x288xbf16>
    %c0_1 = arith.constant 0 : index
    %c0_2 = arith.constant 0 : index
    %2 = vector.load %arg4[%c0_1, %c0_2] : memref<288x64xbf16, #tpu.memory_space<vmem>>, vector<288x64xbf16>
    %cst = arith.constant dense<0.000000e+00> : vector<128x64xf32>
    %3 = tpu.matmul %1, %2, %cst {dimension_numbers = #tpu.dot_dimension_numbers<[1], [0], [0], [1], [0, 0, 1, 1], [], []>} : vector<128x288xbf16>, vector<288x64xbf16>, vector<128x64xf32> -> vector<128x64xf32>
    %c0_3 = arith.constant 0 : index
    %c0_4 = arith.constant 0 : index
    %4 = vector.load %arg5[%c0_3, %c0_4] : memref<1x64xf32, #tpu.memory_space<vmem>>, vector<1x64xf32>
    %5 = vector.broadcast %4 : vector<1x64xf32> to vector<128x64xf32>
    %6 = arith.addf %3, %5 : vector<128x64xf32>
    %cst_5 = arith.constant 0.000000e+00 : f32
    %7 = vector.broadcast %cst_5 : f32 to vector<128x64xf32>
    %8 = arith.maximumf %6, %7 : vector<128x64xf32>
    %c0_6 = arith.constant 0 : index
    %c0_7 = arith.constant 0 : index
    %9 = vector.load %arg6[%c0_6, %c0_7] : memref<128x64xf32, #tpu.memory_space<vmem>>, vector<128x64xf32>
    tpu.vector_store %arg6[%c0_6, %c0_7], %8 {strides = array<i32>} : memref<128x64xf32, #tpu.memory_space<vmem>>, vector<128x64xf32>,
    return
  }
  func.func @transform_0(%arg0: i32, %arg1: i32, %arg2: i32) -> (i32, i32) {
    %c0_i32 = arith.constant 0 : i32
    return %arg0, %arg2 : i32, i32
  }
  func.func @transform_1(%arg0: i32, %arg1: i32, %arg2: i32) -> (i32, i32) {
    %c0_i32 = arith.constant 0 : i32
    return %arg2, %arg1 : i32, i32
  }
  func.func @transform_2(%arg0: i32, %arg1: i32, %arg2: i32) -> (i32, i32) {
    %c0_i32 = arith.constant 0 : i32
    %c0_i32_0 = arith.constant 0 : i32
    return %c0_i32, %arg1 : i32, i32
  }
  func.func @transform_3(%arg0: i32, %arg1: i32, %arg2: i32) -> (i32, i32) {
    %c0_i32 = arith.constant 0 : i32
    return %arg0, %arg1 : i32, i32
  }
}

module attributes {stable_mosaic.version = 11 : i64} {
  func.func @_matmul_fused_kernel(%arg0: i32, %arg1: i32, %arg2: i32, %arg3: memref<128x576xf32, #tpu.memory_space<vmem>>, %arg4: memref<576x64xbf16, #tpu.memory_space<vmem>>, %arg5: memref<1x64xf32, #tpu.memory_space<vmem>>, %arg6: memref<128x64xf32, #tpu.memory_space<vmem>>) attributes {dimension_semantics = [#tpu.dimension_semantics<parallel>, #tpu.dimension_semantics<parallel>, #tpu.dimension_semantics<arbitrary>], iteration_bounds = array<i64: 1, 1, 1>, scalar_prefetch = 0 : i64, scratch_operands = 0 : i64, tpu.core_type = #tpu.core_type<tc>, window_params = [{transform_indices = @transform_0, window_bounds = array<i64: 128, 576>}, {transform_indices = @transform_1, window_bounds = array<i64: 576, 64>}, {transform_indices = @transform_2, window_bounds = array<i64: 1, 64>}, {transform_indices = @transform_3, window_bounds = array<i64: 128, 64>}]} {
    %c0 = arith.constant 0 : index
    %c0_0 = arith.constant 0 : index
    %0 = vector.load %arg3[%c0, %c0_0] : memref<128x576xf32, #tpu.memory_space<vmem>>, vector<128x576xf32>
    %1 = arith.truncf %0 : vector<128x576xf32> to vector<128x576xbf16>
    %c0_1 = arith.constant 0 : index
    %c0_2 = arith.constant 0 : index
    %2 = vector.load %arg4[%c0_1, %c0_2] : memref<576x64xbf16, #tpu.memory_space<vmem>>, vector<576x64xbf16>
    %cst = arith.constant dense<0.000000e+00> : vector<128x64xf32>
    %3 = tpu.matmul %1, %2, %cst {dimension_numbers = #tpu.dot_dimension_numbers<[1], [0], [0], [1], [0, 0, 1, 1], [], []>} : vector<128x576xbf16>, vector<576x64xbf16>, vector<128x64xf32> -> vector<128x64xf32>
    %c0_3 = arith.constant 0 : index
    %c0_4 = arith.constant 0 : index
    %4 = vector.load %arg5[%c0_3, %c0_4] : memref<1x64xf32, #tpu.memory_space<vmem>>, vector<1x64xf32>
    %5 = vector.broadcast %4 : vector<1x64xf32> to vector<128x64xf32>
    %6 = arith.addf %3, %5 : vector<128x64xf32>
    %c0_5 = arith.constant 0 : index
    %c0_6 = arith.constant 0 : index
    %7 = vector.load %arg6[%c0_5, %c0_6] : memref<128x64xf32, #tpu.memory_space<vmem>>, vector<128x64xf32>
    tpu.vector_store %arg6[%c0_5, %c0_6], %6 {strides = array<i32>} : memref<128x64xf32, #tpu.memory_space<vmem>>, vector<128x64xf32>,
    return
  }
  func.func @transform_0(%arg0: i32, %arg1: i32, %arg2: i32) -> (i32, i32) {
    %c0_i32 = arith.constant 0 : i32
    return %arg0, %arg2 : i32, i32
  }
  func.func @transform_1(%arg0: i32, %arg1: i32, %arg2: i32) -> (i32, i32) {
    %c0_i32 = arith.constant 0 : i32
    return %arg2, %arg1 : i32, i32
  }
  func.func @transform_2(%arg0: i32, %arg1: i32, %arg2: i32) -> (i32, i32) {
    %c0_i32 = arith.constant 0 : i32
    %c0_i32_0 = arith.constant 0 : i32
    return %c0_i32, %arg1 : i32, i32
  }
  func.func @transform_3(%arg0: i32, %arg1: i32, %arg2: i32) -> (i32, i32) {
    %c0_i32 = arith.constant 0 : i32
    return %arg0, %arg1 : i32, i32
  }
}

module attributes {stable_mosaic.version = 11 : i64} {
  func.func @_se_squeeze_kernel(%arg0: memref<2x64x64xf32, #tpu.memory_space<vmem>>, %arg1: memref<64x16xf32, #tpu.memory_space<vmem>>, %arg2: memref<16x64xf32, #tpu.memory_space<vmem>>, %arg3: memref<2x64xf32, #tpu.memory_space<vmem>>) attributes {dimension_semantics = [], scalar_prefetch = 0 : i64, scratch_operands = 0 : i64, tpu.core_type = #tpu.core_type<tc>} {
    %c0 = arith.constant 0 : index
    %c0_0 = arith.constant 0 : index
    %c0_1 = arith.constant 0 : index
    %0 = vector.load %arg0[%c0, %c0_0, %c0_1] : memref<2x64x64xf32, #tpu.memory_space<vmem>>, vector<2x64x64xf32>
    %cst = arith.constant dense<0.000000e+00> : vector<2x64xf32>
    %1 = vector.multi_reduction <add>, %0, %cst [1] : vector<2x64x64xf32> to vector<2x64xf32>
    %cst_2 = arith.constant 6.400000e+01 : f32
    %2 = vector.broadcast %cst_2 : f32 to vector<2x64xf32>
    %3 = arith.divf %1, %2 : vector<2x64xf32>
    %c0_3 = arith.constant 0 : index
    %c0_4 = arith.constant 0 : index
    %4 = vector.load %arg1[%c0_3, %c0_4] : memref<64x16xf32, #tpu.memory_space<vmem>>, vector<64x16xf32>
    %cst_5 = arith.constant dense<0.000000e+00> : vector<2x16xf32>
    %5 = tpu.matmul %3, %4, %cst_5 {dimension_numbers = #tpu.dot_dimension_numbers<[1], [0], [0], [1], [0, 0, 1, 1], [], []>} : vector<2x64xf32>, vector<64x16xf32>, vector<2x16xf32> -> vector<2x16xf32>
    %cst_6 = arith.constant 0.000000e+00 : f32
    %6 = vector.broadcast %cst_6 : f32 to vector<2x16xf32>
    %7 = arith.maximumf %5, %6 : vector<2x16xf32>
    %c0_7 = arith.constant 0 : index
    %c0_8 = arith.constant 0 : index
    %8 = vector.load %arg2[%c0_7, %c0_8] : memref<16x64xf32, #tpu.memory_space<vmem>>, vector<16x64xf32>
    %cst_9 = arith.constant dense<0.000000e+00> : vector<2x64xf32>
    %9 = tpu.matmul %7, %8, %cst_9 {dimension_numbers = #tpu.dot_dimension_numbers<[1], [0], [0], [1], [0, 0, 1, 1], [], []>} : vector<2x16xf32>, vector<16x64xf32>, vector<2x64xf32> -> vector<2x64xf32>
    %10 = arith.negf %9 : vector<2x64xf32>
    %11 = math.exp %10 : vector<2x64xf32>
    %cst_10 = arith.constant 1.000000e+00 : f32
    %12 = vector.broadcast %cst_10 : f32 to vector<2x64xf32>
    %13 = arith.addf %12, %11 : vector<2x64xf32>
    %14 = arith.divf %12, %13 : vector<2x64xf32>
    %c0_11 = arith.constant 0 : index
    %c0_12 = arith.constant 0 : index
    %15 = vector.load %arg3[%c0_11, %c0_12] : memref<2x64xf32, #tpu.memory_space<vmem>>, vector<2x64xf32>
    tpu.vector_store %arg3[%c0_11, %c0_12], %14 {strides = array<i32>} : memref<2x64xf32, #tpu.memory_space<vmem>>, vector<2x64xf32>,
    return
  }
}

module attributes {stable_mosaic.version = 11 : i64} {
  func.func @_matmul_fused_kernel(%arg0: i32, %arg1: i32, %arg2: i32, %arg3: memref<128x32xf32, #tpu.memory_space<vmem>>, %arg4: memref<32x64xbf16, #tpu.memory_space<vmem>>, %arg5: memref<1x64xf32, #tpu.memory_space<vmem>>, %arg6: memref<128x64xf32, #tpu.memory_space<vmem>>) attributes {dimension_semantics = [#tpu.dimension_semantics<parallel>, #tpu.dimension_semantics<parallel>, #tpu.dimension_semantics<arbitrary>], iteration_bounds = array<i64: 1, 1, 1>, scalar_prefetch = 0 : i64, scratch_operands = 0 : i64, tpu.core_type = #tpu.core_type<tc>, window_params = [{transform_indices = @transform_0, window_bounds = array<i64: 128, 32>}, {transform_indices = @transform_1, window_bounds = array<i64: 32, 64>}, {transform_indices = @transform_2, window_bounds = array<i64: 1, 64>}, {transform_indices = @transform_3, window_bounds = array<i64: 128, 64>}]} {
    %c0 = arith.constant 0 : index
    %c0_0 = arith.constant 0 : index
    %0 = vector.load %arg3[%c0, %c0_0] : memref<128x32xf32, #tpu.memory_space<vmem>>, vector<128x32xf32>
    %1 = arith.truncf %0 : vector<128x32xf32> to vector<128x32xbf16>
    %c0_1 = arith.constant 0 : index
    %c0_2 = arith.constant 0 : index
    %2 = vector.load %arg4[%c0_1, %c0_2] : memref<32x64xbf16, #tpu.memory_space<vmem>>, vector<32x64xbf16>
    %cst = arith.constant dense<0.000000e+00> : vector<128x64xf32>
    %3 = tpu.matmul %1, %2, %cst {dimension_numbers = #tpu.dot_dimension_numbers<[1], [0], [0], [1], [0, 0, 1, 1], [], []>} : vector<128x32xbf16>, vector<32x64xbf16>, vector<128x64xf32> -> vector<128x64xf32>
    %c0_3 = arith.constant 0 : index
    %c0_4 = arith.constant 0 : index
    %4 = vector.load %arg5[%c0_3, %c0_4] : memref<1x64xf32, #tpu.memory_space<vmem>>, vector<1x64xf32>
    %5 = vector.broadcast %4 : vector<1x64xf32> to vector<128x64xf32>
    %6 = arith.addf %3, %5 : vector<128x64xf32>
    %c0_5 = arith.constant 0 : index
    %c0_6 = arith.constant 0 : index
    %7 = vector.load %arg6[%c0_5, %c0_6] : memref<128x64xf32, #tpu.memory_space<vmem>>, vector<128x64xf32>
    tpu.vector_store %arg6[%c0_5, %c0_6], %6 {strides = array<i32>} : memref<128x64xf32, #tpu.memory_space<vmem>>, vector<128x64xf32>,
    return
  }
  func.func @transform_0(%arg0: i32, %arg1: i32, %arg2: i32) -> (i32, i32) {
    %c0_i32 = arith.constant 0 : i32
    return %arg0, %arg2 : i32, i32
  }
  func.func @transform_1(%arg0: i32, %arg1: i32, %arg2: i32) -> (i32, i32) {
    %c0_i32 = arith.constant 0 : i32
    return %arg2, %arg1 : i32, i32
  }
  func.func @transform_2(%arg0: i32, %arg1: i32, %arg2: i32) -> (i32, i32) {
    %c0_i32 = arith.constant 0 : i32
    %c0_i32_0 = arith.constant 0 : i32
    return %c0_i32, %arg1 : i32, i32
  }
  func.func @transform_3(%arg0: i32, %arg1: i32, %arg2: i32) -> (i32, i32) {
    %c0_i32 = arith.constant 0 : i32
    return %arg0, %arg1 : i32, i32
  }
}

module attributes {stable_mosaic.version = 11 : i64} {
  func.func @_se_residual_kernel(%arg0: memref<2x64x64xf32, #tpu.memory_space<vmem>>, %arg1: memref<2x1x64xf32, #tpu.memory_space<vmem>>, %arg2: memref<2x64x64xf32, #tpu.memory_space<vmem>>, %arg3: memref<2x64x64xf32, #tpu.memory_space<vmem>>) attributes {dimension_semantics = [], scalar_prefetch = 0 : i64, scratch_operands = 0 : i64, tpu.core_type = #tpu.core_type<tc>} {
    %c0 = arith.constant 0 : index
    %c0_0 = arith.constant 0 : index
    %c0_1 = arith.constant 0 : index
    %0 = vector.load %arg0[%c0, %c0_0, %c0_1] : memref<2x64x64xf32, #tpu.memory_space<vmem>>, vector<2x64x64xf32>
    %c0_2 = arith.constant 0 : index
    %c0_3 = arith.constant 0 : index
    %c0_4 = arith.constant 0 : index
    %1 = vector.load %arg1[%c0_2, %c0_3, %c0_4] : memref<2x1x64xf32, #tpu.memory_space<vmem>>, vector<2x1x64xf32>
    %2 = vector.broadcast %1 : vector<2x1x64xf32> to vector<2x64x64xf32>
    %3 = arith.mulf %0, %2 : vector<2x64x64xf32>
    %c0_5 = arith.constant 0 : index
    %c0_6 = arith.constant 0 : index
    %c0_7 = arith.constant 0 : index
    %4 = vector.load %arg2[%c0_5, %c0_6, %c0_7] : memref<2x64x64xf32, #tpu.memory_space<vmem>>, vector<2x64x64xf32>
    %5 = arith.addf %3, %4 : vector<2x64x64xf32>
    %cst = arith.constant 0.000000e+00 : f32
    %6 = vector.broadcast %cst : f32 to vector<2x64x64xf32>
    %7 = arith.maximumf %5, %6 : vector<2x64x64xf32>
    %c0_8 = arith.constant 0 : index
    %c0_9 = arith.constant 0 : index
    %c0_10 = arith.constant 0 : index
    %8 = vector.load %arg3[%c0_8, %c0_9, %c0_10] : memref<2x64x64xf32, #tpu.memory_space<vmem>>, vector<2x64x64xf32>
    tpu.vector_store %arg3[%c0_8, %c0_9, %c0_10], %7 {strides = array<i32>} : memref<2x64x64xf32, #tpu.memory_space<vmem>>, vector<2x64x64xf32>,
    return
  }
}

module attributes {stable_mosaic.version = 11 : i64} {
  func.func @_matmul_fused_kernel(%arg0: i32, %arg1: i32, %arg2: i32, %arg3: memref<128x576xf32, #tpu.memory_space<vmem>>, %arg4: memref<576x64xbf16, #tpu.memory_space<vmem>>, %arg5: memref<1x64xf32, #tpu.memory_space<vmem>>, %arg6: memref<128x64xf32, #tpu.memory_space<vmem>>) attributes {dimension_semantics = [#tpu.dimension_semantics<parallel>, #tpu.dimension_semantics<parallel>, #tpu.dimension_semantics<arbitrary>], iteration_bounds = array<i64: 1, 1, 1>, scalar_prefetch = 0 : i64, scratch_operands = 0 : i64, tpu.core_type = #tpu.core_type<tc>, window_params = [{transform_indices = @transform_0, window_bounds = array<i64: 128, 576>}, {transform_indices = @transform_1, window_bounds = array<i64: 576, 64>}, {transform_indices = @transform_2, window_bounds = array<i64: 1, 64>}, {transform_indices = @transform_3, window_bounds = array<i64: 128, 64>}]} {
    %c0 = arith.constant 0 : index
    %c0_0 = arith.constant 0 : index
    %0 = vector.load %arg3[%c0, %c0_0] : memref<128x576xf32, #tpu.memory_space<vmem>>, vector<128x576xf32>
    %1 = arith.truncf %0 : vector<128x576xf32> to vector<128x576xbf16>
    %c0_1 = arith.constant 0 : index
    %c0_2 = arith.constant 0 : index
    %2 = vector.load %arg4[%c0_1, %c0_2] : memref<576x64xbf16, #tpu.memory_space<vmem>>, vector<576x64xbf16>
    %cst = arith.constant dense<0.000000e+00> : vector<128x64xf32>
    %3 = tpu.matmul %1, %2, %cst {dimension_numbers = #tpu.dot_dimension_numbers<[1], [0], [0], [1], [0, 0, 1, 1], [], []>} : vector<128x576xbf16>, vector<576x64xbf16>, vector<128x64xf32> -> vector<128x64xf32>
    %c0_3 = arith.constant 0 : index
    %c0_4 = arith.constant 0 : index
    %4 = vector.load %arg5[%c0_3, %c0_4] : memref<1x64xf32, #tpu.memory_space<vmem>>, vector<1x64xf32>
    %5 = vector.broadcast %4 : vector<1x64xf32> to vector<128x64xf32>
    %6 = arith.addf %3, %5 : vector<128x64xf32>
    %cst_5 = arith.constant 0.000000e+00 : f32
    %7 = vector.broadcast %cst_5 : f32 to vector<128x64xf32>
    %8 = arith.maximumf %6, %7 : vector<128x64xf32>
    %c0_6 = arith.constant 0 : index
    %c0_7 = arith.constant 0 : index
    %9 = vector.load %arg6[%c0_6, %c0_7] : memref<128x64xf32, #tpu.memory_space<vmem>>, vector<128x64xf32>
    tpu.vector_store %arg6[%c0_6, %c0_7], %8 {strides = array<i32>} : memref<128x64xf32, #tpu.memory_space<vmem>>, vector<128x64xf32>,
    return
  }
  func.func @transform_0(%arg0: i32, %arg1: i32, %arg2: i32) -> (i32, i32) {
    %c0_i32 = arith.constant 0 : i32
    return %arg0, %arg2 : i32, i32
  }
  func.func @transform_1(%arg0: i32, %arg1: i32, %arg2: i32) -> (i32, i32) {
    %c0_i32 = arith.constant 0 : i32
    return %arg2, %arg1 : i32, i32
  }
  func.func @transform_2(%arg0: i32, %arg1: i32, %arg2: i32) -> (i32, i32) {
    %c0_i32 = arith.constant 0 : i32
    %c0_i32_0 = arith.constant 0 : i32
    return %c0_i32, %arg1 : i32, i32
  }
  func.func @transform_3(%arg0: i32, %arg1: i32, %arg2: i32) -> (i32, i32) {
    %c0_i32 = arith.constant 0 : i32
    return %arg0, %arg1 : i32, i32
  }
}

module attributes {stable_mosaic.version = 11 : i64} {
  func.func @_bilstm_kernel(%arg0: i32, %arg1: i32, %arg2: memref<1x64x64xf32, #tpu.memory_space<vmem>>, %arg3: memref<1x64x128xf32, #tpu.memory_space<vmem>>, %arg4: memref<1x32x128xf32, #tpu.memory_space<vmem>>, %arg5: memref<1x1x128xf32, #tpu.memory_space<vmem>>, %arg6: memref<1x1x64x32xf32, #tpu.memory_space<vmem>>, %arg7: memref<64x32xf32, #tpu.memory_space<vmem>>, %arg8: memref<64x32xf32, #tpu.memory_space<vmem>>) attributes {dimension_semantics = [#tpu.dimension_semantics<parallel>, #tpu.dimension_semantics<arbitrary>], iteration_bounds = array<i64: 2, 2>, scalar_prefetch = 0 : i64, scratch_operands = 2 : i64, tpu.core_type = #tpu.core_type<tc>, window_params = [{transform_indices = @transform_0, window_bounds = array<i64: 1, 64, 64>}, {transform_indices = @transform_1, window_bounds = array<i64: 1, 64, 128>}, {transform_indices = @transform_2, window_bounds = array<i64: 1, 32, 128>}, {transform_indices = @transform_3, window_bounds = array<i64: 1, 1, 128>}, {transform_indices = @transform_4, window_bounds = array<i64: 1, 1, 64, 32>}]} {
    %c0_i32 = arith.constant 0 : i32
    %0 = arith.cmpi eq, %arg1, %c0_i32 : i32
    %1 = arith.extui %0 : i1 to i32
    %c0_i32_0 = arith.constant 0 : i32
    %2 = arith.cmpi ne, %1, %c0_i32_0 : i32
    scf.if %2 {
      %cst_28 = arith.constant 0.000000e+00 : f32
      %48 = vector.broadcast %cst_28 : f32 to vector<64x32xf32>
      %c0_29 = arith.constant 0 : index
      %c0_30 = arith.constant 0 : index
      %49 = vector.load %arg7[%c0_29, %c0_30] : memref<64x32xf32, #tpu.memory_space<vmem>>, vector<64x32xf32>
      tpu.vector_store %arg7[%c0_29, %c0_30], %48 {strides = array<i32>} : memref<64x32xf32, #tpu.memory_space<vmem>>, vector<64x32xf32>,
      %cst_31 = arith.constant 0.000000e+00 : f32
      %50 = vector.broadcast %cst_31 : f32 to vector<64x32xf32>
      %c0_32 = arith.constant 0 : index
      %c0_33 = arith.constant 0 : index
      %51 = vector.load %arg8[%c0_32, %c0_33] : memref<64x32xf32, #tpu.memory_space<vmem>>, vector<64x32xf32>
      tpu.vector_store %arg8[%c0_32, %c0_33], %50 {strides = array<i32>} : memref<64x32xf32, #tpu.memory_space<vmem>>, vector<64x32xf32>,
    } else {
    }
    %c0 = arith.constant 0 : index
    %c0_1 = arith.constant 0 : index
    %c0_2 = arith.constant 0 : index
    %3 = vector.load %arg2[%c0, %c0_1, %c0_2] : memref<1x64x64xf32, #tpu.memory_space<vmem>>, vector<1x64x64xf32>
    %4 = vector.shape_cast %3 : vector<1x64x64xf32> to vector<64x64xf32>
    %c0_3 = arith.constant 0 : index
    %c0_4 = arith.constant 0 : index
    %c0_5 = arith.constant 0 : index
    %5 = vector.load %arg3[%c0_3, %c0_4, %c0_5] : memref<1x64x128xf32, #tpu.memory_space<vmem>>, vector<1x64x128xf32>
    %6 = vector.shape_cast %5 : vector<1x64x128xf32> to vector<64x128xf32>
    %cst = arith.constant dense<0.000000e+00> : vector<64x128xf32>
    %7 = tpu.matmul %4, %6, %cst {dimension_numbers = #tpu.dot_dimension_numbers<[1], [0], [0], [1], [0, 0, 1, 1], [], []>} : vector<64x64xf32>, vector<64x128xf32>, vector<64x128xf32> -> vector<64x128xf32>
    %c0_6 = arith.constant 0 : index
    %c0_7 = arith.constant 0 : index
    %8 = vector.load %arg7[%c0_6, %c0_7] : memref<64x32xf32, #tpu.memory_space<vmem>>, vector<64x32xf32>
    %c0_8 = arith.constant 0 : index
    %c0_9 = arith.constant 0 : index
    %c0_10 = arith.constant 0 : index
    %9 = vector.load %arg4[%c0_8, %c0_9, %c0_10] : memref<1x32x128xf32, #tpu.memory_space<vmem>>, vector<1x32x128xf32>
    %10 = vector.shape_cast %9 : vector<1x32x128xf32> to vector<32x128xf32>
    %cst_11 = arith.constant dense<0.000000e+00> : vector<64x128xf32>
    %11 = tpu.matmul %8, %10, %cst_11 {dimension_numbers = #tpu.dot_dimension_numbers<[1], [0], [0], [1], [0, 0, 1, 1], [], []>} : vector<64x32xf32>, vector<32x128xf32>, vector<64x128xf32> -> vector<64x128xf32>
    %12 = arith.addf %7, %11 : vector<64x128xf32>
    %c0_12 = arith.constant 0 : index
    %c0_13 = arith.constant 0 : index
    %c0_14 = arith.constant 0 : index
    %13 = vector.load %arg5[%c0_12, %c0_13, %c0_14] : memref<1x1x128xf32, #tpu.memory_space<vmem>>, vector<1x1x128xf32>
    %14 = vector.shape_cast %13 : vector<1x1x128xf32> to vector<1x128xf32>
    %15 = vector.broadcast %14 : vector<1x128xf32> to vector<64x128xf32>
    %16 = arith.addf %12, %15 : vector<64x128xf32>
    %17 = vector.extract_strided_slice %16 {offsets = [0, 0], sizes = [64, 32], strides = [1, 1]} : vector<64x128xf32> to vector<64x32xf32>
    %18 = arith.negf %17 : vector<64x32xf32>
    %19 = math.exp %18 : vector<64x32xf32>
    %cst_15 = arith.constant 1.000000e+00 : f32
    %20 = vector.broadcast %cst_15 : f32 to vector<64x32xf32>
    %21 = arith.addf %20, %19 : vector<64x32xf32>
    %22 = arith.divf %20, %21 : vector<64x32xf32>
    %23 = vector.extract_strided_slice %16 {offsets = [0, 32], sizes = [64, 32], strides = [1, 1]} : vector<64x128xf32> to vector<64x32xf32>
    %24 = arith.negf %23 : vector<64x32xf32>
    %25 = math.exp %24 : vector<64x32xf32>
    %cst_16 = arith.constant 1.000000e+00 : f32
    %26 = vector.broadcast %cst_16 : f32 to vector<64x32xf32>
    %27 = arith.addf %26, %25 : vector<64x32xf32>
    %28 = arith.divf %26, %27 : vector<64x32xf32>
    %29 = vector.extract_strided_slice %16 {offsets = [0, 64], sizes = [64, 32], strides = [1, 1]} : vector<64x128xf32> to vector<64x32xf32>
    %30 = math.tanh %29 : vector<64x32xf32>
    %31 = vector.extract_strided_slice %16 {offsets = [0, 96], sizes = [64, 32], strides = [1, 1]} : vector<64x128xf32> to vector<64x32xf32>
    %32 = arith.negf %31 : vector<64x32xf32>
    %33 = math.exp %32 : vector<64x32xf32>
    %cst_17 = arith.constant 1.000000e+00 : f32
    %34 = vector.broadcast %cst_17 : f32 to vector<64x32xf32>
    %35 = arith.addf %34, %33 : vector<64x32xf32>
    %36 = arith.divf %34, %35 : vector<64x32xf32>
    %c0_18 = arith.constant 0 : index
    %c0_19 = arith.constant 0 : index
    %37 = vector.load %arg8[%c0_18, %c0_19] : memref<64x32xf32, #tpu.memory_space<vmem>>, vector<64x32xf32>
    %38 = arith.mulf %28, %37 : vector<64x32xf32>
    %39 = arith.mulf %22, %30 : vector<64x32xf32>
    %40 = arith.addf %38, %39 : vector<64x32xf32>
    %41 = math.tanh %40 : vector<64x32xf32>
    %42 = arith.mulf %36, %41 : vector<64x32xf32>
    %c0_20 = arith.constant 0 : index
    %c0_21 = arith.constant 0 : index
    %43 = vector.load %arg8[%c0_20, %c0_21] : memref<64x32xf32, #tpu.memory_space<vmem>>, vector<64x32xf32>
    tpu.vector_store %arg8[%c0_20, %c0_21], %40 {strides = array<i32>} : memref<64x32xf32, #tpu.memory_space<vmem>>, vector<64x32xf32>,
    %c0_22 = arith.constant 0 : index
    %c0_23 = arith.constant 0 : index
    %44 = vector.load %arg7[%c0_22, %c0_23] : memref<64x32xf32, #tpu.memory_space<vmem>>, vector<64x32xf32>
    tpu.vector_store %arg7[%c0_22, %c0_23], %42 {strides = array<i32>} : memref<64x32xf32, #tpu.memory_space<vmem>>, vector<64x32xf32>,
    %c0_24 = arith.constant 0 : index
    %c0_25 = arith.constant 0 : index
    %c0_26 = arith.constant 0 : index
    %c0_27 = arith.constant 0 : index
    %45 = vector.load %arg6[%c0_24, %c0_25, %c0_26, %c0_27] : memref<1x1x64x32xf32, #tpu.memory_space<vmem>>, vector<1x1x64x32xf32>
    %46 = vector.shape_cast %45 : vector<1x1x64x32xf32> to vector<64x32xf32>
    %47 = vector.shape_cast %42 : vector<64x32xf32> to vector<1x1x64x32xf32>
    tpu.vector_store %arg6[%c0_24, %c0_25, %c0_26, %c0_27], %47 {strides = array<i32>} : memref<1x1x64x32xf32, #tpu.memory_space<vmem>>, vector<1x1x64x32xf32>,
    return
  }
  func.func @transform_0(%arg0: i32, %arg1: i32) -> (i32, i32, i32) {
    %c2_i32 = arith.constant 2 : i32
    %0 = arith.muli %c2_i32, %arg1 : i32
    %c1_i32 = arith.constant 1 : i32
    %1 = arith.subi %c1_i32, %0 : i32
    %2 = arith.muli %arg0, %1 : i32
    %3 = arith.addi %arg1, %2 : i32
    %c0_i32 = arith.constant 0 : i32
    %c0_i32_0 = arith.constant 0 : i32
    %c0_i32_1 = arith.constant 0 : i32
    return %3, %c0_i32, %c0_i32_0 : i32, i32, i32
  }
  func.func @transform_1(%arg0: i32, %arg1: i32) -> (i32, i32, i32) {
    %c0_i32 = arith.constant 0 : i32
    %c0_i32_0 = arith.constant 0 : i32
    %c0_i32_1 = arith.constant 0 : i32
    return %arg0, %c0_i32, %c0_i32_0 : i32, i32, i32
  }
  func.func @transform_2(%arg0: i32, %arg1: i32) -> (i32, i32, i32) {
    %c0_i32 = arith.constant 0 : i32
    %c0_i32_0 = arith.constant 0 : i32
    %c0_i32_1 = arith.constant 0 : i32
    return %arg0, %c0_i32, %c0_i32_0 : i32, i32, i32
  }
  func.func @transform_3(%arg0: i32, %arg1: i32) -> (i32, i32, i32) {
    %c0_i32 = arith.constant 0 : i32
    %c0_i32_0 = arith.constant 0 : i32
    %c0_i32_1 = arith.constant 0 : i32
    return %arg0, %c0_i32, %c0_i32_0 : i32, i32, i32
  }
  func.func @transform_4(%arg0: i32, %arg1: i32) -> (i32, i32, i32, i32) {
    %c2_i32 = arith.constant 2 : i32
    %0 = arith.muli %c2_i32, %arg1 : i32
    %c1_i32 = arith.constant 1 : i32
    %1 = arith.subi %c1_i32, %0 : i32
    %2 = arith.muli %arg0, %1 : i32
    %3 = arith.addi %arg1, %2 : i32
    %c0_i32 = arith.constant 0 : i32
    %c0_i32_0 = arith.constant 0 : i32
    %c0_i32_1 = arith.constant 0 : i32
    return %arg0, %3, %c0_i32, %c0_i32_0 : i32, i32, i32, i32
  }
}

module attributes {stable_mosaic.version = 11 : i64} {
  func.func @_attention_kernel(%arg0: i32, %arg1: memref<1x64x64xf32, #tpu.memory_space<vmem>>, %arg2: memref<64x48xf32, #tpu.memory_space<vmem>>, %arg3: memref<16x64xf32, #tpu.memory_space<vmem>>, %arg4: memref<1x64xf32, #tpu.memory_space<vmem>>, %arg5: memref<1x64x64xf32, #tpu.memory_space<vmem>>) attributes {dimension_semantics = [#tpu.dimension_semantics<parallel>], iteration_bounds = array<i64: 2>, scalar_prefetch = 0 : i64, scratch_operands = 0 : i64, tpu.core_type = #tpu.core_type<tc>, window_params = [{transform_indices = @transform_0, window_bounds = array<i64: 1, 64, 64>}, {pipeline_mode = #tpu.pipeline_mode<synchronous>, transform_indices = @transform_1, window_bounds = array<i64: 64, 48>}, {pipeline_mode = #tpu.pipeline_mode<synchronous>, transform_indices = @transform_2, window_bounds = array<i64: 16, 64>}, {pipeline_mode = #tpu.pipeline_mode<synchronous>, transform_indices = @transform_3, window_bounds = array<i64: 1, 64>}, {transform_indices = @transform_4, window_bounds = array<i64: 1, 64, 64>}]} {
    %c0 = arith.constant 0 : index
    %c0_0 = arith.constant 0 : index
    %c0_1 = arith.constant 0 : index
    %0 = vector.load %arg1[%c0, %c0_0, %c0_1] : memref<1x64x64xf32, #tpu.memory_space<vmem>>, vector<1x64x64xf32>
    %1 = vector.shape_cast %0 : vector<1x64x64xf32> to vector<64x64xf32>
    %c0_2 = arith.constant 0 : index
    %c0_3 = arith.constant 0 : index
    %2 = vector.load %arg2[%c0_2, %c0_3] : memref<64x48xf32, #tpu.memory_space<vmem>>, vector<64x48xf32>
    %cst = arith.constant dense<0.000000e+00> : vector<64x48xf32>
    %3 = tpu.matmul %1, %2, %cst {dimension_numbers = #tpu.dot_dimension_numbers<[1], [0], [0], [1], [0, 0, 1, 1], [], []>} : vector<64x64xf32>, vector<64x48xf32>, vector<64x48xf32> -> vector<64x48xf32>
    %4 = vector.extract_strided_slice %3 {offsets = [0, 0], sizes = [64, 16], strides = [1, 1]} : vector<64x48xf32> to vector<64x16xf32>
    %5 = vector.extract_strided_slice %3 {offsets = [0, 16], sizes = [64, 16], strides = [1, 1]} : vector<64x48xf32> to vector<64x16xf32>
    %6 = vector.extract_strided_slice %3 {offsets = [0, 32], sizes = [64, 16], strides = [1, 1]} : vector<64x48xf32> to vector<64x16xf32>
    %cst_4 = arith.constant dense<0.000000e+00> : vector<64x64xf32>
    %7 = tpu.matmul %4, %5, %cst_4 {dimension_numbers = #tpu.dot_dimension_numbers<[1], [1], [0], [0], [0, 0, 1, 0], [], []>} : vector<64x16xf32>, vector<64x16xf32>, vector<64x64xf32> -> vector<64x64xf32>
    %cst_5 = arith.constant 2.500000e-01 : f32
    %8 = vector.broadcast %cst_5 : f32 to vector<64x64xf32>
    %9 = arith.mulf %7, %8 : vector<64x64xf32>
    %cst_6 = arith.constant dense<0xFF800000> : vector<64xf32>
    %10 = vector.multi_reduction <maximumf>, %9, %cst_6 [1] : vector<64x64xf32> to vector<64xf32>
    %11 = vector.shape_cast %10 : vector<64xf32> to vector<64x1xf32>
    %12 = vector.broadcast %11 : vector<64x1xf32> to vector<64x64xf32>
    %13 = arith.subf %9, %12 : vector<64x64xf32>
    %14 = math.exp %13 : vector<64x64xf32>
    %cst_7 = arith.constant dense<0.000000e+00> : vector<64xf32>
    %15 = vector.multi_reduction <add>, %14, %cst_7 [1] : vector<64x64xf32> to vector<64xf32>
    %16 = vector.shape_cast %15 : vector<64xf32> to vector<64x1xf32>
    %17 = tpu.reciprocal %16 {approx = true} : vector<64x1xf32> -> vector<64x1xf32>
    %18 = vector.broadcast %17 : vector<64x1xf32> to vector<64x64xf32>
    %19 = arith.mulf %14, %18 : vector<64x64xf32>
    %cst_8 = arith.constant dense<0.000000e+00> : vector<64x16xf32>
    %20 = tpu.matmul %19, %6, %cst_8 {dimension_numbers = #tpu.dot_dimension_numbers<[1], [0], [0], [1], [0, 0, 1, 1], [], []>} : vector<64x64xf32>, vector<64x16xf32>, vector<64x16xf32> -> vector<64x16xf32>
    %c0_9 = arith.constant 0 : index
    %c0_10 = arith.constant 0 : index
    %21 = vector.load %arg3[%c0_9, %c0_10] : memref<16x64xf32, #tpu.memory_space<vmem>>, vector<16x64xf32>
    %cst_11 = arith.constant dense<0.000000e+00> : vector<64x64xf32>
    %22 = tpu.matmul %20, %21, %cst_11 {dimension_numbers = #tpu.dot_dimension_numbers<[1], [0], [0], [1], [0, 0, 1, 1], [], []>} : vector<64x16xf32>, vector<16x64xf32>, vector<64x64xf32> -> vector<64x64xf32>
    %c0_12 = arith.constant 0 : index
    %c0_13 = arith.constant 0 : index
    %23 = vector.load %arg4[%c0_12, %c0_13] : memref<1x64xf32, #tpu.memory_space<vmem>>, vector<1x64xf32>
    %24 = vector.broadcast %23 : vector<1x64xf32> to vector<64x64xf32>
    %25 = arith.addf %22, %24 : vector<64x64xf32>
    %c0_14 = arith.constant 0 : index
    %c0_15 = arith.constant 0 : index
    %c0_16 = arith.constant 0 : index
    %26 = vector.load %arg5[%c0_14, %c0_15, %c0_16] : memref<1x64x64xf32, #tpu.memory_space<vmem>>, vector<1x64x64xf32>
    %27 = vector.shape_cast %26 : vector<1x64x64xf32> to vector<64x64xf32>
    %28 = vector.shape_cast %25 : vector<64x64xf32> to vector<1x64x64xf32>
    tpu.vector_store %arg5[%c0_14, %c0_15, %c0_16], %28 {strides = array<i32>} : memref<1x64x64xf32, #tpu.memory_space<vmem>>, vector<1x64x64xf32>,
    return
  }
  func.func @transform_0(%arg0: i32) -> (i32, i32, i32) {
    %c0_i32 = arith.constant 0 : i32
    %c0_i32_0 = arith.constant 0 : i32
    %c0_i32_1 = arith.constant 0 : i32
    return %arg0, %c0_i32, %c0_i32_0 : i32, i32, i32
  }
  func.func @transform_1(%arg0: i32) -> (i32, i32) {
    %c0_i32 = arith.constant 0 : i32
    %c0_i32_0 = arith.constant 0 : i32
    %c0_i32_1 = arith.constant 0 : i32
    return %c0_i32, %c0_i32_0 : i32, i32
  }
  func.func @transform_2(%arg0: i32) -> (i32, i32) {
    %c0_i32 = arith.constant 0 : i32
    %c0_i32_0 = arith.constant 0 : i32
    %c0_i32_1 = arith.constant 0 : i32
    return %c0_i32, %c0_i32_0 : i32, i32
  }
  func.func @transform_3(%arg0: i32) -> (i32, i32) {
    %c0_i32 = arith.constant 0 : i32
    %c0_i32_0 = arith.constant 0 : i32
    %c0_i32_1 = arith.constant 0 : i32
    return %c0_i32, %c0_i32_0 : i32, i32
  }
  func.func @transform_4(%arg0: i32) -> (i32, i32, i32) {
    %c0_i32 = arith.constant 0 : i32
    %c0_i32_0 = arith.constant 0 : i32
    %c0_i32_1 = arith.constant 0 : i32
    return %arg0, %c0_i32, %c0_i32_0 : i32, i32, i32
  }
}

module attributes {stable_mosaic.version = 11 : i64} {
  func.func @_fc_sigmoid_kernel(%arg0: i32, %arg1: memref<2x4096xf32, #tpu.memory_space<vmem>>, %arg2: memref<1x4096xf32, #tpu.memory_space<vmem>>, %arg3: memref<1x1xf32, #tpu.memory_space<vmem>>, %arg4: memref<2x1xf32, #tpu.memory_space<vmem>>, %arg5: memref<2x1xf32, #tpu.memory_space<vmem>>) attributes {dimension_semantics = [#tpu.dimension_semantics<arbitrary>], iteration_bounds = array<i64: 1>, scalar_prefetch = 0 : i64, scratch_operands = 1 : i64, tpu.core_type = #tpu.core_type<tc>, window_params = [{transform_indices = @transform_0, window_bounds = array<i64: 2, 4096>}, {transform_indices = @transform_1, window_bounds = array<i64: 1, 4096>}, {pipeline_mode = #tpu.pipeline_mode<synchronous>, transform_indices = @transform_2, window_bounds = array<i64: 1, 1>}, {pipeline_mode = #tpu.pipeline_mode<synchronous>, transform_indices = @transform_3, window_bounds = array<i64: 2, 1>}]} {
    %c0_i32 = arith.constant 0 : i32
    %0 = arith.cmpi eq, %arg0, %c0_i32 : i32
    %1 = arith.extui %0 : i1 to i32
    %c0_i32_0 = arith.constant 0 : i32
    %2 = arith.cmpi ne, %1, %c0_i32_0 : i32
    scf.if %2 {
      %cst_10 = arith.constant 0.000000e+00 : f32
      %15 = vector.broadcast %cst_10 : f32 to vector<2x1xf32>
      %c0_11 = arith.constant 0 : index
      %c0_12 = arith.constant 0 : index
      %16 = vector.load %arg5[%c0_11, %c0_12] : memref<2x1xf32, #tpu.memory_space<vmem>>, vector<2x1xf32>
      tpu.vector_store %arg5[%c0_11, %c0_12], %15 {strides = array<i32>} : memref<2x1xf32, #tpu.memory_space<vmem>>, vector<2x1xf32>,
    } else {
    }
    %c0 = arith.constant 0 : index
    %c0_1 = arith.constant 0 : index
    %3 = vector.load %arg5[%c0, %c0_1] : memref<2x1xf32, #tpu.memory_space<vmem>>, vector<2x1xf32>
    %c0_2 = arith.constant 0 : index
    %c0_3 = arith.constant 0 : index
    %4 = vector.load %arg1[%c0_2, %c0_3] : memref<2x4096xf32, #tpu.memory_space<vmem>>, vector<2x4096xf32>
    %c0_4 = arith.constant 0 : index
    %c0_5 = arith.constant 0 : index
    %5 = vector.load %arg2[%c0_4, %c0_5] : memref<1x4096xf32, #tpu.memory_space<vmem>>, vector<1x4096xf32>
    %6 = vector.broadcast %5 : vector<1x4096xf32> to vector<2x4096xf32>
    %7 = arith.mulf %4, %6 : vector<2x4096xf32>
    %cst = arith.constant dense<0.000000e+00> : vector<2xf32>
    %8 = vector.multi_reduction <add>, %7, %cst [1] : vector<2x4096xf32> to vector<2xf32>
    %9 = vector.shape_cast %8 : vector<2xf32> to vector<2x1xf32>
    %10 = arith.addf %3, %9 : vector<2x1xf32>
    %c0_6 = arith.constant 0 : index
    %c0_7 = arith.constant 0 : index
    %11 = vector.load %arg5[%c0_6, %c0_7] : memref<2x1xf32, #tpu.memory_space<vmem>>, vector<2x1xf32>
    tpu.vector_store %arg5[%c0_6, %c0_7], %10 {strides = array<i32>} : memref<2x1xf32, #tpu.memory_space<vmem>>, vector<2x1xf32>,
    %c0_i32_8 = arith.constant 0 : i32
    %12 = arith.cmpi eq, %arg0, %c0_i32_8 : i32
    %13 = arith.extui %12 : i1 to i32
    %c0_i32_9 = arith.constant 0 : i32
    %14 = arith.cmpi ne, %13, %c0_i32_9 : i32
    scf.if %14 {
      %c0_10 = arith.constant 0 : index
      %c0_11 = arith.constant 0 : index
      %15 = vector.load %arg5[%c0_10, %c0_11] : memref<2x1xf32, #tpu.memory_space<vmem>>, vector<2x1xf32>
      %c0_12 = arith.constant 0 : index
      %c0_13 = arith.constant 0 : index
      %16 = vector.load %arg3[%c0_12, %c0_13] : memref<1x1xf32, #tpu.memory_space<vmem>>, vector<1x1xf32>
      %17 = vector.broadcast %16 : vector<1x1xf32> to vector<2x1xf32>
      %18 = arith.addf %15, %17 : vector<2x1xf32>
      %19 = arith.negf %18 : vector<2x1xf32>
      %20 = math.exp %19 : vector<2x1xf32>
      %cst_14 = arith.constant 1.000000e+00 : f32
      %21 = vector.broadcast %cst_14 : f32 to vector<2x1xf32>
      %22 = arith.addf %21, %20 : vector<2x1xf32>
      %23 = arith.divf %21, %22 : vector<2x1xf32>
      %c0_15 = arith.constant 0 : index
      %c0_16 = arith.constant 0 : index
      %24 = vector.load %arg4[%c0_15, %c0_16] : memref<2x1xf32, #tpu.memory_space<vmem>>, vector<2x1xf32>
      tpu.vector_store %arg4[%c0_15, %c0_16], %23 {strides = array<i32>} : memref<2x1xf32, #tpu.memory_space<vmem>>, vector<2x1xf32>,
    } else {
    }
    return
  }
  func.func @transform_0(%arg0: i32) -> (i32, i32) {
    %c0_i32 = arith.constant 0 : i32
    %c0_i32_0 = arith.constant 0 : i32
    return %c0_i32, %arg0 : i32, i32
  }
  func.func @transform_1(%arg0: i32) -> (i32, i32) {
    %c0_i32 = arith.constant 0 : i32
    %c0_i32_0 = arith.constant 0 : i32
    return %c0_i32, %arg0 : i32, i32
  }
  func.func @transform_2(%arg0: i32) -> (i32, i32) {
    %c0_i32 = arith.constant 0 : i32
    %c0_i32_0 = arith.constant 0 : i32
    %c0_i32_1 = arith.constant 0 : i32
    return %c0_i32, %c0_i32_0 : i32, i32
  }
  func.func @transform_3(%arg0: i32) -> (i32, i32) {
    %c0_i32 = arith.constant 0 : i32
    %c0_i32_0 = arith.constant 0 : i32
    %c0_i32_1 = arith.constant 0 : i32
    return %c0_i32, %c0_i32_0 : i32, i32
  }
}

</mosaic_0001>

<llo_original>
// kernel: fluentnet_forward.73
$region0: #{fluentnet_forward.73}
  #allocation0 [shape = 'u32[]', space=smem, size = 0x4, offset = 0x4, fixed_abs, tag = 'smem constant byte address 0x4 - core index']
  #allocation1 [shape = 'u32[144,128]{1,0:T(1,128)}', space=vmem, size = 0x12000, scoped, tag = 'internal scratch']
  %s0 = inlined_call_operand.vmem [shape: f32[512,49], index: 0, kind: input, shape index: {}]
  %s1 = inlined_call_operand.vmem [shape: bf16[49,8], index: 1, kind: input, shape index: {}]
  %s2 = inlined_call_operand.vmem [shape: f32[1,8], index: 2, kind: input, shape index: {}]
  %s3 = inlined_call_operand.vmem [shape: f32[512,8], index: 3, kind: output, shape index: {}]
  %s4 = sld [smem:[#allocation0]]
  $region22: #{fluentnet_forward.73} parent=0
    _
  %s6 = ssub.s32 1, %s4
  %s7 = scalar_select 0, %s6, %s4
  // Predicated region
  $region2: #{fluentnet_forward.73} parent=0 // pred_check
    _
  $region3: #{fluentnet_forward.73} parent=0 // pred_check_branch
    %9 = sbr.rel (0) target = $region5
  $region4: #{fluentnet_forward.73} parent=0 // pred_region
    _
  $region5: #{fluentnet_forward.73} parent=0 // pred_fallthru
    _
  // Predicated region
  $region6: #{fluentnet_forward.73} parent=0 // pred_check
    _
  $region7: #{fluentnet_forward.73} parent=0 // pred_check_branch
    %11 = sbr.rel (0) target = $region9
  $region8: #{fluentnet_forward.73} parent=0 // pred_region
    _
  $region9: #{fluentnet_forward.73} parent=0 // pred_fallthru
    _
  // Predicated region
  $region10: #{fluentnet_forward.73} parent=0 // pred_check
    _
  $region11: #{fluentnet_forward.73} parent=0 // pred_check_branch
    %13 = sbr.rel (0) target = $region13
  $region12: #{fluentnet_forward.73} parent=0 // pred_region
    _
  $region13: #{fluentnet_forward.73} parent=0 // pred_fallthru
    _
  %v15 = vld [vmem:[%s0] sm:$0xff]
  %v16 = vld [vmem:[%s0 + $0x8] sm:$0xff]
  %v17 = vld [vmem:[%s0 + $0x10] sm:$0xff]
  %v18 = vld [vmem:[%s0 + $0x18] sm:$0xff]
  %v19 = vld [vmem:[%s0 + $0x20] sm:$0xff]
  %v20 = vld [vmem:[%s0 + $0x28] sm:$0xff]
  %v21 = vld [vmem:[%s0 + $0x30] sm:$0xff]
  %v22 = vld [vmem:[%s0 + $0x38] sm:$0xff]
  %v23 = vld [vmem:[%s0 + $0x40] sm:$0xff]
  %v24 = vld [vmem:[%s0 + $0x48] sm:$0xff]
  %v25 = vld [vmem:[%s0 + $0x50] sm:$0xff]
  %v26 = vld [vmem:[%s0 + $0x58] sm:$0xff]
  %v27 = vld [vmem:[%s0 + $0x60] sm:$0xff]
  %v28 = vld [vmem:[%s0 + $0x68] sm:$0xff]
  %v29 = vld [vmem:[%s0 + $0x70] sm:$0xff]
  %v30 = vld [vmem:[%s0 + $0x78] sm:$0xff]
  %v31 = vld [vmem:[%s0 + $0x80] sm:$0xff]
  %v32 = vld [vmem:[%s0 + $0x88] sm:$0xff]
  %v33 = vld [vmem:[%s0 + $0x90] sm:$0xff]
  %v34 = vld [vmem:[%s0 + $0x98] sm:$0xff]
  %v35 = vld [vmem:[%s0 + $0xa0] sm:$0xff]
  %v36 = vld [vmem:[%s0 + $0xa8] sm:$0xff]
  %v37 = vld [vmem:[%s0 + $0xb0] sm:$0xff]
  %v38 = vld [vmem:[%s0 + $0xb8] sm:$0xff]
  %v39 = vld [vmem:[%s0 + $0xc0] sm:$0xff]
  %v40 = vld [vmem:[%s0 + $0xc8] sm:$0xff]
  %v41 = vld [vmem:[%s0 + $0xd0] sm:$0xff]
  %v42 = vld [vmem:[%s0 + $0xd8] sm:$0xff]
  %v43 = vld [vmem:[%s0 + $0xe0] sm:$0xff]
  %v44 = vld [vmem:[%s0 + $0xe8] sm:$0xff]
  %v45 = vld [vmem:[%s0 + $0xf0] sm:$0xff]
  %v46 = vld [vmem:[%s0 + $0xf8] sm:$0xff]
  %v47 = vld [vmem:[%s0 + $0x100] sm:$0xff]
  %v48 = vld [vmem:[%s0 + $0x108] sm:$0xff]
  %v49 = vld [vmem:[%s0 + $0x110] sm:$0xff]
  %v50 = vld [vmem:[%s0 + $0x118] sm:$0xff]
  %v51 = vld [vmem:[%s0 + $0x120] sm:$0xff]
  %v52 = vld [vmem:[%s0 + $0x128] sm:$0xff]
  %v53 = vld [vmem:[%s0 + $0x130] sm:$0xff]
  %v54 = vld [vmem:[%s0 + $0x138] sm:$0xff]
  %v55 = vld [vmem:[%s0 + $0x140] sm:$0xff]
  %v56 = vld [vmem:[%s0 + $0x148] sm:$0xff]
  %v57 = vld [vmem:[%s0 + $0x150] sm:$0xff]
  %v58 = vld [vmem:[%s0 + $0x158] sm:$0xff]
  %v59 = vld [vmem:[%s0 + $0x160] sm:$0xff]
  %v60 = vld [vmem:[%s0 + $0x168] sm:$0xff]
  %v61 = vld [vmem:[%s0 + $0x170] sm:$0xff]
  %v62 = vld [vmem:[%s0 + $0x178] sm:$0xff]
  %v63 = vld [vmem:[%s0 + $0x180] sm:$0xff]
  %v64 = vld [vmem:[%s0 + $0x188] sm:$0xff]
  %v65 = vld [vmem:[%s0 + $0x190] sm:$0xff]
  %v66 = vld [vmem:[%s0 + $0x198] sm:$0xff]
  %v67 = vld [vmem:[%s0 + $0x1a0] sm:$0xff]
  %v68 = vld [vmem:[%s0 + $0x1a8] sm:$0xff]
  %v69 = vld [vmem:[%s0 + $0x1b0] sm:$0xff]
  %v70 = vld [vmem:[%s0 + $0x1b8] sm:$0xff]
  %v71 = vld [vmem:[%s0 + $0x1c0] sm:$0xff]
  %v72 = vld [vmem:[%s0 + $0x1c8] sm:$0xff]
  %v73 = vld [vmem:[%s0 + $0x1d0] sm:$0xff]
  %v74 = vld [vmem:[%s0 + $0x1d8] sm:$0xff]
  %v75 = vld [vmem:[%s0 + $0x1e0] sm:$0xff]
  %v76 = vld [vmem:[%s0 + $0x1e8] sm:$0xff]
  %v77 = vld [vmem:[%s0 + $0x1f0] sm:$0xff]
  %v78 = vld [vmem:[%s0 + $0x1f8] sm:$0xff]
  %v79 = vpack.c.bf16 %v16, %v15
  %v80 = vpack.c.bf16 %v18, %v17
  %v81 = vpack.c.bf16 %v20, %v19
  %v82 = vpack.c.bf16 %v22, %v21
  %v83 = vpack.c.bf16 %v24, %v23
  %v84 = vpack.c.bf16 %v26, %v25
  %v85 = vpack.c.bf16 %v28, %v27
  %v86 = vpack.c.bf16 %v30, %v29
  %v87 = vpack.c.bf16 %v32, %v31
  %v88 = vpack.c.bf16 %v34, %v33
  %v89 = vpack.c.bf16 %v36, %v35
  %v90 = vpack.c.bf16 %v38, %v37
  %v91 = vpack.c.bf16 %v40, %v39
  %v92 = vpack.c.bf16 %v42, %v41
  %v93 = vpack.c.bf16 %v44, %v43
  %v94 = vpack.c.bf16 %v46, %v45
  %v95 = vpack.c.bf16 %v48, %v47
  %v96 = vpack.c.bf16 %v50, %v49
  %v97 = vpack.c.bf16 %v52, %v51
  %v98 = vpack.c.bf16 %v54, %v53
  %v99 = vpack.c.bf16 %v56, %v55
  %v100 = vpack.c.bf16 %v58, %v57
  %v101 = vpack.c.bf16 %v60, %v59
  %v102 = vpack.c.bf16 %v62, %v61
  %v103 = vpack.c.bf16 %v64, %v63
  %v104 = vpack.c.bf16 %v66, %v65
  %v105 = vpack.c.bf16 %v68, %v67
  %v106 = vpack.c.bf16 %v70, %v69
  %v107 = vpack.c.bf16 %v72, %v71
  %v108 = vpack.c.bf16 %v74, %v73
  %v109 = vpack.c.bf16 %v76, %v75
  %v110 = vpack.c.bf16 %v78, %v77
  %v111 = vld [vmem:[%s1] sm:$0xf]
  %v112 = vld [vmem:[%s1 + $0x4] sm:$0xf]
  %v113 = vld [vmem:[%s1 + $0x8] sm:$0xf]
  %v114 = vld [vmem:[%s1 + $0xc] sm:$0xf]
  %v115 = vld [vmem:[%s1 + $0x10] sm:$0xf]
  %v116 = vld [vmem:[%s1 + $0x14] sm:$0xf]
  %v117 = vld [vmem:[%s1 + $0x18] sm:$0x1]
  %v118 = vld [vmem:[%s2] sm:$0x1]
  %v120 = vlaneseq
  %v121 = vshrl.u32 %v120, 7
  %v122 = vsub.s32 0, %v121
  %v123 = vrot.slane %v118, %v122
  %v132 = vunpack.c.l.b16 %v111
  %v133 = vunpack.c.l.b16 %v112
  %v134 = vunpack.c.l.b16 %v113
  %v135 = vunpack.c.l.b16 %v114
  %v136 = vunpack.c.l.b16 %v115
  %v137 = vunpack.c.l.b16 %v116
  %v138 = vunpack.c.l.b16 %v117
  %v139 = vpack.c.b16 %v133, %v132
  %v140 = vpack.c.b16 %v135, %v134
  %v141 = vpack.c.b16 %v137, %v136
  %v142 = vpack.c.b16 %v138, %v138
  %vm146 = vcmask 400384
  %v148 = vsel %vm146, %v79, 0
  %v151 = vsel %vm146, %v80, 0
  %v154 = vsel %vm146, %v81, 0
  %v157 = vsel %vm146, %v82, 0
  %v160 = vsel %vm146, %v83, 0
  %v163 = vsel %vm146, %v84, 0
  %v166 = vsel %vm146, %v85, 0
  %v169 = vsel %vm146, %v86, 0
  %v172 = vsel %vm146, %v87, 0
  %v175 = vsel %vm146, %v88, 0
  %v178 = vsel %vm146, %v89, 0
  %v181 = vsel %vm146, %v90, 0
  %v184 = vsel %vm146, %v91, 0
  %v187 = vsel %vm146, %v92, 0
  %v190 = vsel %vm146, %v93, 0
  %v193 = vsel %vm146, %v94, 0
  %v196 = vsel %vm146, %v95, 0
  %v199 = vsel %vm146, %v96, 0
  %v202 = vsel %vm146, %v97, 0
  %v205 = vsel %vm146, %v98, 0
  %v208 = vsel %vm146, %v99, 0
  %v211 = vsel %vm146, %v100, 0
  %v214 = vsel %vm146, %v101, 0
  %v217 = vsel %vm146, %v102, 0
  %v220 = vsel %vm146, %v103, 0
  %v223 = vsel %vm146, %v104, 0
  %v226 = vsel %vm146, %v105, 0
  %v229 = vsel %vm146, %v106, 0
  %v232 = vsel %vm146, %v107, 0
  %v235 = vsel %vm146, %v108, 0
  %v238 = vsel %vm146, %v109, 0
  %v241 = vsel %vm146, %v110, 0
  %vm243 = vcmask 1040384
  %v244 = vsel 0, 4294967295, 65535
  %v245 = vsel %vm243, %v244, 0
  %v247 = vand.u32 %v142, %v245
  %249 = vmatprep.subr.bf16.mxu0 0
  %250 = vmatpush1.bf16.msra.mxu0 %v139
  %251 = vmatprep.subr.bf16.mxu0 0
  %252 = vmatpush1.bf16.msra.mxu0 %v140
  %253 = vmatprep.subr.bf16.mxu0 0
  %254 = vmatpush1.bf16.msra.mxu0 %v141
  %255 = vmatprep.subr.bf16.mxu0 0
  %256 = vmatpush1.bf16.msra.mxu0 %v247
  %257 = vmatprep.subr.bf16.mxu0 0
  %258 = vmatpush1.bf16.msra.mxu0 0
  %259 = vmatprep.subr.bf16.mxu0 0
  %260 = vmatpush1.bf16.msra.mxu0 0
  %261 = vmatprep.subr.bf16.mxu0 0
  %262 = vmatpush1.bf16.msra.mxu0 0
  %263 = vmatprep.subr.bf16.mxu0 0
  %264 = vmatpush1.bf16.msra.mxu0 0
  %265 = vmatprep.subr.bf16.mxu0 0
  %266 = vmatpush1.bf16.msra.mxu0 0
  %267 = vmatprep.subr.bf16.mxu0 0
  %268 = vmatpush1.bf16.msra.mxu0 0
  %269 = vmatprep.subr.bf16.mxu0 0
  %270 = vmatpush1.bf16.msra.mxu0 0
  %271 = vmatprep.subr.bf16.mxu0 0
  %272 = vmatpush1.bf16.msra.mxu0 0
  %273 = vmatprep.subr.bf16.mxu0 0
  %274 = vmatpush1.bf16.msra.mxu0 0
  %275 = vmatprep.subr.bf16.mxu0 0
  %276 = vmatpush1.bf16.msra.mxu0 0
  %277 = vmatprep.subr.bf16.mxu0 0
  %278 = vmatpush1.bf16.msra.mxu0 0
  %279 = vmatprep.subr.bf16.mxu0 0
  %280 = vmatpush1.bf16.msra.mxu0 0
  %281 = vmatprep.mubr.bf16.mxu0 0
  %282 = vmatmul.mubr.bf16.gmra.mrb[0].mxu0 %v148
  %v283 = vpop.f32.mrb[0].mxu0
  %v284 = vadd.f32 %v123, %v283
  %v285 = vpop.f32.mrb[0].mxu0
  %v286 = vpop.f32.mrb[0].mxu0
  %v287 = vadd.f32 %v123, %v286
  %v288 = vpop.f32.mrb[0].mxu0
  %289 = vmatprep.mubr.bf16.mxu0 0
  %290 = vmatmul.mubr.bf16.gmra.mrb[0].mxu0 %v151
  %v291 = vpop.f32.mrb[0].mxu0
  %v292 = vadd.f32 %v123, %v291
  %v293 = vpop.f32.mrb[0].mxu0
  %v294 = vpop.f32.mrb[0].mxu0
  %v295 = vadd.f32 %v123, %v294
  %v296 = vpop.f32.mrb[0].mxu0
  %297 = vmatprep.mubr.bf16.mxu0 0
  %298 = vmatmul.mubr.bf16.gmra.mrb[0].mxu0 %v154
  %v299 = vpop.f32.mrb[0].mxu0
  %v300 = vadd.f32 %v123, %v299
  %v301 = vpop.f32.mrb[0].mxu0
  %v302 = vpop.f32.mrb[0].mxu0
  %v303 = vadd.f32 %v123, %v302
  %v304 = vpop.f32.mrb[0].mxu0
  %305 = vmatprep.mubr.bf16.mxu0 0
  %306 = vmatmul.mubr.bf16.gmra.mrb[0].mxu0 %v157
  %v307 = vpop.f32.mrb[0].mxu0
  %v308 = vadd.f32 %v123, %v307
  %v309 = vpop.f32.mrb[0].mxu0
  %v310 = vpop.f32.mrb[0].mxu0
  %v311 = vadd.f32 %v123, %v310
  %v312 = vpop.f32.mrb[0].mxu0
  %313 = vmatprep.mubr.bf16.mxu0 0
  %314 = vmatmul.mubr.bf16.gmra.mrb[0].mxu0 %v160
  %v315 = vpop.f32.mrb[0].mxu0
  %v316 = vadd.f32 %v123, %v315
  %v317 = vpop.f32.mrb[0].mxu0
  %v318 = vpop.f32.mrb[0].mxu0
  %v319 = vadd.f32 %v123, %v318
  %v320 = vpop.f32.mrb[0].mxu0
  %321 = vmatprep.mubr.bf16.mxu0 0
  %322 = vmatmul.mubr.bf16.gmra.mrb[0].mxu0 %v163
  %v323 = vpop.f32.mrb[0].mxu0
  %v324 = vadd.f32 %v123, %v323
  %v325 = vpop.f32.mrb[0].mxu0
  %v326 = vpop.f32.mrb[0].mxu0
  %v327 = vadd.f32 %v123, %v326
  %v328 = vpop.f32.mrb[0].mxu0
  %329 = vmatprep.mubr.bf16.mxu0 0
  %330 = vmatmul.mubr.bf16.gmra.mrb[0].mxu0 %v166
  %v331 = vpop.f32.mrb[0].mxu0
  %v332 = vadd.f32 %v123, %v331
  %v333 = vpop.f32.mrb[0].mxu0
  %v334 = vpop.f32.mrb[0].mxu0
  %v335 = vadd.f32 %v123, %v334
  %v336 = vpop.f32.mrb[0].mxu0
  %337 = vmatprep.mubr.bf16.mxu0 0
  %338 = vmatmul.mubr.bf16.gmra.mrb[0].mxu0 %v169
  %v339 = vpop.f32.mrb[0].mxu0
  %v340 = vadd.f32 %v123, %v339
  %v341 = vpop.f32.mrb[0].mxu0
  %v342 = vpop.f32.mrb[0].mxu0
  %v343 = vadd.f32 %v123, %v342
  %v344 = vpop.f32.mrb[0].mxu0
  %345 = vmatprep.mubr.bf16.mxu0 0
  %346 = vmatmul.mubr.bf16.gmra.mrb[0].mxu0 %v172
  %v347 = vpop.f32.mrb[0].mxu0
  %v348 = vadd.f32 %v123, %v347
  %v349 = vpop.f32.mrb[0].mxu0
  %v350 = vpop.f32.mrb[0].mxu0
  %v351 = vadd.f32 %v123, %v350
  %v352 = vpop.f32.mrb[0].mxu0
  %353 = vmatprep.mubr.bf16.mxu0 0
  %354 = vmatmul.mubr.bf16.gmra.mrb[0].mxu0 %v175
  %v355 = vpop.f32.mrb[0].mxu0
  %v356 = vadd.f32 %v123, %v355
  %v357 = vpop.f32.mrb[0].mxu0
  %v358 = vpop.f32.mrb[0].mxu0
  %v359 = vadd.f32 %v123, %v358
  %v360 = vpop.f32.mrb[0].mxu0
  %361 = vmatprep.mubr.bf16.mxu0 0
  %362 = vmatmul.mubr.bf16.gmra.mrb[0].mxu0 %v178
  %v363 = vpop.f32.mrb[0].mxu0
  %v364 = vadd.f32 %v123, %v363
  %v365 = vpop.f32.mrb[0].mxu0
  %v366 = vpop.f32.mrb[0].mxu0
  %v367 = vadd.f32 %v123, %v366
  %v368 = vpop.f32.mrb[0].mxu0
  %369 = vmatprep.mubr.bf16.mxu0 0
  %370 = vmatmul.mubr.bf16.gmra.mrb[0].mxu0 %v181
  %v371 = vpop.f32.mrb[0].mxu0
  %v372 = vadd.f32 %v123, %v371
  %v373 = vpop.f32.mrb[0].mxu0
  %v374 = vpop.f32.mrb[0].mxu0
  %v375 = vadd.f32 %v123, %v374
  %v376 = vpop.f32.mrb[0].mxu0
  %377 = vmatprep.mubr.bf16.mxu0 0
  %378 = vmatmul.mubr.bf16.gmra.mrb[0].mxu0 %v184
  %v379 = vpop.f32.mrb[0].mxu0
  %v380 = vadd.f32 %v123, %v379
  %v381 = vpop.f32.mrb[0].mxu0
  %v382 = vpop.f32.mrb[0].mxu0
  %v383 = vadd.f32 %v123, %v382
  %v384 = vpop.f32.mrb[0].mxu0
  %385 = vmatprep.mubr.bf16.mxu0 0
  %386 = vmatmul.mubr.bf16.gmra.mrb[0].mxu0 %v187
  %v387 = vpop.f32.mrb[0].mxu0
  %v388 = vadd.f32 %v123, %v387
  %v389 = vpop.f32.mrb[0].mxu0
  %v390 = vpop.f32.mrb[0].mxu0
  %v391 = vadd.f32 %v123, %v390
  %v392 = vpop.f32.mrb[0].mxu0
  %393 = vmatprep.mubr.bf16.mxu0 0
  %394 = vmatmul.mubr.bf16.gmra.mrb[0].mxu0 %v190
  %v395 = vpop.f32.mrb[0].mxu0
  %v396 = vadd.f32 %v123, %v395
  %v397 = vpop.f32.mrb[0].mxu0
  %v398 = vpop.f32.mrb[0].mxu0
  %v399 = vadd.f32 %v123, %v398
  %v400 = vpop.f32.mrb[0].mxu0
  %401 = vmatprep.mubr.bf16.mxu0 0
  %402 = vmatmul.mubr.bf16.gmra.mrb[0].mxu0 %v193
  %v403 = vpop.f32.mrb[0].mxu0
  %v404 = vadd.f32 %v123, %v403
  %v405 = vpop.f32.mrb[0].mxu0
  %v406 = vpop.f32.mrb[0].mxu0
  %v407 = vadd.f32 %v123, %v406
  %v408 = vpop.f32.mrb[0].mxu0
  %409 = vmatprep.mubr.bf16.mxu0 0
  %410 = vmatmul.mubr.bf16.gmra.mrb[0].mxu0 %v196
  %v411 = vpop.f32.mrb[0].mxu0
  %v412 = vadd.f32 %v123, %v411
  %v413 = vpop.f32.mrb[0].mxu0
  %v414 = vpop.f32.mrb[0].mxu0
  %v415 = vadd.f32 %v123, %v414
  %v416 = vpop.f32.mrb[0].mxu0
  %417 = vmatprep.mubr.bf16.mxu0 0
  %418 = vmatmul.mubr.bf16.gmra.mrb[0].mxu0 %v199
  %v419 = vpop.f32.mrb[0].mxu0
  %v420 = vadd.f32 %v123, %v419
  %v421 = vpop.f32.mrb[0].mxu0
  %v422 = vpop.f32.mrb[0].mxu0
  %v423 = vadd.f32 %v123, %v422
  %v424 = vpop.f32.mrb[0].mxu0
  %425 = vmatprep.mubr.bf16.mxu0 0
  %426 = vmatmul.mubr.bf16.gmra.mrb[0].mxu0 %v202
  %v427 = vpop.f32.mrb[0].mxu0
  %v428 = vadd.f32 %v123, %v427
  %v429 = vpop.f32.mrb[0].mxu0
  %v430 = vpop.f32.mrb[0].mxu0
  %v431 = vadd.f32 %v123, %v430
  %v432 = vpop.f32.mrb[0].mxu0
  %433 = vmatprep.mubr.bf16.mxu0 0
  %434 = vmatmul.mubr.bf16.gmra.mrb[0].mxu0 %v205
  %v435 = vpop.f32.mrb[0].mxu0
  %v436 = vadd.f32 %v123, %v435
  %v437 = vpop.f32.mrb[0].mxu0
  %v438 = vpop.f32.mrb[0].mxu0
  %v439 = vadd.f32 %v123, %v438
  %v440 = vpop.f32.mrb[0].mxu0
  %441 = vmatprep.mubr.bf16.mxu0 0
  %442 = vmatmul.mubr.bf16.gmra.mrb[0].mxu0 %v208
  %v443 = vpop.f32.mrb[0].mxu0
  %v444 = vadd.f32 %v123, %v443
  %v445 = vpop.f32.mrb[0].mxu0
  %v446 = vpop.f32.mrb[0].mxu0
  %v447 = vadd.f32 %v123, %v446
  %v448 = vpop.f32.mrb[0].mxu0
  %449 = vmatprep.mubr.bf16.mxu0 0
  %450 = vmatmul.mubr.bf16.gmra.mrb[0].mxu0 %v211
  %v451 = vpop.f32.mrb[0].mxu0
  %v452 = vadd.f32 %v123, %v451
  %v453 = vpop.f32.mrb[0].mxu0
  %v454 = vpop.f32.mrb[0].mxu0
  %v455 = vadd.f32 %v123, %v454
  %v456 = vpop.f32.mrb[0].mxu0
  %457 = vmatprep.mubr.bf16.mxu0 0
  %458 = vmatmul.mubr.bf16.gmra.mrb[0].mxu0 %v214
  %v459 = vpop.f32.mrb[0].mxu0
  %v460 = vadd.f32 %v123, %v459
  %v461 = vpop.f32.mrb[0].mxu0
  %v462 = vpop.f32.mrb[0].mxu0
  %v463 = vadd.f32 %v123, %v462
  %v464 = vpop.f32.mrb[0].mxu0
  %465 = vmatprep.mubr.bf16.mxu0 0
  %466 = vmatmul.mubr.bf16.gmra.mrb[0].mxu0 %v217
  %v467 = vpop.f32.mrb[0].mxu0
  %v468 = vadd.f32 %v123, %v467
  %v469 = vpop.f32.mrb[0].mxu0
  %v470 = vpop.f32.mrb[0].mxu0
  %v471 = vadd.f32 %v123, %v470
  %v472 = vpop.f32.mrb[0].mxu0
  %473 = vmatprep.mubr.bf16.mxu0 0
  %474 = vmatmul.mubr.bf16.gmra.mrb[0].mxu0 %v220
  %v475 = vpop.f32.mrb[0].mxu0
  %v476 = vadd.f32 %v123, %v475
  %v477 = vpop.f32.mrb[0].mxu0
  %v478 = vpop.f32.mrb[0].mxu0
  %v479 = vadd.f32 %v123, %v478
  %v480 = vpop.f32.mrb[0].mxu0
  %481 = vmatprep.mubr.bf16.mxu0 0
  %482 = vmatmul.mubr.bf16.gmra.mrb[0].mxu0 %v223
  %v483 = vpop.f32.mrb[0].mxu0
  %v484 = vadd.f32 %v123, %v483
  %v485 = vpop.f32.mrb[0].mxu0
  %v486 = vpop.f32.mrb[0].mxu0
  %v487 = vadd.f32 %v123, %v486
  %v488 = vpop.f32.mrb[0].mxu0
  %489 = vmatprep.mubr.bf16.mxu0 0
  %490 = vmatmul.mubr.bf16.gmra.mrb[0].mxu0 %v226
  %v491 = vpop.f32.mrb[0].mxu0
  %v492 = vadd.f32 %v123, %v491
  %v493 = vpop.f32.mrb[0].mxu0
  %v494 = vpop.f32.mrb[0].mxu0
  %v495 = vadd.f32 %v123, %v494
  %v496 = vpop.f32.mrb[0].mxu0
  %497 = vmatprep.mubr.bf16.mxu0 0
  %498 = vmatmul.mubr.bf16.gmra.mrb[0].mxu0 %v229
  %v499 = vpop.f32.mrb[0].mxu0
  %v500 = vadd.f32 %v123, %v499
  %v501 = vpop.f32.mrb[0].mxu0
  %v502 = vpop.f32.mrb[0].mxu0
  %v503 = vadd.f32 %v123, %v502
  %v504 = vpop.f32.mrb[0].mxu0
  %505 = vmatprep.mubr.bf16.mxu0 0
  %506 = vmatmul.mubr.bf16.gmra.mrb[0].mxu0 %v232
  %v507 = vpop.f32.mrb[0].mxu0
  %v508 = vadd.f32 %v123, %v507
  %v509 = vpop.f32.mrb[0].mxu0
  %v510 = vpop.f32.mrb[0].mxu0
  %v511 = vadd.f32 %v123, %v510
  %v512 = vpop.f32.mrb[0].mxu0
  %513 = vmatprep.mubr.bf16.mxu0 0
  %514 = vmatmul.mubr.bf16.gmra.mrb[0].mxu0 %v235
  %v515 = vpop.f32.mrb[0].mxu0
  %v516 = vadd.f32 %v123, %v515
  %v517 = vpop.f32.mrb[0].mxu0
  %v518 = vpop.f32.mrb[0].mxu0
  %v519 = vadd.f32 %v123, %v518
  %v520 = vpop.f32.mrb[0].mxu0
  %521 = vmatprep.mubr.bf16.mxu0 0
  %522 = vmatmul.mubr.bf16.gmra.mrb[0].mxu0 %v238
  %v523 = vpop.f32.mrb[0].mxu0
  %v524 = vadd.f32 %v123, %v523
  %v525 = vpop.f32.mrb[0].mxu0
  %v526 = vpop.f32.mrb[0].mxu0
  %v527 = vadd.f32 %v123, %v526
  %v528 = vpop.f32.mrb[0].mxu0
  %529 = vmatprep.mubr.bf16.mxu0 0
  %530 = vmatmul.mubr.bf16.gmra.mrb[0].mxu0 %v241
  %v531 = vpop.f32.mrb[0].mxu0
  %v532 = vadd.f32 %v123, %v531
  %v533 = vpop.f32.mrb[0].mxu0
  %v534 = vpop.f32.mrb[0].mxu0
  %v535 = vadd.f32 %v123, %v534
  %v536 = vpop.f32.mrb[0].mxu0
  %537 = vdwg.mxu0
  %v538 = vmax.f32 %v284, 0.0
  %v539 = vmax.f32 %v287, 0.0
  %v540 = vmax.f32 %v292, 0.0
  %v541 = vmax.f32 %v295, 0.0
  %v542 = vmax.f32 %v300, 0.0
  %v543 = vmax.f32 %v303, 0.0
  %v544 = vmax.f32 %v308, 0.0
  %v545 = vmax.f32 %v311, 0.0
  %v546 = vmax.f32 %v316, 0.0
  %v547 = vmax.f32 %v319, 0.0
  %v548 = vmax.f32 %v324, 0.0
  %v549 = vmax.f32 %v327, 0.0
  %v550 = vmax.f32 %v332, 0.0
  %v551 = vmax.f32 %v335, 0.0
  %v552 = vmax.f32 %v340, 0.0
  %v553 = vmax.f32 %v343, 0.0
  %v554 = vmax.f32 %v348, 0.0
  %v555 = vmax.f32 %v351, 0.0
  %v556 = vmax.f32 %v356, 0.0
  %v557 = vmax.f32 %v359, 0.0
  %v558 = vmax.f32 %v364, 0.0
  %v559 = vmax.f32 %v367, 0.0
  %v560 = vmax.f32 %v372, 0.0
  %v561 = vmax.f32 %v375, 0.0
  %v562 = vmax.f32 %v380, 0.0
  %v563 = vmax.f32 %v383, 0.0
  %v564 = vmax.f32 %v388, 0.0
  %v565 = vmax.f32 %v391, 0.0
  %v566 = vmax.f32 %v396, 0.0
  %v567 = vmax.f32 %v399, 0.0
  %v568 = vmax.f32 %v404, 0.0
  %v569 = vmax.f32 %v407, 0.0
  %v570 = vmax.f32 %v412, 0.0
  %v571 = vmax.f32 %v415, 0.0
  %v572 = vmax.f32 %v420, 0.0
  %v573 = vmax.f32 %v423, 0.0
  %v574 = vmax.f32 %v428, 0.0
  %v575 = vmax.f32 %v431, 0.0
  %v576 = vmax.f32 %v436, 0.0
  %v577 = vmax.f32 %v439, 0.0
  %v578 = vmax.f32 %v444, 0.0
  %v579 = vmax.f32 %v447, 0.0
  %v580 = vmax.f32 %v452, 0.0
  %v581 = vmax.f32 %v455, 0.0
  %v582 = vmax.f32 %v460, 0.0
  %v583 = vmax.f32 %v463, 0.0
  %v584 = vmax.f32 %v468, 0.0
  %v585 = vmax.f32 %v471, 0.0
  %v586 = vmax.f32 %v476, 0.0
  %v587 = vmax.f32 %v479, 0.0
  %v588 = vmax.f32 %v484, 0.0
  %v589 = vmax.f32 %v487, 0.0
  %v590 = vmax.f32 %v492, 0.0
  %v591 = vmax.f32 %v495, 0.0
  %v592 = vmax.f32 %v500, 0.0
  %v593 = vmax.f32 %v503, 0.0
  %v594 = vmax.f32 %v508, 0.0
  %v595 = vmax.f32 %v511, 0.0
  %v596 = vmax.f32 %v516, 0.0
  %v597 = vmax.f32 %v519, 0.0
  %v598 = vmax.f32 %v524, 0.0
  %v599 = vmax.f32 %v527, 0.0
  %v600 = vmax.f32 %v532, 0.0
  %v601 = vmax.f32 %v535, 0.0
  %vm602 = vcmask 64512
  %603 = vst.msk [vmem:[%s3] sm:$0xff] %vm602, %v538
  %604 = vst.msk [vmem:[%s3 + $0x8] sm:$0xff] %vm602, %v539
  %605 = vst.msk [vmem:[%s3 + $0x10] sm:$0xff] %vm602, %v540
  %606 = vst.msk [vmem:[%s3 + $0x18] sm:$0xff] %vm602, %v541
  %607 = vst.msk [vmem:[%s3 + $0x20] sm:$0xff] %vm602, %v542
  %608 = vst.msk [vmem:[%s3 + $0x28] sm:$0xff] %vm602, %v543
  %609 = vst.msk [vmem:[%s3 + $0x30] sm:$0xff] %vm602, %v544
  %610 = vst.msk [vmem:[%s3 + $0x38] sm:$0xff] %vm602, %v545
  %611 = vst.msk [vmem:[%s3 + $0x40] sm:$0xff] %vm602, %v546
  %612 = vst.msk [vmem:[%s3 + $0x48] sm:$0xff] %vm602, %v547
  %613 = vst.msk [vmem:[%s3 + $0x50] sm:$0xff] %vm602, %v548
  %614 = vst.msk [vmem:[%s3 + $0x58] sm:$0xff] %vm602, %v549
  %615 = vst.msk [vmem:[%s3 + $0x60] sm:$0xff] %vm602, %v550
  %616 = vst.msk [vmem:[%s3 + $0x68] sm:$0xff] %vm602, %v551
  %617 = vst.msk [vmem:[%s3 + $0x70] sm:$0xff] %vm602, %v552
  %618 = vst.msk [vmem:[%s3 + $0x78] sm:$0xff] %vm602, %v553
  %619 = vst.msk [vmem:[%s3 + $0x80] sm:$0xff] %vm602, %v554
  %620 = vst.msk [vmem:[%s3 + $0x88] sm:$0xff] %vm602, %v555
  %621 = vst.msk [vmem:[%s3 + $0x90] sm:$0xff] %vm602, %v556
  %622 = vst.msk [vmem:[%s3 + $0x98] sm:$0xff] %vm602, %v557
  %623 = vst.msk [vmem:[%s3 + $0xa0] sm:$0xff] %vm602, %v558
  %624 = vst.msk [vmem:[%s3 + $0xa8] sm:$0xff] %vm602, %v559
  %625 = vst.msk [vmem:[%s3 + $0xb0] sm:$0xff] %vm602, %v560
  %626 = vst.msk [vmem:[%s3 + $0xb8] sm:$0xff] %vm602, %v561
  %627 = vst.msk [vmem:[%s3 + $0xc0] sm:$0xff] %vm602, %v562
  %628 = vst.msk [vmem:[%s3 + $0xc8] sm:$0xff] %vm602, %v563
  %629 = vst.msk [vmem:[%s3 + $0xd0] sm:$0xff] %vm602, %v564
  %630 = vst.msk [vmem:[%s3 + $0xd8] sm:$0xff] %vm602, %v565
  %631 = vst.msk [vmem:[%s3 + $0xe0] sm:$0xff] %vm602, %v566
  %632 = vst.msk [vmem:[%s3 + $0xe8] sm:$0xff] %vm602, %v567
  %633 = vst.msk [vmem:[%s3 + $0xf0] sm:$0xff] %vm602, %v568
  %634 = vst.msk [vmem:[%s3 + $0xf8] sm:$0xff] %vm602, %v569
  %635 = vst.msk [vmem:[%s3 + $0x100] sm:$0xff] %vm602, %v570
  %636 = vst.msk [vmem:[%s3 + $0x108] sm:$0xff] %vm602, %v571
  %637 = vst.msk [vmem:[%s3 + $0x110] sm:$0xff] %vm602, %v572
  %638 = vst.msk [vmem:[%s3 + $0x118] sm:$0xff] %vm602, %v573
  %639 = vst.msk [vmem:[%s3 + $0x120] sm:$0xff] %vm602, %v574
  %640 = vst.msk [vmem:[%s3 + $0x128] sm:$0xff] %vm602, %v575
  %641 = vst.msk [vmem:[%s3 + $0x130] sm:$0xff] %vm602, %v576
  %642 = vst.msk [vmem:[%s3 + $0x138] sm:$0xff] %vm602, %v577
  %643 = vst.msk [vmem:[%s3 + $0x140] sm:$0xff] %vm602, %v578
  %644 = vst.msk [vmem:[%s3 + $0x148] sm:$0xff] %vm602, %v579
  %645 = vst.msk [vmem:[%s3 + $0x150] sm:$0xff] %vm602, %v580
  %646 = vst.msk [vmem:[%s3 + $0x158] sm:$0xff] %vm602, %v581
  %647 = vst.msk [vmem:[%s3 + $0x160] sm:$0xff] %vm602, %v582
  %648 = vst.msk [vmem:[%s3 + $0x168] sm:$0xff] %vm602, %v583
  %649 = vst.msk [vmem:[%s3 + $0x170] sm:$0xff] %vm602, %v584
  %650 = vst.msk [vmem:[%s3 + $0x178] sm:$0xff] %vm602, %v585
  %651 = vst.msk [vmem:[%s3 + $0x180] sm:$0xff] %vm602, %v586
  %652 = vst.msk [vmem:[%s3 + $0x188] sm:$0xff] %vm602, %v587
  %653 = vst.msk [vmem:[%s3 + $0x190] sm:$0xff] %vm602, %v588
  %654 = vst.msk [vmem:[%s3 + $0x198] sm:$0xff] %vm602, %v589
  %655 = vst.msk [vmem:[%s3 + $0x1a0] sm:$0xff] %vm602, %v590
  %656 = vst.msk [vmem:[%s3 + $0x1a8] sm:$0xff] %vm602, %v591
  %657 = vst.msk [vmem:[%s3 + $0x1b0] sm:$0xff] %vm602, %v592
  %658 = vst.msk [vmem:[%s3 + $0x1b8] sm:$0xff] %vm602, %v593
  %659 = vst.msk [vmem:[%s3 + $0x1c0] sm:$0xff] %vm602, %v594
  %660 = vst.msk [vmem:[%s3 + $0x1c8] sm:$0xff] %vm602, %v595
  %661 = vst.msk [vmem:[%s3 + $0x1d0] sm:$0xff] %vm602, %v596
  %662 = vst.msk [vmem:[%s3 + $0x1d8] sm:$0xff] %vm602, %v597
  %663 = vst.msk [vmem:[%s3 + $0x1e0] sm:$0xff] %vm602, %v598
  %664 = vst.msk [vmem:[%s3 + $0x1e8] sm:$0xff] %vm602, %v599
  %665 = vst.msk [vmem:[%s3 + $0x1f0] sm:$0xff] %vm602, %v600
  %666 = vst.msk [vmem:[%s3 + $0x1f8] sm:$0xff] %vm602, %v601
  // Predicated region
  $region14: #{fluentnet_forward.73} parent=0 // pred_check
    _
  $region15: #{fluentnet_forward.73} parent=0 // pred_check_branch
    %668 = sbr.rel (0) target = $region17
  $region16: #{fluentnet_forward.73} parent=0 // pred_region
    _
  $region17: #{fluentnet_forward.73} parent=0 // pred_fallthru
    _
  // Predicated region
  $region18: #{fluentnet_forward.73} parent=0 // pred_check
    _
  $region19: #{fluentnet_forward.73} parent=0 // pred_check_branch
    %670 = sbr.rel (0) target = $region21
  $region20: #{fluentnet_forward.73} parent=0 // pred_region
    _
  $region21: #{fluentnet_forward.73} parent=0 // pred_fallthru
    _

// kernel: fluentnet_forward.74
$region0: #{fluentnet_forward.74}
  #allocation0 [shape = 'u32[]', space=smem, size = 0x4, offset = 0x4, fixed_abs, tag = 'smem constant byte address 0x4 - core index']
  #allocation1 [shape = 'u32[144,128]{1,0:T(1,128)}', space=vmem, size = 0x12000, scoped, tag = 'internal scratch']
  %s0 = inlined_call_operand.vmem [shape: f32[9,1024], index: 0, kind: input, shape index: {}]
  %s1 = inlined_call_operand.vmem [shape: f32[1,1024], index: 1, kind: output, shape index: {}]
  %s2 = sld [smem:[#allocation0]]
  $region14: #{fluentnet_forward.74} parent=0
    _
  %s4 = ssub.s32 1, %s2
  %s5 = scalar_select 0, %s4, %s2
  // Predicated region
  $region2: #{fluentnet_forward.74} parent=0 // pred_check
    _
  $region3: #{fluentnet_forward.74} parent=0 // pred_check_branch
    %7 = sbr.rel (0) target = $region5
  $region4: #{fluentnet_forward.74} parent=0 // pred_region
    _
  $region5: #{fluentnet_forward.74} parent=0 // pred_fallthru
    _
  %v8 = vld [vmem:[%s0] sm:$0xff]
  %v9 = vld [vmem:[%s0 + $0x8] sm:$0xff]
  %v10 = vld [vmem:[%s0 + $0x10] sm:$0xff]
  %v11 = vld [vmem:[%s0 + $0x18] sm:$0xff]
  %v12 = vld [vmem:[%s0 + $0x20] sm:$0xff]
  %v13 = vld [vmem:[%s0 + $0x28] sm:$0xff]
  %v14 = vld [vmem:[%s0 + $0x30] sm:$0xff]
  %v15 = vld [vmem:[%s0 + $0x38] sm:$0xff]
  %v16 = vld [vmem:[%s0 + $0x40] sm:$0x1]
  %v17 = vld [vmem:[%s0 + $0x48] sm:$0x1]
  %v18 = vld [vmem:[%s0 + $0x50] sm:$0x1]
  %v19 = vld [vmem:[%s0 + $0x58] sm:$0x1]
  %v20 = vld [vmem:[%s0 + $0x60] sm:$0x1]
  %v21 = vld [vmem:[%s0 + $0x68] sm:$0x1]
  %v22 = vld [vmem:[%s0 + $0x70] sm:$0x1]
  %v23 = vld [vmem:[%s0 + $0x78] sm:$0x1]
  %vm24 = vcmask 1040384
  %v25 = vsel %vm24, %v16, -inf
  %v26 = vmax.f32 %v8, %v25
  %v27 = vrot.slane %v26, 4
  %v28 = vmax.f32 %v26, %v27
  %v29 = vrot.slane %v28, 2
  %v30 = vmax.f32 %v28, %v29
  %v31 = vrot.slane %v30, 1
  %v32 = vmax.f32 %v30, %v31
  %v33 = vsel %vm24, %v17, -inf
  %v34 = vmax.f32 %v9, %v33
  %v35 = vrot.slane %v34, 4
  %v36 = vmax.f32 %v34, %v35
  %v37 = vrot.slane %v36, 2
  %v38 = vmax.f32 %v36, %v37
  %v39 = vrot.slane %v38, 1
  %v40 = vmax.f32 %v38, %v39
  %v41 = vsel %vm24, %v18, -inf
  %v42 = vmax.f32 %v10, %v41
  %v43 = vrot.slane %v42, 4
  %v44 = vmax.f32 %v42, %v43
  %v45 = vrot.slane %v44, 2
  %v46 = vmax.f32 %v44, %v45
  %v47 = vrot.slane %v46, 1
  %v48 = vmax.f32 %v46, %v47
  %v49 = vsel %vm24, %v19, -inf
  %v50 = vmax.f32 %v11, %v49
  %v51 = vrot.slane %v50, 4
  %v52 = vmax.f32 %v50, %v51
  %v53 = vrot.slane %v52, 2
  %v54 = vmax.f32 %v52, %v53
  %v55 = vrot.slane %v54, 1
  %v56 = vmax.f32 %v54, %v55
  %v57 = vsel %vm24, %v20, -inf
  %v58 = vmax.f32 %v12, %v57
  %v59 = vrot.slane %v58, 4
  %v60 = vmax.f32 %v58, %v59
  %v61 = vrot.slane %v60, 2
  %v62 = vmax.f32 %v60, %v61
  %v63 = vrot.slane %v62, 1
  %v64 = vmax.f32 %v62, %v63
  %v65 = vsel %vm24, %v21, -inf
  %v66 = vmax.f32 %v13, %v65
  %v67 = vrot.slane %v66, 4
  %v68 = vmax.f32 %v66, %v67
  %v69 = vrot.slane %v68, 2
  %v70 = vmax.f32 %v68, %v69
  %v71 = vrot.slane %v70, 1
  %v72 = vmax.f32 %v70, %v71
  %v73 = vsel %vm24, %v22, -inf
  %v74 = vmax.f32 %v14, %v73
  %v75 = vrot.slane %v74, 4
  %v76 = vmax.f32 %v74, %v75
  %v77 = vrot.slane %v76, 2
  %v78 = vmax.f32 %v76, %v77
  %v79 = vrot.slane %v78, 1
  %v80 = vmax.f32 %v78, %v79
  %v81 = vsel %vm24, %v23, -inf
  %v82 = vmax.f32 %v15, %v81
  %v83 = vrot.slane %v82, 4
  %v84 = vmax.f32 %v82, %v83
  %v85 = vrot.slane %v84, 2
  %v86 = vmax.f32 %v84, %v85
  %v87 = vrot.slane %v86, 1
  %v88 = vmax.f32 %v86, %v87
  %v97 = vcombine.low %v32, %v40
  %v98 = vcombine.low %v48, %v56
  %v99 = vcombine.low %v64, %v72
  %v100 = vcombine.low %v80, %v88
  %v102 = vunpack.c.l.s4 1966171168
  %v103 = vunpack.c.0.s8 %v102
  %v104 = vlaneseq
  %v105 = vshrl.u32 %v104, 7
  %v106 = vsub.s32 %v103, %v105
  %v107 = vrot.slane %v97, %v106
  %v109 = vunpack.c.l.s4 1966171168
  %v110 = vunpack.c.0.s8 %v109
  %v111 = vlaneseq
  %v112 = vshrl.u32 %v111, 7
  %v113 = vsub.s32 %v110, %v112
  %v114 = vrot.slane %v98, %v113
  %v116 = vunpack.c.l.s4 1966171168
  %v117 = vunpack.c.0.s8 %v116
  %v118 = vlaneseq
  %v119 = vshrl.u32 %v118, 7
  %v120 = vsub.s32 %v117, %v119
  %v121 = vrot.slane %v99, %v120
  %v123 = vunpack.c.l.s4 1966171168
  %v124 = vunpack.c.0.s8 %v123
  %v125 = vlaneseq
  %v126 = vshrl.u32 %v125, 7
  %v127 = vsub.s32 %v124, %v126
  %v128 = vrot.slane %v100, %v127
  %v129 = vcombine.low %v107, %v114
  %v130 = vcombine.low %v121, %v128
  %v132 = vunpack.c.l.s4 1966171168
  %v133 = vunpack.c.0.s8 %v132
  %v134 = vlaneseq
  %v135 = vshrl.u32 %v134, 7
  %v136 = vsub.s32 %v133, %v135
  %v137 = vrot.slane %v129, %v136
  %v139 = vunpack.c.l.s4 1966171168
  %v140 = vunpack.c.0.s8 %v139
  %v141 = vlaneseq
  %v142 = vshrl.u32 %v141, 7
  %v143 = vsub.s32 %v140, %v142
  %v144 = vrot.slane %v130, %v143
  %v145 = vcombine.low %v137, %v144
  %147 = vst [vmem:[%s1] sm:$0xff] %v145
  // Predicated region
  $region6: #{fluentnet_forward.74} parent=0 // pred_check
    _
  $region7: #{fluentnet_forward.74} parent=0 // pred_check_branch
    %149 = sbr.rel (0) target = $region9
  $region8: #{fluentnet_forward.74} parent=0 // pred_region
    _
  $region9: #{fluentnet_forward.74} parent=0 // pred_fallthru
    _
  // Predicated region
  $region10: #{fluentnet_forward.74} parent=0 // pred_check
    _
  $region11: #{fluentnet_forward.74} parent=0 // pred_check_branch
    %151 = sbr.rel (0) target = $region13
  $region12: #{fluentnet_forward.74} parent=0 // pred_region
    _
  $region13: #{fluentnet_forward.74} parent=0 // pred_fallthru
    _

// kernel: fluentnet_forward.75
$region0: #{fluentnet_forward.75}
  #allocation0 [shape = 'u32[]', space=smem, size = 0x4, offset = 0x4, fixed_abs, tag = 'smem constant byte address 0x4 - core index']
  #allocation1 [shape = 'u32[144,128]{1,0:T(1,128)}', space=vmem, size = 0x12000, scoped, tag = 'internal scratch']
  %s0 = inlined_call_operand.vmem [shape: f32[128,72], index: 0, kind: input, shape index: {}]
  %s1 = inlined_call_operand.vmem [shape: bf16[72,8], index: 1, kind: input, shape index: {}]
  %s2 = inlined_call_operand.vmem [shape: f32[1,8], index: 2, kind: input, shape index: {}]
  %s3 = inlined_call_operand.vmem [shape: f32[128,8], index: 3, kind: output, shape index: {}]
  %s4 = sld [smem:[#allocation0]]
  $region22: #{fluentnet_forward.75} parent=0
    _
  %s6 = ssub.s32 1, %s4
  %s7 = scalar_select 0, %s6, %s4
  // Predicated region
  $region2: #{fluentnet_forward.75} parent=0 // pred_check
    _
  $region3: #{fluentnet_forward.75} parent=0 // pred_check_branch
    %9 = sbr.rel (0) target = $region5
  $region4: #{fluentnet_forward.75} parent=0 // pred_region
    _
  $region5: #{fluentnet_forward.75} parent=0 // pred_fallthru
    _
  // Predicated region
  $region6: #{fluentnet_forward.75} parent=0 // pred_check
    _
  $region7: #{fluentnet_forward.75} parent=0 // pred_check_branch
    %11 = sbr.rel (0) target = $region9
  $region8: #{fluentnet_forward.75} parent=0 // pred_region
    _
  $region9: #{fluentnet_forward.75} parent=0 // pred_fallthru
    _
  // Predicated region
  $region10: #{fluentnet_forward.75} parent=0 // pred_check
    _
  $region11: #{fluentnet_forward.75} parent=0 // pred_check_branch
    %13 = sbr.rel (0) target = $region13
  $region12: #{fluentnet_forward.75} parent=0 // pred_region
    _
  $region13: #{fluentnet_forward.75} parent=0 // pred_fallthru
    _
  %v15 = vld [vmem:[%s0] sm:$0xff]
  %v16 = vld [vmem:[%s0 + $0x8] sm:$0xff]
  %v17 = vld [vmem:[%s0 + $0x10] sm:$0xff]
  %v18 = vld [vmem:[%s0 + $0x18] sm:$0xff]
  %v19 = vld [vmem:[%s0 + $0x20] sm:$0xff]
  %v20 = vld [vmem:[%s0 + $0x28] sm:$0xff]
  %v21 = vld [vmem:[%s0 + $0x30] sm:$0xff]
  %v22 = vld [vmem:[%s0 + $0x38] sm:$0xff]
  %v23 = vld [vmem:[%s0 + $0x40] sm:$0xff]
  %v24 = vld [vmem:[%s0 + $0x48] sm:$0xff]
  %v25 = vld [vmem:[%s0 + $0x50] sm:$0xff]
  %v26 = vld [vmem:[%s0 + $0x58] sm:$0xff]
  %v27 = vld [vmem:[%s0 + $0x60] sm:$0xff]
  %v28 = vld [vmem:[%s0 + $0x68] sm:$0xff]
  %v29 = vld [vmem:[%s0 + $0x70] sm:$0xff]
  %v30 = vld [vmem:[%s0 + $0x78] sm:$0xff]
  %v31 = vpack.c.bf16 %v16, %v15
  %v32 = vpack.c.bf16 %v18, %v17
  %v33 = vpack.c.bf16 %v20, %v19
  %v34 = vpack.c.bf16 %v22, %v21
  %v35 = vpack.c.bf16 %v24, %v23
  %v36 = vpack.c.bf16 %v26, %v25
  %v37 = vpack.c.bf16 %v28, %v27
  %v38 = vpack.c.bf16 %v30, %v29
  %v39 = vld [vmem:[%s1] sm:$0xf]
  %v40 = vld [vmem:[%s1 + $0x4] sm:$0xf]
  %v41 = vld [vmem:[%s1 + $0x8] sm:$0xf]
  %v42 = vld [vmem:[%s1 + $0xc] sm:$0xf]
  %v43 = vld [vmem:[%s1 + $0x10] sm:$0xf]
  %v44 = vld [vmem:[%s1 + $0x14] sm:$0xf]
  %v45 = vld [vmem:[%s1 + $0x18] sm:$0xf]
  %v46 = vld [vmem:[%s1 + $0x1c] sm:$0xf]
  %v47 = vld [vmem:[%s1 + $0x20] sm:$0xf]
  %v48 = vld [vmem:[%s2] sm:$0x1]
  %v50 = vlaneseq
  %v51 = vshrl.u32 %v50, 7
  %v52 = vsub.s32 0, %v51
  %v53 = vrot.slane %v48, %v52
  %v64 = vunpack.c.l.b16 %v39
  %v65 = vunpack.c.l.b16 %v40
  %v66 = vunpack.c.l.b16 %v41
  %v67 = vunpack.c.l.b16 %v42
  %v68 = vunpack.c.l.b16 %v43
  %v69 = vunpack.c.l.b16 %v44
  %v70 = vunpack.c.l.b16 %v45
  %v71 = vunpack.c.l.b16 %v46
  %v72 = vunpack.c.l.b16 %v47
  %v73 = vpack.c.b16 %v65, %v64
  %v74 = vpack.c.b16 %v67, %v66
  %v75 = vpack.c.b16 %v69, %v68
  %v76 = vpack.c.b16 %v71, %v70
  %v77 = vpack.c.b16 %v72, %v72
  %vm82 = vcmask 588800
  %v84 = vsel %vm82, %v31, 0
  %v87 = vsel %vm82, %v32, 0
  %v90 = vsel %vm82, %v33, 0
  %v93 = vsel %vm82, %v34, 0
  %v96 = vsel %vm82, %v35, 0
  %v99 = vsel %vm82, %v36, 0
  %v102 = vsel %vm82, %v37, 0
  %v105 = vsel %vm82, %v38, 0
  %vm107 = vcmask 1043456
  %v109 = vsel %vm107, %v77, 0
  %111 = vmatprep.subr.bf16.mxu0 0
  %112 = vmatpush1.bf16.msra.mxu0 %v73
  %113 = vmatprep.subr.bf16.mxu0 0
  %114 = vmatpush1.bf16.msra.mxu0 %v74
  %115 = vmatprep.subr.bf16.mxu0 0
  %116 = vmatpush1.bf16.msra.mxu0 %v75
  %117 = vmatprep.subr.bf16.mxu0 0
  %118 = vmatpush1.bf16.msra.mxu0 %v76
  %119 = vmatprep.subr.bf16.mxu0 0
  %120 = vmatpush1.bf16.msra.mxu0 %v109
  %121 = vmatprep.subr.bf16.mxu0 0
  %122 = vmatpush1.bf16.msra.mxu0 0
  %123 = vmatprep.subr.bf16.mxu0 0
  %124 = vmatpush1.bf16.msra.mxu0 0
  %125 = vmatprep.subr.bf16.mxu0 0
  %126 = vmatpush1.bf16.msra.mxu0 0
  %127 = vmatprep.subr.bf16.mxu0 0
  %128 = vmatpush1.bf16.msra.mxu0 0
  %129 = vmatprep.subr.bf16.mxu0 0
  %130 = vmatpush1.bf16.msra.mxu0 0
  %131 = vmatprep.subr.bf16.mxu0 0
  %132 = vmatpush1.bf16.msra.mxu0 0
  %133 = vmatprep.subr.bf16.mxu0 0
  %134 = vmatpush1.bf16.msra.mxu0 0
  %135 = vmatprep.subr.bf16.mxu0 0
  %136 = vmatpush1.bf16.msra.mxu0 0
  %137 = vmatprep.subr.bf16.mxu0 0
  %138 = vmatpush1.bf16.msra.mxu0 0
  %139 = vmatprep.subr.bf16.mxu0 0
  %140 = vmatpush1.bf16.msra.mxu0 0
  %141 = vmatprep.subr.bf16.mxu0 0
  %142 = vmatpush1.bf16.msra.mxu0 0
  %143 = vmatprep.mubr.bf16.mxu0 0
  %144 = vmatmul.mubr.bf16.gmra.mrb[0].mxu0 %v84
  %v145 = vpop.f32.mrb[0].mxu0
  %v146 = vadd.f32 %v53, %v145
  %v147 = vpop.f32.mrb[0].mxu0
  %v148 = vpop.f32.mrb[0].mxu0
  %v149 = vadd.f32 %v53, %v148
  %v150 = vpop.f32.mrb[0].mxu0
  %151 = vmatprep.mubr.bf16.mxu0 0
  %152 = vmatmul.mubr.bf16.gmra.mrb[0].mxu0 %v87
  %v153 = vpop.f32.mrb[0].mxu0
  %v154 = vadd.f32 %v53, %v153
  %v155 = vpop.f32.mrb[0].mxu0
  %v156 = vpop.f32.mrb[0].mxu0
  %v157 = vadd.f32 %v53, %v156
  %v158 = vpop.f32.mrb[0].mxu0
  %159 = vmatprep.mubr.bf16.mxu0 0
  %160 = vmatmul.mubr.bf16.gmra.mrb[0].mxu0 %v90
  %v161 = vpop.f32.mrb[0].mxu0
  %v162 = vadd.f32 %v53, %v161
  %v163 = vpop.f32.mrb[0].mxu0
  %v164 = vpop.f32.mrb[0].mxu0
  %v165 = vadd.f32 %v53, %v164
  %v166 = vpop.f32.mrb[0].mxu0
  %167 = vmatprep.mubr.bf16.mxu0 0
  %168 = vmatmul.mubr.bf16.gmra.mrb[0].mxu0 %v93
  %v169 = vpop.f32.mrb[0].mxu0
  %v170 = vadd.f32 %v53, %v169
  %v171 = vpop.f32.mrb[0].mxu0
  %v172 = vpop.f32.mrb[0].mxu0
  %v173 = vadd.f32 %v53, %v172
  %v174 = vpop.f32.mrb[0].mxu0
  %175 = vmatprep.mubr.bf16.mxu0 0
  %176 = vmatmul.mubr.bf16.gmra.mrb[0].mxu0 %v96
  %v177 = vpop.f32.mrb[0].mxu0
  %v178 = vadd.f32 %v53, %v177
  %v179 = vpop.f32.mrb[0].mxu0
  %v180 = vpop.f32.mrb[0].mxu0
  %v181 = vadd.f32 %v53, %v180
  %v182 = vpop.f32.mrb[0].mxu0
  %183 = vmatprep.mubr.bf16.mxu0 0
  %184 = vmatmul.mubr.bf16.gmra.mrb[0].mxu0 %v99
  %v185 = vpop.f32.mrb[0].mxu0
  %v186 = vadd.f32 %v53, %v185
  %v187 = vpop.f32.mrb[0].mxu0
  %v188 = vpop.f32.mrb[0].mxu0
  %v189 = vadd.f32 %v53, %v188
  %v190 = vpop.f32.mrb[0].mxu0
  %191 = vmatprep.mubr.bf16.mxu0 0
  %192 = vmatmul.mubr.bf16.gmra.mrb[0].mxu0 %v102
  %v193 = vpop.f32.mrb[0].mxu0
  %v194 = vadd.f32 %v53, %v193
  %v195 = vpop.f32.mrb[0].mxu0
  %v196 = vpop.f32.mrb[0].mxu0
  %v197 = vadd.f32 %v53, %v196
  %v198 = vpop.f32.mrb[0].mxu0
  %199 = vmatprep.mubr.bf16.mxu0 0
  %200 = vmatmul.mubr.bf16.gmra.mrb[0].mxu0 %v105
  %v201 = vpop.f32.mrb[0].mxu0
  %v202 = vadd.f32 %v53, %v201
  %v203 = vpop.f32.mrb[0].mxu0
  %v204 = vpop.f32.mrb[0].mxu0
  %v205 = vadd.f32 %v53, %v204
  %v206 = vpop.f32.mrb[0].mxu0
  %207 = vdwg.mxu0
  %v208 = vmax.f32 %v146, 0.0
  %v209 = vmax.f32 %v149, 0.0
  %v210 = vmax.f32 %v154, 0.0
  %v211 = vmax.f32 %v157, 0.0
  %v212 = vmax.f32 %v162, 0.0
  %v213 = vmax.f32 %v165, 0.0
  %v214 = vmax.f32 %v170, 0.0
  %v215 = vmax.f32 %v173, 0.0
  %v216 = vmax.f32 %v178, 0.0
  %v217 = vmax.f32 %v181, 0.0
  %v218 = vmax.f32 %v186, 0.0
  %v219 = vmax.f32 %v189, 0.0
  %v220 = vmax.f32 %v194, 0.0
  %v221 = vmax.f32 %v197, 0.0
  %v222 = vmax.f32 %v202, 0.0
  %v223 = vmax.f32 %v205, 0.0
  %vm224 = vcmask 64512
  %225 = vst.msk [vmem:[%s3] sm:$0xff] %vm224, %v208
  %226 = vst.msk [vmem:[%s3 + $0x8] sm:$0xff] %vm224, %v209
  %227 = vst.msk [vmem:[%s3 + $0x10] sm:$0xff] %vm224, %v210
  %228 = vst.msk [vmem:[%s3 + $0x18] sm:$0xff] %vm224, %v211
  %229 = vst.msk [vmem:[%s3 + $0x20] sm:$0xff] %vm224, %v212
  %230 = vst.msk [vmem:[%s3 + $0x28] sm:$0xff] %vm224, %v213
  %231 = vst.msk [vmem:[%s3 + $0x30] sm:$0xff] %vm224, %v214
  %232 = vst.msk [vmem:[%s3 + $0x38] sm:$0xff] %vm224, %v215
  %233 = vst.msk [vmem:[%s3 + $0x40] sm:$0xff] %vm224, %v216
  %234 = vst.msk [vmem:[%s3 + $0x48] sm:$0xff] %vm224, %v217
  %235 = vst.msk [vmem:[%s3 + $0x50] sm:$0xff] %vm224, %v218
  %236 = vst.msk [vmem:[%s3 + $0x58] sm:$0xff] %vm224, %v219
  %237 = vst.msk [vmem:[%s3 + $0x60] sm:$0xff] %vm224, %v220
  %238 = vst.msk [vmem:[%s3 + $0x68] sm:$0xff] %vm224, %v221
  %239 = vst.msk [vmem:[%s3 + $0x70] sm:$0xff] %vm224, %v222
  %240 = vst.msk [vmem:[%s3 + $0x78] sm:$0xff] %vm224, %v223
  // Predicated region
  $region14: #{fluentnet_forward.75} parent=0 // pred_check
    _
  $region15: #{fluentnet_forward.75} parent=0 // pred_check_branch
    %242 = sbr.rel (0) target = $region17
  $region16: #{fluentnet_forward.75} parent=0 // pred_region
    _
  $region17: #{fluentnet_forward.75} parent=0 // pred_fallthru
    _
  // Predicated region
  $region18: #{fluentnet_forward.75} parent=0 // pred_check
    _
  $region19: #{fluentnet_forward.75} parent=0 // pred_check_branch
    %244 = sbr.rel (0) target = $region21
  $region20: #{fluentnet_forward.75} parent=0 // pred_region
    _
  $region21: #{fluentnet_forward.75} parent=0 // pred_fallthru
    _

// kernel: fluentnet_forward.76
$region0: #{fluentnet_forward.76}
  #allocation0 [shape = 'u32[]', space=smem, size = 0x4, offset = 0x4, fixed_abs, tag = 'smem constant byte address 0x4 - core index']
  #allocation1 [shape = 'u32[144,128]{1,0:T(1,128)}', space=vmem, size = 0x12000, scoped, tag = 'internal scratch']
  %s0 = inlined_call_operand.vmem [shape: f32[128,72], index: 0, kind: input, shape index: {}]
  %s1 = inlined_call_operand.vmem [shape: bf16[72,8], index: 1, kind: input, shape index: {}]
  %s2 = inlined_call_operand.vmem [shape: f32[1,8], index: 2, kind: input, shape index: {}]
  %s3 = inlined_call_operand.vmem [shape: f32[128,8], index: 3, kind: output, shape index: {}]
  %s4 = sld [smem:[#allocation0]]
  $region22: #{fluentnet_forward.76} parent=0
    _
  %s6 = ssub.s32 1, %s4
  %s7 = scalar_select 0, %s6, %s4
  // Predicated region
  $region2: #{fluentnet_forward.76} parent=0 // pred_check
    _
  $region3: #{fluentnet_forward.76} parent=0 // pred_check_branch
    %9 = sbr.rel (0) target = $region5
  $region4: #{fluentnet_forward.76} parent=0 // pred_region
    _
  $region5: #{fluentnet_forward.76} parent=0 // pred_fallthru
    _
  // Predicated region
  $region6: #{fluentnet_forward.76} parent=0 // pred_check
    _
  $region7: #{fluentnet_forward.76} parent=0 // pred_check_branch
    %11 = sbr.rel (0) target = $region9
  $region8: #{fluentnet_forward.76} parent=0 // pred_region
    _
  $region9: #{fluentnet_forward.76} parent=0 // pred_fallthru
    _
  // Predicated region
  $region10: #{fluentnet_forward.76} parent=0 // pred_check
    _
  $region11: #{fluentnet_forward.76} parent=0 // pred_check_branch
    %13 = sbr.rel (0) target = $region13
  $region12: #{fluentnet_forward.76} parent=0 // pred_region
    _
  $region13: #{fluentnet_forward.76} parent=0 // pred_fallthru
    _
  %v15 = vld [vmem:[%s0] sm:$0xff]
  %v16 = vld [vmem:[%s0 + $0x8] sm:$0xff]
  %v17 = vld [vmem:[%s0 + $0x10] sm:$0xff]
  %v18 = vld [vmem:[%s0 + $0x18] sm:$0xff]
  %v19 = vld [vmem:[%s0 + $0x20] sm:$0xff]
  %v20 = vld [vmem:[%s0 + $0x28] sm:$0xff]
  %v21 = vld [vmem:[%s0 + $0x30] sm:$0xff]
  %v22 = vld [vmem:[%s0 + $0x38] sm:$0xff]
  %v23 = vld [vmem:[%s0 + $0x40] sm:$0xff]
  %v24 = vld [vmem:[%s0 + $0x48] sm:$0xff]
  %v25 = vld [vmem:[%s0 + $0x50] sm:$0xff]
  %v26 = vld [vmem:[%s0 + $0x58] sm:$0xff]
  %v27 = vld [vmem:[%s0 + $0x60] sm:$0xff]
  %v28 = vld [vmem:[%s0 + $0x68] sm:$0xff]
  %v29 = vld [vmem:[%s0 + $0x70] sm:$0xff]
  %v30 = vld [vmem:[%s0 + $0x78] sm:$0xff]
  %v31 = vpack.c.bf16 %v16, %v15
  %v32 = vpack.c.bf16 %v18, %v17
  %v33 = vpack.c.bf16 %v20, %v19
  %v34 = vpack.c.bf16 %v22, %v21
  %v35 = vpack.c.bf16 %v24, %v23
  %v36 = vpack.c.bf16 %v26, %v25
  %v37 = vpack.c.bf16 %v28, %v27
  %v38 = vpack.c.bf16 %v30, %v29
  %v39 = vld [vmem:[%s1] sm:$0xf]
  %v40 = vld [vmem:[%s1 + $0x4] sm:$0xf]
  %v41 = vld [vmem:[%s1 + $0x8] sm:$0xf]
  %v42 = vld [vmem:[%s1 + $0xc] sm:$0xf]
  %v43 = vld [vmem:[%s1 + $0x10] sm:$0xf]
  %v44 = vld [vmem:[%s1 + $0x14] sm:$0xf]
  %v45 = vld [vmem:[%s1 + $0x18] sm:$0xf]
  %v46 = vld [vmem:[%s1 + $0x1c] sm:$0xf]
  %v47 = vld [vmem:[%s1 + $0x20] sm:$0xf]
  %v48 = vld [vmem:[%s2] sm:$0x1]
  %v50 = vlaneseq
  %v51 = vshrl.u32 %v50, 7
  %v52 = vsub.s32 0, %v51
  %v53 = vrot.slane %v48, %v52
  %v64 = vunpack.c.l.b16 %v39
  %v65 = vunpack.c.l.b16 %v40
  %v66 = vunpack.c.l.b16 %v41
  %v67 = vunpack.c.l.b16 %v42
  %v68 = vunpack.c.l.b16 %v43
  %v69 = vunpack.c.l.b16 %v44
  %v70 = vunpack.c.l.b16 %v45
  %v71 = vunpack.c.l.b16 %v46
  %v72 = vunpack.c.l.b16 %v47
  %v73 = vpack.c.b16 %v65, %v64
  %v74 = vpack.c.b16 %v67, %v66
  %v75 = vpack.c.b16 %v69, %v68
  %v76 = vpack.c.b16 %v71, %v70
  %v77 = vpack.c.b16 %v72, %v72
  %vm82 = vcmask 588800
  %v84 = vsel %vm82, %v31, 0
  %v87 = vsel %vm82, %v32, 0
  %v90 = vsel %vm82, %v33, 0
  %v93 = vsel %vm82, %v34, 0
  %v96 = vsel %vm82, %v35, 0
  %v99 = vsel %vm82, %v36, 0
  %v102 = vsel %vm82, %v37, 0
  %v105 = vsel %vm82, %v38, 0
  %vm107 = vcmask 1043456
  %v109 = vsel %vm107, %v77, 0
  %111 = vmatprep.subr.bf16.mxu0 0
  %112 = vmatpush1.bf16.msra.mxu0 %v73
  %113 = vmatprep.subr.bf16.mxu0 0
  %114 = vmatpush1.bf16.msra.mxu0 %v74
  %115 = vmatprep.subr.bf16.mxu0 0
  %116 = vmatpush1.bf16.msra.mxu0 %v75
  %117 = vmatprep.subr.bf16.mxu0 0
  %118 = vmatpush1.bf16.msra.mxu0 %v76
  %119 = vmatprep.subr.bf16.mxu0 0
  %120 = vmatpush1.bf16.msra.mxu0 %v109
  %121 = vmatprep.subr.bf16.mxu0 0
  %122 = vmatpush1.bf16.msra.mxu0 0
  %123 = vmatprep.subr.bf16.mxu0 0
  %124 = vmatpush1.bf16.msra.mxu0 0
  %125 = vmatprep.subr.bf16.mxu0 0
  %126 = vmatpush1.bf16.msra.mxu0 0
  %127 = vmatprep.subr.bf16.mxu0 0
  %128 = vmatpush1.bf16.msra.mxu0 0
  %129 = vmatprep.subr.bf16.mxu0 0
  %130 = vmatpush1.bf16.msra.mxu0 0
  %131 = vmatprep.subr.bf16.mxu0 0
  %132 = vmatpush1.bf16.msra.mxu0 0
  %133 = vmatprep.subr.bf16.mxu0 0
  %134 = vmatpush1.bf16.msra.mxu0 0
  %135 = vmatprep.subr.bf16.mxu0 0
  %136 = vmatpush1.bf16.msra.mxu0 0
  %137 = vmatprep.subr.bf16.mxu0 0
  %138 = vmatpush1.bf16.msra.mxu0 0
  %139 = vmatprep.subr.bf16.mxu0 0
  %140 = vmatpush1.bf16.msra.mxu0 0
  %141 = vmatprep.subr.bf16.mxu0 0
  %142 = vmatpush1.bf16.msra.mxu0 0
  %143 = vmatprep.mubr.bf16.mxu0 0
  %144 = vmatmul.mubr.bf16.gmra.mrb[0].mxu0 %v84
  %v145 = vpop.f32.mrb[0].mxu0
  %v146 = vadd.f32 %v53, %v145
  %v147 = vpop.f32.mrb[0].mxu0
  %v148 = vpop.f32.mrb[0].mxu0
  %v149 = vadd.f32 %v53, %v148
  %v150 = vpop.f32.mrb[0].mxu0
  %151 = vmatprep.mubr.bf16.mxu0 0
  %152 = vmatmul.mubr.bf16.gmra.mrb[0].mxu0 %v87
  %v153 = vpop.f32.mrb[0].mxu0
  %v154 = vadd.f32 %v53, %v153
  %v155 = vpop.f32.mrb[0].mxu0
  %v156 = vpop.f32.mrb[0].mxu0
  %v157 = vadd.f32 %v53, %v156
  %v158 = vpop.f32.mrb[0].mxu0
  %159 = vmatprep.mubr.bf16.mxu0 0
  %160 = vmatmul.mubr.bf16.gmra.mrb[0].mxu0 %v90
  %v161 = vpop.f32.mrb[0].mxu0
  %v162 = vadd.f32 %v53, %v161
  %v163 = vpop.f32.mrb[0].mxu0
  %v164 = vpop.f32.mrb[0].mxu0
  %v165 = vadd.f32 %v53, %v164
  %v166 = vpop.f32.mrb[0].mxu0
  %167 = vmatprep.mubr.bf16.mxu0 0
  %168 = vmatmul.mubr.bf16.gmra.mrb[0].mxu0 %v93
  %v169 = vpop.f32.mrb[0].mxu0
  %v170 = vadd.f32 %v53, %v169
  %v171 = vpop.f32.mrb[0].mxu0
  %v172 = vpop.f32.mrb[0].mxu0
  %v173 = vadd.f32 %v53, %v172
  %v174 = vpop.f32.mrb[0].mxu0
  %175 = vmatprep.mubr.bf16.mxu0 0
  %176 = vmatmul.mubr.bf16.gmra.mrb[0].mxu0 %v96
  %v177 = vpop.f32.mrb[0].mxu0
  %v178 = vadd.f32 %v53, %v177
  %v179 = vpop.f32.mrb[0].mxu0
  %v180 = vpop.f32.mrb[0].mxu0
  %v181 = vadd.f32 %v53, %v180
  %v182 = vpop.f32.mrb[0].mxu0
  %183 = vmatprep.mubr.bf16.mxu0 0
  %184 = vmatmul.mubr.bf16.gmra.mrb[0].mxu0 %v99
  %v185 = vpop.f32.mrb[0].mxu0
  %v186 = vadd.f32 %v53, %v185
  %v187 = vpop.f32.mrb[0].mxu0
  %v188 = vpop.f32.mrb[0].mxu0
  %v189 = vadd.f32 %v53, %v188
  %v190 = vpop.f32.mrb[0].mxu0
  %191 = vmatprep.mubr.bf16.mxu0 0
  %192 = vmatmul.mubr.bf16.gmra.mrb[0].mxu0 %v102
  %v193 = vpop.f32.mrb[0].mxu0
  %v194 = vadd.f32 %v53, %v193
  %v195 = vpop.f32.mrb[0].mxu0
  %v196 = vpop.f32.mrb[0].mxu0
  %v197 = vadd.f32 %v53, %v196
  %v198 = vpop.f32.mrb[0].mxu0
  %199 = vmatprep.mubr.bf16.mxu0 0
  %200 = vmatmul.mubr.bf16.gmra.mrb[0].mxu0 %v105
  %v201 = vpop.f32.mrb[0].mxu0
  %v202 = vadd.f32 %v53, %v201
  %v203 = vpop.f32.mrb[0].mxu0
  %v204 = vpop.f32.mrb[0].mxu0
  %v205 = vadd.f32 %v53, %v204
  %v206 = vpop.f32.mrb[0].mxu0
  %207 = vdwg.mxu0
  %vm208 = vcmask 64512
  %209 = vst.msk [vmem:[%s3] sm:$0xff] %vm208, %v146
  %210 = vst.msk [vmem:[%s3 + $0x8] sm:$0xff] %vm208, %v149
  %211 = vst.msk [vmem:[%s3 + $0x10] sm:$0xff] %vm208, %v154
  %212 = vst.msk [vmem:[%s3 + $0x18] sm:$0xff] %vm208, %v157
  %213 = vst.msk [vmem:[%s3 + $0x20] sm:$0xff] %vm208, %v162
  %214 = vst.msk [vmem:[%s3 + $0x28] sm:$0xff] %vm208, %v165
  %215 = vst.msk [vmem:[%s3 + $0x30] sm:$0xff] %vm208, %v170
  %216 = vst.msk [vmem:[%s3 + $0x38] sm:$0xff] %vm208, %v173
  %217 = vst.msk [vmem:[%s3 + $0x40] sm:$0xff] %vm208, %v178
  %218 = vst.msk [vmem:[%s3 + $0x48] sm:$0xff] %vm208, %v181
  %219 = vst.msk [vmem:[%s3 + $0x50] sm:$0xff] %vm208, %v186
  %220 = vst.msk [vmem:[%s3 + $0x58] sm:$0xff] %vm208, %v189
  %221 = vst.msk [vmem:[%s3 + $0x60] sm:$0xff] %vm208, %v194
  %222 = vst.msk [vmem:[%s3 + $0x68] sm:$0xff] %vm208, %v197
  %223 = vst.msk [vmem:[%s3 + $0x70] sm:$0xff] %vm208, %v202
  %224 = vst.msk [vmem:[%s3 + $0x78] sm:$0xff] %vm208, %v205
  // Predicated region
  $region14: #{fluentnet_forward.76} parent=0 // pred_check
    _
  $region15: #{fluentnet_forward.76} parent=0 // pred_check_branch
    %226 = sbr.rel (0) target = $region17
  $region16: #{fluentnet_forward.76} parent=0 // pred_region
    _
  $region17: #{fluentnet_forward.76} parent=0 // pred_fallthru
    _
  // Predicated region
  $region18: #{fluentnet_forward.76} parent=0 // pred_check
    _
  $region19: #{fluentnet_forward.76} parent=0 // pred_check_branch
    %228 = sbr.rel (0) target = $region21
  $region20: #{fluentnet_forward.76} parent=0 // pred_region
    _
  $region21: #{fluentnet_forward.76} parent=0 // pred_fallthru
    _

// kernel: fluentnet_forward.77
$region0: #{fluentnet_forward.77}
  #allocation0 [shape = 'u32[]', space=smem, size = 0x4, offset = 0x4, fixed_abs, tag = 'smem constant byte address 0x4 - core index']
  #allocation1 [shape = 'u32[144,128]{1,0:T(1,128)}', space=vmem, size = 0x12000, scoped, tag = 'internal scratch']
  %s0 = inlined_call_operand.vmem [shape: f32[2,64,8], index: 0, kind: input, shape index: {}]
  %s1 = inlined_call_operand.vmem [shape: f32[8,2], index: 1, kind: input, shape index: {}]
  %s2 = inlined_call_operand.vmem [shape: f32[2,8], index: 2, kind: input, shape index: {}]
  %s3 = inlined_call_operand.vmem [shape: f32[2,8], index: 3, kind: output, shape index: {}]
  %s4 = sld [smem:[#allocation0]]
  $region22: #{fluentnet_forward.77} parent=0
    _
  %s6 = ssub.s32 1, %s4
  %s7 = scalar_select 0, %s6, %s4
  // Predicated region
  $region2: #{fluentnet_forward.77} parent=0 // pred_check
    _
  $region3: #{fluentnet_forward.77} parent=0 // pred_check_branch
    %9 = sbr.rel (0) target = $region5
  $region4: #{fluentnet_forward.77} parent=0 // pred_region
    _
  $region5: #{fluentnet_forward.77} parent=0 // pred_fallthru
    _
  // Predicated region
  $region6: #{fluentnet_forward.77} parent=0 // pred_check
    _
  $region7: #{fluentnet_forward.77} parent=0 // pred_check_branch
    %11 = sbr.rel (0) target = $region9
  $region8: #{fluentnet_forward.77} parent=0 // pred_region
    _
  $region9: #{fluentnet_forward.77} parent=0 // pred_fallthru
    _
  // Predicated region
  $region10: #{fluentnet_forward.77} parent=0 // pred_check
    _
  $region11: #{fluentnet_forward.77} parent=0 // pred_check_branch
    %13 = sbr.rel (0) target = $region13
  $region12: #{fluentnet_forward.77} parent=0 // pred_region
    _
  $region13: #{fluentnet_forward.77} parent=0 // pred_fallthru
    _
  %v14 = vld [vmem:[%s0] sm:$0xff]
  %v15 = vld [vmem:[%s0 + $0x8] sm:$0xff]
  %v16 = vld [vmem:[%s0 + $0x10] sm:$0xff]
  %v17 = vld [vmem:[%s0 + $0x18] sm:$0xff]
  %v18 = vld [vmem:[%s0 + $0x20] sm:$0xff]
  %v19 = vld [vmem:[%s0 + $0x28] sm:$0xff]
  %v20 = vld [vmem:[%s0 + $0x30] sm:$0xff]
  %v21 = vld [vmem:[%s0 + $0x38] sm:$0xff]
  %v22 = vld [vmem:[%s0 + $0x40] sm:$0xff]
  %v23 = vld [vmem:[%s0 + $0x48] sm:$0xff]
  %v24 = vld [vmem:[%s0 + $0x50] sm:$0xff]
  %v25 = vld [vmem:[%s0 + $0x58] sm:$0xff]
  %v26 = vld [vmem:[%s0 + $0x60] sm:$0xff]
  %v27 = vld [vmem:[%s0 + $0x68] sm:$0xff]
  %v28 = vld [vmem:[%s0 + $0x70] sm:$0xff]
  %v29 = vld [vmem:[%s0 + $0x78] sm:$0xff]
  %vm30 = vcmask 64512
  %v31 = vsel %vm30, %v14, 0.0
  %v32 = vsel %vm30, %v15, 0.0
  %v33 = vadd.f32 %v31, %v32
  %v34 = vsel %vm30, %v16, 0.0
  %v35 = vadd.f32 %v33, %v34
  %v36 = vsel %vm30, %v17, 0.0
  %v37 = vadd.f32 %v35, %v36
  %v38 = vsel %vm30, %v18, 0.0
  %v39 = vadd.f32 %v37, %v38
  %v40 = vsel %vm30, %v19, 0.0
  %v41 = vadd.f32 %v39, %v40
  %v42 = vsel %vm30, %v20, 0.0
  %v43 = vadd.f32 %v41, %v42
  %v44 = vsel %vm30, %v21, 0.0
  %v45 = vadd.f32 %v43, %v44
  %v46 = vrot.slane %v45, 4
  %v47 = vadd.f32 %v45, %v46
  %v48 = vrot.slane %v47, 2
  %v49 = vadd.f32 %v47, %v48
  %v50 = vrot.slane %v49, 1
  %v51 = vadd.f32 %v49, %v50
  %v52 = vsel %vm30, %v22, 0.0
  %v53 = vsel %vm30, %v23, 0.0
  %v54 = vadd.f32 %v52, %v53
  %v55 = vsel %vm30, %v24, 0.0
  %v56 = vadd.f32 %v54, %v55
  %v57 = vsel %vm30, %v25, 0.0
  %v58 = vadd.f32 %v56, %v57
  %v59 = vsel %vm30, %v26, 0.0
  %v60 = vadd.f32 %v58, %v59
  %v61 = vsel %vm30, %v27, 0.0
  %v62 = vadd.f32 %v60, %v61
  %v63 = vsel %vm30, %v28, 0.0
  %v64 = vadd.f32 %v62, %v63
  %v65 = vsel %vm30, %v29, 0.0
  %v66 = vadd.f32 %v64, %v65
  %v67 = vrot.slane %v66, 4
  %v68 = vadd.f32 %v66, %v67
  %v69 = vrot.slane %v68, 2
  %v70 = vadd.f32 %v68, %v69
  %v71 = vrot.slane %v70, 1
  %v72 = vadd.f32 %v70, %v71
  %v73 = vrcp.pop 64.0
  %v74 = vmul.f32 %v51, %v73
  %v75 = vmul.f32 %v72, %v73
  %v76 = vld [vmem:[%s1] sm:$0xff]
  %vm79 = vcmask 1041409
  %v80 = vsel %vm79, %v75, %v74
  %v81 = vsel %vm30, %v80, 0
  %83 = vmatprep.subr.mxu0 0.0
  %84 = vmatpush1.msra.mxu0 %v76
  %85 = vmatprep.subr.mxu0 0.0
  %86 = vmatpush1.msra.mxu0 0.0
  %87 = vmatprep.subr.mxu0 0.0
  %88 = vmatpush1.msra.mxu0 0.0
  %89 = vmatprep.subr.mxu0 0.0
  %90 = vmatpush1.msra.mxu0 0.0
  %91 = vmatprep.subr.mxu0 0.0
  %92 = vmatpush1.msra.mxu0 0.0
  %93 = vmatprep.subr.mxu0 0.0
  %94 = vmatpush1.msra.mxu0 0.0
  %95 = vmatprep.subr.mxu0 0.0
  %96 = vmatpush1.msra.mxu0 0.0
  %97 = vmatprep.subr.mxu0 0.0
  %98 = vmatpush1.msra.mxu0 0.0
  %99 = vmatprep.subr.mxu0 0.0
  %100 = vmatpush1.msra.mxu0 0.0
  %101 = vmatprep.subr.mxu0 0.0
  %102 = vmatpush1.msra.mxu0 0.0
  %103 = vmatprep.subr.mxu0 0.0
  %104 = vmatpush1.msra.mxu0 0.0
  %105 = vmatprep.subr.mxu0 0.0
  %106 = vmatpush1.msra.mxu0 0.0
  %107 = vmatprep.subr.mxu0 0.0
  %108 = vmatpush1.msra.mxu0 0.0
  %109 = vmatprep.subr.mxu0 0.0
  %110 = vmatpush1.msra.mxu0 0.0
  %111 = vmatprep.subr.mxu0 0.0
  %112 = vmatpush1.msra.mxu0 0.0
  %113 = vmatprep.subr.mxu0 0.0
  %114 = vmatpush1.msra.mxu0 0.0
  %115 = vmatprep.subr.mxu0 0.0
  %116 = vmatpush1.msra.mxu0 0.0
  %117 = vmatprep.subr.mxu0 0.0
  %118 = vmatpush1.msra.mxu0 0.0
  %119 = vmatprep.subr.mxu0 0.0
  %120 = vmatpush1.msra.mxu0 0.0
  %121 = vmatprep.subr.mxu0 0.0
  %122 = vmatpush1.msra.mxu0 0.0
  %123 = vmatprep.subr.mxu0 0.0
  %124 = vmatpush1.msra.mxu0 0.0
  %125 = vmatprep.subr.mxu0 0.0
  %126 = vmatpush1.msra.mxu0 0.0
  %127 = vmatprep.subr.mxu0 0.0
  %128 = vmatpush1.msra.mxu0 0.0
  %129 = vmatprep.subr.mxu0 0.0
  %130 = vmatpush1.msra.mxu0 0.0
  %131 = vmatprep.subr.mxu0 0.0
  %132 = vmatpush1.msra.mxu0 0.0
  %133 = vmatprep.subr.mxu0 0.0
  %134 = vmatpush1.msra.mxu0 0.0
  %135 = vmatprep.subr.mxu0 0.0
  %136 = vmatpush1.msra.mxu0 0.0
  %137 = vmatprep.subr.mxu0 0.0
  %138 = vmatpush1.msra.mxu0 0.0
  %139 = vmatprep.subr.mxu0 0.0
  %140 = vmatpush1.msra.mxu0 0.0
  %141 = vmatprep.subr.mxu0 0.0
  %142 = vmatpush1.msra.mxu0 0.0
  %143 = vmatprep.subr.mxu0 0.0
  %144 = vmatpush1.msra.mxu0 0.0
  %145 = vmatprep.subr.mxu0 0.0
  %146 = vmatpush1.msra.mxu0 0.0
  %147 = vmatprep.mubr.f32.mxu0 0.0
  %148 = vmatmul.mubr.f32.gmra.mrb[0].mxu0 %v81
  %v149 = vpop.f32.mrb[0].mxu0
  %v150 = vadd.f32 0.0, %v149
  %v151 = vpop.f32.mrb[0].mxu0
  %152 = vdwg.mxu0
  %v153 = vmax.f32 %v150, 0.0
  %v154 = vld [vmem:[%s2] sm:$0x3]
  %vm155 = vcmask 15360
  %v157 = vsel %vm155, %v153, 0
  %vm159 = vcmask 1041408
  %v161 = vsel %vm159, %v154, 0
  %163 = vmatprep.subr.mxu0 0.0
  %164 = vmatpush1.msra.mxu0 %v161
  %165 = vmatprep.subr.mxu0 0.0
  %166 = vmatpush1.msra.mxu0 0.0
  %167 = vmatprep.subr.mxu0 0.0
  %168 = vmatpush1.msra.mxu0 0.0
  %169 = vmatprep.subr.mxu0 0.0
  %170 = vmatpush1.msra.mxu0 0.0
  %171 = vmatprep.subr.mxu0 0.0
  %172 = vmatpush1.msra.mxu0 0.0
  %173 = vmatprep.subr.mxu0 0.0
  %174 = vmatpush1.msra.mxu0 0.0
  %175 = vmatprep.subr.mxu0 0.0
  %176 = vmatpush1.msra.mxu0 0.0
  %177 = vmatprep.subr.mxu0 0.0
  %178 = vmatpush1.msra.mxu0 0.0
  %179 = vmatprep.subr.mxu0 0.0
  %180 = vmatpush1.msra.mxu0 0.0
  %181 = vmatprep.subr.mxu0 0.0
  %182 = vmatpush1.msra.mxu0 0.0
  %183 = vmatprep.subr.mxu0 0.0
  %184 = vmatpush1.msra.mxu0 0.0
  %185 = vmatprep.subr.mxu0 0.0
  %186 = vmatpush1.msra.mxu0 0.0
  %187 = vmatprep.subr.mxu0 0.0
  %188 = vmatpush1.msra.mxu0 0.0
  %189 = vmatprep.subr.mxu0 0.0
  %190 = vmatpush1.msra.mxu0 0.0
  %191 = vmatprep.subr.mxu0 0.0
  %192 = vmatpush1.msra.mxu0 0.0
  %193 = vmatprep.subr.mxu0 0.0
  %194 = vmatpush1.msra.mxu0 0.0
  %195 = vmatprep.subr.mxu0 0.0
  %196 = vmatpush1.msra.mxu0 0.0
  %197 = vmatprep.subr.mxu0 0.0
  %198 = vmatpush1.msra.mxu0 0.0
  %199 = vmatprep.subr.mxu0 0.0
  %200 = vmatpush1.msra.mxu0 0.0
  %201 = vmatprep.subr.mxu0 0.0
  %202 = vmatpush1.msra.mxu0 0.0
  %203 = vmatprep.subr.mxu0 0.0
  %204 = vmatpush1.msra.mxu0 0.0
  %205 = vmatprep.subr.mxu0 0.0
  %206 = vmatpush1.msra.mxu0 0.0
  %207 = vmatprep.subr.mxu0 0.0
  %208 = vmatpush1.msra.mxu0 0.0
  %209 = vmatprep.subr.mxu0 0.0
  %210 = vmatpush1.msra.mxu0 0.0
  %211 = vmatprep.subr.mxu0 0.0
  %212 = vmatpush1.msra.mxu0 0.0
  %213 = vmatprep.subr.mxu0 0.0
  %214 = vmatpush1.msra.mxu0 0.0
  %215 = vmatprep.subr.mxu0 0.0
  %216 = vmatpush1.msra.mxu0 0.0
  %217 = vmatprep.subr.mxu0 0.0
  %218 = vmatpush1.msra.mxu0 0.0
  %219 = vmatprep.subr.mxu0 0.0
  %220 = vmatpush1.msra.mxu0 0.0
  %221 = vmatprep.subr.mxu0 0.0
  %222 = vmatpush1.msra.mxu0 0.0
  %223 = vmatprep.subr.mxu0 0.0
  %224 = vmatpush1.msra.mxu0 0.0
  %225 = vmatprep.subr.mxu0 0.0
  %226 = vmatpush1.msra.mxu0 0.0
  %227 = vmatprep.mubr.f32.mxu0 0.0
  %228 = vmatmul.mubr.f32.gmra.mrb[0].mxu0 %v157
  %v229 = vpop.f32.mrb[0].mxu0
  %v230 = vadd.f32 0.0, %v229
  %v231 = vpop.f32.mrb[0].mxu0
  %232 = vdwg.mxu0
  %v233 = vxor.u32 %v230, 2147483648
  %v234 = vmul.f32 %v233, 1.442695
  %v235 = vpow.pop %v234
  %v236 = vadd.f32 %v235, 1.0
  %v237 = vrcp.pop %v236
  %v238 = vmul.f32 1.0, %v237
  %vm239 = vcmask 58368
  %240 = vst.msk [vmem:[%s3] sm:$0x3] %vm239, %v238
  // Predicated region
  $region14: #{fluentnet_forward.77} parent=0 // pred_check
    _
  $region15: #{fluentnet_forward.77} parent=0 // pred_check_branch
    %242 = sbr.rel (0) target = $region17
  $region16: #{fluentnet_forward.77} parent=0 // pred_region
    _
  $region17: #{fluentnet_forward.77} parent=0 // pred_fallthru
    _
  // Predicated region
  $region18: #{fluentnet_forward.77} parent=0 // pred_check
    _
  $region19: #{fluentnet_forward.77} parent=0 // pred_check_branch
    %244 = sbr.rel (0) target = $region21
  $region20: #{fluentnet_forward.77} parent=0 // pred_region
    _
  $region21: #{fluentnet_forward.77} parent=0 // pred_fallthru
    _

// kernel: fluentnet_forward.78
$region0: #{fluentnet_forward.78}
  #allocation0 [shape = 'u32[]', space=smem, size = 0x4, offset = 0x4, fixed_abs, tag = 'smem constant byte address 0x4 - core index']
  #allocation1 [shape = 'u32[144,128]{1,0:T(1,128)}', space=vmem, size = 0x12000, scoped, tag = 'internal scratch']
  %s0 = inlined_call_operand.vmem [shape: f32[2,64,8], index: 0, kind: input, shape index: {}]
  %s1 = inlined_call_operand.vmem [shape: f32[2,1,8], index: 1, kind: input, shape index: {}]
  %s2 = inlined_call_operand.vmem [shape: f32[2,64,8], index: 2, kind: input, shape index: {}]
  %s3 = inlined_call_operand.vmem [shape: f32[2,64,8], index: 3, kind: output, shape index: {}]
  %s4 = sld [smem:[#allocation0]]
  $region22: #{fluentnet_forward.78} parent=0
    _
  %s6 = ssub.s32 1, %s4
  %s7 = scalar_select 0, %s6, %s4
  // Predicated region
  $region2: #{fluentnet_forward.78} parent=0 // pred_check
    _
  $region3: #{fluentnet_forward.78} parent=0 // pred_check_branch
    %9 = sbr.rel (0) target = $region5
  $region4: #{fluentnet_forward.78} parent=0 // pred_region
    _
  $region5: #{fluentnet_forward.78} parent=0 // pred_fallthru
    _
  // Predicated region
  $region6: #{fluentnet_forward.78} parent=0 // pred_check
    _
  $region7: #{fluentnet_forward.78} parent=0 // pred_check_branch
    %11 = sbr.rel (0) target = $region9
  $region8: #{fluentnet_forward.78} parent=0 // pred_region
    _
  $region9: #{fluentnet_forward.78} parent=0 // pred_fallthru
    _
  // Predicated region
  $region10: #{fluentnet_forward.78} parent=0 // pred_check
    _
  $region11: #{fluentnet_forward.78} parent=0 // pred_check_branch
    %13 = sbr.rel (0) target = $region13
  $region12: #{fluentnet_forward.78} parent=0 // pred_region
    _
  $region13: #{fluentnet_forward.78} parent=0 // pred_fallthru
    _
  %v14 = vld [vmem:[%s0] sm:$0xff]
  %v15 = vld [vmem:[%s0 + $0x8] sm:$0xff]
  %v16 = vld [vmem:[%s0 + $0x10] sm:$0xff]
  %v17 = vld [vmem:[%s0 + $0x18] sm:$0xff]
  %v18 = vld [vmem:[%s0 + $0x20] sm:$0xff]
  %v19 = vld [vmem:[%s0 + $0x28] sm:$0xff]
  %v20 = vld [vmem:[%s0 + $0x30] sm:$0xff]
  %v21 = vld [vmem:[%s0 + $0x38] sm:$0xff]
  %v22 = vld [vmem:[%s0 + $0x40] sm:$0xff]
  %v23 = vld [vmem:[%s0 + $0x48] sm:$0xff]
  %v24 = vld [vmem:[%s0 + $0x50] sm:$0xff]
  %v25 = vld [vmem:[%s0 + $0x58] sm:$0xff]
  %v26 = vld [vmem:[%s0 + $0x60] sm:$0xff]
  %v27 = vld [vmem:[%s0 + $0x68] sm:$0xff]
  %v28 = vld [vmem:[%s0 + $0x70] sm:$0xff]
  %v29 = vld [vmem:[%s0 + $0x78] sm:$0xff]
  %v30 = vld [vmem:[%s1] sm:$0x1]
  %v31 = vld [vmem:[%s1 + $0x1] sm:$0x1]
  %v34 = vlaneseq
  %v35 = vshrl.u32 %v34, 7
  %v36 = vsub.s32 0, %v35
  %v37 = vrot.slane %v30, %v36
  %v38 = vlaneseq
  %v39 = vshrl.u32 %v38, 7
  %v40 = vsub.s32 0, %v39
  %v41 = vrot.slane %v31, %v40
  %v44 = vmul.f32 %v14, %v37
  %v45 = vmul.f32 %v15, %v37
  %v46 = vmul.f32 %v16, %v37
  %v47 = vmul.f32 %v17, %v37
  %v48 = vmul.f32 %v18, %v37
  %v49 = vmul.f32 %v19, %v37
  %v50 = vmul.f32 %v20, %v37
  %v51 = vmul.f32 %v21, %v37
  %v52 = vmul.f32 %v22, %v41
  %v53 = vmul.f32 %v23, %v41
  %v54 = vmul.f32 %v24, %v41
  %v55 = vmul.f32 %v25, %v41
  %v56 = vmul.f32 %v26, %v41
  %v57 = vmul.f32 %v27, %v41
  %v58 = vmul.f32 %v28, %v41
  %v59 = vmul.f32 %v29, %v41
  %v60 = vld [vmem:[%s2] sm:$0xff]
  %v61 = vld [vmem:[%s2 + $0x8] sm:$0xff]
  %v62 = vld [vmem:[%s2 + $0x10] sm:$0xff]
  %v63 = vld [vmem:[%s2 + $0x18] sm:$0xff]
  %v64 = vld [vmem:[%s2 + $0x20] sm:$0xff]
  %v65 = vld [vmem:[%s2 + $0x28] sm:$0xff]
  %v66 = vld [vmem:[%s2 + $0x30] sm:$0xff]
  %v67 = vld [vmem:[%s2 + $0x38] sm:$0xff]
  %v68 = vld [vmem:[%s2 + $0x40] sm:$0xff]
  %v69 = vld [vmem:[%s2 + $0x48] sm:$0xff]
  %v70 = vld [vmem:[%s2 + $0x50] sm:$0xff]
  %v71 = vld [vmem:[%s2 + $0x58] sm:$0xff]
  %v72 = vld [vmem:[%s2 + $0x60] sm:$0xff]
  %v73 = vld [vmem:[%s2 + $0x68] sm:$0xff]
  %v74 = vld [vmem:[%s2 + $0x70] sm:$0xff]
  %v75 = vld [vmem:[%s2 + $0x78] sm:$0xff]
  %v76 = vadd.f32 %v44, %v60
  %v77 = vadd.f32 %v45, %v61
  %v78 = vadd.f32 %v46, %v62
  %v79 = vadd.f32 %v47, %v63
  %v80 = vadd.f32 %v48, %v64
  %v81 = vadd.f32 %v49, %v65
  %v82 = vadd.f32 %v50, %v66
  %v83 = vadd.f32 %v51, %v67
  %v84 = vadd.f32 %v52, %v68
  %v85 = vadd.f32 %v53, %v69
  %v86 = vadd.f32 %v54, %v70
  %v87 = vadd.f32 %v55, %v71
  %v88 = vadd.f32 %v56, %v72
  %v89 = vadd.f32 %v57, %v73
  %v90 = vadd.f32 %v58, %v74
  %v91 = vadd.f32 %v59, %v75
  %v92 = vmax.f32 %v76, 0.0
  %v93 = vmax.f32 %v77, 0.0
  %v94 = vmax.f32 %v78, 0.0
  %v95 = vmax.f32 %v79, 0.0
  %v96 = vmax.f32 %v80, 0.0
  %v97 = vmax.f32 %v81, 0.0
  %v98 = vmax.f32 %v82, 0.0
  %v99 = vmax.f32 %v83, 0.0
  %v100 = vmax.f32 %v84, 0.0
  %v101 = vmax.f32 %v85, 0.0
  %v102 = vmax.f32 %v86, 0.0
  %v103 = vmax.f32 %v87, 0.0
  %v104 = vmax.f32 %v88, 0.0
  %v105 = vmax.f32 %v89, 0.0
  %v106 = vmax.f32 %v90, 0.0
  %v107 = vmax.f32 %v91, 0.0
  %vm108 = vcmask 64512
  %109 = vst.msk [vmem:[%s3] sm:$0xff] %vm108, %v92
  %110 = vst.msk [vmem:[%s3 + $0x8] sm:$0xff] %vm108, %v93
  %111 = vst.msk [vmem:[%s3 + $0x10] sm:$0xff] %vm108, %v94
  %112 = vst.msk [vmem:[%s3 + $0x18] sm:$0xff] %vm108, %v95
  %113 = vst.msk [vmem:[%s3 + $0x20] sm:$0xff] %vm108, %v96
  %114 = vst.msk [vmem:[%s3 + $0x28] sm:$0xff] %vm108, %v97
  %115 = vst.msk [vmem:[%s3 + $0x30] sm:$0xff] %vm108, %v98
  %116 = vst.msk [vmem:[%s3 + $0x38] sm:$0xff] %vm108, %v99
  %117 = vst.msk [vmem:[%s3 + $0x40] sm:$0xff] %vm108, %v100
  %118 = vst.msk [vmem:[%s3 + $0x48] sm:$0xff] %vm108, %v101
  %119 = vst.msk [vmem:[%s3 + $0x50] sm:$0xff] %vm108, %v102
  %120 = vst.msk [vmem:[%s3 + $0x58] sm:$0xff] %vm108, %v103
  %121 = vst.msk [vmem:[%s3 + $0x60] sm:$0xff] %vm108, %v104
  %122 = vst.msk [vmem:[%s3 + $0x68] sm:$0xff] %vm108, %v105
  %123 = vst.msk [vmem:[%s3 + $0x70] sm:$0xff] %vm108, %v106
  %124 = vst.msk [vmem:[%s3 + $0x78] sm:$0xff] %vm108, %v107
  // Predicated region
  $region14: #{fluentnet_forward.78} parent=0 // pred_check
    _
  $region15: #{fluentnet_forward.78} parent=0 // pred_check_branch
    %126 = sbr.rel (0) target = $region17
  $region16: #{fluentnet_forward.78} parent=0 // pred_region
    _
  $region17: #{fluentnet_forward.78} parent=0 // pred_fallthru
    _
  // Predicated region
  $region18: #{fluentnet_forward.78} parent=0 // pred_check
    _
  $region19: #{fluentnet_forward.78} parent=0 // pred_check_branch
    %128 = sbr.rel (0) target = $region21
  $region20: #{fluentnet_forward.78} parent=0 // pred_region
    _
  $region21: #{fluentnet_forward.78} parent=0 // pred_fallthru
    _

// kernel: fluentnet_forward.91
$region0: #{fluentnet_forward.91}
  #allocation0 [shape = 'u32[]', space=smem, size = 0x4, offset = 0x4, fixed_abs, tag = 'smem constant byte address 0x4 - core index']
  #allocation1 [shape = 'u32[144,128]{1,0:T(1,128)}', space=vmem, size = 0x12000, scoped, tag = 'internal scratch']
  %s0 = inlined_call_operand.vmem [shape: f32[128,72], index: 0, kind: input, shape index: {}]
  %s1 = inlined_call_operand.vmem [shape: bf16[72,16], index: 1, kind: input, shape index: {}]
  %s2 = inlined_call_operand.vmem [shape: f32[1,16], index: 2, kind: input, shape index: {}]
  %s3 = inlined_call_operand.vmem [shape: f32[128,16], index: 3, kind: output, shape index: {}]
  %s4 = sld [smem:[#allocation0]]
  $region22: #{fluentnet_forward.91} parent=0
    _
  %s6 = ssub.s32 1, %s4
  %s7 = scalar_select 0, %s6, %s4
  // Predicated region
  $region2: #{fluentnet_forward.91} parent=0 // pred_check
    _
  $region3: #{fluentnet_forward.91} parent=0 // pred_check_branch
    %9 = sbr.rel (0) target = $region5
  $region4: #{fluentnet_forward.91} parent=0 // pred_region
    _
  $region5: #{fluentnet_forward.91} parent=0 // pred_fallthru
    _
  // Predicated region
  $region6: #{fluentnet_forward.91} parent=0 // pred_check
    _
  $region7: #{fluentnet_forward.91} parent=0 // pred_check_branch
    %11 = sbr.rel (0) target = $region9
  $region8: #{fluentnet_forward.91} parent=0 // pred_region
    _
  $region9: #{fluentnet_forward.91} parent=0 // pred_fallthru
    _
  // Predicated region
  $region10: #{fluentnet_forward.91} parent=0 // pred_check
    _
  $region11: #{fluentnet_forward.91} parent=0 // pred_check_branch
    %13 = sbr.rel (0) target = $region13
  $region12: #{fluentnet_forward.91} parent=0 // pred_region
    _
  $region13: #{fluentnet_forward.91} parent=0 // pred_fallthru
    _
  %v15 = vld [vmem:[%s0] sm:$0xff]
  %v16 = vld [vmem:[%s0 + $0x8] sm:$0xff]
  %v17 = vld [vmem:[%s0 + $0x10] sm:$0xff]
  %v18 = vld [vmem:[%s0 + $0x18] sm:$0xff]
  %v19 = vld [vmem:[%s0 + $0x20] sm:$0xff]
  %v20 = vld [vmem:[%s0 + $0x28] sm:$0xff]
  %v21 = vld [vmem:[%s0 + $0x30] sm:$0xff]
  %v22 = vld [vmem:[%s0 + $0x38] sm:$0xff]
  %v23 = vld [vmem:[%s0 + $0x40] sm:$0xff]
  %v24 = vld [vmem:[%s0 + $0x48] sm:$0xff]
  %v25 = vld [vmem:[%s0 + $0x50] sm:$0xff]
  %v26 = vld [vmem:[%s0 + $0x58] sm:$0xff]
  %v27 = vld [vmem:[%s0 + $0x60] sm:$0xff]
  %v28 = vld [vmem:[%s0 + $0x68] sm:$0xff]
  %v29 = vld [vmem:[%s0 + $0x70] sm:$0xff]
  %v30 = vld [vmem:[%s0 + $0x78] sm:$0xff]
  %v31 = vpack.c.bf16 %v16, %v15
  %v32 = vpack.c.bf16 %v18, %v17
  %v33 = vpack.c.bf16 %v20, %v19
  %v34 = vpack.c.bf16 %v22, %v21
  %v35 = vpack.c.bf16 %v24, %v23
  %v36 = vpack.c.bf16 %v26, %v25
  %v37 = vpack.c.bf16 %v28, %v27
  %v38 = vpack.c.bf16 %v30, %v29
  %v39 = vld [vmem:[%s1] sm:$0xf]
  %v40 = vld [vmem:[%s1 + $0x4] sm:$0xf]
  %v41 = vld [vmem:[%s1 + $0x8] sm:$0xf]
  %v42 = vld [vmem:[%s1 + $0xc] sm:$0xf]
  %v43 = vld [vmem:[%s1 + $0x10] sm:$0xf]
  %v44 = vld [vmem:[%s1 + $0x14] sm:$0xf]
  %v45 = vld [vmem:[%s1 + $0x18] sm:$0xf]
  %v46 = vld [vmem:[%s1 + $0x1c] sm:$0xf]
  %v47 = vld [vmem:[%s1 + $0x20] sm:$0xf]
  %v48 = vld [vmem:[%s2] sm:$0x1]
  %v50 = vlaneseq
  %v51 = vshrl.u32 %v50, 7
  %v52 = vsub.s32 0, %v51
  %v53 = vrot.slane %v48, %v52
  %v64 = vunpack.c.l.b16 %v39
  %v65 = vunpack.c.l.b16 %v40
  %v66 = vunpack.c.l.b16 %v41
  %v67 = vunpack.c.l.b16 %v42
  %v68 = vunpack.c.l.b16 %v43
  %v69 = vunpack.c.l.b16 %v44
  %v70 = vunpack.c.l.b16 %v45
  %v71 = vunpack.c.l.b16 %v46
  %v72 = vunpack.c.l.b16 %v47
  %v73 = vpack.c.b16 %v65, %v64
  %v74 = vpack.c.b16 %v67, %v66
  %v75 = vpack.c.b16 %v69, %v68
  %v76 = vpack.c.b16 %v71, %v70
  %v77 = vpack.c.b16 %v72, %v72
  %vm82 = vcmask 588800
  %v84 = vsel %vm82, %v31, 0
  %v87 = vsel %vm82, %v32, 0
  %v90 = vsel %vm82, %v33, 0
  %v93 = vsel %vm82, %v34, 0
  %v96 = vsel %vm82, %v35, 0
  %v99 = vsel %vm82, %v36, 0
  %v102 = vsel %vm82, %v37, 0
  %v105 = vsel %vm82, %v38, 0
  %vm107 = vcmask 1043456
  %v109 = vsel %vm107, %v77, 0
  %111 = vmatprep.subr.bf16.mxu0 0
  %112 = vmatpush1.bf16.msra.mxu0 %v73
  %113 = vmatprep.subr.bf16.mxu0 0
  %114 = vmatpush1.bf16.msra.mxu0 %v74
  %115 = vmatprep.subr.bf16.mxu0 0
  %116 = vmatpush1.bf16.msra.mxu0 %v75
  %117 = vmatprep.subr.bf16.mxu0 0
  %118 = vmatpush1.bf16.msra.mxu0 %v76
  %119 = vmatprep.subr.bf16.mxu0 0
  %120 = vmatpush1.bf16.msra.mxu0 %v109
  %121 = vmatprep.subr.bf16.mxu0 0
  %122 = vmatpush1.bf16.msra.mxu0 0
  %123 = vmatprep.subr.bf16.mxu0 0
  %124 = vmatpush1.bf16.msra.mxu0 0
  %125 = vmatprep.subr.bf16.mxu0 0
  %126 = vmatpush1.bf16.msra.mxu0 0
  %127 = vmatprep.subr.bf16.mxu0 0
  %128 = vmatpush1.bf16.msra.mxu0 0
  %129 = vmatprep.subr.bf16.mxu0 0
  %130 = vmatpush1.bf16.msra.mxu0 0
  %131 = vmatprep.subr.bf16.mxu0 0
  %132 = vmatpush1.bf16.msra.mxu0 0
  %133 = vmatprep.subr.bf16.mxu0 0
  %134 = vmatpush1.bf16.msra.mxu0 0
  %135 = vmatprep.subr.bf16.mxu0 0
  %136 = vmatpush1.bf16.msra.mxu0 0
  %137 = vmatprep.subr.bf16.mxu0 0
  %138 = vmatpush1.bf16.msra.mxu0 0
  %139 = vmatprep.subr.bf16.mxu0 0
  %140 = vmatpush1.bf16.msra.mxu0 0
  %141 = vmatprep.subr.bf16.mxu0 0
  %142 = vmatpush1.bf16.msra.mxu0 0
  %143 = vmatprep.mubr.bf16.mxu0 0
  %144 = vmatmul.mubr.bf16.gmra.mrb[0].mxu0 %v84
  %v145 = vpop.f32.mrb[0].mxu0
  %v146 = vadd.f32 %v53, %v145
  %v147 = vpop.f32.mrb[0].mxu0
  %v148 = vpop.f32.mrb[0].mxu0
  %v149 = vadd.f32 %v53, %v148
  %v150 = vpop.f32.mrb[0].mxu0
  %151 = vmatprep.mubr.bf16.mxu0 0
  %152 = vmatmul.mubr.bf16.gmra.mrb[0].mxu0 %v87
  %v153 = vpop.f32.mrb[0].mxu0
  %v154 = vadd.f32 %v53, %v153
  %v155 = vpop.f32.mrb[0].mxu0
  %v156 = vpop.f32.mrb[0].mxu0
  %v157 = vadd.f32 %v53, %v156
  %v158 = vpop.f32.mrb[0].mxu0
  %159 = vmatprep.mubr.bf16.mxu0 0
  %160 = vmatmul.mubr.bf16.gmra.mrb[0].mxu0 %v90
  %v161 = vpop.f32.mrb[0].mxu0
  %v162 = vadd.f32 %v53, %v161
  %v163 = vpop.f32.mrb[0].mxu0
  %v164 = vpop.f32.mrb[0].mxu0
  %v165 = vadd.f32 %v53, %v164
  %v166 = vpop.f32.mrb[0].mxu0
  %167 = vmatprep.mubr.bf16.mxu0 0
  %168 = vmatmul.mubr.bf16.gmra.mrb[0].mxu0 %v93
  %v169 = vpop.f32.mrb[0].mxu0
  %v170 = vadd.f32 %v53, %v169
  %v171 = vpop.f32.mrb[0].mxu0
  %v172 = vpop.f32.mrb[0].mxu0
  %v173 = vadd.f32 %v53, %v172
  %v174 = vpop.f32.mrb[0].mxu0
  %175 = vmatprep.mubr.bf16.mxu0 0
  %176 = vmatmul.mubr.bf16.gmra.mrb[0].mxu0 %v96
  %v177 = vpop.f32.mrb[0].mxu0
  %v178 = vadd.f32 %v53, %v177
  %v179 = vpop.f32.mrb[0].mxu0
  %v180 = vpop.f32.mrb[0].mxu0
  %v181 = vadd.f32 %v53, %v180
  %v182 = vpop.f32.mrb[0].mxu0
  %183 = vmatprep.mubr.bf16.mxu0 0
  %184 = vmatmul.mubr.bf16.gmra.mrb[0].mxu0 %v99
  %v185 = vpop.f32.mrb[0].mxu0
  %v186 = vadd.f32 %v53, %v185
  %v187 = vpop.f32.mrb[0].mxu0
  %v188 = vpop.f32.mrb[0].mxu0
  %v189 = vadd.f32 %v53, %v188
  %v190 = vpop.f32.mrb[0].mxu0
  %191 = vmatprep.mubr.bf16.mxu0 0
  %192 = vmatmul.mubr.bf16.gmra.mrb[0].mxu0 %v102
  %v193 = vpop.f32.mrb[0].mxu0
  %v194 = vadd.f32 %v53, %v193
  %v195 = vpop.f32.mrb[0].mxu0
  %v196 = vpop.f32.mrb[0].mxu0
  %v197 = vadd.f32 %v53, %v196
  %v198 = vpop.f32.mrb[0].mxu0
  %199 = vmatprep.mubr.bf16.mxu0 0
  %200 = vmatmul.mubr.bf16.gmra.mrb[0].mxu0 %v105
  %v201 = vpop.f32.mrb[0].mxu0
  %v202 = vadd.f32 %v53, %v201
  %v203 = vpop.f32.mrb[0].mxu0
  %v204 = vpop.f32.mrb[0].mxu0
  %v205 = vadd.f32 %v53, %v204
  %v206 = vpop.f32.mrb[0].mxu0
  %207 = vdwg.mxu0
  %v208 = vmax.f32 %v146, 0.0
  %v209 = vmax.f32 %v149, 0.0
  %v210 = vmax.f32 %v154, 0.0
  %v211 = vmax.f32 %v157, 0.0
  %v212 = vmax.f32 %v162, 0.0
  %v213 = vmax.f32 %v165, 0.0
  %v214 = vmax.f32 %v170, 0.0
  %v215 = vmax.f32 %v173, 0.0
  %v216 = vmax.f32 %v178, 0.0
  %v217 = vmax.f32 %v181, 0.0
  %v218 = vmax.f32 %v186, 0.0
  %v219 = vmax.f32 %v189, 0.0
  %v220 = vmax.f32 %v194, 0.0
  %v221 = vmax.f32 %v197, 0.0
  %v222 = vmax.f32 %v202, 0.0
  %v223 = vmax.f32 %v205, 0.0
  %vm224 = vcmask 130048
  %225 = vst.msk [vmem:[%s3] sm:$0xff] %vm224, %v208
  %226 = vst.msk [vmem:[%s3 + $0x8] sm:$0xff] %vm224, %v209
  %227 = vst.msk [vmem:[%s3 + $0x10] sm:$0xff] %vm224, %v210
  %228 = vst.msk [vmem:[%s3 + $0x18] sm:$0xff] %vm224, %v211
  %229 = vst.msk [vmem:[%s3 + $0x20] sm:$0xff] %vm224, %v212
  %230 = vst.msk [vmem:[%s3 + $0x28] sm:$0xff] %vm224, %v213
  %231 = vst.msk [vmem:[%s3 + $0x30] sm:$0xff] %vm224, %v214
  %232 = vst.msk [vmem:[%s3 + $0x38] sm:$0xff] %vm224, %v215
  %233 = vst.msk [vmem:[%s3 + $0x40] sm:$0xff] %vm224, %v216
  %234 = vst.msk [vmem:[%s3 + $0x48] sm:$0xff] %vm224, %v217
  %235 = vst.msk [vmem:[%s3 + $0x50] sm:$0xff] %vm224, %v218
  %236 = vst.msk [vmem:[%s3 + $0x58] sm:$0xff] %vm224, %v219
  %237 = vst.msk [vmem:[%s3 + $0x60] sm:$0xff] %vm224, %v220
  %238 = vst.msk [vmem:[%s3 + $0x68] sm:$0xff] %vm224, %v221
  %239 = vst.msk [vmem:[%s3 + $0x70] sm:$0xff] %vm224, %v222
  %240 = vst.msk [vmem:[%s3 + $0x78] sm:$0xff] %vm224, %v223
  // Predicated region
  $region14: #{fluentnet_forward.91} parent=0 // pred_check
    _
  $region15: #{fluentnet_forward.91} parent=0 // pred_check_branch
    %242 = sbr.rel (0) target = $region17
  $region16: #{fluentnet_forward.91} parent=0 // pred_region
    _
  $region17: #{fluentnet_forward.91} parent=0 // pred_fallthru
    _
  // Predicated region
  $region18: #{fluentnet_forward.91} parent=0 // pred_check
    _
  $region19: #{fluentnet_forward.91} parent=0 // pred_check_branch
    %244 = sbr.rel (0) target = $region21
  $region20: #{fluentnet_forward.91} parent=0 // pred_region
    _
  $region21: #{fluentnet_forward.91} parent=0 // pred_fallthru
    _

// kernel: fluentnet_forward.92
$region0: #{fluentnet_forward.92}
  #allocation0 [shape = 'u32[]', space=smem, size = 0x4, offset = 0x4, fixed_abs, tag = 'smem constant byte address 0x4 - core index']
  #allocation1 [shape = 'u32[144,128]{1,0:T(1,128)}', space=vmem, size = 0x12000, scoped, tag = 'internal scratch']
  %s0 = inlined_call_operand.vmem [shape: f32[128,144], index: 0, kind: input, shape index: {}]
  %s1 = inlined_call_operand.vmem [shape: bf16[144,16], index: 1, kind: input, shape index: {}]
  %s2 = inlined_call_operand.vmem [shape: f32[1,16], index: 2, kind: input, shape index: {}]
  %s3 = inlined_call_operand.vmem [shape: f32[128,16], index: 3, kind: output, shape index: {}]
  %s4 = sld [smem:[#allocation0]]
  $region22: #{fluentnet_forward.92} parent=0
    _
  %s6 = ssub.s32 1, %s4
  %s7 = scalar_select 0, %s6, %s4
  // Predicated region
  $region2: #{fluentnet_forward.92} parent=0 // pred_check
    _
  $region3: #{fluentnet_forward.92} parent=0 // pred_check_branch
    %9 = sbr.rel (0) target = $region5
  $region4: #{fluentnet_forward.92} parent=0 // pred_region
    _
  $region5: #{fluentnet_forward.92} parent=0 // pred_fallthru
    _
  // Predicated region
  $region6: #{fluentnet_forward.92} parent=0 // pred_check
    _
  $region7: #{fluentnet_forward.92} parent=0 // pred_check_branch
    %11 = sbr.rel (0) target = $region9
  $region8: #{fluentnet_forward.92} parent=0 // pred_region
    _
  $region9: #{fluentnet_forward.92} parent=0 // pred_fallthru
    _
  // Predicated region
  $region10: #{fluentnet_forward.92} parent=0 // pred_check
    _
  $region11: #{fluentnet_forward.92} parent=0 // pred_check_branch
    %13 = sbr.rel (0) target = $region13
  $region12: #{fluentnet_forward.92} parent=0 // pred_region
    _
  $region13: #{fluentnet_forward.92} parent=0 // pred_fallthru
    _
  %v15 = vld [vmem:[%s0] sm:$0xff]
  %v16 = vld [vmem:[%s0 + $0x8] sm:$0xff]
  %v17 = vld [vmem:[%s0 + $0x10] sm:$0xff]
  %v18 = vld [vmem:[%s0 + $0x18] sm:$0xff]
  %v19 = vld [vmem:[%s0 + $0x20] sm:$0xff]
  %v20 = vld [vmem:[%s0 + $0x28] sm:$0xff]
  %v21 = vld [vmem:[%s0 + $0x30] sm:$0xff]
  %v22 = vld [vmem:[%s0 + $0x38] sm:$0xff]
  %v23 = vld [vmem:[%s0 + $0x40] sm:$0xff]
  %v24 = vld [vmem:[%s0 + $0x48] sm:$0xff]
  %v25 = vld [vmem:[%s0 + $0x50] sm:$0xff]
  %v26 = vld [vmem:[%s0 + $0x58] sm:$0xff]
  %v27 = vld [vmem:[%s0 + $0x60] sm:$0xff]
  %v28 = vld [vmem:[%s0 + $0x68] sm:$0xff]
  %v29 = vld [vmem:[%s0 + $0x70] sm:$0xff]
  %v30 = vld [vmem:[%s0 + $0x78] sm:$0xff]
  %v31 = vld [vmem:[%s0 + $0x80] sm:$0xff]
  %v32 = vld [vmem:[%s0 + $0x88] sm:$0xff]
  %v33 = vld [vmem:[%s0 + $0x90] sm:$0xff]
  %v34 = vld [vmem:[%s0 + $0x98] sm:$0xff]
  %v35 = vld [vmem:[%s0 + $0xa0] sm:$0xff]
  %v36 = vld [vmem:[%s0 + $0xa8] sm:$0xff]
  %v37 = vld [vmem:[%s0 + $0xb0] sm:$0xff]
  %v38 = vld [vmem:[%s0 + $0xb8] sm:$0xff]
  %v39 = vld [vmem:[%s0 + $0xc0] sm:$0xff]
  %v40 = vld [vmem:[%s0 + $0xc8] sm:$0xff]
  %v41 = vld [vmem:[%s0 + $0xd0] sm:$0xff]
  %v42 = vld [vmem:[%s0 + $0xd8] sm:$0xff]
  %v43 = vld [vmem:[%s0 + $0xe0] sm:$0xff]
  %v44 = vld [vmem:[%s0 + $0xe8] sm:$0xff]
  %v45 = vld [vmem:[%s0 + $0xf0] sm:$0xff]
  %v46 = vld [vmem:[%s0 + $0xf8] sm:$0xff]
  %v47 = vpack.c.bf16 %v17, %v15
  %v48 = vpack.c.bf16 %v18, %v16
  %v49 = vpack.c.bf16 %v21, %v19
  %v50 = vpack.c.bf16 %v22, %v20
  %v51 = vpack.c.bf16 %v25, %v23
  %v52 = vpack.c.bf16 %v26, %v24
  %v53 = vpack.c.bf16 %v29, %v27
  %v54 = vpack.c.bf16 %v30, %v28
  %v55 = vpack.c.bf16 %v33, %v31
  %v56 = vpack.c.bf16 %v34, %v32
  %v57 = vpack.c.bf16 %v37, %v35
  %v58 = vpack.c.bf16 %v38, %v36
  %v59 = vpack.c.bf16 %v41, %v39
  %v60 = vpack.c.bf16 %v42, %v40
  %v61 = vpack.c.bf16 %v45, %v43
  %v62 = vpack.c.bf16 %v46, %v44
  %v63 = vld [vmem:[%s1] sm:$0xf]
  %v64 = vld [vmem:[%s1 + $0x4] sm:$0xf]
  %v65 = vld [vmem:[%s1 + $0x8] sm:$0xf]
  %v66 = vld [vmem:[%s1 + $0xc] sm:$0xf]
  %v67 = vld [vmem:[%s1 + $0x10] sm:$0xf]
  %v68 = vld [vmem:[%s1 + $0x14] sm:$0xf]
  %v69 = vld [vmem:[%s1 + $0x18] sm:$0xf]
  %v70 = vld [vmem:[%s1 + $0x1c] sm:$0xf]
  %v71 = vld [vmem:[%s1 + $0x20] sm:$0xf]
  %v72 = vld [vmem:[%s1 + $0x24] sm:$0xf]
  %v73 = vld [vmem:[%s1 + $0x28] sm:$0xf]
  %v74 = vld [vmem:[%s1 + $0x2c] sm:$0xf]
  %v75 = vld [vmem:[%s1 + $0x30] sm:$0xf]
  %v76 = vld [vmem:[%s1 + $0x34] sm:$0xf]
  %v77 = vld [vmem:[%s1 + $0x38] sm:$0xf]
  %v78 = vld [vmem:[%s1 + $0x3c] sm:$0xf]
  %v79 = vld [vmem:[%s1 + $0x40] sm:$0xf]
  %v80 = vld [vmem:[%s1 + $0x44] sm:$0xf]
  %v81 = vld [vmem:[%s2] sm:$0x1]
  %v83 = vlaneseq
  %v84 = vshrl.u32 %v83, 7
  %v85 = vsub.s32 0, %v84
  %v86 = vrot.slane %v81, %v85
  %v106 = vunpack.c.l.b16 %v63
  %v107 = vunpack.c.l.b16 %v64
  %v108 = vunpack.c.l.b16 %v65
  %v109 = vunpack.c.l.b16 %v66
  %v110 = vunpack.c.l.b16 %v67
  %v111 = vunpack.c.l.b16 %v68
  %v112 = vunpack.c.l.b16 %v69
  %v113 = vunpack.c.l.b16 %v70
  %v114 = vunpack.c.l.b16 %v71
  %v115 = vunpack.c.l.b16 %v72
  %v116 = vunpack.c.l.b16 %v73
  %v117 = vunpack.c.l.b16 %v74
  %v118 = vunpack.c.l.b16 %v75
  %v119 = vunpack.c.l.b16 %v76
  %v120 = vunpack.c.l.b16 %v77
  %v121 = vunpack.c.l.b16 %v78
  %v122 = vunpack.c.l.b16 %v79
  %v123 = vunpack.c.l.b16 %v80
  %v124 = vpack.c.b16 %v107, %v106
  %v125 = vpack.c.b16 %v109, %v108
  %v126 = vpack.c.b16 %v111, %v110
  %v127 = vpack.c.b16 %v113, %v112
  %v128 = vpack.c.b16 %v115, %v114
  %v129 = vpack.c.b16 %v117, %v116
  %v130 = vpack.c.b16 %v119, %v118
  %v131 = vpack.c.b16 %v121, %v120
  %v132 = vpack.c.b16 %v123, %v122
  %vm142 = vcmask 130048
  %v144 = vsel %vm142, %v48, 0
  %v147 = vsel %vm142, %v50, 0
  %v150 = vsel %vm142, %v52, 0
  %v153 = vsel %vm142, %v54, 0
  %v156 = vsel %vm142, %v56, 0
  %v159 = vsel %vm142, %v58, 0
  %v162 = vsel %vm142, %v60, 0
  %v165 = vsel %vm142, %v62, 0
  %167 = vmatprep.subr.bf16.mxu0 0
  %168 = vmatpush1.bf16.msra.mxu0 %v124
  %169 = vmatprep.subr.bf16.mxu0 0
  %170 = vmatpush1.bf16.msra.mxu0 %v125
  %171 = vmatprep.subr.bf16.mxu0 0
  %172 = vmatpush1.bf16.msra.mxu0 %v126
  %173 = vmatprep.subr.bf16.mxu0 0
  %174 = vmatpush1.bf16.msra.mxu0 %v127
  %175 = vmatprep.subr.bf16.mxu0 0
  %176 = vmatpush1.bf16.msra.mxu0 %v128
  %177 = vmatprep.subr.bf16.mxu0 0
  %178 = vmatpush1.bf16.msra.mxu0 %v129
  %179 = vmatprep.subr.bf16.mxu0 0
  %180 = vmatpush1.bf16.msra.mxu0 %v130
  %181 = vmatprep.subr.bf16.mxu0 0
  %182 = vmatpush1.bf16.msra.mxu0 %v131
  %183 = vmatprep.subr.bf16.mxu0 0
  %184 = vmatpush1.bf16.msra.mxu0 %v132
  %185 = vmatprep.subr.bf16.mxu0 0
  %186 = vmatpush1.bf16.msra.mxu0 0
  %187 = vmatprep.subr.bf16.mxu0 0
  %188 = vmatpush1.bf16.msra.mxu0 0
  %189 = vmatprep.subr.bf16.mxu0 0
  %190 = vmatpush1.bf16.msra.mxu0 0
  %191 = vmatprep.subr.bf16.mxu0 0
  %192 = vmatpush1.bf16.msra.mxu0 0
  %193 = vmatprep.subr.bf16.mxu0 0
  %194 = vmatpush1.bf16.msra.mxu0 0
  %195 = vmatprep.subr.bf16.mxu0 0
  %196 = vmatpush1.bf16.msra.mxu0 0
  %197 = vmatprep.subr.bf16.mxu0 0
  %198 = vmatpush1.bf16.msra.mxu0 0
  %199 = vmatprep.mubr.bf16.mxu0 %v144
  %200 = vmatmul.mubr.bf16.gmra.mrb[0].mxu0 %v47
  %v201 = vpop.f32.mrb[0].mxu0
  %v202 = vadd.f32 %v86, %v201
  %v203 = vpop.f32.mrb[0].mxu0
  %v204 = vpop.f32.mrb[0].mxu0
  %v205 = vadd.f32 %v86, %v204
  %v206 = vpop.f32.mrb[0].mxu0
  %207 = vmatprep.mubr.bf16.mxu0 %v147
  %208 = vmatmul.mubr.bf16.gmra.mrb[0].mxu0 %v49
  %v209 = vpop.f32.mrb[0].mxu0
  %v210 = vadd.f32 %v86, %v209
  %v211 = vpop.f32.mrb[0].mxu0
  %v212 = vpop.f32.mrb[0].mxu0
  %v213 = vadd.f32 %v86, %v212
  %v214 = vpop.f32.mrb[0].mxu0
  %215 = vmatprep.mubr.bf16.mxu0 %v150
  %216 = vmatmul.mubr.bf16.gmra.mrb[0].mxu0 %v51
  %v217 = vpop.f32.mrb[0].mxu0
  %v218 = vadd.f32 %v86, %v217
  %v219 = vpop.f32.mrb[0].mxu0
  %v220 = vpop.f32.mrb[0].mxu0
  %v221 = vadd.f32 %v86, %v220
  %v222 = vpop.f32.mrb[0].mxu0
  %223 = vmatprep.mubr.bf16.mxu0 %v153
  %224 = vmatmul.mubr.bf16.gmra.mrb[0].mxu0 %v53
  %v225 = vpop.f32.mrb[0].mxu0
  %v226 = vadd.f32 %v86, %v225
  %v227 = vpop.f32.mrb[0].mxu0
  %v228 = vpop.f32.mrb[0].mxu0
  %v229 = vadd.f32 %v86, %v228
  %v230 = vpop.f32.mrb[0].mxu0
  %231 = vmatprep.mubr.bf16.mxu0 %v156
  %232 = vmatmul.mubr.bf16.gmra.mrb[0].mxu0 %v55
  %v233 = vpop.f32.mrb[0].mxu0
  %v234 = vadd.f32 %v86, %v233
  %v235 = vpop.f32.mrb[0].mxu0
  %v236 = vpop.f32.mrb[0].mxu0
  %v237 = vadd.f32 %v86, %v236
  %v238 = vpop.f32.mrb[0].mxu0
  %239 = vmatprep.mubr.bf16.mxu0 %v159
  %240 = vmatmul.mubr.bf16.gmra.mrb[0].mxu0 %v57
  %v241 = vpop.f32.mrb[0].mxu0
  %v242 = vadd.f32 %v86, %v241
  %v243 = vpop.f32.mrb[0].mxu0
  %v244 = vpop.f32.mrb[0].mxu0
  %v245 = vadd.f32 %v86, %v244
  %v246 = vpop.f32.mrb[0].mxu0
  %247 = vmatprep.mubr.bf16.mxu0 %v162
  %248 = vmatmul.mubr.bf16.gmra.mrb[0].mxu0 %v59
  %v249 = vpop.f32.mrb[0].mxu0
  %v250 = vadd.f32 %v86, %v249
  %v251 = vpop.f32.mrb[0].mxu0
  %v252 = vpop.f32.mrb[0].mxu0
  %v253 = vadd.f32 %v86, %v252
  %v254 = vpop.f32.mrb[0].mxu0
  %255 = vmatprep.mubr.bf16.mxu0 %v165
  %256 = vmatmul.mubr.bf16.gmra.mrb[0].mxu0 %v61
  %v257 = vpop.f32.mrb[0].mxu0
  %v258 = vadd.f32 %v86, %v257
  %v259 = vpop.f32.mrb[0].mxu0
  %v260 = vpop.f32.mrb[0].mxu0
  %v261 = vadd.f32 %v86, %v260
  %v262 = vpop.f32.mrb[0].mxu0
  %263 = vdwg.mxu0
  %264 = vst.msk [vmem:[%s3] sm:$0xff] %vm142, %v202
  %265 = vst.msk [vmem:[%s3 + $0x8] sm:$0xff] %vm142, %v205
  %266 = vst.msk [vmem:[%s3 + $0x10] sm:$0xff] %vm142, %v210
  %267 = vst.msk [vmem:[%s3 + $0x18] sm:$0xff] %vm142, %v213
  %268 = vst.msk [vmem:[%s3 + $0x20] sm:$0xff] %vm142, %v218
  %269 = vst.msk [vmem:[%s3 + $0x28] sm:$0xff] %vm142, %v221
  %270 = vst.msk [vmem:[%s3 + $0x30] sm:$0xff] %vm142, %v226
  %271 = vst.msk [vmem:[%s3 + $0x38] sm:$0xff] %vm142, %v229
  %272 = vst.msk [vmem:[%s3 + $0x40] sm:$0xff] %vm142, %v234
  %273 = vst.msk [vmem:[%s3 + $0x48] sm:$0xff] %vm142, %v237
  %274 = vst.msk [vmem:[%s3 + $0x50] sm:$0xff] %vm142, %v242
  %275 = vst.msk [vmem:[%s3 + $0x58] sm:$0xff] %vm142, %v245
  %276 = vst.msk [vmem:[%s3 + $0x60] sm:$0xff] %vm142, %v250
  %277 = vst.msk [vmem:[%s3 + $0x68] sm:$0xff] %vm142, %v253
  %278 = vst.msk [vmem:[%s3 + $0x70] sm:$0xff] %vm142, %v258
  %279 = vst.msk [vmem:[%s3 + $0x78] sm:$0xff] %vm142, %v261
  // Predicated region
  $region14: #{fluentnet_forward.92} parent=0 // pred_check
    _
  $region15: #{fluentnet_forward.92} parent=0 // pred_check_branch
    %281 = sbr.rel (0) target = $region17
  $region16: #{fluentnet_forward.92} parent=0 // pred_region
    _
  $region17: #{fluentnet_forward.92} parent=0 // pred_fallthru
    _
  // Predicated region
  $region18: #{fluentnet_forward.92} parent=0 // pred_check
    _
  $region19: #{fluentnet_forward.92} parent=0 // pred_check_branch
    %283 = sbr.rel (0) target = $region21
  $region20: #{fluentnet_forward.92} parent=0 // pred_region
    _
  $region21: #{fluentnet_forward.92} parent=0 // pred_fallthru
    _

// kernel: fluentnet_forward.94
$region0: #{fluentnet_forward.94}
  #allocation0 [shape = 'u32[]', space=smem, size = 0x4, offset = 0x4, fixed_abs, tag = 'smem constant byte address 0x4 - core index']
  #allocation1 [shape = 'u32[144,128]{1,0:T(1,128)}', space=vmem, size = 0x12000, scoped, tag = 'internal scratch']
  %s0 = inlined_call_operand.vmem [shape: f32[2,64,16], index: 0, kind: input, shape index: {}]
  %s1 = inlined_call_operand.vmem [shape: f32[16,4], index: 1, kind: input, shape index: {}]
  %s2 = inlined_call_operand.vmem [shape: f32[4,16], index: 2, kind: input, shape index: {}]
  %s3 = inlined_call_operand.vmem [shape: f32[2,16], index: 3, kind: output, shape index: {}]
  %s4 = sld [smem:[#allocation0]]
  $region22: #{fluentnet_forward.94} parent=0
    _
  %s6 = ssub.s32 1, %s4
  %s7 = scalar_select 0, %s6, %s4
  // Predicated region
  $region2: #{fluentnet_forward.94} parent=0 // pred_check
    _
  $region3: #{fluentnet_forward.94} parent=0 // pred_check_branch
    %9 = sbr.rel (0) target = $region5
  $region4: #{fluentnet_forward.94} parent=0 // pred_region
    _
  $region5: #{fluentnet_forward.94} parent=0 // pred_fallthru
    _
  // Predicated region
  $region6: #{fluentnet_forward.94} parent=0 // pred_check
    _
  $region7: #{fluentnet_forward.94} parent=0 // pred_check_branch
    %11 = sbr.rel (0) target = $region9
  $region8: #{fluentnet_forward.94} parent=0 // pred_region
    _
  $region9: #{fluentnet_forward.94} parent=0 // pred_fallthru
    _
  // Predicated region
  $region10: #{fluentnet_forward.94} parent=0 // pred_check
    _
  $region11: #{fluentnet_forward.94} parent=0 // pred_check_branch
    %13 = sbr.rel (0) target = $region13
  $region12: #{fluentnet_forward.94} parent=0 // pred_region
    _
  $region13: #{fluentnet_forward.94} parent=0 // pred_fallthru
    _
  %v14 = vld [vmem:[%s0] sm:$0xff]
  %v15 = vld [vmem:[%s0 + $0x8] sm:$0xff]
  %v16 = vld [vmem:[%s0 + $0x10] sm:$0xff]
  %v17 = vld [vmem:[%s0 + $0x18] sm:$0xff]
  %v18 = vld [vmem:[%s0 + $0x20] sm:$0xff]
  %v19 = vld [vmem:[%s0 + $0x28] sm:$0xff]
  %v20 = vld [vmem:[%s0 + $0x30] sm:$0xff]
  %v21 = vld [vmem:[%s0 + $0x38] sm:$0xff]
  %v22 = vld [vmem:[%s0 + $0x40] sm:$0xff]
  %v23 = vld [vmem:[%s0 + $0x48] sm:$0xff]
  %v24 = vld [vmem:[%s0 + $0x50] sm:$0xff]
  %v25 = vld [vmem:[%s0 + $0x58] sm:$0xff]
  %v26 = vld [vmem:[%s0 + $0x60] sm:$0xff]
  %v27 = vld [vmem:[%s0 + $0x68] sm:$0xff]
  %v28 = vld [vmem:[%s0 + $0x70] sm:$0xff]
  %v29 = vld [vmem:[%s0 + $0x78] sm:$0xff]
  %vm30 = vcmask 130048
  %v31 = vsel %vm30, %v14, 0.0
  %v32 = vsel %vm30, %v15, 0.0
  %v33 = vadd.f32 %v31, %v32
  %v34 = vsel %vm30, %v16, 0.0
  %v35 = vadd.f32 %v33, %v34
  %v36 = vsel %vm30, %v17, 0.0
  %v37 = vadd.f32 %v35, %v36
  %v38 = vsel %vm30, %v18, 0.0
  %v39 = vadd.f32 %v37, %v38
  %v40 = vsel %vm30, %v19, 0.0
  %v41 = vadd.f32 %v39, %v40
  %v42 = vsel %vm30, %v20, 0.0
  %v43 = vadd.f32 %v41, %v42
  %v44 = vsel %vm30, %v21, 0.0
  %v45 = vadd.f32 %v43, %v44
  %v46 = vrot.slane %v45, 4
  %v47 = vadd.f32 %v45, %v46
  %v48 = vrot.slane %v47, 2
  %v49 = vadd.f32 %v47, %v48
  %v50 = vrot.slane %v49, 1
  %v51 = vadd.f32 %v49, %v50
  %v52 = vsel %vm30, %v22, 0.0
  %v53 = vsel %vm30, %v23, 0.0
  %v54 = vadd.f32 %v52, %v53
  %v55 = vsel %vm30, %v24, 0.0
  %v56 = vadd.f32 %v54, %v55
  %v57 = vsel %vm30, %v25, 0.0
  %v58 = vadd.f32 %v56, %v57
  %v59 = vsel %vm30, %v26, 0.0
  %v60 = vadd.f32 %v58, %v59
  %v61 = vsel %vm30, %v27, 0.0
  %v62 = vadd.f32 %v60, %v61
  %v63 = vsel %vm30, %v28, 0.0
  %v64 = vadd.f32 %v62, %v63
  %v65 = vsel %vm30, %v29, 0.0
  %v66 = vadd.f32 %v64, %v65
  %v67 = vrot.slane %v66, 4
  %v68 = vadd.f32 %v66, %v67
  %v69 = vrot.slane %v68, 2
  %v70 = vadd.f32 %v68, %v69
  %v71 = vrot.slane %v70, 1
  %v72 = vadd.f32 %v70, %v71
  %v73 = vrcp.pop 64.0
  %v74 = vmul.f32 %v51, %v73
  %v75 = vmul.f32 %v72, %v73
  %v76 = vld [vmem:[%s1] sm:$0xff]
  %v77 = vld [vmem:[%s1 + $0x8] sm:$0xff]
  %vm80 = vcmask 1041409
  %v81 = vsel %vm80, %v75, %v74
  %v82 = vsel %vm30, %v81, 0
  %84 = vmatprep.subr.mxu0 0.0
  %85 = vmatpush1.msra.mxu0 %v76
  %86 = vmatprep.subr.mxu0 0.0
  %87 = vmatpush1.msra.mxu0 %v77
  %88 = vmatprep.subr.mxu0 0.0
  %89 = vmatpush1.msra.mxu0 0.0
  %90 = vmatprep.subr.mxu0 0.0
  %91 = vmatpush1.msra.mxu0 0.0
  %92 = vmatprep.subr.mxu0 0.0
  %93 = vmatpush1.msra.mxu0 0.0
  %94 = vmatprep.subr.mxu0 0.0
  %95 = vmatpush1.msra.mxu0 0.0
  %96 = vmatprep.subr.mxu0 0.0
  %97 = vmatpush1.msra.mxu0 0.0
  %98 = vmatprep.subr.mxu0 0.0
  %99 = vmatpush1.msra.mxu0 0.0
  %100 = vmatprep.subr.mxu0 0.0
  %101 = vmatpush1.msra.mxu0 0.0
  %102 = vmatprep.subr.mxu0 0.0
  %103 = vmatpush1.msra.mxu0 0.0
  %104 = vmatprep.subr.mxu0 0.0
  %105 = vmatpush1.msra.mxu0 0.0
  %106 = vmatprep.subr.mxu0 0.0
  %107 = vmatpush1.msra.mxu0 0.0
  %108 = vmatprep.subr.mxu0 0.0
  %109 = vmatpush1.msra.mxu0 0.0
  %110 = vmatprep.subr.mxu0 0.0
  %111 = vmatpush1.msra.mxu0 0.0
  %112 = vmatprep.subr.mxu0 0.0
  %113 = vmatpush1.msra.mxu0 0.0
  %114 = vmatprep.subr.mxu0 0.0
  %115 = vmatpush1.msra.mxu0 0.0
  %116 = vmatprep.subr.mxu0 0.0
  %117 = vmatpush1.msra.mxu0 0.0
  %118 = vmatprep.subr.mxu0 0.0
  %119 = vmatpush1.msra.mxu0 0.0
  %120 = vmatprep.subr.mxu0 0.0
  %121 = vmatpush1.msra.mxu0 0.0
  %122 = vmatprep.subr.mxu0 0.0
  %123 = vmatpush1.msra.mxu0 0.0
  %124 = vmatprep.subr.mxu0 0.0
  %125 = vmatpush1.msra.mxu0 0.0
  %126 = vmatprep.subr.mxu0 0.0
  %127 = vmatpush1.msra.mxu0 0.0
  %128 = vmatprep.subr.mxu0 0.0
  %129 = vmatpush1.msra.mxu0 0.0
  %130 = vmatprep.subr.mxu0 0.0
  %131 = vmatpush1.msra.mxu0 0.0
  %132 = vmatprep.subr.mxu0 0.0
  %133 = vmatpush1.msra.mxu0 0.0
  %134 = vmatprep.subr.mxu0 0.0
  %135 = vmatpush1.msra.mxu0 0.0
  %136 = vmatprep.subr.mxu0 0.0
  %137 = vmatpush1.msra.mxu0 0.0
  %138 = vmatprep.subr.mxu0 0.0
  %139 = vmatpush1.msra.mxu0 0.0
  %140 = vmatprep.subr.mxu0 0.0
  %141 = vmatpush1.msra.mxu0 0.0
  %142 = vmatprep.subr.mxu0 0.0
  %143 = vmatpush1.msra.mxu0 0.0
  %144 = vmatprep.subr.mxu0 0.0
  %145 = vmatpush1.msra.mxu0 0.0
  %146 = vmatprep.subr.mxu0 0.0
  %147 = vmatpush1.msra.mxu0 0.0
  %148 = vmatprep.mubr.f32.mxu0 0.0
  %149 = vmatmul.mubr.f32.gmra.mrb[0].mxu0 %v82
  %v150 = vpop.f32.mrb[0].mxu0
  %v151 = vadd.f32 0.0, %v150
  %v152 = vpop.f32.mrb[0].mxu0
  %153 = vdwg.mxu0
  %v154 = vmax.f32 %v151, 0.0
  %v155 = vld [vmem:[%s2] sm:$0xf]
  %vm156 = vcmask 31744
  %v158 = vsel %vm156, %v154, 0
  %vm160 = vcmask 1043456
  %v162 = vsel %vm160, %v155, 0
  %164 = vmatprep.subr.mxu0 0.0
  %165 = vmatpush1.msra.mxu0 %v162
  %166 = vmatprep.subr.mxu0 0.0
  %167 = vmatpush1.msra.mxu0 0.0
  %168 = vmatprep.subr.mxu0 0.0
  %169 = vmatpush1.msra.mxu0 0.0
  %170 = vmatprep.subr.mxu0 0.0
  %171 = vmatpush1.msra.mxu0 0.0
  %172 = vmatprep.subr.mxu0 0.0
  %173 = vmatpush1.msra.mxu0 0.0
  %174 = vmatprep.subr.mxu0 0.0
  %175 = vmatpush1.msra.mxu0 0.0
  %176 = vmatprep.subr.mxu0 0.0
  %177 = vmatpush1.msra.mxu0 0.0
  %178 = vmatprep.subr.mxu0 0.0
  %179 = vmatpush1.msra.mxu0 0.0
  %180 = vmatprep.subr.mxu0 0.0
  %181 = vmatpush1.msra.mxu0 0.0
  %182 = vmatprep.subr.mxu0 0.0
  %183 = vmatpush1.msra.mxu0 0.0
  %184 = vmatprep.subr.mxu0 0.0
  %185 = vmatpush1.msra.mxu0 0.0
  %186 = vmatprep.subr.mxu0 0.0
  %187 = vmatpush1.msra.mxu0 0.0
  %188 = vmatprep.subr.mxu0 0.0
  %189 = vmatpush1.msra.mxu0 0.0
  %190 = vmatprep.subr.mxu0 0.0
  %191 = vmatpush1.msra.mxu0 0.0
  %192 = vmatprep.subr.mxu0 0.0
  %193 = vmatpush1.msra.mxu0 0.0
  %194 = vmatprep.subr.mxu0 0.0
  %195 = vmatpush1.msra.mxu0 0.0
  %196 = vmatprep.subr.mxu0 0.0
  %197 = vmatpush1.msra.mxu0 0.0
  %198 = vmatprep.subr.mxu0 0.0
  %199 = vmatpush1.msra.mxu0 0.0
  %200 = vmatprep.subr.mxu0 0.0
  %201 = vmatpush1.msra.mxu0 0.0
  %202 = vmatprep.subr.mxu0 0.0
  %203 = vmatpush1.msra.mxu0 0.0
  %204 = vmatprep.subr.mxu0 0.0
  %205 = vmatpush1.msra.mxu0 0.0
  %206 = vmatprep.subr.mxu0 0.0
  %207 = vmatpush1.msra.mxu0 0.0
  %208 = vmatprep.subr.mxu0 0.0
  %209 = vmatpush1.msra.mxu0 0.0
  %210 = vmatprep.subr.mxu0 0.0
  %211 = vmatpush1.msra.mxu0 0.0
  %212 = vmatprep.subr.mxu0 0.0
  %213 = vmatpush1.msra.mxu0 0.0
  %214 = vmatprep.subr.mxu0 0.0
  %215 = vmatpush1.msra.mxu0 0.0
  %216 = vmatprep.subr.mxu0 0.0
  %217 = vmatpush1.msra.mxu0 0.0
  %218 = vmatprep.subr.mxu0 0.0
  %219 = vmatpush1.msra.mxu0 0.0
  %220 = vmatprep.subr.mxu0 0.0
  %221 = vmatpush1.msra.mxu0 0.0
  %222 = vmatprep.subr.mxu0 0.0
  %223 = vmatpush1.msra.mxu0 0.0
  %224 = vmatprep.subr.mxu0 0.0
  %225 = vmatpush1.msra.mxu0 0.0
  %226 = vmatprep.subr.mxu0 0.0
  %227 = vmatpush1.msra.mxu0 0.0
  %228 = vmatprep.mubr.f32.mxu0 0.0
  %229 = vmatmul.mubr.f32.gmra.mrb[0].mxu0 %v158
  %v230 = vpop.f32.mrb[0].mxu0
  %v231 = vadd.f32 0.0, %v230
  %v232 = vpop.f32.mrb[0].mxu0
  %233 = vdwg.mxu0
  %v234 = vxor.u32 %v231, 2147483648
  %v235 = vmul.f32 %v234, 1.442695
  %v236 = vpow.pop %v235
  %v237 = vadd.f32 %v236, 1.0
  %v238 = vrcp.pop %v237
  %v239 = vmul.f32 1.0, %v238
  %vm240 = vcmask 123904
  %241 = vst.msk [vmem:[%s3] sm:$0x3] %vm240, %v239
  // Predicated region
  $region14: #{fluentnet_forward.94} parent=0 // pred_check
    _
  $region15: #{fluentnet_forward.94} parent=0 // pred_check_branch
    %243 = sbr.rel (0) target = $region17
  $region16: #{fluentnet_forward.94} parent=0 // pred_region
    _
  $region17: #{fluentnet_forward.94} parent=0 // pred_fallthru
    _
  // Predicated region
  $region18: #{fluentnet_forward.94} parent=0 // pred_check
    _
  $region19: #{fluentnet_forward.94} parent=0 // pred_check_branch
    %245 = sbr.rel (0) target = $region21
  $region20: #{fluentnet_forward.94} parent=0 // pred_region
    _
  $region21: #{fluentnet_forward.94} parent=0 // pred_fallthru
    _

// kernel: fluentnet_forward.93
$region0: #{fluentnet_forward.93}
  #allocation0 [shape = 'u32[]', space=smem, size = 0x4, offset = 0x4, fixed_abs, tag = 'smem constant byte address 0x4 - core index']
  #allocation1 [shape = 'u32[144,128]{1,0:T(1,128)}', space=vmem, size = 0x12000, scoped, tag = 'internal scratch']
  %s0 = inlined_call_operand.vmem [shape: f32[128,8], index: 0, kind: input, shape index: {}]
  %s1 = inlined_call_operand.vmem [shape: bf16[8,16], index: 1, kind: input, shape index: {}]
  %s2 = inlined_call_operand.vmem [shape: f32[1,16], index: 2, kind: input, shape index: {}]
  %s3 = inlined_call_operand.vmem [shape: f32[128,16], index: 3, kind: output, shape index: {}]
  %s4 = sld [smem:[#allocation0]]
  $region22: #{fluentnet_forward.93} parent=0
    _
  %s6 = ssub.s32 1, %s4
  %s7 = scalar_select 0, %s6, %s4
  // Predicated region
  $region2: #{fluentnet_forward.93} parent=0 // pred_check
    _
  $region3: #{fluentnet_forward.93} parent=0 // pred_check_branch
    %9 = sbr.rel (0) target = $region5
  $region4: #{fluentnet_forward.93} parent=0 // pred_region
    _
  $region5: #{fluentnet_forward.93} parent=0 // pred_fallthru
    _
  // Predicated region
  $region6: #{fluentnet_forward.93} parent=0 // pred_check
    _
  $region7: #{fluentnet_forward.93} parent=0 // pred_check_branch
    %11 = sbr.rel (0) target = $region9
  $region8: #{fluentnet_forward.93} parent=0 // pred_region
    _
  $region9: #{fluentnet_forward.93} parent=0 // pred_fallthru
    _
  // Predicated region
  $region10: #{fluentnet_forward.93} parent=0 // pred_check
    _
  $region11: #{fluentnet_forward.93} parent=0 // pred_check_branch
    %13 = sbr.rel (0) target = $region13
  $region12: #{fluentnet_forward.93} parent=0 // pred_region
    _
  $region13: #{fluentnet_forward.93} parent=0 // pred_fallthru
    _
  %v15 = vld [vmem:[%s0] sm:$0xff]
  %v16 = vld [vmem:[%s0 + $0x8] sm:$0xff]
  %v17 = vld [vmem:[%s0 + $0x10] sm:$0xff]
  %v18 = vld [vmem:[%s0 + $0x18] sm:$0xff]
  %v19 = vld [vmem:[%s0 + $0x20] sm:$0xff]
  %v20 = vld [vmem:[%s0 + $0x28] sm:$0xff]
  %v21 = vld [vmem:[%s0 + $0x30] sm:$0xff]
  %v22 = vld [vmem:[%s0 + $0x38] sm:$0xff]
  %v23 = vld [vmem:[%s0 + $0x40] sm:$0xff]
  %v24 = vld [vmem:[%s0 + $0x48] sm:$0xff]
  %v25 = vld [vmem:[%s0 + $0x50] sm:$0xff]
  %v26 = vld [vmem:[%s0 + $0x58] sm:$0xff]
  %v27 = vld [vmem:[%s0 + $0x60] sm:$0xff]
  %v28 = vld [vmem:[%s0 + $0x68] sm:$0xff]
  %v29 = vld [vmem:[%s0 + $0x70] sm:$0xff]
  %v30 = vld [vmem:[%s0 + $0x78] sm:$0xff]
  %v31 = vpack.c.bf16 %v16, %v15
  %v32 = vpack.c.bf16 %v18, %v17
  %v33 = vpack.c.bf16 %v20, %v19
  %v34 = vpack.c.bf16 %v22, %v21
  %v35 = vpack.c.bf16 %v24, %v23
  %v36 = vpack.c.bf16 %v26, %v25
  %v37 = vpack.c.bf16 %v28, %v27
  %v38 = vpack.c.bf16 %v30, %v29
  %v39 = vld [vmem:[%s1] sm:$0xf]
  %v40 = vld [vmem:[%s2] sm:$0x1]
  %v42 = vlaneseq
  %v43 = vshrl.u32 %v42, 7
  %v44 = vsub.s32 0, %v43
  %v45 = vrot.slane %v40, %v44
  %vm47 = vcmask 64512
  %v49 = vsel %vm47, %v31, 0
  %v52 = vsel %vm47, %v32, 0
  %v55 = vsel %vm47, %v33, 0
  %v58 = vsel %vm47, %v34, 0
  %v61 = vsel %vm47, %v35, 0
  %v64 = vsel %vm47, %v36, 0
  %v67 = vsel %vm47, %v37, 0
  %v70 = vsel %vm47, %v38, 0
  %vm72 = vcmask 1043456
  %v74 = vsel %vm72, %v39, 0
  %76 = vmatprep.subr.bf16.mxu0 0
  %77 = vmatpush1.bf16.msra.mxu0 %v74
  %78 = vmatprep.subr.bf16.mxu0 0
  %79 = vmatpush1.bf16.msra.mxu0 0
  %80 = vmatprep.subr.bf16.mxu0 0
  %81 = vmatpush1.bf16.msra.mxu0 0
  %82 = vmatprep.subr.bf16.mxu0 0
  %83 = vmatpush1.bf16.msra.mxu0 0
  %84 = vmatprep.subr.bf16.mxu0 0
  %85 = vmatpush1.bf16.msra.mxu0 0
  %86 = vmatprep.subr.bf16.mxu0 0
  %87 = vmatpush1.bf16.msra.mxu0 0
  %88 = vmatprep.subr.bf16.mxu0 0
  %89 = vmatpush1.bf16.msra.mxu0 0
  %90 = vmatprep.subr.bf16.mxu0 0
  %91 = vmatpush1.bf16.msra.mxu0 0
  %92 = vmatprep.subr.bf16.mxu0 0
  %93 = vmatpush1.bf16.msra.mxu0 0
  %94 = vmatprep.subr.bf16.mxu0 0
  %95 = vmatpush1.bf16.msra.mxu0 0
  %96 = vmatprep.subr.bf16.mxu0 0
  %97 = vmatpush1.bf16.msra.mxu0 0
  %98 = vmatprep.subr.bf16.mxu0 0
  %99 = vmatpush1.bf16.msra.mxu0 0
  %100 = vmatprep.subr.bf16.mxu0 0
  %101 = vmatpush1.bf16.msra.mxu0 0
  %102 = vmatprep.subr.bf16.mxu0 0
  %103 = vmatpush1.bf16.msra.mxu0 0
  %104 = vmatprep.subr.bf16.mxu0 0
  %105 = vmatpush1.bf16.msra.mxu0 0
  %106 = vmatprep.subr.bf16.mxu0 0
  %107 = vmatpush1.bf16.msra.mxu0 0
  %108 = vmatprep.mubr.bf16.mxu0 0
  %109 = vmatmul.mubr.bf16.gmra.mrb[0].mxu0 %v49
  %v110 = vpop.f32.mrb[0].mxu0
  %v111 = vadd.f32 %v45, %v110
  %v112 = vpop.f32.mrb[0].mxu0
  %v113 = vpop.f32.mrb[0].mxu0
  %v114 = vadd.f32 %v45, %v113
  %v115 = vpop.f32.mrb[0].mxu0
  %116 = vmatprep.mubr.bf16.mxu0 0
  %117 = vmatmul.mubr.bf16.gmra.mrb[0].mxu0 %v52
  %v118 = vpop.f32.mrb[0].mxu0
  %v119 = vadd.f32 %v45, %v118
  %v120 = vpop.f32.mrb[0].mxu0
  %v121 = vpop.f32.mrb[0].mxu0
  %v122 = vadd.f32 %v45, %v121
  %v123 = vpop.f32.mrb[0].mxu0
  %124 = vmatprep.mubr.bf16.mxu0 0
  %125 = vmatmul.mubr.bf16.gmra.mrb[0].mxu0 %v55
  %v126 = vpop.f32.mrb[0].mxu0
  %v127 = vadd.f32 %v45, %v126
  %v128 = vpop.f32.mrb[0].mxu0
  %v129 = vpop.f32.mrb[0].mxu0
  %v130 = vadd.f32 %v45, %v129
  %v131 = vpop.f32.mrb[0].mxu0
  %132 = vmatprep.mubr.bf16.mxu0 0
  %133 = vmatmul.mubr.bf16.gmra.mrb[0].mxu0 %v58
  %v134 = vpop.f32.mrb[0].mxu0
  %v135 = vadd.f32 %v45, %v134
  %v136 = vpop.f32.mrb[0].mxu0
  %v137 = vpop.f32.mrb[0].mxu0
  %v138 = vadd.f32 %v45, %v137
  %v139 = vpop.f32.mrb[0].mxu0
  %140 = vmatprep.mubr.bf16.mxu0 0
  %141 = vmatmul.mubr.bf16.gmra.mrb[0].mxu0 %v61
  %v142 = vpop.f32.mrb[0].mxu0
  %v143 = vadd.f32 %v45, %v142
  %v144 = vpop.f32.mrb[0].mxu0
  %v145 = vpop.f32.mrb[0].mxu0
  %v146 = vadd.f32 %v45, %v145
  %v147 = vpop.f32.mrb[0].mxu0
  %148 = vmatprep.mubr.bf16.mxu0 0
  %149 = vmatmul.mubr.bf16.gmra.mrb[0].mxu0 %v64
  %v150 = vpop.f32.mrb[0].mxu0
  %v151 = vadd.f32 %v45, %v150
  %v152 = vpop.f32.mrb[0].mxu0
  %v153 = vpop.f32.mrb[0].mxu0
  %v154 = vadd.f32 %v45, %v153
  %v155 = vpop.f32.mrb[0].mxu0
  %156 = vmatprep.mubr.bf16.mxu0 0
  %157 = vmatmul.mubr.bf16.gmra.mrb[0].mxu0 %v67
  %v158 = vpop.f32.mrb[0].mxu0
  %v159 = vadd.f32 %v45, %v158
  %v160 = vpop.f32.mrb[0].mxu0
  %v161 = vpop.f32.mrb[0].mxu0
  %v162 = vadd.f32 %v45, %v161
  %v163 = vpop.f32.mrb[0].mxu0
  %164 = vmatprep.mubr.bf16.mxu0 0
  %165 = vmatmul.mubr.bf16.gmra.mrb[0].mxu0 %v70
  %v166 = vpop.f32.mrb[0].mxu0
  %v167 = vadd.f32 %v45, %v166
  %v168 = vpop.f32.mrb[0].mxu0
  %v169 = vpop.f32.mrb[0].mxu0
  %v170 = vadd.f32 %v45, %v169
  %v171 = vpop.f32.mrb[0].mxu0
  %172 = vdwg.mxu0
  %vm173 = vcmask 130048
  %174 = vst.msk [vmem:[%s3] sm:$0xff] %vm173, %v111
  %175 = vst.msk [vmem:[%s3 + $0x8] sm:$0xff] %vm173, %v114
  %176 = vst.msk [vmem:[%s3 + $0x10] sm:$0xff] %vm173, %v119
  %177 = vst.msk [vmem:[%s3 + $0x18] sm:$0xff] %vm173, %v122
  %178 = vst.msk [vmem:[%s3 + $0x20] sm:$0xff] %vm173, %v127
  %179 = vst.msk [vmem:[%s3 + $0x28] sm:$0xff] %vm173, %v130
  %180 = vst.msk [vmem:[%s3 + $0x30] sm:$0xff] %vm173, %v135
  %181 = vst.msk [vmem:[%s3 + $0x38] sm:$0xff] %vm173, %v138
  %182 = vst.msk [vmem:[%s3 + $0x40] sm:$0xff] %vm173, %v143
  %183 = vst.msk [vmem:[%s3 + $0x48] sm:$0xff] %vm173, %v146
  %184 = vst.msk [vmem:[%s3 + $0x50] sm:$0xff] %vm173, %v151
  %185 = vst.msk [vmem:[%s3 + $0x58] sm:$0xff] %vm173, %v154
  %186 = vst.msk [vmem:[%s3 + $0x60] sm:$0xff] %vm173, %v159
  %187 = vst.msk [vmem:[%s3 + $0x68] sm:$0xff] %vm173, %v162
  %188 = vst.msk [vmem:[%s3 + $0x70] sm:$0xff] %vm173, %v167
  %189 = vst.msk [vmem:[%s3 + $0x78] sm:$0xff] %vm173, %v170
  // Predicated region
  $region14: #{fluentnet_forward.93} parent=0 // pred_check
    _
  $region15: #{fluentnet_forward.93} parent=0 // pred_check_branch
    %191 = sbr.rel (0) target = $region17
  $region16: #{fluentnet_forward.93} parent=0 // pred_region
    _
  $region17: #{fluentnet_forward.93} parent=0 // pred_fallthru
    _
  // Predicated region
  $region18: #{fluentnet_forward.93} parent=0 // pred_check
    _
  $region19: #{fluentnet_forward.93} parent=0 // pred_check_branch
    %193 = sbr.rel (0) target = $region21
  $region20: #{fluentnet_forward.93} parent=0 // pred_region
    _
  $region21: #{fluentnet_forward.93} parent=0 // pred_fallthru
    _

// kernel: fluentnet_forward.95
$region0: #{fluentnet_forward.95}
  #allocation0 [shape = 'u32[]', space=smem, size = 0x4, offset = 0x4, fixed_abs, tag = 'smem constant byte address 0x4 - core index']
  #allocation1 [shape = 'u32[144,128]{1,0:T(1,128)}', space=vmem, size = 0x12000, scoped, tag = 'internal scratch']
  %s0 = inlined_call_operand.vmem [shape: f32[2,64,16], index: 0, kind: input, shape index: {}]
  %s1 = inlined_call_operand.vmem [shape: f32[2,1,16], index: 1, kind: input, shape index: {}]
  %s2 = inlined_call_operand.vmem [shape: f32[2,64,16], index: 2, kind: input, shape index: {}]
  %s3 = inlined_call_operand.vmem [shape: f32[2,64,16], index: 3, kind: output, shape index: {}]
  %s4 = sld [smem:[#allocation0]]
  $region22: #{fluentnet_forward.95} parent=0
    _
  %s6 = ssub.s32 1, %s4
  %s7 = scalar_select 0, %s6, %s4
  // Predicated region
  $region2: #{fluentnet_forward.95} parent=0 // pred_check
    _
  $region3: #{fluentnet_forward.95} parent=0 // pred_check_branch
    %9 = sbr.rel (0) target = $region5
  $region4: #{fluentnet_forward.95} parent=0 // pred_region
    _
  $region5: #{fluentnet_forward.95} parent=0 // pred_fallthru
    _
  // Predicated region
  $region6: #{fluentnet_forward.95} parent=0 // pred_check
    _
  $region7: #{fluentnet_forward.95} parent=0 // pred_check_branch
    %11 = sbr.rel (0) target = $region9
  $region8: #{fluentnet_forward.95} parent=0 // pred_region
    _
  $region9: #{fluentnet_forward.95} parent=0 // pred_fallthru
    _
  // Predicated region
  $region10: #{fluentnet_forward.95} parent=0 // pred_check
    _
  $region11: #{fluentnet_forward.95} parent=0 // pred_check_branch
    %13 = sbr.rel (0) target = $region13
  $region12: #{fluentnet_forward.95} parent=0 // pred_region
    _
  $region13: #{fluentnet_forward.95} parent=0 // pred_fallthru
    _
  %v14 = vld [vmem:[%s0] sm:$0xff]
  %v15 = vld [vmem:[%s0 + $0x8] sm:$0xff]
  %v16 = vld [vmem:[%s0 + $0x10] sm:$0xff]
  %v17 = vld [vmem:[%s0 + $0x18] sm:$0xff]
  %v18 = vld [vmem:[%s0 + $0x20] sm:$0xff]
  %v19 = vld [vmem:[%s0 + $0x28] sm:$0xff]
  %v20 = vld [vmem:[%s0 + $0x30] sm:$0xff]
  %v21 = vld [vmem:[%s0 + $0x38] sm:$0xff]
  %v22 = vld [vmem:[%s0 + $0x40] sm:$0xff]
  %v23 = vld [vmem:[%s0 + $0x48] sm:$0xff]
  %v24 = vld [vmem:[%s0 + $0x50] sm:$0xff]
  %v25 = vld [vmem:[%s0 + $0x58] sm:$0xff]
  %v26 = vld [vmem:[%s0 + $0x60] sm:$0xff]
  %v27 = vld [vmem:[%s0 + $0x68] sm:$0xff]
  %v28 = vld [vmem:[%s0 + $0x70] sm:$0xff]
  %v29 = vld [vmem:[%s0 + $0x78] sm:$0xff]
  %v30 = vld [vmem:[%s1] sm:$0x1]
  %v31 = vld [vmem:[%s1 + $0x1] sm:$0x1]
  %v34 = vlaneseq
  %v35 = vshrl.u32 %v34, 7
  %v36 = vsub.s32 0, %v35
  %v37 = vrot.slane %v30, %v36
  %v38 = vlaneseq
  %v39 = vshrl.u32 %v38, 7
  %v40 = vsub.s32 0, %v39
  %v41 = vrot.slane %v31, %v40
  %v44 = vmul.f32 %v14, %v37
  %v45 = vmul.f32 %v15, %v37
  %v46 = vmul.f32 %v16, %v37
  %v47 = vmul.f32 %v17, %v37
  %v48 = vmul.f32 %v18, %v37
  %v49 = vmul.f32 %v19, %v37
  %v50 = vmul.f32 %v20, %v37
  %v51 = vmul.f32 %v21, %v37
  %v52 = vmul.f32 %v22, %v41
  %v53 = vmul.f32 %v23, %v41
  %v54 = vmul.f32 %v24, %v41
  %v55 = vmul.f32 %v25, %v41
  %v56 = vmul.f32 %v26, %v41
  %v57 = vmul.f32 %v27, %v41
  %v58 = vmul.f32 %v28, %v41
  %v59 = vmul.f32 %v29, %v41
  %v60 = vld [vmem:[%s2] sm:$0xff]
  %v61 = vld [vmem:[%s2 + $0x8] sm:$0xff]
  %v62 = vld [vmem:[%s2 + $0x10] sm:$0xff]
  %v63 = vld [vmem:[%s2 + $0x18] sm:$0xff]
  %v64 = vld [vmem:[%s2 + $0x20] sm:$0xff]
  %v65 = vld [vmem:[%s2 + $0x28] sm:$0xff]
  %v66 = vld [vmem:[%s2 + $0x30] sm:$0xff]
  %v67 = vld [vmem:[%s2 + $0x38] sm:$0xff]
  %v68 = vld [vmem:[%s2 + $0x40] sm:$0xff]
  %v69 = vld [vmem:[%s2 + $0x48] sm:$0xff]
  %v70 = vld [vmem:[%s2 + $0x50] sm:$0xff]
  %v71 = vld [vmem:[%s2 + $0x58] sm:$0xff]
  %v72 = vld [vmem:[%s2 + $0x60] sm:$0xff]
  %v73 = vld [vmem:[%s2 + $0x68] sm:$0xff]
  %v74 = vld [vmem:[%s2 + $0x70] sm:$0xff]
  %v75 = vld [vmem:[%s2 + $0x78] sm:$0xff]
  %v76 = vadd.f32 %v44, %v60
  %v77 = vadd.f32 %v45, %v61
  %v78 = vadd.f32 %v46, %v62
  %v79 = vadd.f32 %v47, %v63
  %v80 = vadd.f32 %v48, %v64
  %v81 = vadd.f32 %v49, %v65
  %v82 = vadd.f32 %v50, %v66
  %v83 = vadd.f32 %v51, %v67
  %v84 = vadd.f32 %v52, %v68
  %v85 = vadd.f32 %v53, %v69
  %v86 = vadd.f32 %v54, %v70
  %v87 = vadd.f32 %v55, %v71
  %v88 = vadd.f32 %v56, %v72
  %v89 = vadd.f32 %v57, %v73
  %v90 = vadd.f32 %v58, %v74
  %v91 = vadd.f32 %v59, %v75
  %v92 = vmax.f32 %v76, 0.0
  %v93 = vmax.f32 %v77, 0.0
  %v94 = vmax.f32 %v78, 0.0
  %v95 = vmax.f32 %v79, 0.0
  %v96 = vmax.f32 %v80, 0.0
  %v97 = vmax.f32 %v81, 0.0
  %v98 = vmax.f32 %v82, 0.0
  %v99 = vmax.f32 %v83, 0.0
  %v100 = vmax.f32 %v84, 0.0
  %v101 = vmax.f32 %v85, 0.0
  %v102 = vmax.f32 %v86, 0.0
  %v103 = vmax.f32 %v87, 0.0
  %v104 = vmax.f32 %v88, 0.0
  %v105 = vmax.f32 %v89, 0.0
  %v106 = vmax.f32 %v90, 0.0
  %v107 = vmax.f32 %v91, 0.0
  %vm108 = vcmask 130048
  %109 = vst.msk [vmem:[%s3] sm:$0xff] %vm108, %v92
  %110 = vst.msk [vmem:[%s3 + $0x8] sm:$0xff] %vm108, %v93
  %111 = vst.msk [vmem:[%s3 + $0x10] sm:$0xff] %vm108, %v94
  %112 = vst.msk [vmem:[%s3 + $0x18] sm:$0xff] %vm108, %v95
  %113 = vst.msk [vmem:[%s3 + $0x20] sm:$0xff] %vm108, %v96
  %114 = vst.msk [vmem:[%s3 + $0x28] sm:$0xff] %vm108, %v97
  %115 = vst.msk [vmem:[%s3 + $0x30] sm:$0xff] %vm108, %v98
  %116 = vst.msk [vmem:[%s3 + $0x38] sm:$0xff] %vm108, %v99
  %117 = vst.msk [vmem:[%s3 + $0x40] sm:$0xff] %vm108, %v100
  %118 = vst.msk [vmem:[%s3 + $0x48] sm:$0xff] %vm108, %v101
  %119 = vst.msk [vmem:[%s3 + $0x50] sm:$0xff] %vm108, %v102
  %120 = vst.msk [vmem:[%s3 + $0x58] sm:$0xff] %vm108, %v103
  %121 = vst.msk [vmem:[%s3 + $0x60] sm:$0xff] %vm108, %v104
  %122 = vst.msk [vmem:[%s3 + $0x68] sm:$0xff] %vm108, %v105
  %123 = vst.msk [vmem:[%s3 + $0x70] sm:$0xff] %vm108, %v106
  %124 = vst.msk [vmem:[%s3 + $0x78] sm:$0xff] %vm108, %v107
  // Predicated region
  $region14: #{fluentnet_forward.95} parent=0 // pred_check
    _
  $region15: #{fluentnet_forward.95} parent=0 // pred_check_branch
    %126 = sbr.rel (0) target = $region17
  $region16: #{fluentnet_forward.95} parent=0 // pred_region
    _
  $region17: #{fluentnet_forward.95} parent=0 // pred_fallthru
    _
  // Predicated region
  $region18: #{fluentnet_forward.95} parent=0 // pred_check
    _
  $region19: #{fluentnet_forward.95} parent=0 // pred_check_branch
    %128 = sbr.rel (0) target = $region21
  $region20: #{fluentnet_forward.95} parent=0 // pred_region
    _
  $region21: #{fluentnet_forward.95} parent=0 // pred_fallthru
    _

// kernel: fluentnet_forward.96
$region0: #{fluentnet_forward.96}
  #allocation0 [shape = 'u32[]', space=smem, size = 0x4, offset = 0x4, fixed_abs, tag = 'smem constant byte address 0x4 - core index']
  #allocation1 [shape = 'u32[144,128]{1,0:T(1,128)}', space=vmem, size = 0x12000, scoped, tag = 'internal scratch']
  %s0 = inlined_call_operand.vmem [shape: f32[128,144], index: 0, kind: input, shape index: {}]
  %s1 = inlined_call_operand.vmem [shape: bf16[144,16], index: 1, kind: input, shape index: {}]
  %s2 = inlined_call_operand.vmem [shape: f32[1,16], index: 2, kind: input, shape index: {}]
  %s3 = inlined_call_operand.vmem [shape: f32[128,16], index: 3, kind: output, shape index: {}]
  %s4 = sld [smem:[#allocation0]]
  $region22: #{fluentnet_forward.96} parent=0
    _
  %s6 = ssub.s32 1, %s4
  %s7 = scalar_select 0, %s6, %s4
  // Predicated region
  $region2: #{fluentnet_forward.96} parent=0 // pred_check
    _
  $region3: #{fluentnet_forward.96} parent=0 // pred_check_branch
    %9 = sbr.rel (0) target = $region5
  $region4: #{fluentnet_forward.96} parent=0 // pred_region
    _
  $region5: #{fluentnet_forward.96} parent=0 // pred_fallthru
    _
  // Predicated region
  $region6: #{fluentnet_forward.96} parent=0 // pred_check
    _
  $region7: #{fluentnet_forward.96} parent=0 // pred_check_branch
    %11 = sbr.rel (0) target = $region9
  $region8: #{fluentnet_forward.96} parent=0 // pred_region
    _
  $region9: #{fluentnet_forward.96} parent=0 // pred_fallthru
    _
  // Predicated region
  $region10: #{fluentnet_forward.96} parent=0 // pred_check
    _
  $region11: #{fluentnet_forward.96} parent=0 // pred_check_branch
    %13 = sbr.rel (0) target = $region13
  $region12: #{fluentnet_forward.96} parent=0 // pred_region
    _
  $region13: #{fluentnet_forward.96} parent=0 // pred_fallthru
    _
  %v15 = vld [vmem:[%s0] sm:$0xff]
  %v16 = vld [vmem:[%s0 + $0x8] sm:$0xff]
  %v17 = vld [vmem:[%s0 + $0x10] sm:$0xff]
  %v18 = vld [vmem:[%s0 + $0x18] sm:$0xff]
  %v19 = vld [vmem:[%s0 + $0x20] sm:$0xff]
  %v20 = vld [vmem:[%s0 + $0x28] sm:$0xff]
  %v21 = vld [vmem:[%s0 + $0x30] sm:$0xff]
  %v22 = vld [vmem:[%s0 + $0x38] sm:$0xff]
  %v23 = vld [vmem:[%s0 + $0x40] sm:$0xff]
  %v24 = vld [vmem:[%s0 + $0x48] sm:$0xff]
  %v25 = vld [vmem:[%s0 + $0x50] sm:$0xff]
  %v26 = vld [vmem:[%s0 + $0x58] sm:$0xff]
  %v27 = vld [vmem:[%s0 + $0x60] sm:$0xff]
  %v28 = vld [vmem:[%s0 + $0x68] sm:$0xff]
  %v29 = vld [vmem:[%s0 + $0x70] sm:$0xff]
  %v30 = vld [vmem:[%s0 + $0x78] sm:$0xff]
  %v31 = vld [vmem:[%s0 + $0x80] sm:$0xff]
  %v32 = vld [vmem:[%s0 + $0x88] sm:$0xff]
  %v33 = vld [vmem:[%s0 + $0x90] sm:$0xff]
  %v34 = vld [vmem:[%s0 + $0x98] sm:$0xff]
  %v35 = vld [vmem:[%s0 + $0xa0] sm:$0xff]
  %v36 = vld [vmem:[%s0 + $0xa8] sm:$0xff]
  %v37 = vld [vmem:[%s0 + $0xb0] sm:$0xff]
  %v38 = vld [vmem:[%s0 + $0xb8] sm:$0xff]
  %v39 = vld [vmem:[%s0 + $0xc0] sm:$0xff]
  %v40 = vld [vmem:[%s0 + $0xc8] sm:$0xff]
  %v41 = vld [vmem:[%s0 + $0xd0] sm:$0xff]
  %v42 = vld [vmem:[%s0 + $0xd8] sm:$0xff]
  %v43 = vld [vmem:[%s0 + $0xe0] sm:$0xff]
  %v44 = vld [vmem:[%s0 + $0xe8] sm:$0xff]
  %v45 = vld [vmem:[%s0 + $0xf0] sm:$0xff]
  %v46 = vld [vmem:[%s0 + $0xf8] sm:$0xff]
  %v47 = vpack.c.bf16 %v17, %v15
  %v48 = vpack.c.bf16 %v18, %v16
  %v49 = vpack.c.bf16 %v21, %v19
  %v50 = vpack.c.bf16 %v22, %v20
  %v51 = vpack.c.bf16 %v25, %v23
  %v52 = vpack.c.bf16 %v26, %v24
  %v53 = vpack.c.bf16 %v29, %v27
  %v54 = vpack.c.bf16 %v30, %v28
  %v55 = vpack.c.bf16 %v33, %v31
  %v56 = vpack.c.bf16 %v34, %v32
  %v57 = vpack.c.bf16 %v37, %v35
  %v58 = vpack.c.bf16 %v38, %v36
  %v59 = vpack.c.bf16 %v41, %v39
  %v60 = vpack.c.bf16 %v42, %v40
  %v61 = vpack.c.bf16 %v45, %v43
  %v62 = vpack.c.bf16 %v46, %v44
  %v63 = vld [vmem:[%s1] sm:$0xf]
  %v64 = vld [vmem:[%s1 + $0x4] sm:$0xf]
  %v65 = vld [vmem:[%s1 + $0x8] sm:$0xf]
  %v66 = vld [vmem:[%s1 + $0xc] sm:$0xf]
  %v67 = vld [vmem:[%s1 + $0x10] sm:$0xf]
  %v68 = vld [vmem:[%s1 + $0x14] sm:$0xf]
  %v69 = vld [vmem:[%s1 + $0x18] sm:$0xf]
  %v70 = vld [vmem:[%s1 + $0x1c] sm:$0xf]
  %v71 = vld [vmem:[%s1 + $0x20] sm:$0xf]
  %v72 = vld [vmem:[%s1 + $0x24] sm:$0xf]
  %v73 = vld [vmem:[%s1 + $0x28] sm:$0xf]
  %v74 = vld [vmem:[%s1 + $0x2c] sm:$0xf]
  %v75 = vld [vmem:[%s1 + $0x30] sm:$0xf]
  %v76 = vld [vmem:[%s1 + $0x34] sm:$0xf]
  %v77 = vld [vmem:[%s1 + $0x38] sm:$0xf]
  %v78 = vld [vmem:[%s1 + $0x3c] sm:$0xf]
  %v79 = vld [vmem:[%s1 + $0x40] sm:$0xf]
  %v80 = vld [vmem:[%s1 + $0x44] sm:$0xf]
  %v81 = vld [vmem:[%s2] sm:$0x1]
  %v83 = vlaneseq
  %v84 = vshrl.u32 %v83, 7
  %v85 = vsub.s32 0, %v84
  %v86 = vrot.slane %v81, %v85
  %v106 = vunpack.c.l.b16 %v63
  %v107 = vunpack.c.l.b16 %v64
  %v108 = vunpack.c.l.b16 %v65
  %v109 = vunpack.c.l.b16 %v66
  %v110 = vunpack.c.l.b16 %v67
  %v111 = vunpack.c.l.b16 %v68
  %v112 = vunpack.c.l.b16 %v69
  %v113 = vunpack.c.l.b16 %v70
  %v114 = vunpack.c.l.b16 %v71
  %v115 = vunpack.c.l.b16 %v72
  %v116 = vunpack.c.l.b16 %v73
  %v117 = vunpack.c.l.b16 %v74
  %v118 = vunpack.c.l.b16 %v75
  %v119 = vunpack.c.l.b16 %v76
  %v120 = vunpack.c.l.b16 %v77
  %v121 = vunpack.c.l.b16 %v78
  %v122 = vunpack.c.l.b16 %v79
  %v123 = vunpack.c.l.b16 %v80
  %v124 = vpack.c.b16 %v107, %v106
  %v125 = vpack.c.b16 %v109, %v108
  %v126 = vpack.c.b16 %v111, %v110
  %v127 = vpack.c.b16 %v113, %v112
  %v128 = vpack.c.b16 %v115, %v114
  %v129 = vpack.c.b16 %v117, %v116
  %v130 = vpack.c.b16 %v119, %v118
  %v131 = vpack.c.b16 %v121, %v120
  %v132 = vpack.c.b16 %v123, %v122
  %vm142 = vcmask 130048
  %v144 = vsel %vm142, %v48, 0
  %v147 = vsel %vm142, %v50, 0
  %v150 = vsel %vm142, %v52, 0
  %v153 = vsel %vm142, %v54, 0
  %v156 = vsel %vm142, %v56, 0
  %v159 = vsel %vm142, %v58, 0
  %v162 = vsel %vm142, %v60, 0
  %v165 = vsel %vm142, %v62, 0
  %167 = vmatprep.subr.bf16.mxu0 0
  %168 = vmatpush1.bf16.msra.mxu0 %v124
  %169 = vmatprep.subr.bf16.mxu0 0
  %170 = vmatpush1.bf16.msra.mxu0 %v125
  %171 = vmatprep.subr.bf16.mxu0 0
  %172 = vmatpush1.bf16.msra.mxu0 %v126
  %173 = vmatprep.subr.bf16.mxu0 0
  %174 = vmatpush1.bf16.msra.mxu0 %v127
  %175 = vmatprep.subr.bf16.mxu0 0
  %176 = vmatpush1.bf16.msra.mxu0 %v128
  %177 = vmatprep.subr.bf16.mxu0 0
  %178 = vmatpush1.bf16.msra.mxu0 %v129
  %179 = vmatprep.subr.bf16.mxu0 0
  %180 = vmatpush1.bf16.msra.mxu0 %v130
  %181 = vmatprep.subr.bf16.mxu0 0
  %182 = vmatpush1.bf16.msra.mxu0 %v131
  %183 = vmatprep.subr.bf16.mxu0 0
  %184 = vmatpush1.bf16.msra.mxu0 %v132
  %185 = vmatprep.subr.bf16.mxu0 0
  %186 = vmatpush1.bf16.msra.mxu0 0
  %187 = vmatprep.subr.bf16.mxu0 0
  %188 = vmatpush1.bf16.msra.mxu0 0
  %189 = vmatprep.subr.bf16.mxu0 0
  %190 = vmatpush1.bf16.msra.mxu0 0
  %191 = vmatprep.subr.bf16.mxu0 0
  %192 = vmatpush1.bf16.msra.mxu0 0
  %193 = vmatprep.subr.bf16.mxu0 0
  %194 = vmatpush1.bf16.msra.mxu0 0
  %195 = vmatprep.subr.bf16.mxu0 0
  %196 = vmatpush1.bf16.msra.mxu0 0
  %197 = vmatprep.subr.bf16.mxu0 0
  %198 = vmatpush1.bf16.msra.mxu0 0
  %199 = vmatprep.mubr.bf16.mxu0 %v144
  %200 = vmatmul.mubr.bf16.gmra.mrb[0].mxu0 %v47
  %v201 = vpop.f32.mrb[0].mxu0
  %v202 = vadd.f32 %v86, %v201
  %v203 = vpop.f32.mrb[0].mxu0
  %v204 = vpop.f32.mrb[0].mxu0
  %v205 = vadd.f32 %v86, %v204
  %v206 = vpop.f32.mrb[0].mxu0
  %207 = vmatprep.mubr.bf16.mxu0 %v147
  %208 = vmatmul.mubr.bf16.gmra.mrb[0].mxu0 %v49
  %v209 = vpop.f32.mrb[0].mxu0
  %v210 = vadd.f32 %v86, %v209
  %v211 = vpop.f32.mrb[0].mxu0
  %v212 = vpop.f32.mrb[0].mxu0
  %v213 = vadd.f32 %v86, %v212
  %v214 = vpop.f32.mrb[0].mxu0
  %215 = vmatprep.mubr.bf16.mxu0 %v150
  %216 = vmatmul.mubr.bf16.gmra.mrb[0].mxu0 %v51
  %v217 = vpop.f32.mrb[0].mxu0
  %v218 = vadd.f32 %v86, %v217
  %v219 = vpop.f32.mrb[0].mxu0
  %v220 = vpop.f32.mrb[0].mxu0
  %v221 = vadd.f32 %v86, %v220
  %v222 = vpop.f32.mrb[0].mxu0
  %223 = vmatprep.mubr.bf16.mxu0 %v153
  %224 = vmatmul.mubr.bf16.gmra.mrb[0].mxu0 %v53
  %v225 = vpop.f32.mrb[0].mxu0
  %v226 = vadd.f32 %v86, %v225
  %v227 = vpop.f32.mrb[0].mxu0
  %v228 = vpop.f32.mrb[0].mxu0
  %v229 = vadd.f32 %v86, %v228
  %v230 = vpop.f32.mrb[0].mxu0
  %231 = vmatprep.mubr.bf16.mxu0 %v156
  %232 = vmatmul.mubr.bf16.gmra.mrb[0].mxu0 %v55
  %v233 = vpop.f32.mrb[0].mxu0
  %v234 = vadd.f32 %v86, %v233
  %v235 = vpop.f32.mrb[0].mxu0
  %v236 = vpop.f32.mrb[0].mxu0
  %v237 = vadd.f32 %v86, %v236
  %v238 = vpop.f32.mrb[0].mxu0
  %239 = vmatprep.mubr.bf16.mxu0 %v159
  %240 = vmatmul.mubr.bf16.gmra.mrb[0].mxu0 %v57
  %v241 = vpop.f32.mrb[0].mxu0
  %v242 = vadd.f32 %v86, %v241
  %v243 = vpop.f32.mrb[0].mxu0
  %v244 = vpop.f32.mrb[0].mxu0
  %v245 = vadd.f32 %v86, %v244
  %v246 = vpop.f32.mrb[0].mxu0
  %247 = vmatprep.mubr.bf16.mxu0 %v162
  %248 = vmatmul.mubr.bf16.gmra.mrb[0].mxu0 %v59
  %v249 = vpop.f32.mrb[0].mxu0
  %v250 = vadd.f32 %v86, %v249
  %v251 = vpop.f32.mrb[0].mxu0
  %v252 = vpop.f32.mrb[0].mxu0
  %v253 = vadd.f32 %v86, %v252
  %v254 = vpop.f32.mrb[0].mxu0
  %255 = vmatprep.mubr.bf16.mxu0 %v165
  %256 = vmatmul.mubr.bf16.gmra.mrb[0].mxu0 %v61
  %v257 = vpop.f32.mrb[0].mxu0
  %v258 = vadd.f32 %v86, %v257
  %v259 = vpop.f32.mrb[0].mxu0
  %v260 = vpop.f32.mrb[0].mxu0
  %v261 = vadd.f32 %v86, %v260
  %v262 = vpop.f32.mrb[0].mxu0
  %263 = vdwg.mxu0
  %v264 = vmax.f32 %v202, 0.0
  %v265 = vmax.f32 %v205, 0.0
  %v266 = vmax.f32 %v210, 0.0
  %v267 = vmax.f32 %v213, 0.0
  %v268 = vmax.f32 %v218, 0.0
  %v269 = vmax.f32 %v221, 0.0
  %v270 = vmax.f32 %v226, 0.0
  %v271 = vmax.f32 %v229, 0.0
  %v272 = vmax.f32 %v234, 0.0
  %v273 = vmax.f32 %v237, 0.0
  %v274 = vmax.f32 %v242, 0.0
  %v275 = vmax.f32 %v245, 0.0
  %v276 = vmax.f32 %v250, 0.0
  %v277 = vmax.f32 %v253, 0.0
  %v278 = vmax.f32 %v258, 0.0
  %v279 = vmax.f32 %v261, 0.0
  %280 = vst.msk [vmem:[%s3] sm:$0xff] %vm142, %v264
  %281 = vst.msk [vmem:[%s3 + $0x8] sm:$0xff] %vm142, %v265
  %282 = vst.msk [vmem:[%s3 + $0x10] sm:$0xff] %vm142, %v266
  %283 = vst.msk [vmem:[%s3 + $0x18] sm:$0xff] %vm142, %v267
  %284 = vst.msk [vmem:[%s3 + $0x20] sm:$0xff] %vm142, %v268
  %285 = vst.msk [vmem:[%s3 + $0x28] sm:$0xff] %vm142, %v269
  %286 = vst.msk [vmem:[%s3 + $0x30] sm:$0xff] %vm142, %v270
  %287 = vst.msk [vmem:[%s3 + $0x38] sm:$0xff] %vm142, %v271
  %288 = vst.msk [vmem:[%s3 + $0x40] sm:$0xff] %vm142, %v272
  %289 = vst.msk [vmem:[%s3 + $0x48] sm:$0xff] %vm142, %v273
  %290 = vst.msk [vmem:[%s3 + $0x50] sm:$0xff] %vm142, %v274
  %291 = vst.msk [vmem:[%s3 + $0x58] sm:$0xff] %vm142, %v275
  %292 = vst.msk [vmem:[%s3 + $0x60] sm:$0xff] %vm142, %v276
  %293 = vst.msk [vmem:[%s3 + $0x68] sm:$0xff] %vm142, %v277
  %294 = vst.msk [vmem:[%s3 + $0x70] sm:$0xff] %vm142, %v278
  %295 = vst.msk [vmem:[%s3 + $0x78] sm:$0xff] %vm142, %v279
  // Predicated region
  $region14: #{fluentnet_forward.96} parent=0 // pred_check
    _
  $region15: #{fluentnet_forward.96} parent=0 // pred_check_branch
    %297 = sbr.rel (0) target = $region17
  $region16: #{fluentnet_forward.96} parent=0 // pred_region
    _
  $region17: #{fluentnet_forward.96} parent=0 // pred_fallthru
    _
  // Predicated region
  $region18: #{fluentnet_forward.96} parent=0 // pred_check
    _
  $region19: #{fluentnet_forward.96} parent=0 // pred_check_branch
    %299 = sbr.rel (0) target = $region21
  $region20: #{fluentnet_forward.96} parent=0 // pred_region
    _
  $region21: #{fluentnet_forward.96} parent=0 // pred_fallthru
    _

// kernel: fluentnet_forward.108
$region0: #{fluentnet_forward.108}
  #allocation0 [shape = 'u32[]', space=smem, size = 0x4, offset = 0x4, fixed_abs, tag = 'smem constant byte address 0x4 - core index']
  #allocation1 [shape = 'u32[144,128]{1,0:T(1,128)}', space=vmem, size = 0x12000, scoped, tag = 'internal scratch']
  %s0 = inlined_call_operand.vmem [shape: f32[128,144], index: 0, kind: input, shape index: {}]
  %s1 = inlined_call_operand.vmem [shape: bf16[144,32], index: 1, kind: input, shape index: {}]
  %s2 = inlined_call_operand.vmem [shape: f32[1,32], index: 2, kind: input, shape index: {}]
  %s3 = inlined_call_operand.vmem [shape: f32[128,32], index: 3, kind: output, shape index: {}]
  %s4 = sld [smem:[#allocation0]]
  $region22: #{fluentnet_forward.108} parent=0
    _
  %s6 = ssub.s32 1, %s4
  %s7 = scalar_select 0, %s6, %s4
  // Predicated region
  $region2: #{fluentnet_forward.108} parent=0 // pred_check
    _
  $region3: #{fluentnet_forward.108} parent=0 // pred_check_branch
    %9 = sbr.rel (0) target = $region5
  $region4: #{fluentnet_forward.108} parent=0 // pred_region
    _
  $region5: #{fluentnet_forward.108} parent=0 // pred_fallthru
    _
  // Predicated region
  $region6: #{fluentnet_forward.108} parent=0 // pred_check
    _
  $region7: #{fluentnet_forward.108} parent=0 // pred_check_branch
    %11 = sbr.rel (0) target = $region9
  $region8: #{fluentnet_forward.108} parent=0 // pred_region
    _
  $region9: #{fluentnet_forward.108} parent=0 // pred_fallthru
    _
  // Predicated region
  $region10: #{fluentnet_forward.108} parent=0 // pred_check
    _
  $region11: #{fluentnet_forward.108} parent=0 // pred_check_branch
    %13 = sbr.rel (0) target = $region13
  $region12: #{fluentnet_forward.108} parent=0 // pred_region
    _
  $region13: #{fluentnet_forward.108} parent=0 // pred_fallthru
    _
  %v15 = vld [vmem:[%s0] sm:$0xff]
  %v16 = vld [vmem:[%s0 + $0x8] sm:$0xff]
  %v17 = vld [vmem:[%s0 + $0x10] sm:$0xff]
  %v18 = vld [vmem:[%s0 + $0x18] sm:$0xff]
  %v19 = vld [vmem:[%s0 + $0x20] sm:$0xff]
  %v20 = vld [vmem:[%s0 + $0x28] sm:$0xff]
  %v21 = vld [vmem:[%s0 + $0x30] sm:$0xff]
  %v22 = vld [vmem:[%s0 + $0x38] sm:$0xff]
  %v23 = vld [vmem:[%s0 + $0x40] sm:$0xff]
  %v24 = vld [vmem:[%s0 + $0x48] sm:$0xff]
  %v25 = vld [vmem:[%s0 + $0x50] sm:$0xff]
  %v26 = vld [vmem:[%s0 + $0x58] sm:$0xff]
  %v27 = vld [vmem:[%s0 + $0x60] sm:$0xff]
  %v28 = vld [vmem:[%s0 + $0x68] sm:$0xff]
  %v29 = vld [vmem:[%s0 + $0x70] sm:$0xff]
  %v30 = vld [vmem:[%s0 + $0x78] sm:$0xff]
  %v31 = vld [vmem:[%s0 + $0x80] sm:$0xff]
  %v32 = vld [vmem:[%s0 + $0x88] sm:$0xff]
  %v33 = vld [vmem:[%s0 + $0x90] sm:$0xff]
  %v34 = vld [vmem:[%s0 + $0x98] sm:$0xff]
  %v35 = vld [vmem:[%s0 + $0xa0] sm:$0xff]
  %v36 = vld [vmem:[%s0 + $0xa8] sm:$0xff]
  %v37 = vld [vmem:[%s0 + $0xb0] sm:$0xff]
  %v38 = vld [vmem:[%s0 + $0xb8] sm:$0xff]
  %v39 = vld [vmem:[%s0 + $0xc0] sm:$0xff]
  %v40 = vld [vmem:[%s0 + $0xc8] sm:$0xff]
  %v41 = vld [vmem:[%s0 + $0xd0] sm:$0xff]
  %v42 = vld [vmem:[%s0 + $0xd8] sm:$0xff]
  %v43 = vld [vmem:[%s0 + $0xe0] sm:$0xff]
  %v44 = vld [vmem:[%s0 + $0xe8] sm:$0xff]
  %v45 = vld [vmem:[%s0 + $0xf0] sm:$0xff]
  %v46 = vld [vmem:[%s0 + $0xf8] sm:$0xff]
  %v47 = vpack.c.bf16 %v17, %v15
  %v48 = vpack.c.bf16 %v18, %v16
  %v49 = vpack.c.bf16 %v21, %v19
  %v50 = vpack.c.bf16 %v22, %v20
  %v51 = vpack.c.bf16 %v25, %v23
  %v52 = vpack.c.bf16 %v26, %v24
  %v53 = vpack.c.bf16 %v29, %v27
  %v54 = vpack.c.bf16 %v30, %v28
  %v55 = vpack.c.bf16 %v33, %v31
  %v56 = vpack.c.bf16 %v34, %v32
  %v57 = vpack.c.bf16 %v37, %v35
  %v58 = vpack.c.bf16 %v38, %v36
  %v59 = vpack.c.bf16 %v41, %v39
  %v60 = vpack.c.bf16 %v42, %v40
  %v61 = vpack.c.bf16 %v45, %v43
  %v62 = vpack.c.bf16 %v46, %v44
  %v63 = vld [vmem:[%s1] sm:$0xf]
  %v64 = vld [vmem:[%s1 + $0x4] sm:$0xf]
  %v65 = vld [vmem:[%s1 + $0x8] sm:$0xf]
  %v66 = vld [vmem:[%s1 + $0xc] sm:$0xf]
  %v67 = vld [vmem:[%s1 + $0x10] sm:$0xf]
  %v68 = vld [vmem:[%s1 + $0x14] sm:$0xf]
  %v69 = vld [vmem:[%s1 + $0x18] sm:$0xf]
  %v70 = vld [vmem:[%s1 + $0x1c] sm:$0xf]
  %v71 = vld [vmem:[%s1 + $0x20] sm:$0xf]
  %v72 = vld [vmem:[%s1 + $0x24] sm:$0xf]
  %v73 = vld [vmem:[%s1 + $0x28] sm:$0xf]
  %v74 = vld [vmem:[%s1 + $0x2c] sm:$0xf]
  %v75 = vld [vmem:[%s1 + $0x30] sm:$0xf]
  %v76 = vld [vmem:[%s1 + $0x34] sm:$0xf]
  %v77 = vld [vmem:[%s1 + $0x38] sm:$0xf]
  %v78 = vld [vmem:[%s1 + $0x3c] sm:$0xf]
  %v79 = vld [vmem:[%s1 + $0x40] sm:$0xf]
  %v80 = vld [vmem:[%s1 + $0x44] sm:$0xf]
  %v81 = vld [vmem:[%s2] sm:$0x1]
  %v83 = vlaneseq
  %v84 = vshrl.u32 %v83, 7
  %v85 = vsub.s32 0, %v84
  %v86 = vrot.slane %v81, %v85
  %v106 = vunpack.c.l.b16 %v63
  %v107 = vunpack.c.l.b16 %v64
  %v108 = vunpack.c.l.b16 %v65
  %v109 = vunpack.c.l.b16 %v66
  %v110 = vunpack.c.l.b16 %v67
  %v111 = vunpack.c.l.b16 %v68
  %v112 = vunpack.c.l.b16 %v69
  %v113 = vunpack.c.l.b16 %v70
  %v114 = vunpack.c.l.b16 %v71
  %v115 = vunpack.c.l.b16 %v72
  %v116 = vunpack.c.l.b16 %v73
  %v117 = vunpack.c.l.b16 %v74
  %v118 = vunpack.c.l.b16 %v75
  %v119 = vunpack.c.l.b16 %v76
  %v120 = vunpack.c.l.b16 %v77
  %v121 = vunpack.c.l.b16 %v78
  %v122 = vunpack.c.l.b16 %v79
  %v123 = vunpack.c.l.b16 %v80
  %v124 = vpack.c.b16 %v107, %v106
  %v125 = vpack.c.b16 %v109, %v108
  %v126 = vpack.c.b16 %v111, %v110
  %v127 = vpack.c.b16 %v113, %v112
  %v128 = vpack.c.b16 %v115, %v114
  %v129 = vpack.c.b16 %v117, %v116
  %v130 = vpack.c.b16 %v119, %v118
  %v131 = vpack.c.b16 %v121, %v120
  %v132 = vpack.c.b16 %v123, %v122
  %vm142 = vcmask 130048
  %v144 = vsel %vm142, %v48, 0
  %v147 = vsel %vm142, %v50, 0
  %v150 = vsel %vm142, %v52, 0
  %v153 = vsel %vm142, %v54, 0
  %v156 = vsel %vm142, %v56, 0
  %v159 = vsel %vm142, %v58, 0
  %v162 = vsel %vm142, %v60, 0
  %v165 = vsel %vm142, %v62, 0
  %167 = vmatprep.subr.bf16.mxu0 0
  %168 = vmatpush1.bf16.msra.mxu0 %v124
  %169 = vmatprep.subr.bf16.mxu0 0
  %170 = vmatpush1.bf16.msra.mxu0 %v125
  %171 = vmatprep.subr.bf16.mxu0 0
  %172 = vmatpush1.bf16.msra.mxu0 %v126
  %173 = vmatprep.subr.bf16.mxu0 0
  %174 = vmatpush1.bf16.msra.mxu0 %v127
  %175 = vmatprep.subr.bf16.mxu0 0
  %176 = vmatpush1.bf16.msra.mxu0 %v128
  %177 = vmatprep.subr.bf16.mxu0 0
  %178 = vmatpush1.bf16.msra.mxu0 %v129
  %179 = vmatprep.subr.bf16.mxu0 0
  %180 = vmatpush1.bf16.msra.mxu0 %v130
  %181 = vmatprep.subr.bf16.mxu0 0
  %182 = vmatpush1.bf16.msra.mxu0 %v131
  %183 = vmatprep.subr.bf16.mxu0 0
  %184 = vmatpush1.bf16.msra.mxu0 %v132
  %185 = vmatprep.subr.bf16.mxu0 0
  %186 = vmatpush1.bf16.msra.mxu0 0
  %187 = vmatprep.subr.bf16.mxu0 0
  %188 = vmatpush1.bf16.msra.mxu0 0
  %189 = vmatprep.subr.bf16.mxu0 0
  %190 = vmatpush1.bf16.msra.mxu0 0
  %191 = vmatprep.subr.bf16.mxu0 0
  %192 = vmatpush1.bf16.msra.mxu0 0
  %193 = vmatprep.subr.bf16.mxu0 0
  %194 = vmatpush1.bf16.msra.mxu0 0
  %195 = vmatprep.subr.bf16.mxu0 0
  %196 = vmatpush1.bf16.msra.mxu0 0
  %197 = vmatprep.subr.bf16.mxu0 0
  %198 = vmatpush1.bf16.msra.mxu0 0
  %199 = vmatprep.mubr.bf16.mxu0 %v144
  %200 = vmatmul.mubr.bf16.gmra.mrb[0].mxu0 %v47
  %v201 = vpop.f32.mrb[0].mxu0
  %v202 = vadd.f32 %v86, %v201
  %v203 = vpop.f32.mrb[0].mxu0
  %v204 = vpop.f32.mrb[0].mxu0
  %v205 = vadd.f32 %v86, %v204
  %v206 = vpop.f32.mrb[0].mxu0
  %207 = vmatprep.mubr.bf16.mxu0 %v147
  %208 = vmatmul.mubr.bf16.gmra.mrb[0].mxu0 %v49
  %v209 = vpop.f32.mrb[0].mxu0
  %v210 = vadd.f32 %v86, %v209
  %v211 = vpop.f32.mrb[0].mxu0
  %v212 = vpop.f32.mrb[0].mxu0
  %v213 = vadd.f32 %v86, %v212
  %v214 = vpop.f32.mrb[0].mxu0
  %215 = vmatprep.mubr.bf16.mxu0 %v150
  %216 = vmatmul.mubr.bf16.gmra.mrb[0].mxu0 %v51
  %v217 = vpop.f32.mrb[0].mxu0
  %v218 = vadd.f32 %v86, %v217
  %v219 = vpop.f32.mrb[0].mxu0
  %v220 = vpop.f32.mrb[0].mxu0
  %v221 = vadd.f32 %v86, %v220
  %v222 = vpop.f32.mrb[0].mxu0
  %223 = vmatprep.mubr.bf16.mxu0 %v153
  %224 = vmatmul.mubr.bf16.gmra.mrb[0].mxu0 %v53
  %v225 = vpop.f32.mrb[0].mxu0
  %v226 = vadd.f32 %v86, %v225
  %v227 = vpop.f32.mrb[0].mxu0
  %v228 = vpop.f32.mrb[0].mxu0
  %v229 = vadd.f32 %v86, %v228
  %v230 = vpop.f32.mrb[0].mxu0
  %231 = vmatprep.mubr.bf16.mxu0 %v156
  %232 = vmatmul.mubr.bf16.gmra.mrb[0].mxu0 %v55
  %v233 = vpop.f32.mrb[0].mxu0
  %v234 = vadd.f32 %v86, %v233
  %v235 = vpop.f32.mrb[0].mxu0
  %v236 = vpop.f32.mrb[0].mxu0
  %v237 = vadd.f32 %v86, %v236
  %v238 = vpop.f32.mrb[0].mxu0
  %239 = vmatprep.mubr.bf16.mxu0 %v159
  %240 = vmatmul.mubr.bf16.gmra.mrb[0].mxu0 %v57
  %v241 = vpop.f32.mrb[0].mxu0
  %v242 = vadd.f32 %v86, %v241
  %v243 = vpop.f32.mrb[0].mxu0
  %v244 = vpop.f32.mrb[0].mxu0
  %v245 = vadd.f32 %v86, %v244
  %v246 = vpop.f32.mrb[0].mxu0
  %247 = vmatprep.mubr.bf16.mxu0 %v162
  %248 = vmatmul.mubr.bf16.gmra.mrb[0].mxu0 %v59
  %v249 = vpop.f32.mrb[0].mxu0
  %v250 = vadd.f32 %v86, %v249
  %v251 = vpop.f32.mrb[0].mxu0
  %v252 = vpop.f32.mrb[0].mxu0
  %v253 = vadd.f32 %v86, %v252
  %v254 = vpop.f32.mrb[0].mxu0
  %255 = vmatprep.mubr.bf16.mxu0 %v165
  %256 = vmatmul.mubr.bf16.gmra.mrb[0].mxu0 %v61
  %v257 = vpop.f32.mrb[0].mxu0
  %v258 = vadd.f32 %v86, %v257
  %v259 = vpop.f32.mrb[0].mxu0
  %v260 = vpop.f32.mrb[0].mxu0
  %v261 = vadd.f32 %v86, %v260
  %v262 = vpop.f32.mrb[0].mxu0
  %263 = vdwg.mxu0
  %v264 = vmax.f32 %v202, 0.0
  %v265 = vmax.f32 %v205, 0.0
  %v266 = vmax.f32 %v210, 0.0
  %v267 = vmax.f32 %v213, 0.0
  %v268 = vmax.f32 %v218, 0.0
  %v269 = vmax.f32 %v221, 0.0
  %v270 = vmax.f32 %v226, 0.0
  %v271 = vmax.f32 %v229, 0.0
  %v272 = vmax.f32 %v234, 0.0
  %v273 = vmax.f32 %v237, 0.0
  %v274 = vmax.f32 %v242, 0.0
  %v275 = vmax.f32 %v245, 0.0
  %v276 = vmax.f32 %v250, 0.0
  %v277 = vmax.f32 %v253, 0.0
  %v278 = vmax.f32 %v258, 0.0
  %v279 = vmax.f32 %v261, 0.0
  %vm280 = vcmask 261120
  %281 = vst.msk [vmem:[%s3] sm:$0xff] %vm280, %v264
  %282 = vst.msk [vmem:[%s3 + $0x8] sm:$0xff] %vm280, %v265
  %283 = vst.msk [vmem:[%s3 + $0x10] sm:$0xff] %vm280, %v266
  %284 = vst.msk [vmem:[%s3 + $0x18] sm:$0xff] %vm280, %v267
  %285 = vst.msk [vmem:[%s3 + $0x20] sm:$0xff] %vm280, %v268
  %286 = vst.msk [vmem:[%s3 + $0x28] sm:$0xff] %vm280, %v269
  %287 = vst.msk [vmem:[%s3 + $0x30] sm:$0xff] %vm280, %v270
  %288 = vst.msk [vmem:[%s3 + $0x38] sm:$0xff] %vm280, %v271
  %289 = vst.msk [vmem:[%s3 + $0x40] sm:$0xff] %vm280, %v272
  %290 = vst.msk [vmem:[%s3 + $0x48] sm:$0xff] %vm280, %v273
  %291 = vst.msk [vmem:[%s3 + $0x50] sm:$0xff] %vm280, %v274
  %292 = vst.msk [vmem:[%s3 + $0x58] sm:$0xff] %vm280, %v275
  %293 = vst.msk [vmem:[%s3 + $0x60] sm:$0xff] %vm280, %v276
  %294 = vst.msk [vmem:[%s3 + $0x68] sm:$0xff] %vm280, %v277
  %295 = vst.msk [vmem:[%s3 + $0x70] sm:$0xff] %vm280, %v278
  %296 = vst.msk [vmem:[%s3 + $0x78] sm:$0xff] %vm280, %v279
  // Predicated region
  $region14: #{fluentnet_forward.108} parent=0 // pred_check
    _
  $region15: #{fluentnet_forward.108} parent=0 // pred_check_branch
    %298 = sbr.rel (0) target = $region17
  $region16: #{fluentnet_forward.108} parent=0 // pred_region
    _
  $region17: #{fluentnet_forward.108} parent=0 // pred_fallthru
    _
  // Predicated region
  $region18: #{fluentnet_forward.108} parent=0 // pred_check
    _
  $region19: #{fluentnet_forward.108} parent=0 // pred_check_branch
    %300 = sbr.rel (0) target = $region21
  $region20: #{fluentnet_forward.108} parent=0 // pred_region
    _
  $region21: #{fluentnet_forward.108} parent=0 // pred_fallthru
    _

// kernel: fluentnet_forward.109
$region0: #{fluentnet_forward.109}
  #allocation0 [shape = 'u32[]', space=smem, size = 0x4, offset = 0x4, fixed_abs, tag = 'smem constant byte address 0x4 - core index']
  #allocation1 [shape = 'u32[144,128]{1,0:T(1,128)}', space=vmem, size = 0x12000, scoped, tag = 'internal scratch']
  %s0 = inlined_call_operand.vmem [shape: f32[128,288], index: 0, kind: input, shape index: {}]
  %s1 = inlined_call_operand.vmem [shape: bf16[288,32], index: 1, kind: input, shape index: {}]
  %s2 = inlined_call_operand.vmem [shape: f32[1,32], index: 2, kind: input, shape index: {}]
  %s3 = inlined_call_operand.vmem [shape: f32[128,32], index: 3, kind: output, shape index: {}]
  %s4 = sld [smem:[#allocation0]]
  $region22: #{fluentnet_forward.109} parent=0
    _
  %s6 = ssub.s32 1, %s4
  %s7 = scalar_select 0, %s6, %s4
  // Predicated region
  $region2: #{fluentnet_forward.109} parent=0 // pred_check
    _
  $region3: #{fluentnet_forward.109} parent=0 // pred_check_branch
    %9 = sbr.rel (0) target = $region5
  $region4: #{fluentnet_forward.109} parent=0 // pred_region
    _
  $region5: #{fluentnet_forward.109} parent=0 // pred_fallthru
    _
  // Predicated region
  $region6: #{fluentnet_forward.109} parent=0 // pred_check
    _
  $region7: #{fluentnet_forward.109} parent=0 // pred_check_branch
    %11 = sbr.rel (0) target = $region9
  $region8: #{fluentnet_forward.109} parent=0 // pred_region
    _
  $region9: #{fluentnet_forward.109} parent=0 // pred_fallthru
    _
  // Predicated region
  $region10: #{fluentnet_forward.109} parent=0 // pred_check
    _
  $region11: #{fluentnet_forward.109} parent=0 // pred_check_branch
    %13 = sbr.rel (0) target = $region13
  $region12: #{fluentnet_forward.109} parent=0 // pred_region
    _
  $region13: #{fluentnet_forward.109} parent=0 // pred_fallthru
    _
  %v15 = vld [vmem:[%s0] sm:$0xff]
  %v16 = vld [vmem:[%s0 + $0x8] sm:$0xff]
  %v17 = vld [vmem:[%s0 + $0x10] sm:$0xff]
  %v18 = vld [vmem:[%s0 + $0x18] sm:$0xff]
  %v19 = vld [vmem:[%s0 + $0x20] sm:$0xff]
  %v20 = vld [vmem:[%s0 + $0x28] sm:$0xff]
  %v21 = vld [vmem:[%s0 + $0x30] sm:$0xff]
  %v22 = vld [vmem:[%s0 + $0x38] sm:$0xff]
  %v23 = vld [vmem:[%s0 + $0x40] sm:$0xff]
  %v24 = vld [vmem:[%s0 + $0x48] sm:$0xff]
  %v25 = vld [vmem:[%s0 + $0x50] sm:$0xff]
  %v26 = vld [vmem:[%s0 + $0x58] sm:$0xff]
  %v27 = vld [vmem:[%s0 + $0x60] sm:$0xff]
  %v28 = vld [vmem:[%s0 + $0x68] sm:$0xff]
  %v29 = vld [vmem:[%s0 + $0x70] sm:$0xff]
  %v30 = vld [vmem:[%s0 + $0x78] sm:$0xff]
  %v31 = vld [vmem:[%s0 + $0x80] sm:$0xff]
  %v32 = vld [vmem:[%s0 + $0x88] sm:$0xff]
  %v33 = vld [vmem:[%s0 + $0x90] sm:$0xff]
  %v34 = vld [vmem:[%s0 + $0x98] sm:$0xff]
  %v35 = vld [vmem:[%s0 + $0xa0] sm:$0xff]
  %v36 = vld [vmem:[%s0 + $0xa8] sm:$0xff]
  %v37 = vld [vmem:[%s0 + $0xb0] sm:$0xff]
  %v38 = vld [vmem:[%s0 + $0xb8] sm:$0xff]
  %v39 = vld [vmem:[%s0 + $0xc0] sm:$0xff]
  %v40 = vld [vmem:[%s0 + $0xc8] sm:$0xff]
  %v41 = vld [vmem:[%s0 + $0xd0] sm:$0xff]
  %v42 = vld [vmem:[%s0 + $0xd8] sm:$0xff]
  %v43 = vld [vmem:[%s0 + $0xe0] sm:$0xff]
  %v44 = vld [vmem:[%s0 + $0xe8] sm:$0xff]
  %v45 = vld [vmem:[%s0 + $0xf0] sm:$0xff]
  %v46 = vld [vmem:[%s0 + $0xf8] sm:$0xff]
  %v47 = vld [vmem:[%s0 + $0x100] sm:$0xff]
  %v48 = vld [vmem:[%s0 + $0x108] sm:$0xff]
  %v49 = vld [vmem:[%s0 + $0x110] sm:$0xff]
  %v50 = vld [vmem:[%s0 + $0x118] sm:$0xff]
  %v51 = vld [vmem:[%s0 + $0x120] sm:$0xff]
  %v52 = vld [vmem:[%s0 + $0x128] sm:$0xff]
  %v53 = vld [vmem:[%s0 + $0x130] sm:$0xff]
  %v54 = vld [vmem:[%s0 + $0x138] sm:$0xff]
  %v55 = vld [vmem:[%s0 + $0x140] sm:$0xff]
  %v56 = vld [vmem:[%s0 + $0x148] sm:$0xff]
  %v57 = vld [vmem:[%s0 + $0x150] sm:$0xff]
  %v58 = vld [vmem:[%s0 + $0x158] sm:$0xff]
  %v59 = vld [vmem:[%s0 + $0x160] sm:$0xff]
  %v60 = vld [vmem:[%s0 + $0x168] sm:$0xff]
  %v61 = vld [vmem:[%s0 + $0x170] sm:$0xff]
  %v62 = vld [vmem:[%s0 + $0x178] sm:$0xff]
  %v63 = vpack.c.bf16 %v18, %v15
  %v64 = vpack.c.bf16 %v19, %v16
  %v65 = vpack.c.bf16 %v20, %v17
  %v66 = vpack.c.bf16 %v24, %v21
  %v67 = vpack.c.bf16 %v25, %v22
  %v68 = vpack.c.bf16 %v26, %v23
  %v69 = vpack.c.bf16 %v30, %v27
  %v70 = vpack.c.bf16 %v31, %v28
  %v71 = vpack.c.bf16 %v32, %v29
  %v72 = vpack.c.bf16 %v36, %v33
  %v73 = vpack.c.bf16 %v37, %v34
  %v74 = vpack.c.bf16 %v38, %v35
  %v75 = vpack.c.bf16 %v42, %v39
  %v76 = vpack.c.bf16 %v43, %v40
  %v77 = vpack.c.bf16 %v44, %v41
  %v78 = vpack.c.bf16 %v48, %v45
  %v79 = vpack.c.bf16 %v49, %v46
  %v80 = vpack.c.bf16 %v50, %v47
  %v81 = vpack.c.bf16 %v54, %v51
  %v82 = vpack.c.bf16 %v55, %v52
  %v83 = vpack.c.bf16 %v56, %v53
  %v84 = vpack.c.bf16 %v60, %v57
  %v85 = vpack.c.bf16 %v61, %v58
  %v86 = vpack.c.bf16 %v62, %v59
  %v87 = vld [vmem:[%s1] sm:$0xf]
  %v88 = vld [vmem:[%s1 + $0x4] sm:$0xf]
  %v89 = vld [vmem:[%s1 + $0x8] sm:$0xf]
  %v90 = vld [vmem:[%s1 + $0xc] sm:$0xf]
  %v91 = vld [vmem:[%s1 + $0x10] sm:$0xf]
  %v92 = vld [vmem:[%s1 + $0x14] sm:$0xf]
  %v93 = vld [vmem:[%s1 + $0x18] sm:$0xf]
  %v94 = vld [vmem:[%s1 + $0x1c] sm:$0xf]
  %v95 = vld [vmem:[%s1 + $0x20] sm:$0xf]
  %v96 = vld [vmem:[%s1 + $0x24] sm:$0xf]
  %v97 = vld [vmem:[%s1 + $0x28] sm:$0xf]
  %v98 = vld [vmem:[%s1 + $0x2c] sm:$0xf]
  %v99 = vld [vmem:[%s1 + $0x30] sm:$0xf]
  %v100 = vld [vmem:[%s1 + $0x34] sm:$0xf]
  %v101 = vld [vmem:[%s1 + $0x38] sm:$0xf]
  %v102 = vld [vmem:[%s1 + $0x3c] sm:$0xf]
  %v103 = vld [vmem:[%s1 + $0x40] sm:$0xf]
  %v104 = vld [vmem:[%s1 + $0x44] sm:$0xf]
  %v105 = vld [vmem:[%s1 + $0x48] sm:$0xf]
  %v106 = vld [vmem:[%s1 + $0x4c] sm:$0xf]
  %v107 = vld [vmem:[%s1 + $0x50] sm:$0xf]
  %v108 = vld [vmem:[%s1 + $0x54] sm:$0xf]
  %v109 = vld [vmem:[%s1 + $0x58] sm:$0xf]
  %v110 = vld [vmem:[%s1 + $0x5c] sm:$0xf]
  %v111 = vld [vmem:[%s1 + $0x60] sm:$0xf]
  %v112 = vld [vmem:[%s1 + $0x64] sm:$0xf]
  %v113 = vld [vmem:[%s1 + $0x68] sm:$0xf]
  %v114 = vld [vmem:[%s1 + $0x6c] sm:$0xf]
  %v115 = vld [vmem:[%s1 + $0x70] sm:$0xf]
  %v116 = vld [vmem:[%s1 + $0x74] sm:$0xf]
  %v117 = vld [vmem:[%s1 + $0x78] sm:$0xf]
  %v118 = vld [vmem:[%s1 + $0x7c] sm:$0xf]
  %v119 = vld [vmem:[%s1 + $0x80] sm:$0xf]
  %v120 = vld [vmem:[%s1 + $0x84] sm:$0xf]
  %v121 = vld [vmem:[%s1 + $0x88] sm:$0xf]
  %v122 = vld [vmem:[%s1 + $0x8c] sm:$0xf]
  %v123 = vld [vmem:[%s2] sm:$0x1]
  %v125 = vlaneseq
  %v126 = vshrl.u32 %v125, 7
  %v127 = vsub.s32 0, %v126
  %v128 = vrot.slane %v123, %v127
  %v166 = vunpack.c.l.b16 %v87
  %v167 = vunpack.c.l.b16 %v88
  %v168 = vunpack.c.l.b16 %v89
  %v169 = vunpack.c.l.b16 %v90
  %v170 = vunpack.c.l.b16 %v91
  %v171 = vunpack.c.l.b16 %v92
  %v172 = vunpack.c.l.b16 %v93
  %v173 = vunpack.c.l.b16 %v94
  %v174 = vunpack.c.l.b16 %v95
  %v175 = vunpack.c.l.b16 %v96
  %v176 = vunpack.c.l.b16 %v97
  %v177 = vunpack.c.l.b16 %v98
  %v178 = vunpack.c.l.b16 %v99
  %v179 = vunpack.c.l.b16 %v100
  %v180 = vunpack.c.l.b16 %v101
  %v181 = vunpack.c.l.b16 %v102
  %v182 = vunpack.c.l.b16 %v103
  %v183 = vunpack.c.l.b16 %v104
  %v184 = vunpack.c.l.b16 %v105
  %v185 = vunpack.c.l.b16 %v106
  %v186 = vunpack.c.l.b16 %v107
  %v187 = vunpack.c.l.b16 %v108
  %v188 = vunpack.c.l.b16 %v109
  %v189 = vunpack.c.l.b16 %v110
  %v190 = vunpack.c.l.b16 %v111
  %v191 = vunpack.c.l.b16 %v112
  %v192 = vunpack.c.l.b16 %v113
  %v193 = vunpack.c.l.b16 %v114
  %v194 = vunpack.c.l.b16 %v115
  %v195 = vunpack.c.l.b16 %v116
  %v196 = vunpack.c.l.b16 %v117
  %v197 = vunpack.c.l.b16 %v118
  %v198 = vunpack.c.l.b16 %v119
  %v199 = vunpack.c.l.b16 %v120
  %v200 = vunpack.c.l.b16 %v121
  %v201 = vunpack.c.l.b16 %v122
  %v202 = vpack.c.b16 %v167, %v166
  %v203 = vpack.c.b16 %v169, %v168
  %v204 = vpack.c.b16 %v171, %v170
  %v205 = vpack.c.b16 %v173, %v172
  %v206 = vpack.c.b16 %v175, %v174
  %v207 = vpack.c.b16 %v177, %v176
  %v208 = vpack.c.b16 %v179, %v178
  %v209 = vpack.c.b16 %v181, %v180
  %v210 = vpack.c.b16 %v183, %v182
  %v211 = vpack.c.b16 %v185, %v184
  %v212 = vpack.c.b16 %v187, %v186
  %v213 = vpack.c.b16 %v189, %v188
  %v214 = vpack.c.b16 %v191, %v190
  %v215 = vpack.c.b16 %v193, %v192
  %v216 = vpack.c.b16 %v195, %v194
  %v217 = vpack.c.b16 %v197, %v196
  %v218 = vpack.c.b16 %v199, %v198
  %v219 = vpack.c.b16 %v201, %v200
  %vm238 = vcmask 261120
  %v240 = vsel %vm238, %v65, 0
  %v243 = vsel %vm238, %v68, 0
  %v246 = vsel %vm238, %v71, 0
  %v249 = vsel %vm238, %v74, 0
  %v252 = vsel %vm238, %v77, 0
  %v255 = vsel %vm238, %v80, 0
  %v258 = vsel %vm238, %v83, 0
  %v261 = vsel %vm238, %v86, 0
  %263 = vmatprep.subr.bf16.mxu0 0
  %264 = vmatpush1.bf16.msra.mxu0 %v202
  %265 = vmatprep.subr.bf16.mxu0 0
  %266 = vmatpush1.bf16.msra.mxu0 %v203
  %267 = vmatprep.subr.bf16.mxu0 0
  %268 = vmatpush1.bf16.msra.mxu0 %v204
  %269 = vmatprep.subr.bf16.mxu0 0
  %270 = vmatpush1.bf16.msra.mxu0 %v205
  %271 = vmatprep.subr.bf16.mxu0 0
  %272 = vmatpush1.bf16.msra.mxu0 %v206
  %273 = vmatprep.subr.bf16.mxu0 0
  %274 = vmatpush1.bf16.msra.mxu0 %v207
  %275 = vmatprep.subr.bf16.mxu0 0
  %276 = vmatpush1.bf16.msra.mxu0 %v208
  %277 = vmatprep.subr.bf16.mxu0 0
  %278 = vmatpush1.bf16.msra.mxu0 %v209
  %279 = vmatprep.subr.bf16.mxu0 0
  %280 = vmatpush1.bf16.msra.mxu0 %v210
  %281 = vmatprep.subr.bf16.mxu0 0
  %282 = vmatpush1.bf16.msra.mxu0 %v211
  %283 = vmatprep.subr.bf16.mxu0 0
  %284 = vmatpush1.bf16.msra.mxu0 %v212
  %285 = vmatprep.subr.bf16.mxu0 0
  %286 = vmatpush1.bf16.msra.mxu0 %v213
  %287 = vmatprep.subr.bf16.mxu0 0
  %288 = vmatpush1.bf16.msra.mxu0 %v214
  %289 = vmatprep.subr.bf16.mxu0 0
  %290 = vmatpush1.bf16.msra.mxu0 %v215
  %291 = vmatprep.subr.bf16.mxu0 0
  %292 = vmatpush1.bf16.msra.mxu0 %v216
  %293 = vmatprep.subr.bf16.mxu0 0
  %294 = vmatpush1.bf16.msra.mxu0 %v217
  %295 = vmatprep.mubr.bf16.mxu0 %v64
  %296 = vmatmul.mubr.bf16.gmra.mrb[0].mxu0 %v63
  %v297 = vpop.f32.mrb[0].mxu0
  %v298 = vadd.f32 %v128, %v297
  %v299 = vpop.f32.mrb[0].mxu0
  %v300 = vpop.f32.mrb[0].mxu0
  %v301 = vadd.f32 %v128, %v300
  %v302 = vpop.f32.mrb[0].mxu0
  %303 = vmatprep.mubr.bf16.mxu0 %v67
  %304 = vmatmul.mubr.bf16.gmra.mrb[0].mxu0 %v66
  %v305 = vpop.f32.mrb[0].mxu0
  %v306 = vadd.f32 %v128, %v305
  %v307 = vpop.f32.mrb[0].mxu0
  %v308 = vpop.f32.mrb[0].mxu0
  %v309 = vadd.f32 %v128, %v308
  %v310 = vpop.f32.mrb[0].mxu0
  %311 = vmatprep.mubr.bf16.mxu0 %v70
  %312 = vmatmul.mubr.bf16.gmra.mrb[0].mxu0 %v69
  %v313 = vpop.f32.mrb[0].mxu0
  %v314 = vadd.f32 %v128, %v313
  %v315 = vpop.f32.mrb[0].mxu0
  %v316 = vpop.f32.mrb[0].mxu0
  %v317 = vadd.f32 %v128, %v316
  %v318 = vpop.f32.mrb[0].mxu0
  %319 = vmatprep.mubr.bf16.mxu0 %v73
  %320 = vmatmul.mubr.bf16.gmra.mrb[0].mxu0 %v72
  %v321 = vpop.f32.mrb[0].mxu0
  %v322 = vadd.f32 %v128, %v321
  %v323 = vpop.f32.mrb[0].mxu0
  %v324 = vpop.f32.mrb[0].mxu0
  %v325 = vadd.f32 %v128, %v324
  %v326 = vpop.f32.mrb[0].mxu0
  %327 = vmatprep.mubr.bf16.mxu0 %v76
  %328 = vmatmul.mubr.bf16.gmra.mrb[0].mxu0 %v75
  %v329 = vpop.f32.mrb[0].mxu0
  %v330 = vadd.f32 %v128, %v329
  %v331 = vpop.f32.mrb[0].mxu0
  %v332 = vpop.f32.mrb[0].mxu0
  %v333 = vadd.f32 %v128, %v332
  %v334 = vpop.f32.mrb[0].mxu0
  %335 = vmatprep.mubr.bf16.mxu0 %v79
  %336 = vmatmul.mubr.bf16.gmra.mrb[0].mxu0 %v78
  %v337 = vpop.f32.mrb[0].mxu0
  %v338 = vadd.f32 %v128, %v337
  %v339 = vpop.f32.mrb[0].mxu0
  %v340 = vpop.f32.mrb[0].mxu0
  %v341 = vadd.f32 %v128, %v340
  %v342 = vpop.f32.mrb[0].mxu0
  %343 = vmatprep.mubr.bf16.mxu0 %v82
  %344 = vmatmul.mubr.bf16.gmra.mrb[0].mxu0 %v81
  %v345 = vpop.f32.mrb[0].mxu0
  %v346 = vadd.f32 %v128, %v345
  %v347 = vpop.f32.mrb[0].mxu0
  %v348 = vpop.f32.mrb[0].mxu0
  %v349 = vadd.f32 %v128, %v348
  %v350 = vpop.f32.mrb[0].mxu0
  %351 = vmatprep.mubr.bf16.mxu0 %v85
  %352 = vmatmul.mubr.bf16.gmra.mrb[0].mxu0 %v84
  %v353 = vpop.f32.mrb[0].mxu0
  %v354 = vadd.f32 %v128, %v353
  %v355 = vpop.f32.mrb[0].mxu0
  %v356 = vpop.f32.mrb[0].mxu0
  %v357 = vadd.f32 %v128, %v356
  %v358 = vpop.f32.mrb[0].mxu0
  %359 = vdwg.mxu0
  %360 = vmatprep.subr.bf16.mxu0 0
  %361 = vmatpush1.bf16.msra.mxu0 %v218
  %362 = vmatprep.subr.bf16.mxu0 0
  %363 = vmatpush1.bf16.msra.mxu0 %v219
  %364 = vmatprep.subr.bf16.mxu0 0
  %365 = vmatpush1.bf16.msra.mxu0 0
  %366 = vmatprep.subr.bf16.mxu0 0
  %367 = vmatpush1.bf16.msra.mxu0 0
  %368 = vmatprep.subr.bf16.mxu0 0
  %369 = vmatpush1.bf16.msra.mxu0 0
  %370 = vmatprep.subr.bf16.mxu0 0
  %371 = vmatpush1.bf16.msra.mxu0 0
  %372 = vmatprep.subr.bf16.mxu0 0
  %373 = vmatpush1.bf16.msra.mxu0 0
  %374 = vmatprep.subr.bf16.mxu0 0
  %375 = vmatpush1.bf16.msra.mxu0 0
  %376 = vmatprep.subr.bf16.mxu0 0
  %377 = vmatpush1.bf16.msra.mxu0 0
  %378 = vmatprep.subr.bf16.mxu0 0
  %379 = vmatpush1.bf16.msra.mxu0 0
  %380 = vmatprep.subr.bf16.mxu0 0
  %381 = vmatpush1.bf16.msra.mxu0 0
  %382 = vmatprep.subr.bf16.mxu0 0
  %383 = vmatpush1.bf16.msra.mxu0 0
  %384 = vmatprep.subr.bf16.mxu0 0
  %385 = vmatpush1.bf16.msra.mxu0 0
  %386 = vmatprep.subr.bf16.mxu0 0
  %387 = vmatpush1.bf16.msra.mxu0 0
  %388 = vmatprep.subr.bf16.mxu0 0
  %389 = vmatpush1.bf16.msra.mxu0 0
  %390 = vmatprep.subr.bf16.mxu0 0
  %391 = vmatpush1.bf16.msra.mxu0 0
  %392 = vmatprep.mubr.bf16.mxu0 0
  %393 = vmatmul.mubr.bf16.gmra.mrb[0].mxu0 %v240
  %v394 = vpop.f32.mrb[0].mxu0
  %v395 = vadd.f32 %v298, %v394
  %v396 = vpop.f32.mrb[0].mxu0
  %v397 = vpop.f32.mrb[0].mxu0
  %v398 = vadd.f32 %v301, %v397
  %v399 = vpop.f32.mrb[0].mxu0
  %400 = vmatprep.mubr.bf16.mxu0 0
  %401 = vmatmul.mubr.bf16.gmra.mrb[0].mxu0 %v243
  %v402 = vpop.f32.mrb[0].mxu0
  %v403 = vadd.f32 %v306, %v402
  %v404 = vpop.f32.mrb[0].mxu0
  %v405 = vpop.f32.mrb[0].mxu0
  %v406 = vadd.f32 %v309, %v405
  %v407 = vpop.f32.mrb[0].mxu0
  %408 = vmatprep.mubr.bf16.mxu0 0
  %409 = vmatmul.mubr.bf16.gmra.mrb[0].mxu0 %v246
  %v410 = vpop.f32.mrb[0].mxu0
  %v411 = vadd.f32 %v314, %v410
  %v412 = vpop.f32.mrb[0].mxu0
  %v413 = vpop.f32.mrb[0].mxu0
  %v414 = vadd.f32 %v317, %v413
  %v415 = vpop.f32.mrb[0].mxu0
  %416 = vmatprep.mubr.bf16.mxu0 0
  %417 = vmatmul.mubr.bf16.gmra.mrb[0].mxu0 %v249
  %v418 = vpop.f32.mrb[0].mxu0
  %v419 = vadd.f32 %v322, %v418
  %v420 = vpop.f32.mrb[0].mxu0
  %v421 = vpop.f32.mrb[0].mxu0
  %v422 = vadd.f32 %v325, %v421
  %v423 = vpop.f32.mrb[0].mxu0
  %424 = vmatprep.mubr.bf16.mxu0 0
  %425 = vmatmul.mubr.bf16.gmra.mrb[0].mxu0 %v252
  %v426 = vpop.f32.mrb[0].mxu0
  %v427 = vadd.f32 %v330, %v426
  %v428 = vpop.f32.mrb[0].mxu0
  %v429 = vpop.f32.mrb[0].mxu0
  %v430 = vadd.f32 %v333, %v429
  %v431 = vpop.f32.mrb[0].mxu0
  %432 = vmatprep.mubr.bf16.mxu0 0
  %433 = vmatmul.mubr.bf16.gmra.mrb[0].mxu0 %v255
  %v434 = vpop.f32.mrb[0].mxu0
  %v435 = vadd.f32 %v338, %v434
  %v436 = vpop.f32.mrb[0].mxu0
  %v437 = vpop.f32.mrb[0].mxu0
  %v438 = vadd.f32 %v341, %v437
  %v439 = vpop.f32.mrb[0].mxu0
  %440 = vmatprep.mubr.bf16.mxu0 0
  %441 = vmatmul.mubr.bf16.gmra.mrb[0].mxu0 %v258
  %v442 = vpop.f32.mrb[0].mxu0
  %v443 = vadd.f32 %v346, %v442
  %v444 = vpop.f32.mrb[0].mxu0
  %v445 = vpop.f32.mrb[0].mxu0
  %v446 = vadd.f32 %v349, %v445
  %v447 = vpop.f32.mrb[0].mxu0
  %448 = vmatprep.mubr.bf16.mxu0 0
  %449 = vmatmul.mubr.bf16.gmra.mrb[0].mxu0 %v261
  %v450 = vpop.f32.mrb[0].mxu0
  %v451 = vadd.f32 %v354, %v450
  %v452 = vpop.f32.mrb[0].mxu0
  %v453 = vpop.f32.mrb[0].mxu0
  %v454 = vadd.f32 %v357, %v453
  %v455 = vpop.f32.mrb[0].mxu0
  %456 = vdwg.mxu0
  %457 = vst.msk [vmem:[%s3] sm:$0xff] %vm238, %v395
  %458 = vst.msk [vmem:[%s3 + $0x8] sm:$0xff] %vm238, %v398
  %459 = vst.msk [vmem:[%s3 + $0x10] sm:$0xff] %vm238, %v403
  %460 = vst.msk [vmem:[%s3 + $0x18] sm:$0xff] %vm238, %v406
  %461 = vst.msk [vmem:[%s3 + $0x20] sm:$0xff] %vm238, %v411
  %462 = vst.msk [vmem:[%s3 + $0x28] sm:$0xff] %vm238, %v414
  %463 = vst.msk [vmem:[%s3 + $0x30] sm:$0xff] %vm238, %v419
  %464 = vst.msk [vmem:[%s3 + $0x38] sm:$0xff] %vm238, %v422
  %465 = vst.msk [vmem:[%s3 + $0x40] sm:$0xff] %vm238, %v427
  %466 = vst.msk [vmem:[%s3 + $0x48] sm:$0xff] %vm238, %v430
  %467 = vst.msk [vmem:[%s3 + $0x50] sm:$0xff] %vm238, %v435
  %468 = vst.msk [vmem:[%s3 + $0x58] sm:$0xff] %vm238, %v438
  %469 = vst.msk [vmem:[%s3 + $0x60] sm:$0xff] %vm238, %v443
  %470 = vst.msk [vmem:[%s3 + $0x68] sm:$0xff] %vm238, %v446
  %471 = vst.msk [vmem:[%s3 + $0x70] sm:$0xff] %vm238, %v451
  %472 = vst.msk [vmem:[%s3 + $0x78] sm:$0xff] %vm238, %v454
  // Predicated region
  $region14: #{fluentnet_forward.109} parent=0 // pred_check
    _
  $region15: #{fluentnet_forward.109} parent=0 // pred_check_branch
    %474 = sbr.rel (0) target = $region17
  $region16: #{fluentnet_forward.109} parent=0 // pred_region
    _
  $region17: #{fluentnet_forward.109} parent=0 // pred_fallthru
    _
  // Predicated region
  $region18: #{fluentnet_forward.109} parent=0 // pred_check
    _
  $region19: #{fluentnet_forward.109} parent=0 // pred_check_branch
    %476 = sbr.rel (0) target = $region21
  $region20: #{fluentnet_forward.109} parent=0 // pred_region
    _
  $region21: #{fluentnet_forward.109} parent=0 // pred_fallthru
    _

// kernel: fluentnet_forward.111
$region0: #{fluentnet_forward.111}
  #allocation0 [shape = 'u32[]', space=smem, size = 0x4, offset = 0x4, fixed_abs, tag = 'smem constant byte address 0x4 - core index']
  #allocation1 [shape = 'u32[144,128]{1,0:T(1,128)}', space=vmem, size = 0x12000, scoped, tag = 'internal scratch']
  %s0 = inlined_call_operand.vmem [shape: f32[2,64,32], index: 0, kind: input, shape index: {}]
  %s1 = inlined_call_operand.vmem [shape: f32[32,8], index: 1, kind: input, shape index: {}]
  %s2 = inlined_call_operand.vmem [shape: f32[8,32], index: 2, kind: input, shape index: {}]
  %s3 = inlined_call_operand.vmem [shape: f32[2,32], index: 3, kind: output, shape index: {}]
  %s4 = sld [smem:[#allocation0]]
  $region22: #{fluentnet_forward.111} parent=0
    _
  %s6 = ssub.s32 1, %s4
  %s7 = scalar_select 0, %s6, %s4
  // Predicated region
  $region2: #{fluentnet_forward.111} parent=0 // pred_check
    _
  $region3: #{fluentnet_forward.111} parent=0 // pred_check_branch
    %9 = sbr.rel (0) target = $region5
  $region4: #{fluentnet_forward.111} parent=0 // pred_region
    _
  $region5: #{fluentnet_forward.111} parent=0 // pred_fallthru
    _
  // Predicated region
  $region6: #{fluentnet_forward.111} parent=0 // pred_check
    _
  $region7: #{fluentnet_forward.111} parent=0 // pred_check_branch
    %11 = sbr.rel (0) target = $region9
  $region8: #{fluentnet_forward.111} parent=0 // pred_region
    _
  $region9: #{fluentnet_forward.111} parent=0 // pred_fallthru
    _
  // Predicated region
  $region10: #{fluentnet_forward.111} parent=0 // pred_check
    _
  $region11: #{fluentnet_forward.111} parent=0 // pred_check_branch
    %13 = sbr.rel (0) target = $region13
  $region12: #{fluentnet_forward.111} parent=0 // pred_region
    _
  $region13: #{fluentnet_forward.111} parent=0 // pred_fallthru
    _
  %v14 = vld [vmem:[%s0] sm:$0xff]
  %v15 = vld [vmem:[%s0 + $0x8] sm:$0xff]
  %v16 = vld [vmem:[%s0 + $0x10] sm:$0xff]
  %v17 = vld [vmem:[%s0 + $0x18] sm:$0xff]
  %v18 = vld [vmem:[%s0 + $0x20] sm:$0xff]
  %v19 = vld [vmem:[%s0 + $0x28] sm:$0xff]
  %v20 = vld [vmem:[%s0 + $0x30] sm:$0xff]
  %v21 = vld [vmem:[%s0 + $0x38] sm:$0xff]
  %v22 = vld [vmem:[%s0 + $0x40] sm:$0xff]
  %v23 = vld [vmem:[%s0 + $0x48] sm:$0xff]
  %v24 = vld [vmem:[%s0 + $0x50] sm:$0xff]
  %v25 = vld [vmem:[%s0 + $0x58] sm:$0xff]
  %v26 = vld [vmem:[%s0 + $0x60] sm:$0xff]
  %v27 = vld [vmem:[%s0 + $0x68] sm:$0xff]
  %v28 = vld [vmem:[%s0 + $0x70] sm:$0xff]
  %v29 = vld [vmem:[%s0 + $0x78] sm:$0xff]
  %vm30 = vcmask 261120
  %v31 = vsel %vm30, %v14, 0.0
  %v32 = vsel %vm30, %v15, 0.0
  %v33 = vadd.f32 %v31, %v32
  %v34 = vsel %vm30, %v16, 0.0
  %v35 = vadd.f32 %v33, %v34
  %v36 = vsel %vm30, %v17, 0.0
  %v37 = vadd.f32 %v35, %v36
  %v38 = vsel %vm30, %v18, 0.0
  %v39 = vadd.f32 %v37, %v38
  %v40 = vsel %vm30, %v19, 0.0
  %v41 = vadd.f32 %v39, %v40
  %v42 = vsel %vm30, %v20, 0.0
  %v43 = vadd.f32 %v41, %v42
  %v44 = vsel %vm30, %v21, 0.0
  %v45 = vadd.f32 %v43, %v44
  %v46 = vrot.slane %v45, 4
  %v47 = vadd.f32 %v45, %v46
  %v48 = vrot.slane %v47, 2
  %v49 = vadd.f32 %v47, %v48
  %v50 = vrot.slane %v49, 1
  %v51 = vadd.f32 %v49, %v50
  %v52 = vsel %vm30, %v22, 0.0
  %v53 = vsel %vm30, %v23, 0.0
  %v54 = vadd.f32 %v52, %v53
  %v55 = vsel %vm30, %v24, 0.0
  %v56 = vadd.f32 %v54, %v55
  %v57 = vsel %vm30, %v25, 0.0
  %v58 = vadd.f32 %v56, %v57
  %v59 = vsel %vm30, %v26, 0.0
  %v60 = vadd.f32 %v58, %v59
  %v61 = vsel %vm30, %v27, 0.0
  %v62 = vadd.f32 %v60, %v61
  %v63 = vsel %vm30, %v28, 0.0
  %v64 = vadd.f32 %v62, %v63
  %v65 = vsel %vm30, %v29, 0.0
  %v66 = vadd.f32 %v64, %v65
  %v67 = vrot.slane %v66, 4
  %v68 = vadd.f32 %v66, %v67
  %v69 = vrot.slane %v68, 2
  %v70 = vadd.f32 %v68, %v69
  %v71 = vrot.slane %v70, 1
  %v72 = vadd.f32 %v70, %v71
  %v73 = vrcp.pop 64.0
  %v74 = vmul.f32 %v51, %v73
  %v75 = vmul.f32 %v72, %v73
  %v76 = vld [vmem:[%s1] sm:$0xff]
  %v77 = vld [vmem:[%s1 + $0x8] sm:$0xff]
  %v78 = vld [vmem:[%s1 + $0x10] sm:$0xff]
  %v79 = vld [vmem:[%s1 + $0x18] sm:$0xff]
  %vm82 = vcmask 1041409
  %v83 = vsel %vm82, %v75, %v74
  %v84 = vsel %vm30, %v83, 0
  %86 = vmatprep.subr.mxu0 0.0
  %87 = vmatpush1.msra.mxu0 %v76
  %88 = vmatprep.subr.mxu0 0.0
  %89 = vmatpush1.msra.mxu0 %v77
  %90 = vmatprep.subr.mxu0 0.0
  %91 = vmatpush1.msra.mxu0 %v78
  %92 = vmatprep.subr.mxu0 0.0
  %93 = vmatpush1.msra.mxu0 %v79
  %94 = vmatprep.subr.mxu0 0.0
  %95 = vmatpush1.msra.mxu0 0.0
  %96 = vmatprep.subr.mxu0 0.0
  %97 = vmatpush1.msra.mxu0 0.0
  %98 = vmatprep.subr.mxu0 0.0
  %99 = vmatpush1.msra.mxu0 0.0
  %100 = vmatprep.subr.mxu0 0.0
  %101 = vmatpush1.msra.mxu0 0.0
  %102 = vmatprep.subr.mxu0 0.0
  %103 = vmatpush1.msra.mxu0 0.0
  %104 = vmatprep.subr.mxu0 0.0
  %105 = vmatpush1.msra.mxu0 0.0
  %106 = vmatprep.subr.mxu0 0.0
  %107 = vmatpush1.msra.mxu0 0.0
  %108 = vmatprep.subr.mxu0 0.0
  %109 = vmatpush1.msra.mxu0 0.0
  %110 = vmatprep.subr.mxu0 0.0
  %111 = vmatpush1.msra.mxu0 0.0
  %112 = vmatprep.subr.mxu0 0.0
  %113 = vmatpush1.msra.mxu0 0.0
  %114 = vmatprep.subr.mxu0 0.0
  %115 = vmatpush1.msra.mxu0 0.0
  %116 = vmatprep.subr.mxu0 0.0
  %117 = vmatpush1.msra.mxu0 0.0
  %118 = vmatprep.subr.mxu0 0.0
  %119 = vmatpush1.msra.mxu0 0.0
  %120 = vmatprep.subr.mxu0 0.0
  %121 = vmatpush1.msra.mxu0 0.0
  %122 = vmatprep.subr.mxu0 0.0
  %123 = vmatpush1.msra.mxu0 0.0
  %124 = vmatprep.subr.mxu0 0.0
  %125 = vmatpush1.msra.mxu0 0.0
  %126 = vmatprep.subr.mxu0 0.0
  %127 = vmatpush1.msra.mxu0 0.0
  %128 = vmatprep.subr.mxu0 0.0
  %129 = vmatpush1.msra.mxu0 0.0
  %130 = vmatprep.subr.mxu0 0.0
  %131 = vmatpush1.msra.mxu0 0.0
  %132 = vmatprep.subr.mxu0 0.0
  %133 = vmatpush1.msra.mxu0 0.0
  %134 = vmatprep.subr.mxu0 0.0
  %135 = vmatpush1.msra.mxu0 0.0
  %136 = vmatprep.subr.mxu0 0.0
  %137 = vmatpush1.msra.mxu0 0.0
  %138 = vmatprep.subr.mxu0 0.0
  %139 = vmatpush1.msra.mxu0 0.0
  %140 = vmatprep.subr.mxu0 0.0
  %141 = vmatpush1.msra.mxu0 0.0
  %142 = vmatprep.subr.mxu0 0.0
  %143 = vmatpush1.msra.mxu0 0.0
  %144 = vmatprep.subr.mxu0 0.0
  %145 = vmatpush1.msra.mxu0 0.0
  %146 = vmatprep.subr.mxu0 0.0
  %147 = vmatpush1.msra.mxu0 0.0
  %148 = vmatprep.subr.mxu0 0.0
  %149 = vmatpush1.msra.mxu0 0.0
  %150 = vmatprep.mubr.f32.mxu0 0.0
  %151 = vmatmul.mubr.f32.gmra.mrb[0].mxu0 %v84
  %v152 = vpop.f32.mrb[0].mxu0
  %v153 = vadd.f32 0.0, %v152
  %v154 = vpop.f32.mrb[0].mxu0
  %155 = vdwg.mxu0
  %v156 = vmax.f32 %v153, 0.0
  %v157 = vld [vmem:[%s2] sm:$0xff]
  %vm158 = vcmask 64512
  %v160 = vsel %vm158, %v156, 0
  %162 = vmatprep.subr.mxu0 0.0
  %163 = vmatpush1.msra.mxu0 %v157
  %164 = vmatprep.subr.mxu0 0.0
  %165 = vmatpush1.msra.mxu0 0.0
  %166 = vmatprep.subr.mxu0 0.0
  %167 = vmatpush1.msra.mxu0 0.0
  %168 = vmatprep.subr.mxu0 0.0
  %169 = vmatpush1.msra.mxu0 0.0
  %170 = vmatprep.subr.mxu0 0.0
  %171 = vmatpush1.msra.mxu0 0.0
  %172 = vmatprep.subr.mxu0 0.0
  %173 = vmatpush1.msra.mxu0 0.0
  %174 = vmatprep.subr.mxu0 0.0
  %175 = vmatpush1.msra.mxu0 0.0
  %176 = vmatprep.subr.mxu0 0.0
  %177 = vmatpush1.msra.mxu0 0.0
  %178 = vmatprep.subr.mxu0 0.0
  %179 = vmatpush1.msra.mxu0 0.0
  %180 = vmatprep.subr.mxu0 0.0
  %181 = vmatpush1.msra.mxu0 0.0
  %182 = vmatprep.subr.mxu0 0.0
  %183 = vmatpush1.msra.mxu0 0.0
  %184 = vmatprep.subr.mxu0 0.0
  %185 = vmatpush1.msra.mxu0 0.0
  %186 = vmatprep.subr.mxu0 0.0
  %187 = vmatpush1.msra.mxu0 0.0
  %188 = vmatprep.subr.mxu0 0.0
  %189 = vmatpush1.msra.mxu0 0.0
  %190 = vmatprep.subr.mxu0 0.0
  %191 = vmatpush1.msra.mxu0 0.0
  %192 = vmatprep.subr.mxu0 0.0
  %193 = vmatpush1.msra.mxu0 0.0
  %194 = vmatprep.subr.mxu0 0.0
  %195 = vmatpush1.msra.mxu0 0.0
  %196 = vmatprep.subr.mxu0 0.0
  %197 = vmatpush1.msra.mxu0 0.0
  %198 = vmatprep.subr.mxu0 0.0
  %199 = vmatpush1.msra.mxu0 0.0
  %200 = vmatprep.subr.mxu0 0.0
  %201 = vmatpush1.msra.mxu0 0.0
  %202 = vmatprep.subr.mxu0 0.0
  %203 = vmatpush1.msra.mxu0 0.0
  %204 = vmatprep.subr.mxu0 0.0
  %205 = vmatpush1.msra.mxu0 0.0
  %206 = vmatprep.subr.mxu0 0.0
  %207 = vmatpush1.msra.mxu0 0.0
  %208 = vmatprep.subr.mxu0 0.0
  %209 = vmatpush1.msra.mxu0 0.0
  %210 = vmatprep.subr.mxu0 0.0
  %211 = vmatpush1.msra.mxu0 0.0
  %212 = vmatprep.subr.mxu0 0.0
  %213 = vmatpush1.msra.mxu0 0.0
  %214 = vmatprep.subr.mxu0 0.0
  %215 = vmatpush1.msra.mxu0 0.0
  %216 = vmatprep.subr.mxu0 0.0
  %217 = vmatpush1.msra.mxu0 0.0
  %218 = vmatprep.subr.mxu0 0.0
  %219 = vmatpush1.msra.mxu0 0.0
  %220 = vmatprep.subr.mxu0 0.0
  %221 = vmatpush1.msra.mxu0 0.0
  %222 = vmatprep.subr.mxu0 0.0
  %223 = vmatpush1.msra.mxu0 0.0
  %224 = vmatprep.subr.mxu0 0.0
  %225 = vmatpush1.msra.mxu0 0.0
  %226 = vmatprep.mubr.f32.mxu0 0.0
  %227 = vmatmul.mubr.f32.gmra.mrb[0].mxu0 %v160
  %v228 = vpop.f32.mrb[0].mxu0
  %v229 = vadd.f32 0.0, %v228
  %v230 = vpop.f32.mrb[0].mxu0
  %231 = vdwg.mxu0
  %v232 = vxor.u32 %v229, 2147483648
  %v233 = vmul.f32 %v232, 1.442695
  %v234 = vpow.pop %v233
  %v235 = vadd.f32 %v234, 1.0
  %v236 = vrcp.pop %v235
  %v237 = vmul.f32 1.0, %v236
  %vm238 = vcmask 254976
  %239 = vst.msk [vmem:[%s3] sm:$0x3] %vm238, %v237
  // Predicated region
  $region14: #{fluentnet_forward.111} parent=0 // pred_check
    _
  $region15: #{fluentnet_forward.111} parent=0 // pred_check_branch
    %241 = sbr.rel (0) target = $region17
  $region16: #{fluentnet_forward.111} parent=0 // pred_region
    _
  $region17: #{fluentnet_forward.111} parent=0 // pred_fallthru
    _
  // Predicated region
  $region18: #{fluentnet_forward.111} parent=0 // pred_check
    _
  $region19: #{fluentnet_forward.111} parent=0 // pred_check_branch
    %243 = sbr.rel (0) target = $region21
  $region20: #{fluentnet_forward.111} parent=0 // pred_region
    _
  $region21: #{fluentnet_forward.111} parent=0 // pred_fallthru
    _

// kernel: fluentnet_forward.112
$region0: #{fluentnet_forward.112}
  #allocation0 [shape = 'u32[]', space=smem, size = 0x4, offset = 0x4, fixed_abs, tag = 'smem constant byte address 0x4 - core index']
  #allocation1 [shape = 'u32[144,128]{1,0:T(1,128)}', space=vmem, size = 0x12000, scoped, tag = 'internal scratch']
  %s0 = inlined_call_operand.vmem [shape: f32[2,64,32], index: 0, kind: input, shape index: {}]
  %s1 = inlined_call_operand.vmem [shape: f32[2,1,32], index: 1, kind: input, shape index: {}]
  %s2 = inlined_call_operand.vmem [shape: f32[2,64,32], index: 2, kind: input, shape index: {}]
  %s3 = inlined_call_operand.vmem [shape: f32[2,64,32], index: 3, kind: output, shape index: {}]
  %s4 = sld [smem:[#allocation0]]
  $region22: #{fluentnet_forward.112} parent=0
    _
  %s6 = ssub.s32 1, %s4
  %s7 = scalar_select 0, %s6, %s4
  // Predicated region
  $region2: #{fluentnet_forward.112} parent=0 // pred_check
    _
  $region3: #{fluentnet_forward.112} parent=0 // pred_check_branch
    %9 = sbr.rel (0) target = $region5
  $region4: #{fluentnet_forward.112} parent=0 // pred_region
    _
  $region5: #{fluentnet_forward.112} parent=0 // pred_fallthru
    _
  // Predicated region
  $region6: #{fluentnet_forward.112} parent=0 // pred_check
    _
  $region7: #{fluentnet_forward.112} parent=0 // pred_check_branch
    %11 = sbr.rel (0) target = $region9
  $region8: #{fluentnet_forward.112} parent=0 // pred_region
    _
  $region9: #{fluentnet_forward.112} parent=0 // pred_fallthru
    _
  // Predicated region
  $region10: #{fluentnet_forward.112} parent=0 // pred_check
    _
  $region11: #{fluentnet_forward.112} parent=0 // pred_check_branch
    %13 = sbr.rel (0) target = $region13
  $region12: #{fluentnet_forward.112} parent=0 // pred_region
    _
  $region13: #{fluentnet_forward.112} parent=0 // pred_fallthru
    _
  %v14 = vld [vmem:[%s0] sm:$0xff]
  %v15 = vld [vmem:[%s0 + $0x8] sm:$0xff]
  %v16 = vld [vmem:[%s0 + $0x10] sm:$0xff]
  %v17 = vld [vmem:[%s0 + $0x18] sm:$0xff]
  %v18 = vld [vmem:[%s0 + $0x20] sm:$0xff]
  %v19 = vld [vmem:[%s0 + $0x28] sm:$0xff]
  %v20 = vld [vmem:[%s0 + $0x30] sm:$0xff]
  %v21 = vld [vmem:[%s0 + $0x38] sm:$0xff]
  %v22 = vld [vmem:[%s0 + $0x40] sm:$0xff]
  %v23 = vld [vmem:[%s0 + $0x48] sm:$0xff]
  %v24 = vld [vmem:[%s0 + $0x50] sm:$0xff]
  %v25 = vld [vmem:[%s0 + $0x58] sm:$0xff]
  %v26 = vld [vmem:[%s0 + $0x60] sm:$0xff]
  %v27 = vld [vmem:[%s0 + $0x68] sm:$0xff]
  %v28 = vld [vmem:[%s0 + $0x70] sm:$0xff]
  %v29 = vld [vmem:[%s0 + $0x78] sm:$0xff]
  %v30 = vld [vmem:[%s1] sm:$0x1]
  %v31 = vld [vmem:[%s1 + $0x1] sm:$0x1]
  %v34 = vlaneseq
  %v35 = vshrl.u32 %v34, 7
  %v36 = vsub.s32 0, %v35
  %v37 = vrot.slane %v30, %v36
  %v38 = vlaneseq
  %v39 = vshrl.u32 %v38, 7
  %v40 = vsub.s32 0, %v39
  %v41 = vrot.slane %v31, %v40
  %v44 = vmul.f32 %v14, %v37
  %v45 = vmul.f32 %v15, %v37
  %v46 = vmul.f32 %v16, %v37
  %v47 = vmul.f32 %v17, %v37
  %v48 = vmul.f32 %v18, %v37
  %v49 = vmul.f32 %v19, %v37
  %v50 = vmul.f32 %v20, %v37
  %v51 = vmul.f32 %v21, %v37
  %v52 = vmul.f32 %v22, %v41
  %v53 = vmul.f32 %v23, %v41
  %v54 = vmul.f32 %v24, %v41
  %v55 = vmul.f32 %v25, %v41
  %v56 = vmul.f32 %v26, %v41
  %v57 = vmul.f32 %v27, %v41
  %v58 = vmul.f32 %v28, %v41
  %v59 = vmul.f32 %v29, %v41
  %v60 = vld [vmem:[%s2] sm:$0xff]
  %v61 = vld [vmem:[%s2 + $0x8] sm:$0xff]
  %v62 = vld [vmem:[%s2 + $0x10] sm:$0xff]
  %v63 = vld [vmem:[%s2 + $0x18] sm:$0xff]
  %v64 = vld [vmem:[%s2 + $0x20] sm:$0xff]
  %v65 = vld [vmem:[%s2 + $0x28] sm:$0xff]
  %v66 = vld [vmem:[%s2 + $0x30] sm:$0xff]
  %v67 = vld [vmem:[%s2 + $0x38] sm:$0xff]
  %v68 = vld [vmem:[%s2 + $0x40] sm:$0xff]
  %v69 = vld [vmem:[%s2 + $0x48] sm:$0xff]
  %v70 = vld [vmem:[%s2 + $0x50] sm:$0xff]
  %v71 = vld [vmem:[%s2 + $0x58] sm:$0xff]
  %v72 = vld [vmem:[%s2 + $0x60] sm:$0xff]
  %v73 = vld [vmem:[%s2 + $0x68] sm:$0xff]
  %v74 = vld [vmem:[%s2 + $0x70] sm:$0xff]
  %v75 = vld [vmem:[%s2 + $0x78] sm:$0xff]
  %v76 = vadd.f32 %v44, %v60
  %v77 = vadd.f32 %v45, %v61
  %v78 = vadd.f32 %v46, %v62
  %v79 = vadd.f32 %v47, %v63
  %v80 = vadd.f32 %v48, %v64
  %v81 = vadd.f32 %v49, %v65
  %v82 = vadd.f32 %v50, %v66
  %v83 = vadd.f32 %v51, %v67
  %v84 = vadd.f32 %v52, %v68
  %v85 = vadd.f32 %v53, %v69
  %v86 = vadd.f32 %v54, %v70
  %v87 = vadd.f32 %v55, %v71
  %v88 = vadd.f32 %v56, %v72
  %v89 = vadd.f32 %v57, %v73
  %v90 = vadd.f32 %v58, %v74
  %v91 = vadd.f32 %v59, %v75
  %v92 = vmax.f32 %v76, 0.0
  %v93 = vmax.f32 %v77, 0.0
  %v94 = vmax.f32 %v78, 0.0
  %v95 = vmax.f32 %v79, 0.0
  %v96 = vmax.f32 %v80, 0.0
  %v97 = vmax.f32 %v81, 0.0
  %v98 = vmax.f32 %v82, 0.0
  %v99 = vmax.f32 %v83, 0.0
  %v100 = vmax.f32 %v84, 0.0
  %v101 = vmax.f32 %v85, 0.0
  %v102 = vmax.f32 %v86, 0.0
  %v103 = vmax.f32 %v87, 0.0
  %v104 = vmax.f32 %v88, 0.0
  %v105 = vmax.f32 %v89, 0.0
  %v106 = vmax.f32 %v90, 0.0
  %v107 = vmax.f32 %v91, 0.0
  %vm108 = vcmask 261120
  %109 = vst.msk [vmem:[%s3] sm:$0xff] %vm108, %v92
  %110 = vst.msk [vmem:[%s3 + $0x8] sm:$0xff] %vm108, %v93
  %111 = vst.msk [vmem:[%s3 + $0x10] sm:$0xff] %vm108, %v94
  %112 = vst.msk [vmem:[%s3 + $0x18] sm:$0xff] %vm108, %v95
  %113 = vst.msk [vmem:[%s3 + $0x20] sm:$0xff] %vm108, %v96
  %114 = vst.msk [vmem:[%s3 + $0x28] sm:$0xff] %vm108, %v97
  %115 = vst.msk [vmem:[%s3 + $0x30] sm:$0xff] %vm108, %v98
  %116 = vst.msk [vmem:[%s3 + $0x38] sm:$0xff] %vm108, %v99
  %117 = vst.msk [vmem:[%s3 + $0x40] sm:$0xff] %vm108, %v100
  %118 = vst.msk [vmem:[%s3 + $0x48] sm:$0xff] %vm108, %v101
  %119 = vst.msk [vmem:[%s3 + $0x50] sm:$0xff] %vm108, %v102
  %120 = vst.msk [vmem:[%s3 + $0x58] sm:$0xff] %vm108, %v103
  %121 = vst.msk [vmem:[%s3 + $0x60] sm:$0xff] %vm108, %v104
  %122 = vst.msk [vmem:[%s3 + $0x68] sm:$0xff] %vm108, %v105
  %123 = vst.msk [vmem:[%s3 + $0x70] sm:$0xff] %vm108, %v106
  %124 = vst.msk [vmem:[%s3 + $0x78] sm:$0xff] %vm108, %v107
  // Predicated region
  $region14: #{fluentnet_forward.112} parent=0 // pred_check
    _
  $region15: #{fluentnet_forward.112} parent=0 // pred_check_branch
    %126 = sbr.rel (0) target = $region17
  $region16: #{fluentnet_forward.112} parent=0 // pred_region
    _
  $region17: #{fluentnet_forward.112} parent=0 // pred_fallthru
    _
  // Predicated region
  $region18: #{fluentnet_forward.112} parent=0 // pred_check
    _
  $region19: #{fluentnet_forward.112} parent=0 // pred_check_branch
    %128 = sbr.rel (0) target = $region21
  $region20: #{fluentnet_forward.112} parent=0 // pred_region
    _
  $region21: #{fluentnet_forward.112} parent=0 // pred_fallthru
    _

// kernel: fluentnet_forward.110
$region0: #{fluentnet_forward.110}
  #allocation0 [shape = 'u32[]', space=smem, size = 0x4, offset = 0x4, fixed_abs, tag = 'smem constant byte address 0x4 - core index']
  #allocation1 [shape = 'u32[144,128]{1,0:T(1,128)}', space=vmem, size = 0x12000, scoped, tag = 'internal scratch']
  %s0 = inlined_call_operand.vmem [shape: f32[128,16], index: 0, kind: input, shape index: {}]
  %s1 = inlined_call_operand.vmem [shape: bf16[16,32], index: 1, kind: input, shape index: {}]
  %s2 = inlined_call_operand.vmem [shape: f32[1,32], index: 2, kind: input, shape index: {}]
  %s3 = inlined_call_operand.vmem [shape: f32[128,32], index: 3, kind: output, shape index: {}]
  %s4 = sld [smem:[#allocation0]]
  $region22: #{fluentnet_forward.110} parent=0
    _
  %s6 = ssub.s32 1, %s4
  %s7 = scalar_select 0, %s6, %s4
  // Predicated region
  $region2: #{fluentnet_forward.110} parent=0 // pred_check
    _
  $region3: #{fluentnet_forward.110} parent=0 // pred_check_branch
    %9 = sbr.rel (0) target = $region5
  $region4: #{fluentnet_forward.110} parent=0 // pred_region
    _
  $region5: #{fluentnet_forward.110} parent=0 // pred_fallthru
    _
  // Predicated region
  $region6: #{fluentnet_forward.110} parent=0 // pred_check
    _
  $region7: #{fluentnet_forward.110} parent=0 // pred_check_branch
    %11 = sbr.rel (0) target = $region9
  $region8: #{fluentnet_forward.110} parent=0 // pred_region
    _
  $region9: #{fluentnet_forward.110} parent=0 // pred_fallthru
    _
  // Predicated region
  $region10: #{fluentnet_forward.110} parent=0 // pred_check
    _
  $region11: #{fluentnet_forward.110} parent=0 // pred_check_branch
    %13 = sbr.rel (0) target = $region13
  $region12: #{fluentnet_forward.110} parent=0 // pred_region
    _
  $region13: #{fluentnet_forward.110} parent=0 // pred_fallthru
    _
  %v15 = vld [vmem:[%s0] sm:$0xff]
  %v16 = vld [vmem:[%s0 + $0x8] sm:$0xff]
  %v17 = vld [vmem:[%s0 + $0x10] sm:$0xff]
  %v18 = vld [vmem:[%s0 + $0x18] sm:$0xff]
  %v19 = vld [vmem:[%s0 + $0x20] sm:$0xff]
  %v20 = vld [vmem:[%s0 + $0x28] sm:$0xff]
  %v21 = vld [vmem:[%s0 + $0x30] sm:$0xff]
  %v22 = vld [vmem:[%s0 + $0x38] sm:$0xff]
  %v23 = vld [vmem:[%s0 + $0x40] sm:$0xff]
  %v24 = vld [vmem:[%s0 + $0x48] sm:$0xff]
  %v25 = vld [vmem:[%s0 + $0x50] sm:$0xff]
  %v26 = vld [vmem:[%s0 + $0x58] sm:$0xff]
  %v27 = vld [vmem:[%s0 + $0x60] sm:$0xff]
  %v28 = vld [vmem:[%s0 + $0x68] sm:$0xff]
  %v29 = vld [vmem:[%s0 + $0x70] sm:$0xff]
  %v30 = vld [vmem:[%s0 + $0x78] sm:$0xff]
  %v31 = vpack.c.bf16 %v16, %v15
  %v32 = vpack.c.bf16 %v18, %v17
  %v33 = vpack.c.bf16 %v20, %v19
  %v34 = vpack.c.bf16 %v22, %v21
  %v35 = vpack.c.bf16 %v24, %v23
  %v36 = vpack.c.bf16 %v26, %v25
  %v37 = vpack.c.bf16 %v28, %v27
  %v38 = vpack.c.bf16 %v30, %v29
  %v39 = vld [vmem:[%s1] sm:$0xf]
  %v40 = vld [vmem:[%s1 + $0x4] sm:$0xf]
  %v41 = vld [vmem:[%s2] sm:$0x1]
  %v43 = vlaneseq
  %v44 = vshrl.u32 %v43, 7
  %v45 = vsub.s32 0, %v44
  %v46 = vrot.slane %v41, %v45
  %v50 = vunpack.c.l.b16 %v39
  %v51 = vunpack.c.l.b16 %v40
  %v52 = vpack.c.b16 %v51, %v50
  %vm54 = vcmask 130048
  %v56 = vsel %vm54, %v31, 0
  %v59 = vsel %vm54, %v32, 0
  %v62 = vsel %vm54, %v33, 0
  %v65 = vsel %vm54, %v34, 0
  %v68 = vsel %vm54, %v35, 0
  %v71 = vsel %vm54, %v36, 0
  %v74 = vsel %vm54, %v37, 0
  %v77 = vsel %vm54, %v38, 0
  %79 = vmatprep.subr.bf16.mxu0 0
  %80 = vmatpush1.bf16.msra.mxu0 %v52
  %81 = vmatprep.subr.bf16.mxu0 0
  %82 = vmatpush1.bf16.msra.mxu0 0
  %83 = vmatprep.subr.bf16.mxu0 0
  %84 = vmatpush1.bf16.msra.mxu0 0
  %85 = vmatprep.subr.bf16.mxu0 0
  %86 = vmatpush1.bf16.msra.mxu0 0
  %87 = vmatprep.subr.bf16.mxu0 0
  %88 = vmatpush1.bf16.msra.mxu0 0
  %89 = vmatprep.subr.bf16.mxu0 0
  %90 = vmatpush1.bf16.msra.mxu0 0
  %91 = vmatprep.subr.bf16.mxu0 0
  %92 = vmatpush1.bf16.msra.mxu0 0
  %93 = vmatprep.subr.bf16.mxu0 0
  %94 = vmatpush1.bf16.msra.mxu0 0
  %95 = vmatprep.subr.bf16.mxu0 0
  %96 = vmatpush1.bf16.msra.mxu0 0
  %97 = vmatprep.subr.bf16.mxu0 0
  %98 = vmatpush1.bf16.msra.mxu0 0
  %99 = vmatprep.subr.bf16.mxu0 0
  %100 = vmatpush1.bf16.msra.mxu0 0
  %101 = vmatprep.subr.bf16.mxu0 0
  %102 = vmatpush1.bf16.msra.mxu0 0
  %103 = vmatprep.subr.bf16.mxu0 0
  %104 = vmatpush1.bf16.msra.mxu0 0
  %105 = vmatprep.subr.bf16.mxu0 0
  %106 = vmatpush1.bf16.msra.mxu0 0
  %107 = vmatprep.subr.bf16.mxu0 0
  %108 = vmatpush1.bf16.msra.mxu0 0
  %109 = vmatprep.subr.bf16.mxu0 0
  %110 = vmatpush1.bf16.msra.mxu0 0
  %111 = vmatprep.mubr.bf16.mxu0 0
  %112 = vmatmul.mubr.bf16.gmra.mrb[0].mxu0 %v56
  %v113 = vpop.f32.mrb[0].mxu0
  %v114 = vadd.f32 %v46, %v113
  %v115 = vpop.f32.mrb[0].mxu0
  %v116 = vpop.f32.mrb[0].mxu0
  %v117 = vadd.f32 %v46, %v116
  %v118 = vpop.f32.mrb[0].mxu0
  %119 = vmatprep.mubr.bf16.mxu0 0
  %120 = vmatmul.mubr.bf16.gmra.mrb[0].mxu0 %v59
  %v121 = vpop.f32.mrb[0].mxu0
  %v122 = vadd.f32 %v46, %v121
  %v123 = vpop.f32.mrb[0].mxu0
  %v124 = vpop.f32.mrb[0].mxu0
  %v125 = vadd.f32 %v46, %v124
  %v126 = vpop.f32.mrb[0].mxu0
  %127 = vmatprep.mubr.bf16.mxu0 0
  %128 = vmatmul.mubr.bf16.gmra.mrb[0].mxu0 %v62
  %v129 = vpop.f32.mrb[0].mxu0
  %v130 = vadd.f32 %v46, %v129
  %v131 = vpop.f32.mrb[0].mxu0
  %v132 = vpop.f32.mrb[0].mxu0
  %v133 = vadd.f32 %v46, %v132
  %v134 = vpop.f32.mrb[0].mxu0
  %135 = vmatprep.mubr.bf16.mxu0 0
  %136 = vmatmul.mubr.bf16.gmra.mrb[0].mxu0 %v65
  %v137 = vpop.f32.mrb[0].mxu0
  %v138 = vadd.f32 %v46, %v137
  %v139 = vpop.f32.mrb[0].mxu0
  %v140 = vpop.f32.mrb[0].mxu0
  %v141 = vadd.f32 %v46, %v140
  %v142 = vpop.f32.mrb[0].mxu0
  %143 = vmatprep.mubr.bf16.mxu0 0
  %144 = vmatmul.mubr.bf16.gmra.mrb[0].mxu0 %v68
  %v145 = vpop.f32.mrb[0].mxu0
  %v146 = vadd.f32 %v46, %v145
  %v147 = vpop.f32.mrb[0].mxu0
  %v148 = vpop.f32.mrb[0].mxu0
  %v149 = vadd.f32 %v46, %v148
  %v150 = vpop.f32.mrb[0].mxu0
  %151 = vmatprep.mubr.bf16.mxu0 0
  %152 = vmatmul.mubr.bf16.gmra.mrb[0].mxu0 %v71
  %v153 = vpop.f32.mrb[0].mxu0
  %v154 = vadd.f32 %v46, %v153
  %v155 = vpop.f32.mrb[0].mxu0
  %v156 = vpop.f32.mrb[0].mxu0
  %v157 = vadd.f32 %v46, %v156
  %v158 = vpop.f32.mrb[0].mxu0
  %159 = vmatprep.mubr.bf16.mxu0 0
  %160 = vmatmul.mubr.bf16.gmra.mrb[0].mxu0 %v74
  %v161 = vpop.f32.mrb[0].mxu0
  %v162 = vadd.f32 %v46, %v161
  %v163 = vpop.f32.mrb[0].mxu0
  %v164 = vpop.f32.mrb[0].mxu0
  %v165 = vadd.f32 %v46, %v164
  %v166 = vpop.f32.mrb[0].mxu0
  %167 = vmatprep.mubr.bf16.mxu0 0
  %168 = vmatmul.mubr.bf16.gmra.mrb[0].mxu0 %v77
  %v169 = vpop.f32.mrb[0].mxu0
  %v170 = vadd.f32 %v46, %v169
  %v171 = vpop.f32.mrb[0].mxu0
  %v172 = vpop.f32.mrb[0].mxu0
  %v173 = vadd.f32 %v46, %v172
  %v174 = vpop.f32.mrb[0].mxu0
  %175 = vdwg.mxu0
  %vm176 = vcmask 261120
  %177 = vst.msk [vmem:[%s3] sm:$0xff] %vm176, %v114
  %178 = vst.msk [vmem:[%s3 + $0x8] sm:$0xff] %vm176, %v117
  %179 = vst.msk [vmem:[%s3 + $0x10] sm:$0xff] %vm176, %v122
  %180 = vst.msk [vmem:[%s3 + $0x18] sm:$0xff] %vm176, %v125
  %181 = vst.msk [vmem:[%s3 + $0x20] sm:$0xff] %vm176, %v130
  %182 = vst.msk [vmem:[%s3 + $0x28] sm:$0xff] %vm176, %v133
  %183 = vst.msk [vmem:[%s3 + $0x30] sm:$0xff] %vm176, %v138
  %184 = vst.msk [vmem:[%s3 + $0x38] sm:$0xff] %vm176, %v141
  %185 = vst.msk [vmem:[%s3 + $0x40] sm:$0xff] %vm176, %v146
  %186 = vst.msk [vmem:[%s3 + $0x48] sm:$0xff] %vm176, %v149
  %187 = vst.msk [vmem:[%s3 + $0x50] sm:$0xff] %vm176, %v154
  %188 = vst.msk [vmem:[%s3 + $0x58] sm:$0xff] %vm176, %v157
  %189 = vst.msk [vmem:[%s3 + $0x60] sm:$0xff] %vm176, %v162
  %190 = vst.msk [vmem:[%s3 + $0x68] sm:$0xff] %vm176, %v165
  %191 = vst.msk [vmem:[%s3 + $0x70] sm:$0xff] %vm176, %v170
  %192 = vst.msk [vmem:[%s3 + $0x78] sm:$0xff] %vm176, %v173
  // Predicated region
  $region14: #{fluentnet_forward.110} parent=0 // pred_check
    _
  $region15: #{fluentnet_forward.110} parent=0 // pred_check_branch
    %194 = sbr.rel (0) target = $region17
  $region16: #{fluentnet_forward.110} parent=0 // pred_region
    _
  $region17: #{fluentnet_forward.110} parent=0 // pred_fallthru
    _
  // Predicated region
  $region18: #{fluentnet_forward.110} parent=0 // pred_check
    _
  $region19: #{fluentnet_forward.110} parent=0 // pred_check_branch
    %196 = sbr.rel (0) target = $region21
  $region20: #{fluentnet_forward.110} parent=0 // pred_region
    _
  $region21: #{fluentnet_forward.110} parent=0 // pred_fallthru
    _

// kernel: fluentnet_forward.113
$region0: #{fluentnet_forward.113}
  #allocation0 [shape = 'u32[]', space=smem, size = 0x4, offset = 0x4, fixed_abs, tag = 'smem constant byte address 0x4 - core index']
  #allocation1 [shape = 'u32[144,128]{1,0:T(1,128)}', space=vmem, size = 0x12000, scoped, tag = 'internal scratch']
  %s0 = inlined_call_operand.vmem [shape: f32[128,288], index: 0, kind: input, shape index: {}]
  %s1 = inlined_call_operand.vmem [shape: bf16[288,32], index: 1, kind: input, shape index: {}]
  %s2 = inlined_call_operand.vmem [shape: f32[1,32], index: 2, kind: input, shape index: {}]
  %s3 = inlined_call_operand.vmem [shape: f32[128,32], index: 3, kind: output, shape index: {}]
  %s4 = sld [smem:[#allocation0]]
  $region22: #{fluentnet_forward.113} parent=0
    _
  %s6 = ssub.s32 1, %s4
  %s7 = scalar_select 0, %s6, %s4
  // Predicated region
  $region2: #{fluentnet_forward.113} parent=0 // pred_check
    _
  $region3: #{fluentnet_forward.113} parent=0 // pred_check_branch
    %9 = sbr.rel (0) target = $region5
  $region4: #{fluentnet_forward.113} parent=0 // pred_region
    _
  $region5: #{fluentnet_forward.113} parent=0 // pred_fallthru
    _
  // Predicated region
  $region6: #{fluentnet_forward.113} parent=0 // pred_check
    _
  $region7: #{fluentnet_forward.113} parent=0 // pred_check_branch
    %11 = sbr.rel (0) target = $region9
  $region8: #{fluentnet_forward.113} parent=0 // pred_region
    _
  $region9: #{fluentnet_forward.113} parent=0 // pred_fallthru
    _
  // Predicated region
  $region10: #{fluentnet_forward.113} parent=0 // pred_check
    _
  $region11: #{fluentnet_forward.113} parent=0 // pred_check_branch
    %13 = sbr.rel (0) target = $region13
  $region12: #{fluentnet_forward.113} parent=0 // pred_region
    _
  $region13: #{fluentnet_forward.113} parent=0 // pred_fallthru
    _
  %v15 = vld [vmem:[%s0] sm:$0xff]
  %v16 = vld [vmem:[%s0 + $0x8] sm:$0xff]
  %v17 = vld [vmem:[%s0 + $0x10] sm:$0xff]
  %v18 = vld [vmem:[%s0 + $0x18] sm:$0xff]
  %v19 = vld [vmem:[%s0 + $0x20] sm:$0xff]
  %v20 = vld [vmem:[%s0 + $0x28] sm:$0xff]
  %v21 = vld [vmem:[%s0 + $0x30] sm:$0xff]
  %v22 = vld [vmem:[%s0 + $0x38] sm:$0xff]
  %v23 = vld [vmem:[%s0 + $0x40] sm:$0xff]
  %v24 = vld [vmem:[%s0 + $0x48] sm:$0xff]
  %v25 = vld [vmem:[%s0 + $0x50] sm:$0xff]
  %v26 = vld [vmem:[%s0 + $0x58] sm:$0xff]
  %v27 = vld [vmem:[%s0 + $0x60] sm:$0xff]
  %v28 = vld [vmem:[%s0 + $0x68] sm:$0xff]
  %v29 = vld [vmem:[%s0 + $0x70] sm:$0xff]
  %v30 = vld [vmem:[%s0 + $0x78] sm:$0xff]
  %v31 = vld [vmem:[%s0 + $0x80] sm:$0xff]
  %v32 = vld [vmem:[%s0 + $0x88] sm:$0xff]
  %v33 = vld [vmem:[%s0 + $0x90] sm:$0xff]
  %v34 = vld [vmem:[%s0 + $0x98] sm:$0xff]
  %v35 = vld [vmem:[%s0 + $0xa0] sm:$0xff]
  %v36 = vld [vmem:[%s0 + $0xa8] sm:$0xff]
  %v37 = vld [vmem:[%s0 + $0xb0] sm:$0xff]
  %v38 = vld [vmem:[%s0 + $0xb8] sm:$0xff]
  %v39 = vld [vmem:[%s0 + $0xc0] sm:$0xff]
  %v40 = vld [vmem:[%s0 + $0xc8] sm:$0xff]
  %v41 = vld [vmem:[%s0 + $0xd0] sm:$0xff]
  %v42 = vld [vmem:[%s0 + $0xd8] sm:$0xff]
  %v43 = vld [vmem:[%s0 + $0xe0] sm:$0xff]
  %v44 = vld [vmem:[%s0 + $0xe8] sm:$0xff]
  %v45 = vld [vmem:[%s0 + $0xf0] sm:$0xff]
  %v46 = vld [vmem:[%s0 + $0xf8] sm:$0xff]
  %v47 = vld [vmem:[%s0 + $0x100] sm:$0xff]
  %v48 = vld [vmem:[%s0 + $0x108] sm:$0xff]
  %v49 = vld [vmem:[%s0 + $0x110] sm:$0xff]
  %v50 = vld [vmem:[%s0 + $0x118] sm:$0xff]
  %v51 = vld [vmem:[%s0 + $0x120] sm:$0xff]
  %v52 = vld [vmem:[%s0 + $0x128] sm:$0xff]
  %v53 = vld [vmem:[%s0 + $0x130] sm:$0xff]
  %v54 = vld [vmem:[%s0 + $0x138] sm:$0xff]
  %v55 = vld [vmem:[%s0 + $0x140] sm:$0xff]
  %v56 = vld [vmem:[%s0 + $0x148] sm:$0xff]
  %v57 = vld [vmem:[%s0 + $0x150] sm:$0xff]
  %v58 = vld [vmem:[%s0 + $0x158] sm:$0xff]
  %v59 = vld [vmem:[%s0 + $0x160] sm:$0xff]
  %v60 = vld [vmem:[%s0 + $0x168] sm:$0xff]
  %v61 = vld [vmem:[%s0 + $0x170] sm:$0xff]
  %v62 = vld [vmem:[%s0 + $0x178] sm:$0xff]
  %v63 = vpack.c.bf16 %v18, %v15
  %v64 = vpack.c.bf16 %v19, %v16
  %v65 = vpack.c.bf16 %v20, %v17
  %v66 = vpack.c.bf16 %v24, %v21
  %v67 = vpack.c.bf16 %v25, %v22
  %v68 = vpack.c.bf16 %v26, %v23
  %v69 = vpack.c.bf16 %v30, %v27
  %v70 = vpack.c.bf16 %v31, %v28
  %v71 = vpack.c.bf16 %v32, %v29
  %v72 = vpack.c.bf16 %v36, %v33
  %v73 = vpack.c.bf16 %v37, %v34
  %v74 = vpack.c.bf16 %v38, %v35
  %v75 = vpack.c.bf16 %v42, %v39
  %v76 = vpack.c.bf16 %v43, %v40
  %v77 = vpack.c.bf16 %v44, %v41
  %v78 = vpack.c.bf16 %v48, %v45
  %v79 = vpack.c.bf16 %v49, %v46
  %v80 = vpack.c.bf16 %v50, %v47
  %v81 = vpack.c.bf16 %v54, %v51
  %v82 = vpack.c.bf16 %v55, %v52
  %v83 = vpack.c.bf16 %v56, %v53
  %v84 = vpack.c.bf16 %v60, %v57
  %v85 = vpack.c.bf16 %v61, %v58
  %v86 = vpack.c.bf16 %v62, %v59
  %v87 = vld [vmem:[%s1] sm:$0xf]
  %v88 = vld [vmem:[%s1 + $0x4] sm:$0xf]
  %v89 = vld [vmem:[%s1 + $0x8] sm:$0xf]
  %v90 = vld [vmem:[%s1 + $0xc] sm:$0xf]
  %v91 = vld [vmem:[%s1 + $0x10] sm:$0xf]
  %v92 = vld [vmem:[%s1 + $0x14] sm:$0xf]
  %v93 = vld [vmem:[%s1 + $0x18] sm:$0xf]
  %v94 = vld [vmem:[%s1 + $0x1c] sm:$0xf]
  %v95 = vld [vmem:[%s1 + $0x20] sm:$0xf]
  %v96 = vld [vmem:[%s1 + $0x24] sm:$0xf]
  %v97 = vld [vmem:[%s1 + $0x28] sm:$0xf]
  %v98 = vld [vmem:[%s1 + $0x2c] sm:$0xf]
  %v99 = vld [vmem:[%s1 + $0x30] sm:$0xf]
  %v100 = vld [vmem:[%s1 + $0x34] sm:$0xf]
  %v101 = vld [vmem:[%s1 + $0x38] sm:$0xf]
  %v102 = vld [vmem:[%s1 + $0x3c] sm:$0xf]
  %v103 = vld [vmem:[%s1 + $0x40] sm:$0xf]
  %v104 = vld [vmem:[%s1 + $0x44] sm:$0xf]
  %v105 = vld [vmem:[%s1 + $0x48] sm:$0xf]
  %v106 = vld [vmem:[%s1 + $0x4c] sm:$0xf]
  %v107 = vld [vmem:[%s1 + $0x50] sm:$0xf]
  %v108 = vld [vmem:[%s1 + $0x54] sm:$0xf]
  %v109 = vld [vmem:[%s1 + $0x58] sm:$0xf]
  %v110 = vld [vmem:[%s1 + $0x5c] sm:$0xf]
  %v111 = vld [vmem:[%s1 + $0x60] sm:$0xf]
  %v112 = vld [vmem:[%s1 + $0x64] sm:$0xf]
  %v113 = vld [vmem:[%s1 + $0x68] sm:$0xf]
  %v114 = vld [vmem:[%s1 + $0x6c] sm:$0xf]
  %v115 = vld [vmem:[%s1 + $0x70] sm:$0xf]
  %v116 = vld [vmem:[%s1 + $0x74] sm:$0xf]
  %v117 = vld [vmem:[%s1 + $0x78] sm:$0xf]
  %v118 = vld [vmem:[%s1 + $0x7c] sm:$0xf]
  %v119 = vld [vmem:[%s1 + $0x80] sm:$0xf]
  %v120 = vld [vmem:[%s1 + $0x84] sm:$0xf]
  %v121 = vld [vmem:[%s1 + $0x88] sm:$0xf]
  %v122 = vld [vmem:[%s1 + $0x8c] sm:$0xf]
  %v123 = vld [vmem:[%s2] sm:$0x1]
  %v125 = vlaneseq
  %v126 = vshrl.u32 %v125, 7
  %v127 = vsub.s32 0, %v126
  %v128 = vrot.slane %v123, %v127
  %v166 = vunpack.c.l.b16 %v87
  %v167 = vunpack.c.l.b16 %v88
  %v168 = vunpack.c.l.b16 %v89
  %v169 = vunpack.c.l.b16 %v90
  %v170 = vunpack.c.l.b16 %v91
  %v171 = vunpack.c.l.b16 %v92
  %v172 = vunpack.c.l.b16 %v93
  %v173 = vunpack.c.l.b16 %v94
  %v174 = vunpack.c.l.b16 %v95
  %v175 = vunpack.c.l.b16 %v96
  %v176 = vunpack.c.l.b16 %v97
  %v177 = vunpack.c.l.b16 %v98
  %v178 = vunpack.c.l.b16 %v99
  %v179 = vunpack.c.l.b16 %v100
  %v180 = vunpack.c.l.b16 %v101
  %v181 = vunpack.c.l.b16 %v102
  %v182 = vunpack.c.l.b16 %v103
  %v183 = vunpack.c.l.b16 %v104
  %v184 = vunpack.c.l.b16 %v105
  %v185 = vunpack.c.l.b16 %v106
  %v186 = vunpack.c.l.b16 %v107
  %v187 = vunpack.c.l.b16 %v108
  %v188 = vunpack.c.l.b16 %v109
  %v189 = vunpack.c.l.b16 %v110
  %v190 = vunpack.c.l.b16 %v111
  %v191 = vunpack.c.l.b16 %v112
  %v192 = vunpack.c.l.b16 %v113
  %v193 = vunpack.c.l.b16 %v114
  %v194 = vunpack.c.l.b16 %v115
  %v195 = vunpack.c.l.b16 %v116
  %v196 = vunpack.c.l.b16 %v117
  %v197 = vunpack.c.l.b16 %v118
  %v198 = vunpack.c.l.b16 %v119
  %v199 = vunpack.c.l.b16 %v120
  %v200 = vunpack.c.l.b16 %v121
  %v201 = vunpack.c.l.b16 %v122
  %v202 = vpack.c.b16 %v167, %v166
  %v203 = vpack.c.b16 %v169, %v168
  %v204 = vpack.c.b16 %v171, %v170
  %v205 = vpack.c.b16 %v173, %v172
  %v206 = vpack.c.b16 %v175, %v174
  %v207 = vpack.c.b16 %v177, %v176
  %v208 = vpack.c.b16 %v179, %v178
  %v209 = vpack.c.b16 %v181, %v180
  %v210 = vpack.c.b16 %v183, %v182
  %v211 = vpack.c.b16 %v185, %v184
  %v212 = vpack.c.b16 %v187, %v186
  %v213 = vpack.c.b16 %v189, %v188
  %v214 = vpack.c.b16 %v191, %v190
  %v215 = vpack.c.b16 %v193, %v192
  %v216 = vpack.c.b16 %v195, %v194
  %v217 = vpack.c.b16 %v197, %v196
  %v218 = vpack.c.b16 %v199, %v198
  %v219 = vpack.c.b16 %v201, %v200
  %vm238 = vcmask 261120
  %v240 = vsel %vm238, %v65, 0
  %v243 = vsel %vm238, %v68, 0
  %v246 = vsel %vm238, %v71, 0
  %v249 = vsel %vm238, %v74, 0
  %v252 = vsel %vm238, %v77, 0
  %v255 = vsel %vm238, %v80, 0
  %v258 = vsel %vm238, %v83, 0
  %v261 = vsel %vm238, %v86, 0
  %263 = vmatprep.subr.bf16.mxu0 0
  %264 = vmatpush1.bf16.msra.mxu0 %v202
  %265 = vmatprep.subr.bf16.mxu0 0
  %266 = vmatpush1.bf16.msra.mxu0 %v203
  %267 = vmatprep.subr.bf16.mxu0 0
  %268 = vmatpush1.bf16.msra.mxu0 %v204
  %269 = vmatprep.subr.bf16.mxu0 0
  %270 = vmatpush1.bf16.msra.mxu0 %v205
  %271 = vmatprep.subr.bf16.mxu0 0
  %272 = vmatpush1.bf16.msra.mxu0 %v206
  %273 = vmatprep.subr.bf16.mxu0 0
  %274 = vmatpush1.bf16.msra.mxu0 %v207
  %275 = vmatprep.subr.bf16.mxu0 0
  %276 = vmatpush1.bf16.msra.mxu0 %v208
  %277 = vmatprep.subr.bf16.mxu0 0
  %278 = vmatpush1.bf16.msra.mxu0 %v209
  %279 = vmatprep.subr.bf16.mxu0 0
  %280 = vmatpush1.bf16.msra.mxu0 %v210
  %281 = vmatprep.subr.bf16.mxu0 0
  %282 = vmatpush1.bf16.msra.mxu0 %v211
  %283 = vmatprep.subr.bf16.mxu0 0
  %284 = vmatpush1.bf16.msra.mxu0 %v212
  %285 = vmatprep.subr.bf16.mxu0 0
  %286 = vmatpush1.bf16.msra.mxu0 %v213
  %287 = vmatprep.subr.bf16.mxu0 0
  %288 = vmatpush1.bf16.msra.mxu0 %v214
  %289 = vmatprep.subr.bf16.mxu0 0
  %290 = vmatpush1.bf16.msra.mxu0 %v215
  %291 = vmatprep.subr.bf16.mxu0 0
  %292 = vmatpush1.bf16.msra.mxu0 %v216
  %293 = vmatprep.subr.bf16.mxu0 0
  %294 = vmatpush1.bf16.msra.mxu0 %v217
  %295 = vmatprep.mubr.bf16.mxu0 %v64
  %296 = vmatmul.mubr.bf16.gmra.mrb[0].mxu0 %v63
  %v297 = vpop.f32.mrb[0].mxu0
  %v298 = vadd.f32 %v128, %v297
  %v299 = vpop.f32.mrb[0].mxu0
  %v300 = vpop.f32.mrb[0].mxu0
  %v301 = vadd.f32 %v128, %v300
  %v302 = vpop.f32.mrb[0].mxu0
  %303 = vmatprep.mubr.bf16.mxu0 %v67
  %304 = vmatmul.mubr.bf16.gmra.mrb[0].mxu0 %v66
  %v305 = vpop.f32.mrb[0].mxu0
  %v306 = vadd.f32 %v128, %v305
  %v307 = vpop.f32.mrb[0].mxu0
  %v308 = vpop.f32.mrb[0].mxu0
  %v309 = vadd.f32 %v128, %v308
  %v310 = vpop.f32.mrb[0].mxu0
  %311 = vmatprep.mubr.bf16.mxu0 %v70
  %312 = vmatmul.mubr.bf16.gmra.mrb[0].mxu0 %v69
  %v313 = vpop.f32.mrb[0].mxu0
  %v314 = vadd.f32 %v128, %v313
  %v315 = vpop.f32.mrb[0].mxu0
  %v316 = vpop.f32.mrb[0].mxu0
  %v317 = vadd.f32 %v128, %v316
  %v318 = vpop.f32.mrb[0].mxu0
  %319 = vmatprep.mubr.bf16.mxu0 %v73
  %320 = vmatmul.mubr.bf16.gmra.mrb[0].mxu0 %v72
  %v321 = vpop.f32.mrb[0].mxu0
  %v322 = vadd.f32 %v128, %v321
  %v323 = vpop.f32.mrb[0].mxu0
  %v324 = vpop.f32.mrb[0].mxu0
  %v325 = vadd.f32 %v128, %v324
  %v326 = vpop.f32.mrb[0].mxu0
  %327 = vmatprep.mubr.bf16.mxu0 %v76
  %328 = vmatmul.mubr.bf16.gmra.mrb[0].mxu0 %v75
  %v329 = vpop.f32.mrb[0].mxu0
  %v330 = vadd.f32 %v128, %v329
  %v331 = vpop.f32.mrb[0].mxu0
  %v332 = vpop.f32.mrb[0].mxu0
  %v333 = vadd.f32 %v128, %v332
  %v334 = vpop.f32.mrb[0].mxu0
  %335 = vmatprep.mubr.bf16.mxu0 %v79
  %336 = vmatmul.mubr.bf16.gmra.mrb[0].mxu0 %v78
  %v337 = vpop.f32.mrb[0].mxu0
  %v338 = vadd.f32 %v128, %v337
  %v339 = vpop.f32.mrb[0].mxu0
  %v340 = vpop.f32.mrb[0].mxu0
  %v341 = vadd.f32 %v128, %v340
  %v342 = vpop.f32.mrb[0].mxu0
  %343 = vmatprep.mubr.bf16.mxu0 %v82
  %344 = vmatmul.mubr.bf16.gmra.mrb[0].mxu0 %v81
  %v345 = vpop.f32.mrb[0].mxu0
  %v346 = vadd.f32 %v128, %v345
  %v347 = vpop.f32.mrb[0].mxu0
  %v348 = vpop.f32.mrb[0].mxu0
  %v349 = vadd.f32 %v128, %v348
  %v350 = vpop.f32.mrb[0].mxu0
  %351 = vmatprep.mubr.bf16.mxu0 %v85
  %352 = vmatmul.mubr.bf16.gmra.mrb[0].mxu0 %v84
  %v353 = vpop.f32.mrb[0].mxu0
  %v354 = vadd.f32 %v128, %v353
  %v355 = vpop.f32.mrb[0].mxu0
  %v356 = vpop.f32.mrb[0].mxu0
  %v357 = vadd.f32 %v128, %v356
  %v358 = vpop.f32.mrb[0].mxu0
  %359 = vdwg.mxu0
  %360 = vmatprep.subr.bf16.mxu0 0
  %361 = vmatpush1.bf16.msra.mxu0 %v218
  %362 = vmatprep.subr.bf16.mxu0 0
  %363 = vmatpush1.bf16.msra.mxu0 %v219
  %364 = vmatprep.subr.bf16.mxu0 0
  %365 = vmatpush1.bf16.msra.mxu0 0
  %366 = vmatprep.subr.bf16.mxu0 0
  %367 = vmatpush1.bf16.msra.mxu0 0
  %368 = vmatprep.subr.bf16.mxu0 0
  %369 = vmatpush1.bf16.msra.mxu0 0
  %370 = vmatprep.subr.bf16.mxu0 0
  %371 = vmatpush1.bf16.msra.mxu0 0
  %372 = vmatprep.subr.bf16.mxu0 0
  %373 = vmatpush1.bf16.msra.mxu0 0
  %374 = vmatprep.subr.bf16.mxu0 0
  %375 = vmatpush1.bf16.msra.mxu0 0
  %376 = vmatprep.subr.bf16.mxu0 0
  %377 = vmatpush1.bf16.msra.mxu0 0
  %378 = vmatprep.subr.bf16.mxu0 0
  %379 = vmatpush1.bf16.msra.mxu0 0
  %380 = vmatprep.subr.bf16.mxu0 0
  %381 = vmatpush1.bf16.msra.mxu0 0
  %382 = vmatprep.subr.bf16.mxu0 0
  %383 = vmatpush1.bf16.msra.mxu0 0
  %384 = vmatprep.subr.bf16.mxu0 0
  %385 = vmatpush1.bf16.msra.mxu0 0
  %386 = vmatprep.subr.bf16.mxu0 0
  %387 = vmatpush1.bf16.msra.mxu0 0
  %388 = vmatprep.subr.bf16.mxu0 0
  %389 = vmatpush1.bf16.msra.mxu0 0
  %390 = vmatprep.subr.bf16.mxu0 0
  %391 = vmatpush1.bf16.msra.mxu0 0
  %392 = vmatprep.mubr.bf16.mxu0 0
  %393 = vmatmul.mubr.bf16.gmra.mrb[0].mxu0 %v240
  %v394 = vpop.f32.mrb[0].mxu0
  %v395 = vadd.f32 %v298, %v394
  %v396 = vpop.f32.mrb[0].mxu0
  %v397 = vpop.f32.mrb[0].mxu0
  %v398 = vadd.f32 %v301, %v397
  %v399 = vpop.f32.mrb[0].mxu0
  %400 = vmatprep.mubr.bf16.mxu0 0
  %401 = vmatmul.mubr.bf16.gmra.mrb[0].mxu0 %v243
  %v402 = vpop.f32.mrb[0].mxu0
  %v403 = vadd.f32 %v306, %v402
  %v404 = vpop.f32.mrb[0].mxu0
  %v405 = vpop.f32.mrb[0].mxu0
  %v406 = vadd.f32 %v309, %v405
  %v407 = vpop.f32.mrb[0].mxu0
  %408 = vmatprep.mubr.bf16.mxu0 0
  %409 = vmatmul.mubr.bf16.gmra.mrb[0].mxu0 %v246
  %v410 = vpop.f32.mrb[0].mxu0
  %v411 = vadd.f32 %v314, %v410
  %v412 = vpop.f32.mrb[0].mxu0
  %v413 = vpop.f32.mrb[0].mxu0
  %v414 = vadd.f32 %v317, %v413
  %v415 = vpop.f32.mrb[0].mxu0
  %416 = vmatprep.mubr.bf16.mxu0 0
  %417 = vmatmul.mubr.bf16.gmra.mrb[0].mxu0 %v249
  %v418 = vpop.f32.mrb[0].mxu0
  %v419 = vadd.f32 %v322, %v418
  %v420 = vpop.f32.mrb[0].mxu0
  %v421 = vpop.f32.mrb[0].mxu0
  %v422 = vadd.f32 %v325, %v421
  %v423 = vpop.f32.mrb[0].mxu0
  %424 = vmatprep.mubr.bf16.mxu0 0
  %425 = vmatmul.mubr.bf16.gmra.mrb[0].mxu0 %v252
  %v426 = vpop.f32.mrb[0].mxu0
  %v427 = vadd.f32 %v330, %v426
  %v428 = vpop.f32.mrb[0].mxu0
  %v429 = vpop.f32.mrb[0].mxu0
  %v430 = vadd.f32 %v333, %v429
  %v431 = vpop.f32.mrb[0].mxu0
  %432 = vmatprep.mubr.bf16.mxu0 0
  %433 = vmatmul.mubr.bf16.gmra.mrb[0].mxu0 %v255
  %v434 = vpop.f32.mrb[0].mxu0
  %v435 = vadd.f32 %v338, %v434
  %v436 = vpop.f32.mrb[0].mxu0
  %v437 = vpop.f32.mrb[0].mxu0
  %v438 = vadd.f32 %v341, %v437
  %v439 = vpop.f32.mrb[0].mxu0
  %440 = vmatprep.mubr.bf16.mxu0 0
  %441 = vmatmul.mubr.bf16.gmra.mrb[0].mxu0 %v258
  %v442 = vpop.f32.mrb[0].mxu0
  %v443 = vadd.f32 %v346, %v442
  %v444 = vpop.f32.mrb[0].mxu0
  %v445 = vpop.f32.mrb[0].mxu0
  %v446 = vadd.f32 %v349, %v445
  %v447 = vpop.f32.mrb[0].mxu0
  %448 = vmatprep.mubr.bf16.mxu0 0
  %449 = vmatmul.mubr.bf16.gmra.mrb[0].mxu0 %v261
  %v450 = vpop.f32.mrb[0].mxu0
  %v451 = vadd.f32 %v354, %v450
  %v452 = vpop.f32.mrb[0].mxu0
  %v453 = vpop.f32.mrb[0].mxu0
  %v454 = vadd.f32 %v357, %v453
  %v455 = vpop.f32.mrb[0].mxu0
  %456 = vdwg.mxu0
  %v457 = vmax.f32 %v395, 0.0
  %v458 = vmax.f32 %v398, 0.0
  %v459 = vmax.f32 %v403, 0.0
  %v460 = vmax.f32 %v406, 0.0
  %v461 = vmax.f32 %v411, 0.0
  %v462 = vmax.f32 %v414, 0.0
  %v463 = vmax.f32 %v419, 0.0
  %v464 = vmax.f32 %v422, 0.0
  %v465 = vmax.f32 %v427, 0.0
  %v466 = vmax.f32 %v430, 0.0
  %v467 = vmax.f32 %v435, 0.0
  %v468 = vmax.f32 %v438, 0.0
  %v469 = vmax.f32 %v443, 0.0
  %v470 = vmax.f32 %v446, 0.0
  %v471 = vmax.f32 %v451, 0.0
  %v472 = vmax.f32 %v454, 0.0
  %473 = vst.msk [vmem:[%s3] sm:$0xff] %vm238, %v457
  %474 = vst.msk [vmem:[%s3 + $0x8] sm:$0xff] %vm238, %v458
  %475 = vst.msk [vmem:[%s3 + $0x10] sm:$0xff] %vm238, %v459
  %476 = vst.msk [vmem:[%s3 + $0x18] sm:$0xff] %vm238, %v460
  %477 = vst.msk [vmem:[%s3 + $0x20] sm:$0xff] %vm238, %v461
  %478 = vst.msk [vmem:[%s3 + $0x28] sm:$0xff] %vm238, %v462
  %479 = vst.msk [vmem:[%s3 + $0x30] sm:$0xff] %vm238, %v463
  %480 = vst.msk [vmem:[%s3 + $0x38] sm:$0xff] %vm238, %v464
  %481 = vst.msk [vmem:[%s3 + $0x40] sm:$0xff] %vm238, %v465
  %482 = vst.msk [vmem:[%s3 + $0x48] sm:$0xff] %vm238, %v466
  %483 = vst.msk [vmem:[%s3 + $0x50] sm:$0xff] %vm238, %v467
  %484 = vst.msk [vmem:[%s3 + $0x58] sm:$0xff] %vm238, %v468
  %485 = vst.msk [vmem:[%s3 + $0x60] sm:$0xff] %vm238, %v469
  %486 = vst.msk [vmem:[%s3 + $0x68] sm:$0xff] %vm238, %v470
  %487 = vst.msk [vmem:[%s3 + $0x70] sm:$0xff] %vm238, %v471
  %488 = vst.msk [vmem:[%s3 + $0x78] sm:$0xff] %vm238, %v472
  // Predicated region
  $region14: #{fluentnet_forward.113} parent=0 // pred_check
    _
  $region15: #{fluentnet_forward.113} parent=0 // pred_check_branch
    %490 = sbr.rel (0) target = $region17
  $region16: #{fluentnet_forward.113} parent=0 // pred_region
    _
  $region17: #{fluentnet_forward.113} parent=0 // pred_fallthru
    _
  // Predicated region
  $region18: #{fluentnet_forward.113} parent=0 // pred_check
    _
  $region19: #{fluentnet_forward.113} parent=0 // pred_check_branch
    %492 = sbr.rel (0) target = $region21
  $region20: #{fluentnet_forward.113} parent=0 // pred_region
    _
  $region21: #{fluentnet_forward.113} parent=0 // pred_fallthru
    _

// kernel: fluentnet_forward.125
$region0: #{fluentnet_forward.125}
  #allocation0 [shape = 'u32[]', space=smem, size = 0x4, offset = 0x4, fixed_abs, tag = 'smem constant byte address 0x4 - core index']
  #allocation1 [shape = 'u32[144,128]{1,0:T(1,128)}', space=vmem, size = 0x12000, scoped, tag = 'internal scratch']
  %s0 = inlined_call_operand.vmem [shape: f32[128,288], index: 0, kind: input, shape index: {}]
  %s1 = inlined_call_operand.vmem [shape: bf16[288,64], index: 1, kind: input, shape index: {}]
  %s2 = inlined_call_operand.vmem [shape: f32[1,64], index: 2, kind: input, shape index: {}]
  %s3 = inlined_call_operand.vmem [shape: f32[128,64], index: 3, kind: output, shape index: {}]
  %s4 = sld [smem:[#allocation0]]
  $region22: #{fluentnet_forward.125} parent=0
    _
  %s6 = ssub.s32 1, %s4
  %s7 = scalar_select 0, %s6, %s4
  // Predicated region
  $region2: #{fluentnet_forward.125} parent=0 // pred_check
    _
  $region3: #{fluentnet_forward.125} parent=0 // pred_check_branch
    %9 = sbr.rel (0) target = $region5
  $region4: #{fluentnet_forward.125} parent=0 // pred_region
    _
  $region5: #{fluentnet_forward.125} parent=0 // pred_fallthru
    _
  // Predicated region
  $region6: #{fluentnet_forward.125} parent=0 // pred_check
    _
  $region7: #{fluentnet_forward.125} parent=0 // pred_check_branch
    %11 = sbr.rel (0) target = $region9
  $region8: #{fluentnet_forward.125} parent=0 // pred_region
    _
  $region9: #{fluentnet_forward.125} parent=0 // pred_fallthru
    _
  // Predicated region
  $region10: #{fluentnet_forward.125} parent=0 // pred_check
    _
  $region11: #{fluentnet_forward.125} parent=0 // pred_check_branch
    %13 = sbr.rel (0) target = $region13
  $region12: #{fluentnet_forward.125} parent=0 // pred_region
    _
  $region13: #{fluentnet_forward.125} parent=0 // pred_fallthru
    _
  %v15 = vld [vmem:[%s0] sm:$0xff]
  %v16 = vld [vmem:[%s0 + $0x8] sm:$0xff]
  %v17 = vld [vmem:[%s0 + $0x10] sm:$0xff]
  %v18 = vld [vmem:[%s0 + $0x18] sm:$0xff]
  %v19 = vld [vmem:[%s0 + $0x20] sm:$0xff]
  %v20 = vld [vmem:[%s0 + $0x28] sm:$0xff]
  %v21 = vld [vmem:[%s0 + $0x30] sm:$0xff]
  %v22 = vld [vmem:[%s0 + $0x38] sm:$0xff]
  %v23 = vld [vmem:[%s0 + $0x40] sm:$0xff]
  %v24 = vld [vmem:[%s0 + $0x48] sm:$0xff]
  %v25 = vld [vmem:[%s0 + $0x50] sm:$0xff]
  %v26 = vld [vmem:[%s0 + $0x58] sm:$0xff]
  %v27 = vld [vmem:[%s0 + $0x60] sm:$0xff]
  %v28 = vld [vmem:[%s0 + $0x68] sm:$0xff]
  %v29 = vld [vmem:[%s0 + $0x70] sm:$0xff]
  %v30 = vld [vmem:[%s0 + $0x78] sm:$0xff]
  %v31 = vld [vmem:[%s0 + $0x80] sm:$0xff]
  %v32 = vld [vmem:[%s0 + $0x88] sm:$0xff]
  %v33 = vld [vmem:[%s0 + $0x90] sm:$0xff]
  %v34 = vld [vmem:[%s0 + $0x98] sm:$0xff]
  %v35 = vld [vmem:[%s0 + $0xa0] sm:$0xff]
  %v36 = vld [vmem:[%s0 + $0xa8] sm:$0xff]
  %v37 = vld [vmem:[%s0 + $0xb0] sm:$0xff]
  %v38 = vld [vmem:[%s0 + $0xb8] sm:$0xff]
  %v39 = vld [vmem:[%s0 + $0xc0] sm:$0xff]
  %v40 = vld [vmem:[%s0 + $0xc8] sm:$0xff]
  %v41 = vld [vmem:[%s0 + $0xd0] sm:$0xff]
  %v42 = vld [vmem:[%s0 + $0xd8] sm:$0xff]
  %v43 = vld [vmem:[%s0 + $0xe0] sm:$0xff]
  %v44 = vld [vmem:[%s0 + $0xe8] sm:$0xff]
  %v45 = vld [vmem:[%s0 + $0xf0] sm:$0xff]
  %v46 = vld [vmem:[%s0 + $0xf8] sm:$0xff]
  %v47 = vld [vmem:[%s0 + $0x100] sm:$0xff]
  %v48 = vld [vmem:[%s0 + $0x108] sm:$0xff]
  %v49 = vld [vmem:[%s0 + $0x110] sm:$0xff]
  %v50 = vld [vmem:[%s0 + $0x118] sm:$0xff]
  %v51 = vld [vmem:[%s0 + $0x120] sm:$0xff]
  %v52 = vld [vmem:[%s0 + $0x128] sm:$0xff]
  %v53 = vld [vmem:[%s0 + $0x130] sm:$0xff]
  %v54 = vld [vmem:[%s0 + $0x138] sm:$0xff]
  %v55 = vld [vmem:[%s0 + $0x140] sm:$0xff]
  %v56 = vld [vmem:[%s0 + $0x148] sm:$0xff]
  %v57 = vld [vmem:[%s0 + $0x150] sm:$0xff]
  %v58 = vld [vmem:[%s0 + $0x158] sm:$0xff]
  %v59 = vld [vmem:[%s0 + $0x160] sm:$0xff]
  %v60 = vld [vmem:[%s0 + $0x168] sm:$0xff]
  %v61 = vld [vmem:[%s0 + $0x170] sm:$0xff]
  %v62 = vld [vmem:[%s0 + $0x178] sm:$0xff]
  %v63 = vpack.c.bf16 %v18, %v15
  %v64 = vpack.c.bf16 %v19, %v16
  %v65 = vpack.c.bf16 %v20, %v17
  %v66 = vpack.c.bf16 %v24, %v21
  %v67 = vpack.c.bf16 %v25, %v22
  %v68 = vpack.c.bf16 %v26, %v23
  %v69 = vpack.c.bf16 %v30, %v27
  %v70 = vpack.c.bf16 %v31, %v28
  %v71 = vpack.c.bf16 %v32, %v29
  %v72 = vpack.c.bf16 %v36, %v33
  %v73 = vpack.c.bf16 %v37, %v34
  %v74 = vpack.c.bf16 %v38, %v35
  %v75 = vpack.c.bf16 %v42, %v39
  %v76 = vpack.c.bf16 %v43, %v40
  %v77 = vpack.c.bf16 %v44, %v41
  %v78 = vpack.c.bf16 %v48, %v45
  %v79 = vpack.c.bf16 %v49, %v46
  %v80 = vpack.c.bf16 %v50, %v47
  %v81 = vpack.c.bf16 %v54, %v51
  %v82 = vpack.c.bf16 %v55, %v52
  %v83 = vpack.c.bf16 %v56, %v53
  %v84 = vpack.c.bf16 %v60, %v57
  %v85 = vpack.c.bf16 %v61, %v58
  %v86 = vpack.c.bf16 %v62, %v59
  %v87 = vld [vmem:[%s1] sm:$0xf]
  %v88 = vld [vmem:[%s1 + $0x4] sm:$0xf]
  %v89 = vld [vmem:[%s1 + $0x8] sm:$0xf]
  %v90 = vld [vmem:[%s1 + $0xc] sm:$0xf]
  %v91 = vld [vmem:[%s1 + $0x10] sm:$0xf]
  %v92 = vld [vmem:[%s1 + $0x14] sm:$0xf]
  %v93 = vld [vmem:[%s1 + $0x18] sm:$0xf]
  %v94 = vld [vmem:[%s1 + $0x1c] sm:$0xf]
  %v95 = vld [vmem:[%s1 + $0x20] sm:$0xf]
  %v96 = vld [vmem:[%s1 + $0x24] sm:$0xf]
  %v97 = vld [vmem:[%s1 + $0x28] sm:$0xf]
  %v98 = vld [vmem:[%s1 + $0x2c] sm:$0xf]
  %v99 = vld [vmem:[%s1 + $0x30] sm:$0xf]
  %v100 = vld [vmem:[%s1 + $0x34] sm:$0xf]
  %v101 = vld [vmem:[%s1 + $0x38] sm:$0xf]
  %v102 = vld [vmem:[%s1 + $0x3c] sm:$0xf]
  %v103 = vld [vmem:[%s1 + $0x40] sm:$0xf]
  %v104 = vld [vmem:[%s1 + $0x44] sm:$0xf]
  %v105 = vld [vmem:[%s1 + $0x48] sm:$0xf]
  %v106 = vld [vmem:[%s1 + $0x4c] sm:$0xf]
  %v107 = vld [vmem:[%s1 + $0x50] sm:$0xf]
  %v108 = vld [vmem:[%s1 + $0x54] sm:$0xf]
  %v109 = vld [vmem:[%s1 + $0x58] sm:$0xf]
  %v110 = vld [vmem:[%s1 + $0x5c] sm:$0xf]
  %v111 = vld [vmem:[%s1 + $0x60] sm:$0xf]
  %v112 = vld [vmem:[%s1 + $0x64] sm:$0xf]
  %v113 = vld [vmem:[%s1 + $0x68] sm:$0xf]
  %v114 = vld [vmem:[%s1 + $0x6c] sm:$0xf]
  %v115 = vld [vmem:[%s1 + $0x70] sm:$0xf]
  %v116 = vld [vmem:[%s1 + $0x74] sm:$0xf]
  %v117 = vld [vmem:[%s1 + $0x78] sm:$0xf]
  %v118 = vld [vmem:[%s1 + $0x7c] sm:$0xf]
  %v119 = vld [vmem:[%s1 + $0x80] sm:$0xf]
  %v120 = vld [vmem:[%s1 + $0x84] sm:$0xf]
  %v121 = vld [vmem:[%s1 + $0x88] sm:$0xf]
  %v122 = vld [vmem:[%s1 + $0x8c] sm:$0xf]
  %v123 = vld [vmem:[%s2] sm:$0x1]
  %v125 = vlaneseq
  %v126 = vshrl.u32 %v125, 7
  %v127 = vsub.s32 0, %v126
  %v128 = vrot.slane %v123, %v127
  %v166 = vunpack.c.l.b16 %v87
  %v167 = vunpack.c.l.b16 %v88
  %v168 = vunpack.c.l.b16 %v89
  %v169 = vunpack.c.l.b16 %v90
  %v170 = vunpack.c.l.b16 %v91
  %v171 = vunpack.c.l.b16 %v92
  %v172 = vunpack.c.l.b16 %v93
  %v173 = vunpack.c.l.b16 %v94
  %v174 = vunpack.c.l.b16 %v95
  %v175 = vunpack.c.l.b16 %v96
  %v176 = vunpack.c.l.b16 %v97
  %v177 = vunpack.c.l.b16 %v98
  %v178 = vunpack.c.l.b16 %v99
  %v179 = vunpack.c.l.b16 %v100
  %v180 = vunpack.c.l.b16 %v101
  %v181 = vunpack.c.l.b16 %v102
  %v182 = vunpack.c.l.b16 %v103
  %v183 = vunpack.c.l.b16 %v104
  %v184 = vunpack.c.l.b16 %v105
  %v185 = vunpack.c.l.b16 %v106
  %v186 = vunpack.c.l.b16 %v107
  %v187 = vunpack.c.l.b16 %v108
  %v188 = vunpack.c.l.b16 %v109
  %v189 = vunpack.c.l.b16 %v110
  %v190 = vunpack.c.l.b16 %v111
  %v191 = vunpack.c.l.b16 %v112
  %v192 = vunpack.c.l.b16 %v113
  %v193 = vunpack.c.l.b16 %v114
  %v194 = vunpack.c.l.b16 %v115
  %v195 = vunpack.c.l.b16 %v116
  %v196 = vunpack.c.l.b16 %v117
  %v197 = vunpack.c.l.b16 %v118
  %v198 = vunpack.c.l.b16 %v119
  %v199 = vunpack.c.l.b16 %v120
  %v200 = vunpack.c.l.b16 %v121
  %v201 = vunpack.c.l.b16 %v122
  %v202 = vpack.c.b16 %v167, %v166
  %v203 = vpack.c.b16 %v169, %v168
  %v204 = vpack.c.b16 %v171, %v170
  %v205 = vpack.c.b16 %v173, %v172
  %v206 = vpack.c.b16 %v175, %v174
  %v207 = vpack.c.b16 %v177, %v176
  %v208 = vpack.c.b16 %v179, %v178
  %v209 = vpack.c.b16 %v181, %v180
  %v210 = vpack.c.b16 %v183, %v182
  %v211 = vpack.c.b16 %v185, %v184
  %v212 = vpack.c.b16 %v187, %v186
  %v213 = vpack.c.b16 %v189, %v188
  %v214 = vpack.c.b16 %v191, %v190
  %v215 = vpack.c.b16 %v193, %v192
  %v216 = vpack.c.b16 %v195, %v194
  %v217 = vpack.c.b16 %v197, %v196
  %v218 = vpack.c.b16 %v199, %v198
  %v219 = vpack.c.b16 %v201, %v200
  %vm238 = vcmask 261120
  %v240 = vsel %vm238, %v65, 0
  %v243 = vsel %vm238, %v68, 0
  %v246 = vsel %vm238, %v71, 0
  %v249 = vsel %vm238, %v74, 0
  %v252 = vsel %vm238, %v77, 0
  %v255 = vsel %vm238, %v80, 0
  %v258 = vsel %vm238, %v83, 0
  %v261 = vsel %vm238, %v86, 0
  %263 = vmatprep.subr.bf16.mxu0 0
  %264 = vmatpush1.bf16.msra.mxu0 %v202
  %265 = vmatprep.subr.bf16.mxu0 0
  %266 = vmatpush1.bf16.msra.mxu0 %v203
  %267 = vmatprep.subr.bf16.mxu0 0
  %268 = vmatpush1.bf16.msra.mxu0 %v204
  %269 = vmatprep.subr.bf16.mxu0 0
  %270 = vmatpush1.bf16.msra.mxu0 %v205
  %271 = vmatprep.subr.bf16.mxu0 0
  %272 = vmatpush1.bf16.msra.mxu0 %v206
  %273 = vmatprep.subr.bf16.mxu0 0
  %274 = vmatpush1.bf16.msra.mxu0 %v207
  %275 = vmatprep.subr.bf16.mxu0 0
  %276 = vmatpush1.bf16.msra.mxu0 %v208
  %277 = vmatprep.subr.bf16.mxu0 0
  %278 = vmatpush1.bf16.msra.mxu0 %v209
  %279 = vmatprep.subr.bf16.mxu0 0
  %280 = vmatpush1.bf16.msra.mxu0 %v210
  %281 = vmatprep.subr.bf16.mxu0 0
  %282 = vmatpush1.bf16.msra.mxu0 %v211
  %283 = vmatprep.subr.bf16.mxu0 0
  %284 = vmatpush1.bf16.msra.mxu0 %v212
  %285 = vmatprep.subr.bf16.mxu0 0
  %286 = vmatpush1.bf16.msra.mxu0 %v213
  %287 = vmatprep.subr.bf16.mxu0 0
  %288 = vmatpush1.bf16.msra.mxu0 %v214
  %289 = vmatprep.subr.bf16.mxu0 0
  %290 = vmatpush1.bf16.msra.mxu0 %v215
  %291 = vmatprep.subr.bf16.mxu0 0
  %292 = vmatpush1.bf16.msra.mxu0 %v216
  %293 = vmatprep.subr.bf16.mxu0 0
  %294 = vmatpush1.bf16.msra.mxu0 %v217
  %295 = vmatprep.mubr.bf16.mxu0 %v64
  %296 = vmatmul.mubr.bf16.gmra.mrb[0].mxu0 %v63
  %v297 = vpop.f32.mrb[0].mxu0
  %v298 = vadd.f32 %v128, %v297
  %v299 = vpop.f32.mrb[0].mxu0
  %v300 = vpop.f32.mrb[0].mxu0
  %v301 = vadd.f32 %v128, %v300
  %v302 = vpop.f32.mrb[0].mxu0
  %303 = vmatprep.mubr.bf16.mxu0 %v67
  %304 = vmatmul.mubr.bf16.gmra.mrb[0].mxu0 %v66
  %v305 = vpop.f32.mrb[0].mxu0
  %v306 = vadd.f32 %v128, %v305
  %v307 = vpop.f32.mrb[0].mxu0
  %v308 = vpop.f32.mrb[0].mxu0
  %v309 = vadd.f32 %v128, %v308
  %v310 = vpop.f32.mrb[0].mxu0
  %311 = vmatprep.mubr.bf16.mxu0 %v70
  %312 = vmatmul.mubr.bf16.gmra.mrb[0].mxu0 %v69
  %v313 = vpop.f32.mrb[0].mxu0
  %v314 = vadd.f32 %v128, %v313
  %v315 = vpop.f32.mrb[0].mxu0
  %v316 = vpop.f32.mrb[0].mxu0
  %v317 = vadd.f32 %v128, %v316
  %v318 = vpop.f32.mrb[0].mxu0
  %319 = vmatprep.mubr.bf16.mxu0 %v73
  %320 = vmatmul.mubr.bf16.gmra.mrb[0].mxu0 %v72
  %v321 = vpop.f32.mrb[0].mxu0
  %v322 = vadd.f32 %v128, %v321
  %v323 = vpop.f32.mrb[0].mxu0
  %v324 = vpop.f32.mrb[0].mxu0
  %v325 = vadd.f32 %v128, %v324
  %v326 = vpop.f32.mrb[0].mxu0
  %327 = vmatprep.mubr.bf16.mxu0 %v76
  %328 = vmatmul.mubr.bf16.gmra.mrb[0].mxu0 %v75
  %v329 = vpop.f32.mrb[0].mxu0
  %v330 = vadd.f32 %v128, %v329
  %v331 = vpop.f32.mrb[0].mxu0
  %v332 = vpop.f32.mrb[0].mxu0
  %v333 = vadd.f32 %v128, %v332
  %v334 = vpop.f32.mrb[0].mxu0
  %335 = vmatprep.mubr.bf16.mxu0 %v79
  %336 = vmatmul.mubr.bf16.gmra.mrb[0].mxu0 %v78
  %v337 = vpop.f32.mrb[0].mxu0
  %v338 = vadd.f32 %v128, %v337
  %v339 = vpop.f32.mrb[0].mxu0
  %v340 = vpop.f32.mrb[0].mxu0
  %v341 = vadd.f32 %v128, %v340
  %v342 = vpop.f32.mrb[0].mxu0
  %343 = vmatprep.mubr.bf16.mxu0 %v82
  %344 = vmatmul.mubr.bf16.gmra.mrb[0].mxu0 %v81
  %v345 = vpop.f32.mrb[0].mxu0
  %v346 = vadd.f32 %v128, %v345
  %v347 = vpop.f32.mrb[0].mxu0
  %v348 = vpop.f32.mrb[0].mxu0
  %v349 = vadd.f32 %v128, %v348
  %v350 = vpop.f32.mrb[0].mxu0
  %351 = vmatprep.mubr.bf16.mxu0 %v85
  %352 = vmatmul.mubr.bf16.gmra.mrb[0].mxu0 %v84
  %v353 = vpop.f32.mrb[0].mxu0
  %v354 = vadd.f32 %v128, %v353
  %v355 = vpop.f32.mrb[0].mxu0
  %v356 = vpop.f32.mrb[0].mxu0
  %v357 = vadd.f32 %v128, %v356
  %v358 = vpop.f32.mrb[0].mxu0
  %359 = vdwg.mxu0
  %360 = vmatprep.subr.bf16.mxu0 0
  %361 = vmatpush1.bf16.msra.mxu0 %v218
  %362 = vmatprep.subr.bf16.mxu0 0
  %363 = vmatpush1.bf16.msra.mxu0 %v219
  %364 = vmatprep.subr.bf16.mxu0 0
  %365 = vmatpush1.bf16.msra.mxu0 0
  %366 = vmatprep.subr.bf16.mxu0 0
  %367 = vmatpush1.bf16.msra.mxu0 0
  %368 = vmatprep.subr.bf16.mxu0 0
  %369 = vmatpush1.bf16.msra.mxu0 0
  %370 = vmatprep.subr.bf16.mxu0 0
  %371 = vmatpush1.bf16.msra.mxu0 0
  %372 = vmatprep.subr.bf16.mxu0 0
  %373 = vmatpush1.bf16.msra.mxu0 0
  %374 = vmatprep.subr.bf16.mxu0 0
  %375 = vmatpush1.bf16.msra.mxu0 0
  %376 = vmatprep.subr.bf16.mxu0 0
  %377 = vmatpush1.bf16.msra.mxu0 0
  %378 = vmatprep.subr.bf16.mxu0 0
  %379 = vmatpush1.bf16.msra.mxu0 0
  %380 = vmatprep.subr.bf16.mxu0 0
  %381 = vmatpush1.bf16.msra.mxu0 0
  %382 = vmatprep.subr.bf16.mxu0 0
  %383 = vmatpush1.bf16.msra.mxu0 0
  %384 = vmatprep.subr.bf16.mxu0 0
  %385 = vmatpush1.bf16.msra.mxu0 0
  %386 = vmatprep.subr.bf16.mxu0 0
  %387 = vmatpush1.bf16.msra.mxu0 0
  %388 = vmatprep.subr.bf16.mxu0 0
  %389 = vmatpush1.bf16.msra.mxu0 0
  %390 = vmatprep.subr.bf16.mxu0 0
  %391 = vmatpush1.bf16.msra.mxu0 0
  %392 = vmatprep.mubr.bf16.mxu0 0
  %393 = vmatmul.mubr.bf16.gmra.mrb[0].mxu0 %v240
  %v394 = vpop.f32.mrb[0].mxu0
  %v395 = vadd.f32 %v298, %v394
  %v396 = vpop.f32.mrb[0].mxu0
  %v397 = vpop.f32.mrb[0].mxu0
  %v398 = vadd.f32 %v301, %v397
  %v399 = vpop.f32.mrb[0].mxu0
  %400 = vmatprep.mubr.bf16.mxu0 0
  %401 = vmatmul.mubr.bf16.gmra.mrb[0].mxu0 %v243
  %v402 = vpop.f32.mrb[0].mxu0
  %v403 = vadd.f32 %v306, %v402
  %v404 = vpop.f32.mrb[0].mxu0
  %v405 = vpop.f32.mrb[0].mxu0
  %v406 = vadd.f32 %v309, %v405
  %v407 = vpop.f32.mrb[0].mxu0
  %408 = vmatprep.mubr.bf16.mxu0 0
  %409 = vmatmul.mubr.bf16.gmra.mrb[0].mxu0 %v246
  %v410 = vpop.f32.mrb[0].mxu0
  %v411 = vadd.f32 %v314, %v410
  %v412 = vpop.f32.mrb[0].mxu0
  %v413 = vpop.f32.mrb[0].mxu0
  %v414 = vadd.f32 %v317, %v413
  %v415 = vpop.f32.mrb[0].mxu0
  %416 = vmatprep.mubr.bf16.mxu0 0
  %417 = vmatmul.mubr.bf16.gmra.mrb[0].mxu0 %v249
  %v418 = vpop.f32.mrb[0].mxu0
  %v419 = vadd.f32 %v322, %v418
  %v420 = vpop.f32.mrb[0].mxu0
  %v421 = vpop.f32.mrb[0].mxu0
  %v422 = vadd.f32 %v325, %v421
  %v423 = vpop.f32.mrb[0].mxu0
  %424 = vmatprep.mubr.bf16.mxu0 0
  %425 = vmatmul.mubr.bf16.gmra.mrb[0].mxu0 %v252
  %v426 = vpop.f32.mrb[0].mxu0
  %v427 = vadd.f32 %v330, %v426
  %v428 = vpop.f32.mrb[0].mxu0
  %v429 = vpop.f32.mrb[0].mxu0
  %v430 = vadd.f32 %v333, %v429
  %v431 = vpop.f32.mrb[0].mxu0
  %432 = vmatprep.mubr.bf16.mxu0 0
  %433 = vmatmul.mubr.bf16.gmra.mrb[0].mxu0 %v255
  %v434 = vpop.f32.mrb[0].mxu0
  %v435 = vadd.f32 %v338, %v434
  %v436 = vpop.f32.mrb[0].mxu0
  %v437 = vpop.f32.mrb[0].mxu0
  %v438 = vadd.f32 %v341, %v437
  %v439 = vpop.f32.mrb[0].mxu0
  %440 = vmatprep.mubr.bf16.mxu0 0
  %441 = vmatmul.mubr.bf16.gmra.mrb[0].mxu0 %v258
  %v442 = vpop.f32.mrb[0].mxu0
  %v443 = vadd.f32 %v346, %v442
  %v444 = vpop.f32.mrb[0].mxu0
  %v445 = vpop.f32.mrb[0].mxu0
  %v446 = vadd.f32 %v349, %v445
  %v447 = vpop.f32.mrb[0].mxu0
  %448 = vmatprep.mubr.bf16.mxu0 0
  %449 = vmatmul.mubr.bf16.gmra.mrb[0].mxu0 %v261
  %v450 = vpop.f32.mrb[0].mxu0
  %v451 = vadd.f32 %v354, %v450
  %v452 = vpop.f32.mrb[0].mxu0
  %v453 = vpop.f32.mrb[0].mxu0
  %v454 = vadd.f32 %v357, %v453
  %v455 = vpop.f32.mrb[0].mxu0
  %456 = vdwg.mxu0
  %v457 = vmax.f32 %v395, 0.0
  %v458 = vmax.f32 %v398, 0.0
  %v459 = vmax.f32 %v403, 0.0
  %v460 = vmax.f32 %v406, 0.0
  %v461 = vmax.f32 %v411, 0.0
  %v462 = vmax.f32 %v414, 0.0
  %v463 = vmax.f32 %v419, 0.0
  %v464 = vmax.f32 %v422, 0.0
  %v465 = vmax.f32 %v427, 0.0
  %v466 = vmax.f32 %v430, 0.0
  %v467 = vmax.f32 %v435, 0.0
  %v468 = vmax.f32 %v438, 0.0
  %v469 = vmax.f32 %v443, 0.0
  %v470 = vmax.f32 %v446, 0.0
  %v471 = vmax.f32 %v451, 0.0
  %v472 = vmax.f32 %v454, 0.0
  %vm473 = vcmask 523264
  %474 = vst.msk [vmem:[%s3] sm:$0xff] %vm473, %v457
  %475 = vst.msk [vmem:[%s3 + $0x8] sm:$0xff] %vm473, %v458
  %476 = vst.msk [vmem:[%s3 + $0x10] sm:$0xff] %vm473, %v459
  %477 = vst.msk [vmem:[%s3 + $0x18] sm:$0xff] %vm473, %v460
  %478 = vst.msk [vmem:[%s3 + $0x20] sm:$0xff] %vm473, %v461
  %479 = vst.msk [vmem:[%s3 + $0x28] sm:$0xff] %vm473, %v462
  %480 = vst.msk [vmem:[%s3 + $0x30] sm:$0xff] %vm473, %v463
  %481 = vst.msk [vmem:[%s3 + $0x38] sm:$0xff] %vm473, %v464
  %482 = vst.msk [vmem:[%s3 + $0x40] sm:$0xff] %vm473, %v465
  %483 = vst.msk [vmem:[%s3 + $0x48] sm:$0xff] %vm473, %v466
  %484 = vst.msk [vmem:[%s3 + $0x50] sm:$0xff] %vm473, %v467
  %485 = vst.msk [vmem:[%s3 + $0x58] sm:$0xff] %vm473, %v468
  %486 = vst.msk [vmem:[%s3 + $0x60] sm:$0xff] %vm473, %v469
  %487 = vst.msk [vmem:[%s3 + $0x68] sm:$0xff] %vm473, %v470
  %488 = vst.msk [vmem:[%s3 + $0x70] sm:$0xff] %vm473, %v471
  %489 = vst.msk [vmem:[%s3 + $0x78] sm:$0xff] %vm473, %v472
  // Predicated region
  $region14: #{fluentnet_forward.125} parent=0 // pred_check
    _
  $region15: #{fluentnet_forward.125} parent=0 // pred_check_branch
    %491 = sbr.rel (0) target = $region17
  $region16: #{fluentnet_forward.125} parent=0 // pred_region
    _
  $region17: #{fluentnet_forward.125} parent=0 // pred_fallthru
    _
  // Predicated region
  $region18: #{fluentnet_forward.125} parent=0 // pred_check
    _
  $region19: #{fluentnet_forward.125} parent=0 // pred_check_branch
    %493 = sbr.rel (0) target = $region21
  $region20: #{fluentnet_forward.125} parent=0 // pred_region
    _
  $region21: #{fluentnet_forward.125} parent=0 // pred_fallthru
    _

// kernel: fluentnet_forward.126
$region0: #{fluentnet_forward.126}
  #allocation0 [shape = 'u32[]', space=smem, size = 0x4, offset = 0x4, fixed_abs, tag = 'smem constant byte address 0x4 - core index']
  #allocation1 [shape = 'u32[144,128]{1,0:T(1,128)}', space=vmem, size = 0x12000, scoped, tag = 'internal scratch']
  %s0 = inlined_call_operand.vmem [shape: f32[128,576], index: 0, kind: input, shape index: {}]
  %s1 = inlined_call_operand.vmem [shape: bf16[576,64], index: 1, kind: input, shape index: {}]
  %s2 = inlined_call_operand.vmem [shape: f32[1,64], index: 2, kind: input, shape index: {}]
  %s3 = inlined_call_operand.vmem [shape: f32[128,64], index: 3, kind: output, shape index: {}]
  %s4 = sld [smem:[#allocation0]]
  $region22: #{fluentnet_forward.126} parent=0
    _
  %s6 = ssub.s32 1, %s4
  %s7 = scalar_select 0, %s6, %s4
  // Predicated region
  $region2: #{fluentnet_forward.126} parent=0 // pred_check
    _
  $region3: #{fluentnet_forward.126} parent=0 // pred_check_branch
    %9 = sbr.rel (0) target = $region5
  $region4: #{fluentnet_forward.126} parent=0 // pred_region
    _
  $region5: #{fluentnet_forward.126} parent=0 // pred_fallthru
    _
  // Predicated region
  $region6: #{fluentnet_forward.126} parent=0 // pred_check
    _
  $region7: #{fluentnet_forward.126} parent=0 // pred_check_branch
    %11 = sbr.rel (0) target = $region9
  $region8: #{fluentnet_forward.126} parent=0 // pred_region
    _
  $region9: #{fluentnet_forward.126} parent=0 // pred_fallthru
    _
  // Predicated region
  $region10: #{fluentnet_forward.126} parent=0 // pred_check
    _
  $region11: #{fluentnet_forward.126} parent=0 // pred_check_branch
    %13 = sbr.rel (0) target = $region13
  $region12: #{fluentnet_forward.126} parent=0 // pred_region
    _
  $region13: #{fluentnet_forward.126} parent=0 // pred_fallthru
    _
  %v15 = vld [vmem:[%s0] sm:$0xff]
  %v16 = vld [vmem:[%s0 + $0x8] sm:$0xff]
  %v17 = vld [vmem:[%s0 + $0x10] sm:$0xff]
  %v18 = vld [vmem:[%s0 + $0x18] sm:$0xff]
  %v19 = vld [vmem:[%s0 + $0x20] sm:$0xff]
  %v20 = vld [vmem:[%s0 + $0x28] sm:$0xff]
  %v21 = vld [vmem:[%s0 + $0x30] sm:$0xff]
  %v22 = vld [vmem:[%s0 + $0x38] sm:$0xff]
  %v23 = vld [vmem:[%s0 + $0x40] sm:$0xff]
  %v24 = vld [vmem:[%s0 + $0x48] sm:$0xff]
  %v25 = vld [vmem:[%s0 + $0x50] sm:$0xff]
  %v26 = vld [vmem:[%s0 + $0x58] sm:$0xff]
  %v27 = vld [vmem:[%s0 + $0x60] sm:$0xff]
  %v28 = vld [vmem:[%s0 + $0x68] sm:$0xff]
  %v29 = vld [vmem:[%s0 + $0x70] sm:$0xff]
  %v30 = vld [vmem:[%s0 + $0x78] sm:$0xff]
  %v31 = vld [vmem:[%s0 + $0x80] sm:$0xff]
  %v32 = vld [vmem:[%s0 + $0x88] sm:$0xff]
  %v33 = vld [vmem:[%s0 + $0x90] sm:$0xff]
  %v34 = vld [vmem:[%s0 + $0x98] sm:$0xff]
  %v35 = vld [vmem:[%s0 + $0xa0] sm:$0xff]
  %v36 = vld [vmem:[%s0 + $0xa8] sm:$0xff]
  %v37 = vld [vmem:[%s0 + $0xb0] sm:$0xff]
  %v38 = vld [vmem:[%s0 + $0xb8] sm:$0xff]
  %v39 = vld [vmem:[%s0 + $0xc0] sm:$0xff]
  %v40 = vld [vmem:[%s0 + $0xc8] sm:$0xff]
  %v41 = vld [vmem:[%s0 + $0xd0] sm:$0xff]
  %v42 = vld [vmem:[%s0 + $0xd8] sm:$0xff]
  %v43 = vld [vmem:[%s0 + $0xe0] sm:$0xff]
  %v44 = vld [vmem:[%s0 + $0xe8] sm:$0xff]
  %v45 = vld [vmem:[%s0 + $0xf0] sm:$0xff]
  %v46 = vld [vmem:[%s0 + $0xf8] sm:$0xff]
  %v47 = vld [vmem:[%s0 + $0x100] sm:$0xff]
  %v48 = vld [vmem:[%s0 + $0x108] sm:$0xff]
  %v49 = vld [vmem:[%s0 + $0x110] sm:$0xff]
  %v50 = vld [vmem:[%s0 + $0x118] sm:$0xff]
  %v51 = vld [vmem:[%s0 + $0x120] sm:$0xff]
  %v52 = vld [vmem:[%s0 + $0x128] sm:$0xff]
  %v53 = vld [vmem:[%s0 + $0x130] sm:$0xff]
  %v54 = vld [vmem:[%s0 + $0x138] sm:$0xff]
  %v55 = vld [vmem:[%s0 + $0x140] sm:$0xff]
  %v56 = vld [vmem:[%s0 + $0x148] sm:$0xff]
  %v57 = vld [vmem:[%s0 + $0x150] sm:$0xff]
  %v58 = vld [vmem:[%s0 + $0x158] sm:$0xff]
  %v59 = vld [vmem:[%s0 + $0x160] sm:$0xff]
  %v60 = vld [vmem:[%s0 + $0x168] sm:$0xff]
  %v61 = vld [vmem:[%s0 + $0x170] sm:$0xff]
  %v62 = vld [vmem:[%s0 + $0x178] sm:$0xff]
  %v63 = vld [vmem:[%s0 + $0x180] sm:$0xff]
  %v64 = vld [vmem:[%s0 + $0x188] sm:$0xff]
  %v65 = vld [vmem:[%s0 + $0x190] sm:$0xff]
  %v66 = vld [vmem:[%s0 + $0x198] sm:$0xff]
  %v67 = vld [vmem:[%s0 + $0x1a0] sm:$0xff]
  %v68 = vld [vmem:[%s0 + $0x1a8] sm:$0xff]
  %v69 = vld [vmem:[%s0 + $0x1b0] sm:$0xff]
  %v70 = vld [vmem:[%s0 + $0x1b8] sm:$0xff]
  %v71 = vld [vmem:[%s0 + $0x1c0] sm:$0xff]
  %v72 = vld [vmem:[%s0 + $0x1c8] sm:$0xff]
  %v73 = vld [vmem:[%s0 + $0x1d0] sm:$0xff]
  %v74 = vld [vmem:[%s0 + $0x1d8] sm:$0xff]
  %v75 = vld [vmem:[%s0 + $0x1e0] sm:$0xff]
  %v76 = vld [vmem:[%s0 + $0x1e8] sm:$0xff]
  %v77 = vld [vmem:[%s0 + $0x1f0] sm:$0xff]
  %v78 = vld [vmem:[%s0 + $0x1f8] sm:$0xff]
  %v79 = vld [vmem:[%s0 + $0x200] sm:$0xff]
  %v80 = vld [vmem:[%s0 + $0x208] sm:$0xff]
  %v81 = vld [vmem:[%s0 + $0x210] sm:$0xff]
  %v82 = vld [vmem:[%s0 + $0x218] sm:$0xff]
  %v83 = vld [vmem:[%s0 + $0x220] sm:$0xff]
  %v84 = vld [vmem:[%s0 + $0x228] sm:$0xff]
  %v85 = vld [vmem:[%s0 + $0x230] sm:$0xff]
  %v86 = vld [vmem:[%s0 + $0x238] sm:$0xff]
  %v87 = vld [vmem:[%s0 + $0x240] sm:$0xff]
  %v88 = vld [vmem:[%s0 + $0x248] sm:$0xff]
  %v89 = vld [vmem:[%s0 + $0x250] sm:$0xff]
  %v90 = vld [vmem:[%s0 + $0x258] sm:$0xff]
  %v91 = vld [vmem:[%s0 + $0x260] sm:$0xff]
  %v92 = vld [vmem:[%s0 + $0x268] sm:$0xff]
  %v93 = vld [vmem:[%s0 + $0x270] sm:$0xff]
  %v94 = vld [vmem:[%s0 + $0x278] sm:$0xff]
  %v95 = vpack.c.bf16 %v20, %v15
  %v96 = vpack.c.bf16 %v21, %v16
  %v97 = vpack.c.bf16 %v22, %v17
  %v98 = vpack.c.bf16 %v23, %v18
  %v99 = vpack.c.bf16 %v24, %v19
  %v100 = vpack.c.bf16 %v30, %v25
  %v101 = vpack.c.bf16 %v31, %v26
  %v102 = vpack.c.bf16 %v32, %v27
  %v103 = vpack.c.bf16 %v33, %v28
  %v104 = vpack.c.bf16 %v34, %v29
  %v105 = vpack.c.bf16 %v40, %v35
  %v106 = vpack.c.bf16 %v41, %v36
  %v107 = vpack.c.bf16 %v42, %v37
  %v108 = vpack.c.bf16 %v43, %v38
  %v109 = vpack.c.bf16 %v44, %v39
  %v110 = vpack.c.bf16 %v50, %v45
  %v111 = vpack.c.bf16 %v51, %v46
  %v112 = vpack.c.bf16 %v52, %v47
  %v113 = vpack.c.bf16 %v53, %v48
  %v114 = vpack.c.bf16 %v54, %v49
  %v115 = vpack.c.bf16 %v60, %v55
  %v116 = vpack.c.bf16 %v61, %v56
  %v117 = vpack.c.bf16 %v62, %v57
  %v118 = vpack.c.bf16 %v63, %v58
  %v119 = vpack.c.bf16 %v64, %v59
  %v120 = vpack.c.bf16 %v70, %v65
  %v121 = vpack.c.bf16 %v71, %v66
  %v122 = vpack.c.bf16 %v72, %v67
  %v123 = vpack.c.bf16 %v73, %v68
  %v124 = vpack.c.bf16 %v74, %v69
  %v125 = vpack.c.bf16 %v80, %v75
  %v126 = vpack.c.bf16 %v81, %v76
  %v127 = vpack.c.bf16 %v82, %v77
  %v128 = vpack.c.bf16 %v83, %v78
  %v129 = vpack.c.bf16 %v84, %v79
  %v130 = vpack.c.bf16 %v90, %v85
  %v131 = vpack.c.bf16 %v91, %v86
  %v132 = vpack.c.bf16 %v92, %v87
  %v133 = vpack.c.bf16 %v93, %v88
  %v134 = vpack.c.bf16 %v94, %v89
  %v135 = vld [vmem:[%s1] sm:$0xf]
  %v136 = vld [vmem:[%s1 + $0x4] sm:$0xf]
  %v137 = vld [vmem:[%s1 + $0x8] sm:$0xf]
  %v138 = vld [vmem:[%s1 + $0xc] sm:$0xf]
  %v139 = vld [vmem:[%s1 + $0x10] sm:$0xf]
  %v140 = vld [vmem:[%s1 + $0x14] sm:$0xf]
  %v141 = vld [vmem:[%s1 + $0x18] sm:$0xf]
  %v142 = vld [vmem:[%s1 + $0x1c] sm:$0xf]
  %v143 = vld [vmem:[%s1 + $0x20] sm:$0xf]
  %v144 = vld [vmem:[%s1 + $0x24] sm:$0xf]
  %v145 = vld [vmem:[%s1 + $0x28] sm:$0xf]
  %v146 = vld [vmem:[%s1 + $0x2c] sm:$0xf]
  %v147 = vld [vmem:[%s1 + $0x30] sm:$0xf]
  %v148 = vld [vmem:[%s1 + $0x34] sm:$0xf]
  %v149 = vld [vmem:[%s1 + $0x38] sm:$0xf]
  %v150 = vld [vmem:[%s1 + $0x3c] sm:$0xf]
  %v151 = vld [vmem:[%s1 + $0x40] sm:$0xf]
  %v152 = vld [vmem:[%s1 + $0x44] sm:$0xf]
  %v153 = vld [vmem:[%s1 + $0x48] sm:$0xf]
  %v154 = vld [vmem:[%s1 + $0x4c] sm:$0xf]
  %v155 = vld [vmem:[%s1 + $0x50] sm:$0xf]
  %v156 = vld [vmem:[%s1 + $0x54] sm:$0xf]
  %v157 = vld [vmem:[%s1 + $0x58] sm:$0xf]
  %v158 = vld [vmem:[%s1 + $0x5c] sm:$0xf]
  %v159 = vld [vmem:[%s1 + $0x60] sm:$0xf]
  %v160 = vld [vmem:[%s1 + $0x64] sm:$0xf]
  %v161 = vld [vmem:[%s1 + $0x68] sm:$0xf]
  %v162 = vld [vmem:[%s1 + $0x6c] sm:$0xf]
  %v163 = vld [vmem:[%s1 + $0x70] sm:$0xf]
  %v164 = vld [vmem:[%s1 + $0x74] sm:$0xf]
  %v165 = vld [vmem:[%s1 + $0x78] sm:$0xf]
  %v166 = vld [vmem:[%s1 + $0x7c] sm:$0xf]
  %v167 = vld [vmem:[%s1 + $0x80] sm:$0xf]
  %v168 = vld [vmem:[%s1 + $0x84] sm:$0xf]
  %v169 = vld [vmem:[%s1 + $0x88] sm:$0xf]
  %v170 = vld [vmem:[%s1 + $0x8c] sm:$0xf]
  %v171 = vld [vmem:[%s1 + $0x90] sm:$0xf]
  %v172 = vld [vmem:[%s1 + $0x94] sm:$0xf]
  %v173 = vld [vmem:[%s1 + $0x98] sm:$0xf]
  %v174 = vld [vmem:[%s1 + $0x9c] sm:$0xf]
  %v175 = vld [vmem:[%s1 + $0xa0] sm:$0xf]
  %v176 = vld [vmem:[%s1 + $0xa4] sm:$0xf]
  %v177 = vld [vmem:[%s1 + $0xa8] sm:$0xf]
  %v178 = vld [vmem:[%s1 + $0xac] sm:$0xf]
  %v179 = vld [vmem:[%s1 + $0xb0] sm:$0xf]
  %v180 = vld [vmem:[%s1 + $0xb4] sm:$0xf]
  %v181 = vld [vmem:[%s1 + $0xb8] sm:$0xf]
  %v182 = vld [vmem:[%s1 + $0xbc] sm:$0xf]
  %v183 = vld [vmem:[%s1 + $0xc0] sm:$0xf]
  %v184 = vld [vmem:[%s1 + $0xc4] sm:$0xf]
  %v185 = vld [vmem:[%s1 + $0xc8] sm:$0xf]
  %v186 = vld [vmem:[%s1 + $0xcc] sm:$0xf]
  %v187 = vld [vmem:[%s1 + $0xd0] sm:$0xf]
  %v188 = vld [vmem:[%s1 + $0xd4] sm:$0xf]
  %v189 = vld [vmem:[%s1 + $0xd8] sm:$0xf]
  %v190 = vld [vmem:[%s1 + $0xdc] sm:$0xf]
  %v191 = vld [vmem:[%s1 + $0xe0] sm:$0xf]
  %v192 = vld [vmem:[%s1 + $0xe4] sm:$0xf]
  %v193 = vld [vmem:[%s1 + $0xe8] sm:$0xf]
  %v194 = vld [vmem:[%s1 + $0xec] sm:$0xf]
  %v195 = vld [vmem:[%s1 + $0xf0] sm:$0xf]
  %v196 = vld [vmem:[%s1 + $0xf4] sm:$0xf]
  %v197 = vld [vmem:[%s1 + $0xf8] sm:$0xf]
  %v198 = vld [vmem:[%s1 + $0xfc] sm:$0xf]
  %v199 = vld [vmem:[%s1 + $0x100] sm:$0xf]
  %v200 = vld [vmem:[%s1 + $0x104] sm:$0xf]
  %v201 = vld [vmem:[%s1 + $0x108] sm:$0xf]
  %v202 = vld [vmem:[%s1 + $0x10c] sm:$0xf]
  %v203 = vld [vmem:[%s1 + $0x110] sm:$0xf]
  %v204 = vld [vmem:[%s1 + $0x114] sm:$0xf]
  %v205 = vld [vmem:[%s1 + $0x118] sm:$0xf]
  %v206 = vld [vmem:[%s1 + $0x11c] sm:$0xf]
  %v207 = vld [vmem:[%s2] sm:$0x1]
  %v209 = vlaneseq
  %v210 = vshrl.u32 %v209, 7
  %v211 = vsub.s32 0, %v210
  %v212 = vrot.slane %v207, %v211
  %v286 = vunpack.c.l.b16 %v135
  %v287 = vunpack.c.l.b16 %v136
  %v288 = vunpack.c.l.b16 %v137
  %v289 = vunpack.c.l.b16 %v138
  %v290 = vunpack.c.l.b16 %v139
  %v291 = vunpack.c.l.b16 %v140
  %v292 = vunpack.c.l.b16 %v141
  %v293 = vunpack.c.l.b16 %v142
  %v294 = vunpack.c.l.b16 %v143
  %v295 = vunpack.c.l.b16 %v144
  %v296 = vunpack.c.l.b16 %v145
  %v297 = vunpack.c.l.b16 %v146
  %v298 = vunpack.c.l.b16 %v147
  %v299 = vunpack.c.l.b16 %v148
  %v300 = vunpack.c.l.b16 %v149
  %v301 = vunpack.c.l.b16 %v150
  %v302 = vunpack.c.l.b16 %v151
  %v303 = vunpack.c.l.b16 %v152
  %v304 = vunpack.c.l.b16 %v153
  %v305 = vunpack.c.l.b16 %v154
  %v306 = vunpack.c.l.b16 %v155
  %v307 = vunpack.c.l.b16 %v156
  %v308 = vunpack.c.l.b16 %v157
  %v309 = vunpack.c.l.b16 %v158
  %v310 = vunpack.c.l.b16 %v159
  %v311 = vunpack.c.l.b16 %v160
  %v312 = vunpack.c.l.b16 %v161
  %v313 = vunpack.c.l.b16 %v162
  %v314 = vunpack.c.l.b16 %v163
  %v315 = vunpack.c.l.b16 %v164
  %v316 = vunpack.c.l.b16 %v165
  %v317 = vunpack.c.l.b16 %v166
  %v318 = vunpack.c.l.b16 %v167
  %v319 = vunpack.c.l.b16 %v168
  %v320 = vunpack.c.l.b16 %v169
  %v321 = vunpack.c.l.b16 %v170
  %v322 = vunpack.c.l.b16 %v171
  %v323 = vunpack.c.l.b16 %v172
  %v324 = vunpack.c.l.b16 %v173
  %v325 = vunpack.c.l.b16 %v174
  %v326 = vunpack.c.l.b16 %v175
  %v327 = vunpack.c.l.b16 %v176
  %v328 = vunpack.c.l.b16 %v177
  %v329 = vunpack.c.l.b16 %v178
  %v330 = vunpack.c.l.b16 %v179
  %v331 = vunpack.c.l.b16 %v180
  %v332 = vunpack.c.l.b16 %v181
  %v333 = vunpack.c.l.b16 %v182
  %v334 = vunpack.c.l.b16 %v183
  %v335 = vunpack.c.l.b16 %v184
  %v336 = vunpack.c.l.b16 %v185
  %v337 = vunpack.c.l.b16 %v186
  %v338 = vunpack.c.l.b16 %v187
  %v339 = vunpack.c.l.b16 %v188
  %v340 = vunpack.c.l.b16 %v189
  %v341 = vunpack.c.l.b16 %v190
  %v342 = vunpack.c.l.b16 %v191
  %v343 = vunpack.c.l.b16 %v192
  %v344 = vunpack.c.l.b16 %v193
  %v345 = vunpack.c.l.b16 %v194
  %v346 = vunpack.c.l.b16 %v195
  %v347 = vunpack.c.l.b16 %v196
  %v348 = vunpack.c.l.b16 %v197
  %v349 = vunpack.c.l.b16 %v198
  %v350 = vunpack.c.l.b16 %v199
  %v351 = vunpack.c.l.b16 %v200
  %v352 = vunpack.c.l.b16 %v201
  %v353 = vunpack.c.l.b16 %v202
  %v354 = vunpack.c.l.b16 %v203
  %v355 = vunpack.c.l.b16 %v204
  %v356 = vunpack.c.l.b16 %v205
  %v357 = vunpack.c.l.b16 %v206
  %v358 = vpack.c.b16 %v287, %v286
  %v359 = vpack.c.b16 %v289, %v288
  %v360 = vpack.c.b16 %v291, %v290
  %v361 = vpack.c.b16 %v293, %v292
  %v362 = vpack.c.b16 %v295, %v294
  %v363 = vpack.c.b16 %v297, %v296
  %v364 = vpack.c.b16 %v299, %v298
  %v365 = vpack.c.b16 %v301, %v300
  %v366 = vpack.c.b16 %v303, %v302
  %v367 = vpack.c.b16 %v305, %v304
  %v368 = vpack.c.b16 %v307, %v306
  %v369 = vpack.c.b16 %v309, %v308
  %v370 = vpack.c.b16 %v311, %v310
  %v371 = vpack.c.b16 %v313, %v312
  %v372 = vpack.c.b16 %v315, %v314
  %v373 = vpack.c.b16 %v317, %v316
  %v374 = vpack.c.b16 %v319, %v318
  %v375 = vpack.c.b16 %v321, %v320
  %v376 = vpack.c.b16 %v323, %v322
  %v377 = vpack.c.b16 %v325, %v324
  %v378 = vpack.c.b16 %v327, %v326
  %v379 = vpack.c.b16 %v329, %v328
  %v380 = vpack.c.b16 %v331, %v330
  %v381 = vpack.c.b16 %v333, %v332
  %v382 = vpack.c.b16 %v335, %v334
  %v383 = vpack.c.b16 %v337, %v336
  %v384 = vpack.c.b16 %v339, %v338
  %v385 = vpack.c.b16 %v341, %v340
  %v386 = vpack.c.b16 %v343, %v342
  %v387 = vpack.c.b16 %v345, %v344
  %v388 = vpack.c.b16 %v347, %v346
  %v389 = vpack.c.b16 %v349, %v348
  %v390 = vpack.c.b16 %v351, %v350
  %v391 = vpack.c.b16 %v353, %v352
  %v392 = vpack.c.b16 %v355, %v354
  %v393 = vpack.c.b16 %v357, %v356
  %vm430 = vcmask 523264
  %v432 = vsel %vm430, %v99, 0
  %v435 = vsel %vm430, %v104, 0
  %v438 = vsel %vm430, %v109, 0
  %v441 = vsel %vm430, %v114, 0
  %v444 = vsel %vm430, %v119, 0
  %v447 = vsel %vm430, %v124, 0
  %v450 = vsel %vm430, %v129, 0
  %v453 = vsel %vm430, %v134, 0
  %455 = vmatprep.subr.bf16.mxu0 0
  %456 = vmatpush1.bf16.msra.mxu0 %v358
  %457 = vmatprep.subr.bf16.mxu0 0
  %458 = vmatpush1.bf16.msra.mxu0 %v359
  %459 = vmatprep.subr.bf16.mxu0 0
  %460 = vmatpush1.bf16.msra.mxu0 %v360
  %461 = vmatprep.subr.bf16.mxu0 0
  %462 = vmatpush1.bf16.msra.mxu0 %v361
  %463 = vmatprep.subr.bf16.mxu0 0
  %464 = vmatpush1.bf16.msra.mxu0 %v362
  %465 = vmatprep.subr.bf16.mxu0 0
  %466 = vmatpush1.bf16.msra.mxu0 %v363
  %467 = vmatprep.subr.bf16.mxu0 0
  %468 = vmatpush1.bf16.msra.mxu0 %v364
  %469 = vmatprep.subr.bf16.mxu0 0
  %470 = vmatpush1.bf16.msra.mxu0 %v365
  %471 = vmatprep.subr.bf16.mxu0 0
  %472 = vmatpush1.bf16.msra.mxu0 %v366
  %473 = vmatprep.subr.bf16.mxu0 0
  %474 = vmatpush1.bf16.msra.mxu0 %v367
  %475 = vmatprep.subr.bf16.mxu0 0
  %476 = vmatpush1.bf16.msra.mxu0 %v368
  %477 = vmatprep.subr.bf16.mxu0 0
  %478 = vmatpush1.bf16.msra.mxu0 %v369
  %479 = vmatprep.subr.bf16.mxu0 0
  %480 = vmatpush1.bf16.msra.mxu0 %v370
  %481 = vmatprep.subr.bf16.mxu0 0
  %482 = vmatpush1.bf16.msra.mxu0 %v371
  %483 = vmatprep.subr.bf16.mxu0 0
  %484 = vmatpush1.bf16.msra.mxu0 %v372
  %485 = vmatprep.subr.bf16.mxu0 0
  %486 = vmatpush1.bf16.msra.mxu0 %v373
  %487 = vmatprep.mubr.bf16.mxu0 %v96
  %488 = vmatmul.mubr.bf16.gmra.mrb[0].mxu0 %v95
  %v489 = vpop.f32.mrb[0].mxu0
  %v490 = vadd.f32 %v212, %v489
  %v491 = vpop.f32.mrb[0].mxu0
  %v492 = vpop.f32.mrb[0].mxu0
  %v493 = vadd.f32 %v212, %v492
  %v494 = vpop.f32.mrb[0].mxu0
  %495 = vmatprep.mubr.bf16.mxu0 %v101
  %496 = vmatmul.mubr.bf16.gmra.mrb[0].mxu0 %v100
  %v497 = vpop.f32.mrb[0].mxu0
  %v498 = vadd.f32 %v212, %v497
  %v499 = vpop.f32.mrb[0].mxu0
  %v500 = vpop.f32.mrb[0].mxu0
  %v501 = vadd.f32 %v212, %v500
  %v502 = vpop.f32.mrb[0].mxu0
  %503 = vmatprep.mubr.bf16.mxu0 %v106
  %504 = vmatmul.mubr.bf16.gmra.mrb[0].mxu0 %v105
  %v505 = vpop.f32.mrb[0].mxu0
  %v506 = vadd.f32 %v212, %v505
  %v507 = vpop.f32.mrb[0].mxu0
  %v508 = vpop.f32.mrb[0].mxu0
  %v509 = vadd.f32 %v212, %v508
  %v510 = vpop.f32.mrb[0].mxu0
  %511 = vmatprep.mubr.bf16.mxu0 %v111
  %512 = vmatmul.mubr.bf16.gmra.mrb[0].mxu0 %v110
  %v513 = vpop.f32.mrb[0].mxu0
  %v514 = vadd.f32 %v212, %v513
  %v515 = vpop.f32.mrb[0].mxu0
  %v516 = vpop.f32.mrb[0].mxu0
  %v517 = vadd.f32 %v212, %v516
  %v518 = vpop.f32.mrb[0].mxu0
  %519 = vmatprep.mubr.bf16.mxu0 %v116
  %520 = vmatmul.mubr.bf16.gmra.mrb[0].mxu0 %v115
  %v521 = vpop.f32.mrb[0].mxu0
  %v522 = vadd.f32 %v212, %v521
  %v523 = vpop.f32.mrb[0].mxu0
  %v524 = vpop.f32.mrb[0].mxu0
  %v525 = vadd.f32 %v212, %v524
  %v526 = vpop.f32.mrb[0].mxu0
  %527 = vmatprep.mubr.bf16.mxu0 %v121
  %528 = vmatmul.mubr.bf16.gmra.mrb[0].mxu0 %v120
  %v529 = vpop.f32.mrb[0].mxu0
  %v530 = vadd.f32 %v212, %v529
  %v531 = vpop.f32.mrb[0].mxu0
  %v532 = vpop.f32.mrb[0].mxu0
  %v533 = vadd.f32 %v212, %v532
  %v534 = vpop.f32.mrb[0].mxu0
  %535 = vmatprep.mubr.bf16.mxu0 %v126
  %536 = vmatmul.mubr.bf16.gmra.mrb[0].mxu0 %v125
  %v537 = vpop.f32.mrb[0].mxu0
  %v538 = vadd.f32 %v212, %v537
  %v539 = vpop.f32.mrb[0].mxu0
  %v540 = vpop.f32.mrb[0].mxu0
  %v541 = vadd.f32 %v212, %v540
  %v542 = vpop.f32.mrb[0].mxu0
  %543 = vmatprep.mubr.bf16.mxu0 %v131
  %544 = vmatmul.mubr.bf16.gmra.mrb[0].mxu0 %v130
  %v545 = vpop.f32.mrb[0].mxu0
  %v546 = vadd.f32 %v212, %v545
  %v547 = vpop.f32.mrb[0].mxu0
  %v548 = vpop.f32.mrb[0].mxu0
  %v549 = vadd.f32 %v212, %v548
  %v550 = vpop.f32.mrb[0].mxu0
  %551 = vdwg.mxu0
  %552 = vmatprep.subr.bf16.mxu0 0
  %553 = vmatpush1.bf16.msra.mxu0 %v374
  %554 = vmatprep.subr.bf16.mxu0 0
  %555 = vmatpush1.bf16.msra.mxu0 %v375
  %556 = vmatprep.subr.bf16.mxu0 0
  %557 = vmatpush1.bf16.msra.mxu0 %v376
  %558 = vmatprep.subr.bf16.mxu0 0
  %559 = vmatpush1.bf16.msra.mxu0 %v377
  %560 = vmatprep.subr.bf16.mxu0 0
  %561 = vmatpush1.bf16.msra.mxu0 %v378
  %562 = vmatprep.subr.bf16.mxu0 0
  %563 = vmatpush1.bf16.msra.mxu0 %v379
  %564 = vmatprep.subr.bf16.mxu0 0
  %565 = vmatpush1.bf16.msra.mxu0 %v380
  %566 = vmatprep.subr.bf16.mxu0 0
  %567 = vmatpush1.bf16.msra.mxu0 %v381
  %568 = vmatprep.subr.bf16.mxu0 0
  %569 = vmatpush1.bf16.msra.mxu0 %v382
  %570 = vmatprep.subr.bf16.mxu0 0
  %571 = vmatpush1.bf16.msra.mxu0 %v383
  %572 = vmatprep.subr.bf16.mxu0 0
  %573 = vmatpush1.bf16.msra.mxu0 %v384
  %574 = vmatprep.subr.bf16.mxu0 0
  %575 = vmatpush1.bf16.msra.mxu0 %v385
  %576 = vmatprep.subr.bf16.mxu0 0
  %577 = vmatpush1.bf16.msra.mxu0 %v386
  %578 = vmatprep.subr.bf16.mxu0 0
  %579 = vmatpush1.bf16.msra.mxu0 %v387
  %580 = vmatprep.subr.bf16.mxu0 0
  %581 = vmatpush1.bf16.msra.mxu0 %v388
  %582 = vmatprep.subr.bf16.mxu0 0
  %583 = vmatpush1.bf16.msra.mxu0 %v389
  %584 = vmatprep.mubr.bf16.mxu0 %v98
  %585 = vmatmul.mubr.bf16.gmra.mrb[0].mxu0 %v97
  %v586 = vpop.f32.mrb[0].mxu0
  %v587 = vadd.f32 %v490, %v586
  %v588 = vpop.f32.mrb[0].mxu0
  %v589 = vpop.f32.mrb[0].mxu0
  %v590 = vadd.f32 %v493, %v589
  %v591 = vpop.f32.mrb[0].mxu0
  %592 = vmatprep.mubr.bf16.mxu0 %v103
  %593 = vmatmul.mubr.bf16.gmra.mrb[0].mxu0 %v102
  %v594 = vpop.f32.mrb[0].mxu0
  %v595 = vadd.f32 %v498, %v594
  %v596 = vpop.f32.mrb[0].mxu0
  %v597 = vpop.f32.mrb[0].mxu0
  %v598 = vadd.f32 %v501, %v597
  %v599 = vpop.f32.mrb[0].mxu0
  %600 = vmatprep.mubr.bf16.mxu0 %v108
  %601 = vmatmul.mubr.bf16.gmra.mrb[0].mxu0 %v107
  %v602 = vpop.f32.mrb[0].mxu0
  %v603 = vadd.f32 %v506, %v602
  %v604 = vpop.f32.mrb[0].mxu0
  %v605 = vpop.f32.mrb[0].mxu0
  %v606 = vadd.f32 %v509, %v605
  %v607 = vpop.f32.mrb[0].mxu0
  %608 = vmatprep.mubr.bf16.mxu0 %v113
  %609 = vmatmul.mubr.bf16.gmra.mrb[0].mxu0 %v112
  %v610 = vpop.f32.mrb[0].mxu0
  %v611 = vadd.f32 %v514, %v610
  %v612 = vpop.f32.mrb[0].mxu0
  %v613 = vpop.f32.mrb[0].mxu0
  %v614 = vadd.f32 %v517, %v613
  %v615 = vpop.f32.mrb[0].mxu0
  %616 = vmatprep.mubr.bf16.mxu0 %v118
  %617 = vmatmul.mubr.bf16.gmra.mrb[0].mxu0 %v117
  %v618 = vpop.f32.mrb[0].mxu0
  %v619 = vadd.f32 %v522, %v618
  %v620 = vpop.f32.mrb[0].mxu0
  %v621 = vpop.f32.mrb[0].mxu0
  %v622 = vadd.f32 %v525, %v621
  %v623 = vpop.f32.mrb[0].mxu0
  %624 = vmatprep.mubr.bf16.mxu0 %v123
  %625 = vmatmul.mubr.bf16.gmra.mrb[0].mxu0 %v122
  %v626 = vpop.f32.mrb[0].mxu0
  %v627 = vadd.f32 %v530, %v626
  %v628 = vpop.f32.mrb[0].mxu0
  %v629 = vpop.f32.mrb[0].mxu0
  %v630 = vadd.f32 %v533, %v629
  %v631 = vpop.f32.mrb[0].mxu0
  %632 = vmatprep.mubr.bf16.mxu0 %v128
  %633 = vmatmul.mubr.bf16.gmra.mrb[0].mxu0 %v127
  %v634 = vpop.f32.mrb[0].mxu0
  %v635 = vadd.f32 %v538, %v634
  %v636 = vpop.f32.mrb[0].mxu0
  %v637 = vpop.f32.mrb[0].mxu0
  %v638 = vadd.f32 %v541, %v637
  %v639 = vpop.f32.mrb[0].mxu0
  %640 = vmatprep.mubr.bf16.mxu0 %v133
  %641 = vmatmul.mubr.bf16.gmra.mrb[0].mxu0 %v132
  %v642 = vpop.f32.mrb[0].mxu0
  %v643 = vadd.f32 %v546, %v642
  %v644 = vpop.f32.mrb[0].mxu0
  %v645 = vpop.f32.mrb[0].mxu0
  %v646 = vadd.f32 %v549, %v645
  %v647 = vpop.f32.mrb[0].mxu0
  %648 = vdwg.mxu0
  %649 = vmatprep.subr.bf16.mxu0 0
  %650 = vmatpush1.bf16.msra.mxu0 %v390
  %651 = vmatprep.subr.bf16.mxu0 0
  %652 = vmatpush1.bf16.msra.mxu0 %v391
  %653 = vmatprep.subr.bf16.mxu0 0
  %654 = vmatpush1.bf16.msra.mxu0 %v392
  %655 = vmatprep.subr.bf16.mxu0 0
  %656 = vmatpush1.bf16.msra.mxu0 %v393
  %657 = vmatprep.subr.bf16.mxu0 0
  %658 = vmatpush1.bf16.msra.mxu0 0
  %659 = vmatprep.subr.bf16.mxu0 0
  %660 = vmatpush1.bf16.msra.mxu0 0
  %661 = vmatprep.subr.bf16.mxu0 0
  %662 = vmatpush1.bf16.msra.mxu0 0
  %663 = vmatprep.subr.bf16.mxu0 0
  %664 = vmatpush1.bf16.msra.mxu0 0
  %665 = vmatprep.subr.bf16.mxu0 0
  %666 = vmatpush1.bf16.msra.mxu0 0
  %667 = vmatprep.subr.bf16.mxu0 0
  %668 = vmatpush1.bf16.msra.mxu0 0
  %669 = vmatprep.subr.bf16.mxu0 0
  %670 = vmatpush1.bf16.msra.mxu0 0
  %671 = vmatprep.subr.bf16.mxu0 0
  %672 = vmatpush1.bf16.msra.mxu0 0
  %673 = vmatprep.subr.bf16.mxu0 0
  %674 = vmatpush1.bf16.msra.mxu0 0
  %675 = vmatprep.subr.bf16.mxu0 0
  %676 = vmatpush1.bf16.msra.mxu0 0
  %677 = vmatprep.subr.bf16.mxu0 0
  %678 = vmatpush1.bf16.msra.mxu0 0
  %679 = vmatprep.subr.bf16.mxu0 0
  %680 = vmatpush1.bf16.msra.mxu0 0
  %681 = vmatprep.mubr.bf16.mxu0 0
  %682 = vmatmul.mubr.bf16.gmra.mrb[0].mxu0 %v432
  %v683 = vpop.f32.mrb[0].mxu0
  %v684 = vadd.f32 %v587, %v683
  %v685 = vpop.f32.mrb[0].mxu0
  %v686 = vpop.f32.mrb[0].mxu0
  %v687 = vadd.f32 %v590, %v686
  %v688 = vpop.f32.mrb[0].mxu0
  %689 = vmatprep.mubr.bf16.mxu0 0
  %690 = vmatmul.mubr.bf16.gmra.mrb[0].mxu0 %v435
  %v691 = vpop.f32.mrb[0].mxu0
  %v692 = vadd.f32 %v595, %v691
  %v693 = vpop.f32.mrb[0].mxu0
  %v694 = vpop.f32.mrb[0].mxu0
  %v695 = vadd.f32 %v598, %v694
  %v696 = vpop.f32.mrb[0].mxu0
  %697 = vmatprep.mubr.bf16.mxu0 0
  %698 = vmatmul.mubr.bf16.gmra.mrb[0].mxu0 %v438
  %v699 = vpop.f32.mrb[0].mxu0
  %v700 = vadd.f32 %v603, %v699
  %v701 = vpop.f32.mrb[0].mxu0
  %v702 = vpop.f32.mrb[0].mxu0
  %v703 = vadd.f32 %v606, %v702
  %v704 = vpop.f32.mrb[0].mxu0
  %705 = vmatprep.mubr.bf16.mxu0 0
  %706 = vmatmul.mubr.bf16.gmra.mrb[0].mxu0 %v441
  %v707 = vpop.f32.mrb[0].mxu0
  %v708 = vadd.f32 %v611, %v707
  %v709 = vpop.f32.mrb[0].mxu0
  %v710 = vpop.f32.mrb[0].mxu0
  %v711 = vadd.f32 %v614, %v710
  %v712 = vpop.f32.mrb[0].mxu0
  %713 = vmatprep.mubr.bf16.mxu0 0
  %714 = vmatmul.mubr.bf16.gmra.mrb[0].mxu0 %v444
  %v715 = vpop.f32.mrb[0].mxu0
  %v716 = vadd.f32 %v619, %v715
  %v717 = vpop.f32.mrb[0].mxu0
  %v718 = vpop.f32.mrb[0].mxu0
  %v719 = vadd.f32 %v622, %v718
  %v720 = vpop.f32.mrb[0].mxu0
  %721 = vmatprep.mubr.bf16.mxu0 0
  %722 = vmatmul.mubr.bf16.gmra.mrb[0].mxu0 %v447
  %v723 = vpop.f32.mrb[0].mxu0
  %v724 = vadd.f32 %v627, %v723
  %v725 = vpop.f32.mrb[0].mxu0
  %v726 = vpop.f32.mrb[0].mxu0
  %v727 = vadd.f32 %v630, %v726
  %v728 = vpop.f32.mrb[0].mxu0
  %729 = vmatprep.mubr.bf16.mxu0 0
  %730 = vmatmul.mubr.bf16.gmra.mrb[0].mxu0 %v450
  %v731 = vpop.f32.mrb[0].mxu0
  %v732 = vadd.f32 %v635, %v731
  %v733 = vpop.f32.mrb[0].mxu0
  %v734 = vpop.f32.mrb[0].mxu0
  %v735 = vadd.f32 %v638, %v734
  %v736 = vpop.f32.mrb[0].mxu0
  %737 = vmatprep.mubr.bf16.mxu0 0
  %738 = vmatmul.mubr.bf16.gmra.mrb[0].mxu0 %v453
  %v739 = vpop.f32.mrb[0].mxu0
  %v740 = vadd.f32 %v643, %v739
  %v741 = vpop.f32.mrb[0].mxu0
  %v742 = vpop.f32.mrb[0].mxu0
  %v743 = vadd.f32 %v646, %v742
  %v744 = vpop.f32.mrb[0].mxu0
  %745 = vdwg.mxu0
  %746 = vst.msk [vmem:[%s3] sm:$0xff] %vm430, %v684
  %747 = vst.msk [vmem:[%s3 + $0x8] sm:$0xff] %vm430, %v687
  %748 = vst.msk [vmem:[%s3 + $0x10] sm:$0xff] %vm430, %v692
  %749 = vst.msk [vmem:[%s3 + $0x18] sm:$0xff] %vm430, %v695
  %750 = vst.msk [vmem:[%s3 + $0x20] sm:$0xff] %vm430, %v700
  %751 = vst.msk [vmem:[%s3 + $0x28] sm:$0xff] %vm430, %v703
  %752 = vst.msk [vmem:[%s3 + $0x30] sm:$0xff] %vm430, %v708
  %753 = vst.msk [vmem:[%s3 + $0x38] sm:$0xff] %vm430, %v711
  %754 = vst.msk [vmem:[%s3 + $0x40] sm:$0xff] %vm430, %v716
  %755 = vst.msk [vmem:[%s3 + $0x48] sm:$0xff] %vm430, %v719
  %756 = vst.msk [vmem:[%s3 + $0x50] sm:$0xff] %vm430, %v724
  %757 = vst.msk [vmem:[%s3 + $0x58] sm:$0xff] %vm430, %v727
  %758 = vst.msk [vmem:[%s3 + $0x60] sm:$0xff] %vm430, %v732
  %759 = vst.msk [vmem:[%s3 + $0x68] sm:$0xff] %vm430, %v735
  %760 = vst.msk [vmem:[%s3 + $0x70] sm:$0xff] %vm430, %v740
  %761 = vst.msk [vmem:[%s3 + $0x78] sm:$0xff] %vm430, %v743
  // Predicated region
  $region14: #{fluentnet_forward.126} parent=0 // pred_check
    _
  $region15: #{fluentnet_forward.126} parent=0 // pred_check_branch
    %763 = sbr.rel (0) target = $region17
  $region16: #{fluentnet_forward.126} parent=0 // pred_region
    _
  $region17: #{fluentnet_forward.126} parent=0 // pred_fallthru
    _
  // Predicated region
  $region18: #{fluentnet_forward.126} parent=0 // pred_check
    _
  $region19: #{fluentnet_forward.126} parent=0 // pred_check_branch
    %765 = sbr.rel (0) target = $region21
  $region20: #{fluentnet_forward.126} parent=0 // pred_region
    _
  $region21: #{fluentnet_forward.126} parent=0 // pred_fallthru
    _

// kernel: fluentnet_forward.128
$region0: #{fluentnet_forward.128}
  #allocation0 [shape = 'u32[]', space=smem, size = 0x4, offset = 0x4, fixed_abs, tag = 'smem constant byte address 0x4 - core index']
  #allocation1 [shape = 'u32[144,128]{1,0:T(1,128)}', space=vmem, size = 0x12000, scoped, tag = 'internal scratch']
  %s0 = inlined_call_operand.vmem [shape: f32[2,64,64], index: 0, kind: input, shape index: {}]
  %s1 = inlined_call_operand.vmem [shape: f32[64,16], index: 1, kind: input, shape index: {}]
  %s2 = inlined_call_operand.vmem [shape: f32[16,64], index: 2, kind: input, shape index: {}]
  %s3 = inlined_call_operand.vmem [shape: f32[2,64], index: 3, kind: output, shape index: {}]
  %s4 = sld [smem:[#allocation0]]
  $region22: #{fluentnet_forward.128} parent=0
    _
  %s6 = ssub.s32 1, %s4
  %s7 = scalar_select 0, %s6, %s4
  // Predicated region
  $region2: #{fluentnet_forward.128} parent=0 // pred_check
    _
  $region3: #{fluentnet_forward.128} parent=0 // pred_check_branch
    %9 = sbr.rel (0) target = $region5
  $region4: #{fluentnet_forward.128} parent=0 // pred_region
    _
  $region5: #{fluentnet_forward.128} parent=0 // pred_fallthru
    _
  // Predicated region
  $region6: #{fluentnet_forward.128} parent=0 // pred_check
    _
  $region7: #{fluentnet_forward.128} parent=0 // pred_check_branch
    %11 = sbr.rel (0) target = $region9
  $region8: #{fluentnet_forward.128} parent=0 // pred_region
    _
  $region9: #{fluentnet_forward.128} parent=0 // pred_fallthru
    _
  // Predicated region
  $region10: #{fluentnet_forward.128} parent=0 // pred_check
    _
  $region11: #{fluentnet_forward.128} parent=0 // pred_check_branch
    %13 = sbr.rel (0) target = $region13
  $region12: #{fluentnet_forward.128} parent=0 // pred_region
    _
  $region13: #{fluentnet_forward.128} parent=0 // pred_fallthru
    _
  %v14 = vld [vmem:[%s0] sm:$0xff]
  %v15 = vld [vmem:[%s0 + $0x8] sm:$0xff]
  %v16 = vld [vmem:[%s0 + $0x10] sm:$0xff]
  %v17 = vld [vmem:[%s0 + $0x18] sm:$0xff]
  %v18 = vld [vmem:[%s0 + $0x20] sm:$0xff]
  %v19 = vld [vmem:[%s0 + $0x28] sm:$0xff]
  %v20 = vld [vmem:[%s0 + $0x30] sm:$0xff]
  %v21 = vld [vmem:[%s0 + $0x38] sm:$0xff]
  %v22 = vld [vmem:[%s0 + $0x40] sm:$0xff]
  %v23 = vld [vmem:[%s0 + $0x48] sm:$0xff]
  %v24 = vld [vmem:[%s0 + $0x50] sm:$0xff]
  %v25 = vld [vmem:[%s0 + $0x58] sm:$0xff]
  %v26 = vld [vmem:[%s0 + $0x60] sm:$0xff]
  %v27 = vld [vmem:[%s0 + $0x68] sm:$0xff]
  %v28 = vld [vmem:[%s0 + $0x70] sm:$0xff]
  %v29 = vld [vmem:[%s0 + $0x78] sm:$0xff]
  %vm30 = vcmask 523264
  %v31 = vsel %vm30, %v14, 0.0
  %v32 = vsel %vm30, %v15, 0.0
  %v33 = vadd.f32 %v31, %v32
  %v34 = vsel %vm30, %v16, 0.0
  %v35 = vadd.f32 %v33, %v34
  %v36 = vsel %vm30, %v17, 0.0
  %v37 = vadd.f32 %v35, %v36
  %v38 = vsel %vm30, %v18, 0.0
  %v39 = vadd.f32 %v37, %v38
  %v40 = vsel %vm30, %v19, 0.0
  %v41 = vadd.f32 %v39, %v40
  %v42 = vsel %vm30, %v20, 0.0
  %v43 = vadd.f32 %v41, %v42
  %v44 = vsel %vm30, %v21, 0.0
  %v45 = vadd.f32 %v43, %v44
  %v46 = vrot.slane %v45, 4
  %v47 = vadd.f32 %v45, %v46
  %v48 = vrot.slane %v47, 2
  %v49 = vadd.f32 %v47, %v48
  %v50 = vrot.slane %v49, 1
  %v51 = vadd.f32 %v49, %v50
  %v52 = vsel %vm30, %v22, 0.0
  %v53 = vsel %vm30, %v23, 0.0
  %v54 = vadd.f32 %v52, %v53
  %v55 = vsel %vm30, %v24, 0.0
  %v56 = vadd.f32 %v54, %v55
  %v57 = vsel %vm30, %v25, 0.0
  %v58 = vadd.f32 %v56, %v57
  %v59 = vsel %vm30, %v26, 0.0
  %v60 = vadd.f32 %v58, %v59
  %v61 = vsel %vm30, %v27, 0.0
  %v62 = vadd.f32 %v60, %v61
  %v63 = vsel %vm30, %v28, 0.0
  %v64 = vadd.f32 %v62, %v63
  %v65 = vsel %vm30, %v29, 0.0
  %v66 = vadd.f32 %v64, %v65
  %v67 = vrot.slane %v66, 4
  %v68 = vadd.f32 %v66, %v67
  %v69 = vrot.slane %v68, 2
  %v70 = vadd.f32 %v68, %v69
  %v71 = vrot.slane %v70, 1
  %v72 = vadd.f32 %v70, %v71
  %v73 = vrcp.pop 64.0
  %v74 = vmul.f32 %v51, %v73
  %v75 = vmul.f32 %v72, %v73
  %v76 = vld [vmem:[%s1] sm:$0xff]
  %v77 = vld [vmem:[%s1 + $0x8] sm:$0xff]
  %v78 = vld [vmem:[%s1 + $0x10] sm:$0xff]
  %v79 = vld [vmem:[%s1 + $0x18] sm:$0xff]
  %v80 = vld [vmem:[%s1 + $0x20] sm:$0xff]
  %v81 = vld [vmem:[%s1 + $0x28] sm:$0xff]
  %v82 = vld [vmem:[%s1 + $0x30] sm:$0xff]
  %v83 = vld [vmem:[%s1 + $0x38] sm:$0xff]
  %vm86 = vcmask 1041409
  %v87 = vsel %vm86, %v75, %v74
  %v88 = vsel %vm30, %v87, 0
  %90 = vmatprep.subr.mxu0 0.0
  %91 = vmatpush1.msra.mxu0 %v76
  %92 = vmatprep.subr.mxu0 0.0
  %93 = vmatpush1.msra.mxu0 %v77
  %94 = vmatprep.subr.mxu0 0.0
  %95 = vmatpush1.msra.mxu0 %v78
  %96 = vmatprep.subr.mxu0 0.0
  %97 = vmatpush1.msra.mxu0 %v79
  %98 = vmatprep.subr.mxu0 0.0
  %99 = vmatpush1.msra.mxu0 %v80
  %100 = vmatprep.subr.mxu0 0.0
  %101 = vmatpush1.msra.mxu0 %v81
  %102 = vmatprep.subr.mxu0 0.0
  %103 = vmatpush1.msra.mxu0 %v82
  %104 = vmatprep.subr.mxu0 0.0
  %105 = vmatpush1.msra.mxu0 %v83
  %106 = vmatprep.subr.mxu0 0.0
  %107 = vmatpush1.msra.mxu0 0.0
  %108 = vmatprep.subr.mxu0 0.0
  %109 = vmatpush1.msra.mxu0 0.0
  %110 = vmatprep.subr.mxu0 0.0
  %111 = vmatpush1.msra.mxu0 0.0
  %112 = vmatprep.subr.mxu0 0.0
  %113 = vmatpush1.msra.mxu0 0.0
  %114 = vmatprep.subr.mxu0 0.0
  %115 = vmatpush1.msra.mxu0 0.0
  %116 = vmatprep.subr.mxu0 0.0
  %117 = vmatpush1.msra.mxu0 0.0
  %118 = vmatprep.subr.mxu0 0.0
  %119 = vmatpush1.msra.mxu0 0.0
  %120 = vmatprep.subr.mxu0 0.0
  %121 = vmatpush1.msra.mxu0 0.0
  %122 = vmatprep.subr.mxu0 0.0
  %123 = vmatpush1.msra.mxu0 0.0
  %124 = vmatprep.subr.mxu0 0.0
  %125 = vmatpush1.msra.mxu0 0.0
  %126 = vmatprep.subr.mxu0 0.0
  %127 = vmatpush1.msra.mxu0 0.0
  %128 = vmatprep.subr.mxu0 0.0
  %129 = vmatpush1.msra.mxu0 0.0
  %130 = vmatprep.subr.mxu0 0.0
  %131 = vmatpush1.msra.mxu0 0.0
  %132 = vmatprep.subr.mxu0 0.0
  %133 = vmatpush1.msra.mxu0 0.0
  %134 = vmatprep.subr.mxu0 0.0
  %135 = vmatpush1.msra.mxu0 0.0
  %136 = vmatprep.subr.mxu0 0.0
  %137 = vmatpush1.msra.mxu0 0.0
  %138 = vmatprep.subr.mxu0 0.0
  %139 = vmatpush1.msra.mxu0 0.0
  %140 = vmatprep.subr.mxu0 0.0
  %141 = vmatpush1.msra.mxu0 0.0
  %142 = vmatprep.subr.mxu0 0.0
  %143 = vmatpush1.msra.mxu0 0.0
  %144 = vmatprep.subr.mxu0 0.0
  %145 = vmatpush1.msra.mxu0 0.0
  %146 = vmatprep.subr.mxu0 0.0
  %147 = vmatpush1.msra.mxu0 0.0
  %148 = vmatprep.subr.mxu0 0.0
  %149 = vmatpush1.msra.mxu0 0.0
  %150 = vmatprep.subr.mxu0 0.0
  %151 = vmatpush1.msra.mxu0 0.0
  %152 = vmatprep.subr.mxu0 0.0
  %153 = vmatpush1.msra.mxu0 0.0
  %154 = vmatprep.mubr.f32.mxu0 0.0
  %155 = vmatmul.mubr.f32.gmra.mrb[0].mxu0 %v88
  %v156 = vpop.f32.mrb[0].mxu0
  %v157 = vadd.f32 0.0, %v156
  %v158 = vpop.f32.mrb[0].mxu0
  %159 = vdwg.mxu0
  %v160 = vmax.f32 %v157, 0.0
  %v161 = vld [vmem:[%s2] sm:$0xff]
  %v162 = vld [vmem:[%s2 + $0x8] sm:$0xff]
  %vm163 = vcmask 130048
  %v165 = vsel %vm163, %v160, 0
  %167 = vmatprep.subr.mxu0 0.0
  %168 = vmatpush1.msra.mxu0 %v161
  %169 = vmatprep.subr.mxu0 0.0
  %170 = vmatpush1.msra.mxu0 %v162
  %171 = vmatprep.subr.mxu0 0.0
  %172 = vmatpush1.msra.mxu0 0.0
  %173 = vmatprep.subr.mxu0 0.0
  %174 = vmatpush1.msra.mxu0 0.0
  %175 = vmatprep.subr.mxu0 0.0
  %176 = vmatpush1.msra.mxu0 0.0
  %177 = vmatprep.subr.mxu0 0.0
  %178 = vmatpush1.msra.mxu0 0.0
  %179 = vmatprep.subr.mxu0 0.0
  %180 = vmatpush1.msra.mxu0 0.0
  %181 = vmatprep.subr.mxu0 0.0
  %182 = vmatpush1.msra.mxu0 0.0
  %183 = vmatprep.subr.mxu0 0.0
  %184 = vmatpush1.msra.mxu0 0.0
  %185 = vmatprep.subr.mxu0 0.0
  %186 = vmatpush1.msra.mxu0 0.0
  %187 = vmatprep.subr.mxu0 0.0
  %188 = vmatpush1.msra.mxu0 0.0
  %189 = vmatprep.subr.mxu0 0.0
  %190 = vmatpush1.msra.mxu0 0.0
  %191 = vmatprep.subr.mxu0 0.0
  %192 = vmatpush1.msra.mxu0 0.0
  %193 = vmatprep.subr.mxu0 0.0
  %194 = vmatpush1.msra.mxu0 0.0
  %195 = vmatprep.subr.mxu0 0.0
  %196 = vmatpush1.msra.mxu0 0.0
  %197 = vmatprep.subr.mxu0 0.0
  %198 = vmatpush1.msra.mxu0 0.0
  %199 = vmatprep.subr.mxu0 0.0
  %200 = vmatpush1.msra.mxu0 0.0
  %201 = vmatprep.subr.mxu0 0.0
  %202 = vmatpush1.msra.mxu0 0.0
  %203 = vmatprep.subr.mxu0 0.0
  %204 = vmatpush1.msra.mxu0 0.0
  %205 = vmatprep.subr.mxu0 0.0
  %206 = vmatpush1.msra.mxu0 0.0
  %207 = vmatprep.subr.mxu0 0.0
  %208 = vmatpush1.msra.mxu0 0.0
  %209 = vmatprep.subr.mxu0 0.0
  %210 = vmatpush1.msra.mxu0 0.0
  %211 = vmatprep.subr.mxu0 0.0
  %212 = vmatpush1.msra.mxu0 0.0
  %213 = vmatprep.subr.mxu0 0.0
  %214 = vmatpush1.msra.mxu0 0.0
  %215 = vmatprep.subr.mxu0 0.0
  %216 = vmatpush1.msra.mxu0 0.0
  %217 = vmatprep.subr.mxu0 0.0
  %218 = vmatpush1.msra.mxu0 0.0
  %219 = vmatprep.subr.mxu0 0.0
  %220 = vmatpush1.msra.mxu0 0.0
  %221 = vmatprep.subr.mxu0 0.0
  %222 = vmatpush1.msra.mxu0 0.0
  %223 = vmatprep.subr.mxu0 0.0
  %224 = vmatpush1.msra.mxu0 0.0
  %225 = vmatprep.subr.mxu0 0.0
  %226 = vmatpush1.msra.mxu0 0.0
  %227 = vmatprep.subr.mxu0 0.0
  %228 = vmatpush1.msra.mxu0 0.0
  %229 = vmatprep.subr.mxu0 0.0
  %230 = vmatpush1.msra.mxu0 0.0
  %231 = vmatprep.mubr.f32.mxu0 0.0
  %232 = vmatmul.mubr.f32.gmra.mrb[0].mxu0 %v165
  %v233 = vpop.f32.mrb[0].mxu0
  %v234 = vadd.f32 0.0, %v233
  %v235 = vpop.f32.mrb[0].mxu0
  %236 = vdwg.mxu0
  %v237 = vxor.u32 %v234, 2147483648
  %v238 = vmul.f32 %v237, 1.442695
  %v239 = vpow.pop %v238
  %v240 = vadd.f32 %v239, 1.0
  %v241 = vrcp.pop %v240
  %v242 = vmul.f32 1.0, %v241
  %vm243 = vcmask 517120
  %244 = vst.msk [vmem:[%s3] sm:$0x3] %vm243, %v242
  // Predicated region
  $region14: #{fluentnet_forward.128} parent=0 // pred_check
    _
  $region15: #{fluentnet_forward.128} parent=0 // pred_check_branch
    %246 = sbr.rel (0) target = $region17
  $region16: #{fluentnet_forward.128} parent=0 // pred_region
    _
  $region17: #{fluentnet_forward.128} parent=0 // pred_fallthru
    _
  // Predicated region
  $region18: #{fluentnet_forward.128} parent=0 // pred_check
    _
  $region19: #{fluentnet_forward.128} parent=0 // pred_check_branch
    %248 = sbr.rel (0) target = $region21
  $region20: #{fluentnet_forward.128} parent=0 // pred_region
    _
  $region21: #{fluentnet_forward.128} parent=0 // pred_fallthru
    _

// kernel: fluentnet_forward.127
$region0: #{fluentnet_forward.127}
  #allocation0 [shape = 'u32[]', space=smem, size = 0x4, offset = 0x4, fixed_abs, tag = 'smem constant byte address 0x4 - core index']
  #allocation1 [shape = 'u32[144,128]{1,0:T(1,128)}', space=vmem, size = 0x12000, scoped, tag = 'internal scratch']
  %s0 = inlined_call_operand.vmem [shape: f32[128,32], index: 0, kind: input, shape index: {}]
  %s1 = inlined_call_operand.vmem [shape: bf16[32,64], index: 1, kind: input, shape index: {}]
  %s2 = inlined_call_operand.vmem [shape: f32[1,64], index: 2, kind: input, shape index: {}]
  %s3 = inlined_call_operand.vmem [shape: f32[128,64], index: 3, kind: output, shape index: {}]
  %s4 = sld [smem:[#allocation0]]
  $region22: #{fluentnet_forward.127} parent=0
    _
  %s6 = ssub.s32 1, %s4
  %s7 = scalar_select 0, %s6, %s4
  // Predicated region
  $region2: #{fluentnet_forward.127} parent=0 // pred_check
    _
  $region3: #{fluentnet_forward.127} parent=0 // pred_check_branch
    %9 = sbr.rel (0) target = $region5
  $region4: #{fluentnet_forward.127} parent=0 // pred_region
    _
  $region5: #{fluentnet_forward.127} parent=0 // pred_fallthru
    _
  // Predicated region
  $region6: #{fluentnet_forward.127} parent=0 // pred_check
    _
  $region7: #{fluentnet_forward.127} parent=0 // pred_check_branch
    %11 = sbr.rel (0) target = $region9
  $region8: #{fluentnet_forward.127} parent=0 // pred_region
    _
  $region9: #{fluentnet_forward.127} parent=0 // pred_fallthru
    _
  // Predicated region
  $region10: #{fluentnet_forward.127} parent=0 // pred_check
    _
  $region11: #{fluentnet_forward.127} parent=0 // pred_check_branch
    %13 = sbr.rel (0) target = $region13
  $region12: #{fluentnet_forward.127} parent=0 // pred_region
    _
  $region13: #{fluentnet_forward.127} parent=0 // pred_fallthru
    _
  %v15 = vld [vmem:[%s0] sm:$0xff]
  %v16 = vld [vmem:[%s0 + $0x8] sm:$0xff]
  %v17 = vld [vmem:[%s0 + $0x10] sm:$0xff]
  %v18 = vld [vmem:[%s0 + $0x18] sm:$0xff]
  %v19 = vld [vmem:[%s0 + $0x20] sm:$0xff]
  %v20 = vld [vmem:[%s0 + $0x28] sm:$0xff]
  %v21 = vld [vmem:[%s0 + $0x30] sm:$0xff]
  %v22 = vld [vmem:[%s0 + $0x38] sm:$0xff]
  %v23 = vld [vmem:[%s0 + $0x40] sm:$0xff]
  %v24 = vld [vmem:[%s0 + $0x48] sm:$0xff]
  %v25 = vld [vmem:[%s0 + $0x50] sm:$0xff]
  %v26 = vld [vmem:[%s0 + $0x58] sm:$0xff]
  %v27 = vld [vmem:[%s0 + $0x60] sm:$0xff]
  %v28 = vld [vmem:[%s0 + $0x68] sm:$0xff]
  %v29 = vld [vmem:[%s0 + $0x70] sm:$0xff]
  %v30 = vld [vmem:[%s0 + $0x78] sm:$0xff]
  %v31 = vpack.c.bf16 %v16, %v15
  %v32 = vpack.c.bf16 %v18, %v17
  %v33 = vpack.c.bf16 %v20, %v19
  %v34 = vpack.c.bf16 %v22, %v21
  %v35 = vpack.c.bf16 %v24, %v23
  %v36 = vpack.c.bf16 %v26, %v25
  %v37 = vpack.c.bf16 %v28, %v27
  %v38 = vpack.c.bf16 %v30, %v29
  %v39 = vld [vmem:[%s1] sm:$0xf]
  %v40 = vld [vmem:[%s1 + $0x4] sm:$0xf]
  %v41 = vld [vmem:[%s1 + $0x8] sm:$0xf]
  %v42 = vld [vmem:[%s1 + $0xc] sm:$0xf]
  %v43 = vld [vmem:[%s2] sm:$0x1]
  %v45 = vlaneseq
  %v46 = vshrl.u32 %v45, 7
  %v47 = vsub.s32 0, %v46
  %v48 = vrot.slane %v43, %v47
  %v54 = vunpack.c.l.b16 %v39
  %v55 = vunpack.c.l.b16 %v40
  %v56 = vunpack.c.l.b16 %v41
  %v57 = vunpack.c.l.b16 %v42
  %v58 = vpack.c.b16 %v55, %v54
  %v59 = vpack.c.b16 %v57, %v56
  %vm62 = vcmask 261120
  %v64 = vsel %vm62, %v31, 0
  %v67 = vsel %vm62, %v32, 0
  %v70 = vsel %vm62, %v33, 0
  %v73 = vsel %vm62, %v34, 0
  %v76 = vsel %vm62, %v35, 0
  %v79 = vsel %vm62, %v36, 0
  %v82 = vsel %vm62, %v37, 0
  %v85 = vsel %vm62, %v38, 0
  %87 = vmatprep.subr.bf16.mxu0 0
  %88 = vmatpush1.bf16.msra.mxu0 %v58
  %89 = vmatprep.subr.bf16.mxu0 0
  %90 = vmatpush1.bf16.msra.mxu0 %v59
  %91 = vmatprep.subr.bf16.mxu0 0
  %92 = vmatpush1.bf16.msra.mxu0 0
  %93 = vmatprep.subr.bf16.mxu0 0
  %94 = vmatpush1.bf16.msra.mxu0 0
  %95 = vmatprep.subr.bf16.mxu0 0
  %96 = vmatpush1.bf16.msra.mxu0 0
  %97 = vmatprep.subr.bf16.mxu0 0
  %98 = vmatpush1.bf16.msra.mxu0 0
  %99 = vmatprep.subr.bf16.mxu0 0
  %100 = vmatpush1.bf16.msra.mxu0 0
  %101 = vmatprep.subr.bf16.mxu0 0
  %102 = vmatpush1.bf16.msra.mxu0 0
  %103 = vmatprep.subr.bf16.mxu0 0
  %104 = vmatpush1.bf16.msra.mxu0 0
  %105 = vmatprep.subr.bf16.mxu0 0
  %106 = vmatpush1.bf16.msra.mxu0 0
  %107 = vmatprep.subr.bf16.mxu0 0
  %108 = vmatpush1.bf16.msra.mxu0 0
  %109 = vmatprep.subr.bf16.mxu0 0
  %110 = vmatpush1.bf16.msra.mxu0 0
  %111 = vmatprep.subr.bf16.mxu0 0
  %112 = vmatpush1.bf16.msra.mxu0 0
  %113 = vmatprep.subr.bf16.mxu0 0
  %114 = vmatpush1.bf16.msra.mxu0 0
  %115 = vmatprep.subr.bf16.mxu0 0
  %116 = vmatpush1.bf16.msra.mxu0 0
  %117 = vmatprep.subr.bf16.mxu0 0
  %118 = vmatpush1.bf16.msra.mxu0 0
  %119 = vmatprep.mubr.bf16.mxu0 0
  %120 = vmatmul.mubr.bf16.gmra.mrb[0].mxu0 %v64
  %v121 = vpop.f32.mrb[0].mxu0
  %v122 = vadd.f32 %v48, %v121
  %v123 = vpop.f32.mrb[0].mxu0
  %v124 = vpop.f32.mrb[0].mxu0
  %v125 = vadd.f32 %v48, %v124
  %v126 = vpop.f32.mrb[0].mxu0
  %127 = vmatprep.mubr.bf16.mxu0 0
  %128 = vmatmul.mubr.bf16.gmra.mrb[0].mxu0 %v67
  %v129 = vpop.f32.mrb[0].mxu0
  %v130 = vadd.f32 %v48, %v129
  %v131 = vpop.f32.mrb[0].mxu0
  %v132 = vpop.f32.mrb[0].mxu0
  %v133 = vadd.f32 %v48, %v132
  %v134 = vpop.f32.mrb[0].mxu0
  %135 = vmatprep.mubr.bf16.mxu0 0
  %136 = vmatmul.mubr.bf16.gmra.mrb[0].mxu0 %v70
  %v137 = vpop.f32.mrb[0].mxu0
  %v138 = vadd.f32 %v48, %v137
  %v139 = vpop.f32.mrb[0].mxu0
  %v140 = vpop.f32.mrb[0].mxu0
  %v141 = vadd.f32 %v48, %v140
  %v142 = vpop.f32.mrb[0].mxu0
  %143 = vmatprep.mubr.bf16.mxu0 0
  %144 = vmatmul.mubr.bf16.gmra.mrb[0].mxu0 %v73
  %v145 = vpop.f32.mrb[0].mxu0
  %v146 = vadd.f32 %v48, %v145
  %v147 = vpop.f32.mrb[0].mxu0
  %v148 = vpop.f32.mrb[0].mxu0
  %v149 = vadd.f32 %v48, %v148
  %v150 = vpop.f32.mrb[0].mxu0
  %151 = vmatprep.mubr.bf16.mxu0 0
  %152 = vmatmul.mubr.bf16.gmra.mrb[0].mxu0 %v76
  %v153 = vpop.f32.mrb[0].mxu0
  %v154 = vadd.f32 %v48, %v153
  %v155 = vpop.f32.mrb[0].mxu0
  %v156 = vpop.f32.mrb[0].mxu0
  %v157 = vadd.f32 %v48, %v156
  %v158 = vpop.f32.mrb[0].mxu0
  %159 = vmatprep.mubr.bf16.mxu0 0
  %160 = vmatmul.mubr.bf16.gmra.mrb[0].mxu0 %v79
  %v161 = vpop.f32.mrb[0].mxu0
  %v162 = vadd.f32 %v48, %v161
  %v163 = vpop.f32.mrb[0].mxu0
  %v164 = vpop.f32.mrb[0].mxu0
  %v165 = vadd.f32 %v48, %v164
  %v166 = vpop.f32.mrb[0].mxu0
  %167 = vmatprep.mubr.bf16.mxu0 0
  %168 = vmatmul.mubr.bf16.gmra.mrb[0].mxu0 %v82
  %v169 = vpop.f32.mrb[0].mxu0
  %v170 = vadd.f32 %v48, %v169
  %v171 = vpop.f32.mrb[0].mxu0
  %v172 = vpop.f32.mrb[0].mxu0
  %v173 = vadd.f32 %v48, %v172
  %v174 = vpop.f32.mrb[0].mxu0
  %175 = vmatprep.mubr.bf16.mxu0 0
  %176 = vmatmul.mubr.bf16.gmra.mrb[0].mxu0 %v85
  %v177 = vpop.f32.mrb[0].mxu0
  %v178 = vadd.f32 %v48, %v177
  %v179 = vpop.f32.mrb[0].mxu0
  %v180 = vpop.f32.mrb[0].mxu0
  %v181 = vadd.f32 %v48, %v180
  %v182 = vpop.f32.mrb[0].mxu0
  %183 = vdwg.mxu0
  %vm184 = vcmask 523264
  %185 = vst.msk [vmem:[%s3] sm:$0xff] %vm184, %v122
  %186 = vst.msk [vmem:[%s3 + $0x8] sm:$0xff] %vm184, %v125
  %187 = vst.msk [vmem:[%s3 + $0x10] sm:$0xff] %vm184, %v130
  %188 = vst.msk [vmem:[%s3 + $0x18] sm:$0xff] %vm184, %v133
  %189 = vst.msk [vmem:[%s3 + $0x20] sm:$0xff] %vm184, %v138
  %190 = vst.msk [vmem:[%s3 + $0x28] sm:$0xff] %vm184, %v141
  %191 = vst.msk [vmem:[%s3 + $0x30] sm:$0xff] %vm184, %v146
  %192 = vst.msk [vmem:[%s3 + $0x38] sm:$0xff] %vm184, %v149
  %193 = vst.msk [vmem:[%s3 + $0x40] sm:$0xff] %vm184, %v154
  %194 = vst.msk [vmem:[%s3 + $0x48] sm:$0xff] %vm184, %v157
  %195 = vst.msk [vmem:[%s3 + $0x50] sm:$0xff] %vm184, %v162
  %196 = vst.msk [vmem:[%s3 + $0x58] sm:$0xff] %vm184, %v165
  %197 = vst.msk [vmem:[%s3 + $0x60] sm:$0xff] %vm184, %v170
  %198 = vst.msk [vmem:[%s3 + $0x68] sm:$0xff] %vm184, %v173
  %199 = vst.msk [vmem:[%s3 + $0x70] sm:$0xff] %vm184, %v178
  %200 = vst.msk [vmem:[%s3 + $0x78] sm:$0xff] %vm184, %v181
  // Predicated region
  $region14: #{fluentnet_forward.127} parent=0 // pred_check
    _
  $region15: #{fluentnet_forward.127} parent=0 // pred_check_branch
    %202 = sbr.rel (0) target = $region17
  $region16: #{fluentnet_forward.127} parent=0 // pred_region
    _
  $region17: #{fluentnet_forward.127} parent=0 // pred_fallthru
    _
  // Predicated region
  $region18: #{fluentnet_forward.127} parent=0 // pred_check
    _
  $region19: #{fluentnet_forward.127} parent=0 // pred_check_branch
    %204 = sbr.rel (0) target = $region21
  $region20: #{fluentnet_forward.127} parent=0 // pred_region
    _
  $region21: #{fluentnet_forward.127} parent=0 // pred_fallthru
    _

// kernel: fluentnet_forward.129
$region0: #{fluentnet_forward.129}
  #allocation0 [shape = 'u32[]', space=smem, size = 0x4, offset = 0x4, fixed_abs, tag = 'smem constant byte address 0x4 - core index']
  #allocation1 [shape = 'u32[144,128]{1,0:T(1,128)}', space=vmem, size = 0x12000, scoped, tag = 'internal scratch']
  %s0 = inlined_call_operand.vmem [shape: f32[2,64,64], index: 0, kind: input, shape index: {}]
  %s1 = inlined_call_operand.vmem [shape: f32[2,1,64], index: 1, kind: input, shape index: {}]
  %s2 = inlined_call_operand.vmem [shape: f32[2,64,64], index: 2, kind: input, shape index: {}]
  %s3 = inlined_call_operand.vmem [shape: f32[2,64,64], index: 3, kind: output, shape index: {}]
  %s4 = sld [smem:[#allocation0]]
  $region22: #{fluentnet_forward.129} parent=0
    _
  %s6 = ssub.s32 1, %s4
  %s7 = scalar_select 0, %s6, %s4
  // Predicated region
  $region2: #{fluentnet_forward.129} parent=0 // pred_check
    _
  $region3: #{fluentnet_forward.129} parent=0 // pred_check_branch
    %9 = sbr.rel (0) target = $region5
  $region4: #{fluentnet_forward.129} parent=0 // pred_region
    _
  $region5: #{fluentnet_forward.129} parent=0 // pred_fallthru
    _
  // Predicated region
  $region6: #{fluentnet_forward.129} parent=0 // pred_check
    _
  $region7: #{fluentnet_forward.129} parent=0 // pred_check_branch
    %11 = sbr.rel (0) target = $region9
  $region8: #{fluentnet_forward.129} parent=0 // pred_region
    _
  $region9: #{fluentnet_forward.129} parent=0 // pred_fallthru
    _
  // Predicated region
  $region10: #{fluentnet_forward.129} parent=0 // pred_check
    _
  $region11: #{fluentnet_forward.129} parent=0 // pred_check_branch
    %13 = sbr.rel (0) target = $region13
  $region12: #{fluentnet_forward.129} parent=0 // pred_region
    _
  $region13: #{fluentnet_forward.129} parent=0 // pred_fallthru
    _
  %v14 = vld [vmem:[%s0] sm:$0xff]
  %v15 = vld [vmem:[%s0 + $0x8] sm:$0xff]
  %v16 = vld [vmem:[%s0 + $0x10] sm:$0xff]
  %v17 = vld [vmem:[%s0 + $0x18] sm:$0xff]
  %v18 = vld [vmem:[%s0 + $0x20] sm:$0xff]
  %v19 = vld [vmem:[%s0 + $0x28] sm:$0xff]
  %v20 = vld [vmem:[%s0 + $0x30] sm:$0xff]
  %v21 = vld [vmem:[%s0 + $0x38] sm:$0xff]
  %v22 = vld [vmem:[%s0 + $0x40] sm:$0xff]
  %v23 = vld [vmem:[%s0 + $0x48] sm:$0xff]
  %v24 = vld [vmem:[%s0 + $0x50] sm:$0xff]
  %v25 = vld [vmem:[%s0 + $0x58] sm:$0xff]
  %v26 = vld [vmem:[%s0 + $0x60] sm:$0xff]
  %v27 = vld [vmem:[%s0 + $0x68] sm:$0xff]
  %v28 = vld [vmem:[%s0 + $0x70] sm:$0xff]
  %v29 = vld [vmem:[%s0 + $0x78] sm:$0xff]
  %v30 = vld [vmem:[%s1] sm:$0x1]
  %v31 = vld [vmem:[%s1 + $0x1] sm:$0x1]
  %v34 = vlaneseq
  %v35 = vshrl.u32 %v34, 7
  %v36 = vsub.s32 0, %v35
  %v37 = vrot.slane %v30, %v36
  %v38 = vlaneseq
  %v39 = vshrl.u32 %v38, 7
  %v40 = vsub.s32 0, %v39
  %v41 = vrot.slane %v31, %v40
  %v44 = vmul.f32 %v14, %v37
  %v45 = vmul.f32 %v15, %v37
  %v46 = vmul.f32 %v16, %v37
  %v47 = vmul.f32 %v17, %v37
  %v48 = vmul.f32 %v18, %v37
  %v49 = vmul.f32 %v19, %v37
  %v50 = vmul.f32 %v20, %v37
  %v51 = vmul.f32 %v21, %v37
  %v52 = vmul.f32 %v22, %v41
  %v53 = vmul.f32 %v23, %v41
  %v54 = vmul.f32 %v24, %v41
  %v55 = vmul.f32 %v25, %v41
  %v56 = vmul.f32 %v26, %v41
  %v57 = vmul.f32 %v27, %v41
  %v58 = vmul.f32 %v28, %v41
  %v59 = vmul.f32 %v29, %v41
  %v60 = vld [vmem:[%s2] sm:$0xff]
  %v61 = vld [vmem:[%s2 + $0x8] sm:$0xff]
  %v62 = vld [vmem:[%s2 + $0x10] sm:$0xff]
  %v63 = vld [vmem:[%s2 + $0x18] sm:$0xff]
  %v64 = vld [vmem:[%s2 + $0x20] sm:$0xff]
  %v65 = vld [vmem:[%s2 + $0x28] sm:$0xff]
  %v66 = vld [vmem:[%s2 + $0x30] sm:$0xff]
  %v67 = vld [vmem:[%s2 + $0x38] sm:$0xff]
  %v68 = vld [vmem:[%s2 + $0x40] sm:$0xff]
  %v69 = vld [vmem:[%s2 + $0x48] sm:$0xff]
  %v70 = vld [vmem:[%s2 + $0x50] sm:$0xff]
  %v71 = vld [vmem:[%s2 + $0x58] sm:$0xff]
  %v72 = vld [vmem:[%s2 + $0x60] sm:$0xff]
  %v73 = vld [vmem:[%s2 + $0x68] sm:$0xff]
  %v74 = vld [vmem:[%s2 + $0x70] sm:$0xff]
  %v75 = vld [vmem:[%s2 + $0x78] sm:$0xff]
  %v76 = vadd.f32 %v44, %v60
  %v77 = vadd.f32 %v45, %v61
  %v78 = vadd.f32 %v46, %v62
  %v79 = vadd.f32 %v47, %v63
  %v80 = vadd.f32 %v48, %v64
  %v81 = vadd.f32 %v49, %v65
  %v82 = vadd.f32 %v50, %v66
  %v83 = vadd.f32 %v51, %v67
  %v84 = vadd.f32 %v52, %v68
  %v85 = vadd.f32 %v53, %v69
  %v86 = vadd.f32 %v54, %v70
  %v87 = vadd.f32 %v55, %v71
  %v88 = vadd.f32 %v56, %v72
  %v89 = vadd.f32 %v57, %v73
  %v90 = vadd.f32 %v58, %v74
  %v91 = vadd.f32 %v59, %v75
  %v92 = vmax.f32 %v76, 0.0
  %v93 = vmax.f32 %v77, 0.0
  %v94 = vmax.f32 %v78, 0.0
  %v95 = vmax.f32 %v79, 0.0
  %v96 = vmax.f32 %v80, 0.0
  %v97 = vmax.f32 %v81, 0.0
  %v98 = vmax.f32 %v82, 0.0
  %v99 = vmax.f32 %v83, 0.0
  %v100 = vmax.f32 %v84, 0.0
  %v101 = vmax.f32 %v85, 0.0
  %v102 = vmax.f32 %v86, 0.0
  %v103 = vmax.f32 %v87, 0.0
  %v104 = vmax.f32 %v88, 0.0
  %v105 = vmax.f32 %v89, 0.0
  %v106 = vmax.f32 %v90, 0.0
  %v107 = vmax.f32 %v91, 0.0
  %vm108 = vcmask 523264
  %109 = vst.msk [vmem:[%s3] sm:$0xff] %vm108, %v92
  %110 = vst.msk [vmem:[%s3 + $0x8] sm:$0xff] %vm108, %v93
  %111 = vst.msk [vmem:[%s3 + $0x10] sm:$0xff] %vm108, %v94
  %112 = vst.msk [vmem:[%s3 + $0x18] sm:$0xff] %vm108, %v95
  %113 = vst.msk [vmem:[%s3 + $0x20] sm:$0xff] %vm108, %v96
  %114 = vst.msk [vmem:[%s3 + $0x28] sm:$0xff] %vm108, %v97
  %115 = vst.msk [vmem:[%s3 + $0x30] sm:$0xff] %vm108, %v98
  %116 = vst.msk [vmem:[%s3 + $0x38] sm:$0xff] %vm108, %v99
  %117 = vst.msk [vmem:[%s3 + $0x40] sm:$0xff] %vm108, %v100
  %118 = vst.msk [vmem:[%s3 + $0x48] sm:$0xff] %vm108, %v101
  %119 = vst.msk [vmem:[%s3 + $0x50] sm:$0xff] %vm108, %v102
  %120 = vst.msk [vmem:[%s3 + $0x58] sm:$0xff] %vm108, %v103
  %121 = vst.msk [vmem:[%s3 + $0x60] sm:$0xff] %vm108, %v104
  %122 = vst.msk [vmem:[%s3 + $0x68] sm:$0xff] %vm108, %v105
  %123 = vst.msk [vmem:[%s3 + $0x70] sm:$0xff] %vm108, %v106
  %124 = vst.msk [vmem:[%s3 + $0x78] sm:$0xff] %vm108, %v107
  // Predicated region
  $region14: #{fluentnet_forward.129} parent=0 // pred_check
    _
  $region15: #{fluentnet_forward.129} parent=0 // pred_check_branch
    %126 = sbr.rel (0) target = $region17
  $region16: #{fluentnet_forward.129} parent=0 // pred_region
    _
  $region17: #{fluentnet_forward.129} parent=0 // pred_fallthru
    _
  // Predicated region
  $region18: #{fluentnet_forward.129} parent=0 // pred_check
    _
  $region19: #{fluentnet_forward.129} parent=0 // pred_check_branch
    %128 = sbr.rel (0) target = $region21
  $region20: #{fluentnet_forward.129} parent=0 // pred_region
    _
  $region21: #{fluentnet_forward.129} parent=0 // pred_fallthru
    _

// kernel: fluentnet_forward.130
$region0: #{fluentnet_forward.130}
  #allocation0 [shape = 'u32[]', space=smem, size = 0x4, offset = 0x4, fixed_abs, tag = 'smem constant byte address 0x4 - core index']
  #allocation1 [shape = 'u32[144,128]{1,0:T(1,128)}', space=vmem, size = 0x12000, scoped, tag = 'internal scratch']
  %s0 = inlined_call_operand.vmem [shape: f32[128,576], index: 0, kind: input, shape index: {}]
  %s1 = inlined_call_operand.vmem [shape: bf16[576,64], index: 1, kind: input, shape index: {}]
  %s2 = inlined_call_operand.vmem [shape: f32[1,64], index: 2, kind: input, shape index: {}]
  %s3 = inlined_call_operand.vmem [shape: f32[128,64], index: 3, kind: output, shape index: {}]
  %s4 = sld [smem:[#allocation0]]
  $region22: #{fluentnet_forward.130} parent=0
    _
  %s6 = ssub.s32 1, %s4
  %s7 = scalar_select 0, %s6, %s4
  // Predicated region
  $region2: #{fluentnet_forward.130} parent=0 // pred_check
    _
  $region3: #{fluentnet_forward.130} parent=0 // pred_check_branch
    %9 = sbr.rel (0) target = $region5
  $region4: #{fluentnet_forward.130} parent=0 // pred_region
    _
  $region5: #{fluentnet_forward.130} parent=0 // pred_fallthru
    _
  // Predicated region
  $region6: #{fluentnet_forward.130} parent=0 // pred_check
    _
  $region7: #{fluentnet_forward.130} parent=0 // pred_check_branch
    %11 = sbr.rel (0) target = $region9
  $region8: #{fluentnet_forward.130} parent=0 // pred_region
    _
  $region9: #{fluentnet_forward.130} parent=0 // pred_fallthru
    _
  // Predicated region
  $region10: #{fluentnet_forward.130} parent=0 // pred_check
    _
  $region11: #{fluentnet_forward.130} parent=0 // pred_check_branch
    %13 = sbr.rel (0) target = $region13
  $region12: #{fluentnet_forward.130} parent=0 // pred_region
    _
  $region13: #{fluentnet_forward.130} parent=0 // pred_fallthru
    _
  %v15 = vld [vmem:[%s0] sm:$0xff]
  %v16 = vld [vmem:[%s0 + $0x8] sm:$0xff]
  %v17 = vld [vmem:[%s0 + $0x10] sm:$0xff]
  %v18 = vld [vmem:[%s0 + $0x18] sm:$0xff]
  %v19 = vld [vmem:[%s0 + $0x20] sm:$0xff]
  %v20 = vld [vmem:[%s0 + $0x28] sm:$0xff]
  %v21 = vld [vmem:[%s0 + $0x30] sm:$0xff]
  %v22 = vld [vmem:[%s0 + $0x38] sm:$0xff]
  %v23 = vld [vmem:[%s0 + $0x40] sm:$0xff]
  %v24 = vld [vmem:[%s0 + $0x48] sm:$0xff]
  %v25 = vld [vmem:[%s0 + $0x50] sm:$0xff]
  %v26 = vld [vmem:[%s0 + $0x58] sm:$0xff]
  %v27 = vld [vmem:[%s0 + $0x60] sm:$0xff]
  %v28 = vld [vmem:[%s0 + $0x68] sm:$0xff]
  %v29 = vld [vmem:[%s0 + $0x70] sm:$0xff]
  %v30 = vld [vmem:[%s0 + $0x78] sm:$0xff]
  %v31 = vld [vmem:[%s0 + $0x80] sm:$0xff]
  %v32 = vld [vmem:[%s0 + $0x88] sm:$0xff]
  %v33 = vld [vmem:[%s0 + $0x90] sm:$0xff]
  %v34 = vld [vmem:[%s0 + $0x98] sm:$0xff]
  %v35 = vld [vmem:[%s0 + $0xa0] sm:$0xff]
  %v36 = vld [vmem:[%s0 + $0xa8] sm:$0xff]
  %v37 = vld [vmem:[%s0 + $0xb0] sm:$0xff]
  %v38 = vld [vmem:[%s0 + $0xb8] sm:$0xff]
  %v39 = vld [vmem:[%s0 + $0xc0] sm:$0xff]
  %v40 = vld [vmem:[%s0 + $0xc8] sm:$0xff]
  %v41 = vld [vmem:[%s0 + $0xd0] sm:$0xff]
  %v42 = vld [vmem:[%s0 + $0xd8] sm:$0xff]
  %v43 = vld [vmem:[%s0 + $0xe0] sm:$0xff]
  %v44 = vld [vmem:[%s0 + $0xe8] sm:$0xff]
  %v45 = vld [vmem:[%s0 + $0xf0] sm:$0xff]
  %v46 = vld [vmem:[%s0 + $0xf8] sm:$0xff]
  %v47 = vld [vmem:[%s0 + $0x100] sm:$0xff]
  %v48 = vld [vmem:[%s0 + $0x108] sm:$0xff]
  %v49 = vld [vmem:[%s0 + $0x110] sm:$0xff]
  %v50 = vld [vmem:[%s0 + $0x118] sm:$0xff]
  %v51 = vld [vmem:[%s0 + $0x120] sm:$0xff]
  %v52 = vld [vmem:[%s0 + $0x128] sm:$0xff]
  %v53 = vld [vmem:[%s0 + $0x130] sm:$0xff]
  %v54 = vld [vmem:[%s0 + $0x138] sm:$0xff]
  %v55 = vld [vmem:[%s0 + $0x140] sm:$0xff]
  %v56 = vld [vmem:[%s0 + $0x148] sm:$0xff]
  %v57 = vld [vmem:[%s0 + $0x150] sm:$0xff]
  %v58 = vld [vmem:[%s0 + $0x158] sm:$0xff]
  %v59 = vld [vmem:[%s0 + $0x160] sm:$0xff]
  %v60 = vld [vmem:[%s0 + $0x168] sm:$0xff]
  %v61 = vld [vmem:[%s0 + $0x170] sm:$0xff]
  %v62 = vld [vmem:[%s0 + $0x178] sm:$0xff]
  %v63 = vld [vmem:[%s0 + $0x180] sm:$0xff]
  %v64 = vld [vmem:[%s0 + $0x188] sm:$0xff]
  %v65 = vld [vmem:[%s0 + $0x190] sm:$0xff]
  %v66 = vld [vmem:[%s0 + $0x198] sm:$0xff]
  %v67 = vld [vmem:[%s0 + $0x1a0] sm:$0xff]
  %v68 = vld [vmem:[%s0 + $0x1a8] sm:$0xff]
  %v69 = vld [vmem:[%s0 + $0x1b0] sm:$0xff]
  %v70 = vld [vmem:[%s0 + $0x1b8] sm:$0xff]
  %v71 = vld [vmem:[%s0 + $0x1c0] sm:$0xff]
  %v72 = vld [vmem:[%s0 + $0x1c8] sm:$0xff]
  %v73 = vld [vmem:[%s0 + $0x1d0] sm:$0xff]
  %v74 = vld [vmem:[%s0 + $0x1d8] sm:$0xff]
  %v75 = vld [vmem:[%s0 + $0x1e0] sm:$0xff]
  %v76 = vld [vmem:[%s0 + $0x1e8] sm:$0xff]
  %v77 = vld [vmem:[%s0 + $0x1f0] sm:$0xff]
  %v78 = vld [vmem:[%s0 + $0x1f8] sm:$0xff]
  %v79 = vld [vmem:[%s0 + $0x200] sm:$0xff]
  %v80 = vld [vmem:[%s0 + $0x208] sm:$0xff]
  %v81 = vld [vmem:[%s0 + $0x210] sm:$0xff]
  %v82 = vld [vmem:[%s0 + $0x218] sm:$0xff]
  %v83 = vld [vmem:[%s0 + $0x220] sm:$0xff]
  %v84 = vld [vmem:[%s0 + $0x228] sm:$0xff]
  %v85 = vld [vmem:[%s0 + $0x230] sm:$0xff]
  %v86 = vld [vmem:[%s0 + $0x238] sm:$0xff]
  %v87 = vld [vmem:[%s0 + $0x240] sm:$0xff]
  %v88 = vld [vmem:[%s0 + $0x248] sm:$0xff]
  %v89 = vld [vmem:[%s0 + $0x250] sm:$0xff]
  %v90 = vld [vmem:[%s0 + $0x258] sm:$0xff]
  %v91 = vld [vmem:[%s0 + $0x260] sm:$0xff]
  %v92 = vld [vmem:[%s0 + $0x268] sm:$0xff]
  %v93 = vld [vmem:[%s0 + $0x270] sm:$0xff]
  %v94 = vld [vmem:[%s0 + $0x278] sm:$0xff]
  %v95 = vpack.c.bf16 %v20, %v15
  %v96 = vpack.c.bf16 %v21, %v16
  %v97 = vpack.c.bf16 %v22, %v17
  %v98 = vpack.c.bf16 %v23, %v18
  %v99 = vpack.c.bf16 %v24, %v19
  %v100 = vpack.c.bf16 %v30, %v25
  %v101 = vpack.c.bf16 %v31, %v26
  %v102 = vpack.c.bf16 %v32, %v27
  %v103 = vpack.c.bf16 %v33, %v28
  %v104 = vpack.c.bf16 %v34, %v29
  %v105 = vpack.c.bf16 %v40, %v35
  %v106 = vpack.c.bf16 %v41, %v36
  %v107 = vpack.c.bf16 %v42, %v37
  %v108 = vpack.c.bf16 %v43, %v38
  %v109 = vpack.c.bf16 %v44, %v39
  %v110 = vpack.c.bf16 %v50, %v45
  %v111 = vpack.c.bf16 %v51, %v46
  %v112 = vpack.c.bf16 %v52, %v47
  %v113 = vpack.c.bf16 %v53, %v48
  %v114 = vpack.c.bf16 %v54, %v49
  %v115 = vpack.c.bf16 %v60, %v55
  %v116 = vpack.c.bf16 %v61, %v56
  %v117 = vpack.c.bf16 %v62, %v57
  %v118 = vpack.c.bf16 %v63, %v58
  %v119 = vpack.c.bf16 %v64, %v59
  %v120 = vpack.c.bf16 %v70, %v65
  %v121 = vpack.c.bf16 %v71, %v66
  %v122 = vpack.c.bf16 %v72, %v67
  %v123 = vpack.c.bf16 %v73, %v68
  %v124 = vpack.c.bf16 %v74, %v69
  %v125 = vpack.c.bf16 %v80, %v75
  %v126 = vpack.c.bf16 %v81, %v76
  %v127 = vpack.c.bf16 %v82, %v77
  %v128 = vpack.c.bf16 %v83, %v78
  %v129 = vpack.c.bf16 %v84, %v79
  %v130 = vpack.c.bf16 %v90, %v85
  %v131 = vpack.c.bf16 %v91, %v86
  %v132 = vpack.c.bf16 %v92, %v87
  %v133 = vpack.c.bf16 %v93, %v88
  %v134 = vpack.c.bf16 %v94, %v89
  %v135 = vld [vmem:[%s1] sm:$0xf]
  %v136 = vld [vmem:[%s1 + $0x4] sm:$0xf]
  %v137 = vld [vmem:[%s1 + $0x8] sm:$0xf]
  %v138 = vld [vmem:[%s1 + $0xc] sm:$0xf]
  %v139 = vld [vmem:[%s1 + $0x10] sm:$0xf]
  %v140 = vld [vmem:[%s1 + $0x14] sm:$0xf]
  %v141 = vld [vmem:[%s1 + $0x18] sm:$0xf]
  %v142 = vld [vmem:[%s1 + $0x1c] sm:$0xf]
  %v143 = vld [vmem:[%s1 + $0x20] sm:$0xf]
  %v144 = vld [vmem:[%s1 + $0x24] sm:$0xf]
  %v145 = vld [vmem:[%s1 + $0x28] sm:$0xf]
  %v146 = vld [vmem:[%s1 + $0x2c] sm:$0xf]
  %v147 = vld [vmem:[%s1 + $0x30] sm:$0xf]
  %v148 = vld [vmem:[%s1 + $0x34] sm:$0xf]
  %v149 = vld [vmem:[%s1 + $0x38] sm:$0xf]
  %v150 = vld [vmem:[%s1 + $0x3c] sm:$0xf]
  %v151 = vld [vmem:[%s1 + $0x40] sm:$0xf]
  %v152 = vld [vmem:[%s1 + $0x44] sm:$0xf]
  %v153 = vld [vmem:[%s1 + $0x48] sm:$0xf]
  %v154 = vld [vmem:[%s1 + $0x4c] sm:$0xf]
  %v155 = vld [vmem:[%s1 + $0x50] sm:$0xf]
  %v156 = vld [vmem:[%s1 + $0x54] sm:$0xf]
  %v157 = vld [vmem:[%s1 + $0x58] sm:$0xf]
  %v158 = vld [vmem:[%s1 + $0x5c] sm:$0xf]
  %v159 = vld [vmem:[%s1 + $0x60] sm:$0xf]
  %v160 = vld [vmem:[%s1 + $0x64] sm:$0xf]
  %v161 = vld [vmem:[%s1 + $0x68] sm:$0xf]
  %v162 = vld [vmem:[%s1 + $0x6c] sm:$0xf]
  %v163 = vld [vmem:[%s1 + $0x70] sm:$0xf]
  %v164 = vld [vmem:[%s1 + $0x74] sm:$0xf]
  %v165 = vld [vmem:[%s1 + $0x78] sm:$0xf]
  %v166 = vld [vmem:[%s1 + $0x7c] sm:$0xf]
  %v167 = vld [vmem:[%s1 + $0x80] sm:$0xf]
  %v168 = vld [vmem:[%s1 + $0x84] sm:$0xf]
  %v169 = vld [vmem:[%s1 + $0x88] sm:$0xf]
  %v170 = vld [vmem:[%s1 + $0x8c] sm:$0xf]
  %v171 = vld [vmem:[%s1 + $0x90] sm:$0xf]
  %v172 = vld [vmem:[%s1 + $0x94] sm:$0xf]
  %v173 = vld [vmem:[%s1 + $0x98] sm:$0xf]
  %v174 = vld [vmem:[%s1 + $0x9c] sm:$0xf]
  %v175 = vld [vmem:[%s1 + $0xa0] sm:$0xf]
  %v176 = vld [vmem:[%s1 + $0xa4] sm:$0xf]
  %v177 = vld [vmem:[%s1 + $0xa8] sm:$0xf]
  %v178 = vld [vmem:[%s1 + $0xac] sm:$0xf]
  %v179 = vld [vmem:[%s1 + $0xb0] sm:$0xf]
  %v180 = vld [vmem:[%s1 + $0xb4] sm:$0xf]
  %v181 = vld [vmem:[%s1 + $0xb8] sm:$0xf]
  %v182 = vld [vmem:[%s1 + $0xbc] sm:$0xf]
  %v183 = vld [vmem:[%s1 + $0xc0] sm:$0xf]
  %v184 = vld [vmem:[%s1 + $0xc4] sm:$0xf]
  %v185 = vld [vmem:[%s1 + $0xc8] sm:$0xf]
  %v186 = vld [vmem:[%s1 + $0xcc] sm:$0xf]
  %v187 = vld [vmem:[%s1 + $0xd0] sm:$0xf]
  %v188 = vld [vmem:[%s1 + $0xd4] sm:$0xf]
  %v189 = vld [vmem:[%s1 + $0xd8] sm:$0xf]
  %v190 = vld [vmem:[%s1 + $0xdc] sm:$0xf]
  %v191 = vld [vmem:[%s1 + $0xe0] sm:$0xf]
  %v192 = vld [vmem:[%s1 + $0xe4] sm:$0xf]
  %v193 = vld [vmem:[%s1 + $0xe8] sm:$0xf]
  %v194 = vld [vmem:[%s1 + $0xec] sm:$0xf]
  %v195 = vld [vmem:[%s1 + $0xf0] sm:$0xf]
  %v196 = vld [vmem:[%s1 + $0xf4] sm:$0xf]
  %v197 = vld [vmem:[%s1 + $0xf8] sm:$0xf]
  %v198 = vld [vmem:[%s1 + $0xfc] sm:$0xf]
  %v199 = vld [vmem:[%s1 + $0x100] sm:$0xf]
  %v200 = vld [vmem:[%s1 + $0x104] sm:$0xf]
  %v201 = vld [vmem:[%s1 + $0x108] sm:$0xf]
  %v202 = vld [vmem:[%s1 + $0x10c] sm:$0xf]
  %v203 = vld [vmem:[%s1 + $0x110] sm:$0xf]
  %v204 = vld [vmem:[%s1 + $0x114] sm:$0xf]
  %v205 = vld [vmem:[%s1 + $0x118] sm:$0xf]
  %v206 = vld [vmem:[%s1 + $0x11c] sm:$0xf]
  %v207 = vld [vmem:[%s2] sm:$0x1]
  %v209 = vlaneseq
  %v210 = vshrl.u32 %v209, 7
  %v211 = vsub.s32 0, %v210
  %v212 = vrot.slane %v207, %v211
  %v286 = vunpack.c.l.b16 %v135
  %v287 = vunpack.c.l.b16 %v136
  %v288 = vunpack.c.l.b16 %v137
  %v289 = vunpack.c.l.b16 %v138
  %v290 = vunpack.c.l.b16 %v139
  %v291 = vunpack.c.l.b16 %v140
  %v292 = vunpack.c.l.b16 %v141
  %v293 = vunpack.c.l.b16 %v142
  %v294 = vunpack.c.l.b16 %v143
  %v295 = vunpack.c.l.b16 %v144
  %v296 = vunpack.c.l.b16 %v145
  %v297 = vunpack.c.l.b16 %v146
  %v298 = vunpack.c.l.b16 %v147
  %v299 = vunpack.c.l.b16 %v148
  %v300 = vunpack.c.l.b16 %v149
  %v301 = vunpack.c.l.b16 %v150
  %v302 = vunpack.c.l.b16 %v151
  %v303 = vunpack.c.l.b16 %v152
  %v304 = vunpack.c.l.b16 %v153
  %v305 = vunpack.c.l.b16 %v154
  %v306 = vunpack.c.l.b16 %v155
  %v307 = vunpack.c.l.b16 %v156
  %v308 = vunpack.c.l.b16 %v157
  %v309 = vunpack.c.l.b16 %v158
  %v310 = vunpack.c.l.b16 %v159
  %v311 = vunpack.c.l.b16 %v160
  %v312 = vunpack.c.l.b16 %v161
  %v313 = vunpack.c.l.b16 %v162
  %v314 = vunpack.c.l.b16 %v163
  %v315 = vunpack.c.l.b16 %v164
  %v316 = vunpack.c.l.b16 %v165
  %v317 = vunpack.c.l.b16 %v166
  %v318 = vunpack.c.l.b16 %v167
  %v319 = vunpack.c.l.b16 %v168
  %v320 = vunpack.c.l.b16 %v169
  %v321 = vunpack.c.l.b16 %v170
  %v322 = vunpack.c.l.b16 %v171
  %v323 = vunpack.c.l.b16 %v172
  %v324 = vunpack.c.l.b16 %v173
  %v325 = vunpack.c.l.b16 %v174
  %v326 = vunpack.c.l.b16 %v175
  %v327 = vunpack.c.l.b16 %v176
  %v328 = vunpack.c.l.b16 %v177
  %v329 = vunpack.c.l.b16 %v178
  %v330 = vunpack.c.l.b16 %v179
  %v331 = vunpack.c.l.b16 %v180
  %v332 = vunpack.c.l.b16 %v181
  %v333 = vunpack.c.l.b16 %v182
  %v334 = vunpack.c.l.b16 %v183
  %v335 = vunpack.c.l.b16 %v184
  %v336 = vunpack.c.l.b16 %v185
  %v337 = vunpack.c.l.b16 %v186
  %v338 = vunpack.c.l.b16 %v187
  %v339 = vunpack.c.l.b16 %v188
  %v340 = vunpack.c.l.b16 %v189
  %v341 = vunpack.c.l.b16 %v190
  %v342 = vunpack.c.l.b16 %v191
  %v343 = vunpack.c.l.b16 %v192
  %v344 = vunpack.c.l.b16 %v193
  %v345 = vunpack.c.l.b16 %v194
  %v346 = vunpack.c.l.b16 %v195
  %v347 = vunpack.c.l.b16 %v196
  %v348 = vunpack.c.l.b16 %v197
  %v349 = vunpack.c.l.b16 %v198
  %v350 = vunpack.c.l.b16 %v199
  %v351 = vunpack.c.l.b16 %v200
  %v352 = vunpack.c.l.b16 %v201
  %v353 = vunpack.c.l.b16 %v202
  %v354 = vunpack.c.l.b16 %v203
  %v355 = vunpack.c.l.b16 %v204
  %v356 = vunpack.c.l.b16 %v205
  %v357 = vunpack.c.l.b16 %v206
  %v358 = vpack.c.b16 %v287, %v286
  %v359 = vpack.c.b16 %v289, %v288
  %v360 = vpack.c.b16 %v291, %v290
  %v361 = vpack.c.b16 %v293, %v292
  %v362 = vpack.c.b16 %v295, %v294
  %v363 = vpack.c.b16 %v297, %v296
  %v364 = vpack.c.b16 %v299, %v298
  %v365 = vpack.c.b16 %v301, %v300
  %v366 = vpack.c.b16 %v303, %v302
  %v367 = vpack.c.b16 %v305, %v304
  %v368 = vpack.c.b16 %v307, %v306
  %v369 = vpack.c.b16 %v309, %v308
  %v370 = vpack.c.b16 %v311, %v310
  %v371 = vpack.c.b16 %v313, %v312
  %v372 = vpack.c.b16 %v315, %v314
  %v373 = vpack.c.b16 %v317, %v316
  %v374 = vpack.c.b16 %v319, %v318
  %v375 = vpack.c.b16 %v321, %v320
  %v376 = vpack.c.b16 %v323, %v322
  %v377 = vpack.c.b16 %v325, %v324
  %v378 = vpack.c.b16 %v327, %v326
  %v379 = vpack.c.b16 %v329, %v328
  %v380 = vpack.c.b16 %v331, %v330
  %v381 = vpack.c.b16 %v333, %v332
  %v382 = vpack.c.b16 %v335, %v334
  %v383 = vpack.c.b16 %v337, %v336
  %v384 = vpack.c.b16 %v339, %v338
  %v385 = vpack.c.b16 %v341, %v340
  %v386 = vpack.c.b16 %v343, %v342
  %v387 = vpack.c.b16 %v345, %v344
  %v388 = vpack.c.b16 %v347, %v346
  %v389 = vpack.c.b16 %v349, %v348
  %v390 = vpack.c.b16 %v351, %v350
  %v391 = vpack.c.b16 %v353, %v352
  %v392 = vpack.c.b16 %v355, %v354
  %v393 = vpack.c.b16 %v357, %v356
  %vm430 = vcmask 523264
  %v432 = vsel %vm430, %v99, 0
  %v435 = vsel %vm430, %v104, 0
  %v438 = vsel %vm430, %v109, 0
  %v441 = vsel %vm430, %v114, 0
  %v444 = vsel %vm430, %v119, 0
  %v447 = vsel %vm430, %v124, 0
  %v450 = vsel %vm430, %v129, 0
  %v453 = vsel %vm430, %v134, 0
  %455 = vmatprep.subr.bf16.mxu0 0
  %456 = vmatpush1.bf16.msra.mxu0 %v358
  %457 = vmatprep.subr.bf16.mxu0 0
  %458 = vmatpush1.bf16.msra.mxu0 %v359
  %459 = vmatprep.subr.bf16.mxu0 0
  %460 = vmatpush1.bf16.msra.mxu0 %v360
  %461 = vmatprep.subr.bf16.mxu0 0
  %462 = vmatpush1.bf16.msra.mxu0 %v361
  %463 = vmatprep.subr.bf16.mxu0 0
  %464 = vmatpush1.bf16.msra.mxu0 %v362
  %465 = vmatprep.subr.bf16.mxu0 0
  %466 = vmatpush1.bf16.msra.mxu0 %v363
  %467 = vmatprep.subr.bf16.mxu0 0
  %468 = vmatpush1.bf16.msra.mxu0 %v364
  %469 = vmatprep.subr.bf16.mxu0 0
  %470 = vmatpush1.bf16.msra.mxu0 %v365
  %471 = vmatprep.subr.bf16.mxu0 0
  %472 = vmatpush1.bf16.msra.mxu0 %v366
  %473 = vmatprep.subr.bf16.mxu0 0
  %474 = vmatpush1.bf16.msra.mxu0 %v367
  %475 = vmatprep.subr.bf16.mxu0 0
  %476 = vmatpush1.bf16.msra.mxu0 %v368
  %477 = vmatprep.subr.bf16.mxu0 0
  %478 = vmatpush1.bf16.msra.mxu0 %v369
  %479 = vmatprep.subr.bf16.mxu0 0
  %480 = vmatpush1.bf16.msra.mxu0 %v370
  %481 = vmatprep.subr.bf16.mxu0 0
  %482 = vmatpush1.bf16.msra.mxu0 %v371
  %483 = vmatprep.subr.bf16.mxu0 0
  %484 = vmatpush1.bf16.msra.mxu0 %v372
  %485 = vmatprep.subr.bf16.mxu0 0
  %486 = vmatpush1.bf16.msra.mxu0 %v373
  %487 = vmatprep.mubr.bf16.mxu0 %v96
  %488 = vmatmul.mubr.bf16.gmra.mrb[0].mxu0 %v95
  %v489 = vpop.f32.mrb[0].mxu0
  %v490 = vadd.f32 %v212, %v489
  %v491 = vpop.f32.mrb[0].mxu0
  %v492 = vpop.f32.mrb[0].mxu0
  %v493 = vadd.f32 %v212, %v492
  %v494 = vpop.f32.mrb[0].mxu0
  %495 = vmatprep.mubr.bf16.mxu0 %v101
  %496 = vmatmul.mubr.bf16.gmra.mrb[0].mxu0 %v100
  %v497 = vpop.f32.mrb[0].mxu0
  %v498 = vadd.f32 %v212, %v497
  %v499 = vpop.f32.mrb[0].mxu0
  %v500 = vpop.f32.mrb[0].mxu0
  %v501 = vadd.f32 %v212, %v500
  %v502 = vpop.f32.mrb[0].mxu0
  %503 = vmatprep.mubr.bf16.mxu0 %v106
  %504 = vmatmul.mubr.bf16.gmra.mrb[0].mxu0 %v105
  %v505 = vpop.f32.mrb[0].mxu0
  %v506 = vadd.f32 %v212, %v505
  %v507 = vpop.f32.mrb[0].mxu0
  %v508 = vpop.f32.mrb[0].mxu0
  %v509 = vadd.f32 %v212, %v508
  %v510 = vpop.f32.mrb[0].mxu0
  %511 = vmatprep.mubr.bf16.mxu0 %v111
  %512 = vmatmul.mubr.bf16.gmra.mrb[0].mxu0 %v110
  %v513 = vpop.f32.mrb[0].mxu0
  %v514 = vadd.f32 %v212, %v513
  %v515 = vpop.f32.mrb[0].mxu0
  %v516 = vpop.f32.mrb[0].mxu0
  %v517 = vadd.f32 %v212, %v516
  %v518 = vpop.f32.mrb[0].mxu0
  %519 = vmatprep.mubr.bf16.mxu0 %v116
  %520 = vmatmul.mubr.bf16.gmra.mrb[0].mxu0 %v115
  %v521 = vpop.f32.mrb[0].mxu0
  %v522 = vadd.f32 %v212, %v521
  %v523 = vpop.f32.mrb[0].mxu0
  %v524 = vpop.f32.mrb[0].mxu0
  %v525 = vadd.f32 %v212, %v524
  %v526 = vpop.f32.mrb[0].mxu0
  %527 = vmatprep.mubr.bf16.mxu0 %v121
  %528 = vmatmul.mubr.bf16.gmra.mrb[0].mxu0 %v120
  %v529 = vpop.f32.mrb[0].mxu0
  %v530 = vadd.f32 %v212, %v529
  %v531 = vpop.f32.mrb[0].mxu0
  %v532 = vpop.f32.mrb[0].mxu0
  %v533 = vadd.f32 %v212, %v532
  %v534 = vpop.f32.mrb[0].mxu0
  %535 = vmatprep.mubr.bf16.mxu0 %v126
  %536 = vmatmul.mubr.bf16.gmra.mrb[0].mxu0 %v125
  %v537 = vpop.f32.mrb[0].mxu0
  %v538 = vadd.f32 %v212, %v537
  %v539 = vpop.f32.mrb[0].mxu0
  %v540 = vpop.f32.mrb[0].mxu0
  %v541 = vadd.f32 %v212, %v540
  %v542 = vpop.f32.mrb[0].mxu0
  %543 = vmatprep.mubr.bf16.mxu0 %v131
  %544 = vmatmul.mubr.bf16.gmra.mrb[0].mxu0 %v130
  %v545 = vpop.f32.mrb[0].mxu0
  %v546 = vadd.f32 %v212, %v545
  %v547 = vpop.f32.mrb[0].mxu0
  %v548 = vpop.f32.mrb[0].mxu0
  %v549 = vadd.f32 %v212, %v548
  %v550 = vpop.f32.mrb[0].mxu0
  %551 = vdwg.mxu0
  %552 = vmatprep.subr.bf16.mxu0 0
  %553 = vmatpush1.bf16.msra.mxu0 %v374
  %554 = vmatprep.subr.bf16.mxu0 0
  %555 = vmatpush1.bf16.msra.mxu0 %v375
  %556 = vmatprep.subr.bf16.mxu0 0
  %557 = vmatpush1.bf16.msra.mxu0 %v376
  %558 = vmatprep.subr.bf16.mxu0 0
  %559 = vmatpush1.bf16.msra.mxu0 %v377
  %560 = vmatprep.subr.bf16.mxu0 0
  %561 = vmatpush1.bf16.msra.mxu0 %v378
  %562 = vmatprep.subr.bf16.mxu0 0
  %563 = vmatpush1.bf16.msra.mxu0 %v379
  %564 = vmatprep.subr.bf16.mxu0 0
  %565 = vmatpush1.bf16.msra.mxu0 %v380
  %566 = vmatprep.subr.bf16.mxu0 0
  %567 = vmatpush1.bf16.msra.mxu0 %v381
  %568 = vmatprep.subr.bf16.mxu0 0
  %569 = vmatpush1.bf16.msra.mxu0 %v382
  %570 = vmatprep.subr.bf16.mxu0 0
  %571 = vmatpush1.bf16.msra.mxu0 %v383
  %572 = vmatprep.subr.bf16.mxu0 0
  %573 = vmatpush1.bf16.msra.mxu0 %v384
  %574 = vmatprep.subr.bf16.mxu0 0
  %575 = vmatpush1.bf16.msra.mxu0 %v385
  %576 = vmatprep.subr.bf16.mxu0 0
  %577 = vmatpush1.bf16.msra.mxu0 %v386
  %578 = vmatprep.subr.bf16.mxu0 0
  %579 = vmatpush1.bf16.msra.mxu0 %v387
  %580 = vmatprep.subr.bf16.mxu0 0
  %581 = vmatpush1.bf16.msra.mxu0 %v388
  %582 = vmatprep.subr.bf16.mxu0 0
  %583 = vmatpush1.bf16.msra.mxu0 %v389
  %584 = vmatprep.mubr.bf16.mxu0 %v98
  %585 = vmatmul.mubr.bf16.gmra.mrb[0].mxu0 %v97
  %v586 = vpop.f32.mrb[0].mxu0
  %v587 = vadd.f32 %v490, %v586
  %v588 = vpop.f32.mrb[0].mxu0
  %v589 = vpop.f32.mrb[0].mxu0
  %v590 = vadd.f32 %v493, %v589
  %v591 = vpop.f32.mrb[0].mxu0
  %592 = vmatprep.mubr.bf16.mxu0 %v103
  %593 = vmatmul.mubr.bf16.gmra.mrb[0].mxu0 %v102
  %v594 = vpop.f32.mrb[0].mxu0
  %v595 = vadd.f32 %v498, %v594
  %v596 = vpop.f32.mrb[0].mxu0
  %v597 = vpop.f32.mrb[0].mxu0
  %v598 = vadd.f32 %v501, %v597
  %v599 = vpop.f32.mrb[0].mxu0
  %600 = vmatprep.mubr.bf16.mxu0 %v108
  %601 = vmatmul.mubr.bf16.gmra.mrb[0].mxu0 %v107
  %v602 = vpop.f32.mrb[0].mxu0
  %v603 = vadd.f32 %v506, %v602
  %v604 = vpop.f32.mrb[0].mxu0
  %v605 = vpop.f32.mrb[0].mxu0
  %v606 = vadd.f32 %v509, %v605
  %v607 = vpop.f32.mrb[0].mxu0
  %608 = vmatprep.mubr.bf16.mxu0 %v113
  %609 = vmatmul.mubr.bf16.gmra.mrb[0].mxu0 %v112
  %v610 = vpop.f32.mrb[0].mxu0
  %v611 = vadd.f32 %v514, %v610
  %v612 = vpop.f32.mrb[0].mxu0
  %v613 = vpop.f32.mrb[0].mxu0
  %v614 = vadd.f32 %v517, %v613
  %v615 = vpop.f32.mrb[0].mxu0
  %616 = vmatprep.mubr.bf16.mxu0 %v118
  %617 = vmatmul.mubr.bf16.gmra.mrb[0].mxu0 %v117
  %v618 = vpop.f32.mrb[0].mxu0
  %v619 = vadd.f32 %v522, %v618
  %v620 = vpop.f32.mrb[0].mxu0
  %v621 = vpop.f32.mrb[0].mxu0
  %v622 = vadd.f32 %v525, %v621
  %v623 = vpop.f32.mrb[0].mxu0
  %624 = vmatprep.mubr.bf16.mxu0 %v123
  %625 = vmatmul.mubr.bf16.gmra.mrb[0].mxu0 %v122
  %v626 = vpop.f32.mrb[0].mxu0
  %v627 = vadd.f32 %v530, %v626
  %v628 = vpop.f32.mrb[0].mxu0
  %v629 = vpop.f32.mrb[0].mxu0
  %v630 = vadd.f32 %v533, %v629
  %v631 = vpop.f32.mrb[0].mxu0
  %632 = vmatprep.mubr.bf16.mxu0 %v128
  %633 = vmatmul.mubr.bf16.gmra.mrb[0].mxu0 %v127
  %v634 = vpop.f32.mrb[0].mxu0
  %v635 = vadd.f32 %v538, %v634
  %v636 = vpop.f32.mrb[0].mxu0
  %v637 = vpop.f32.mrb[0].mxu0
  %v638 = vadd.f32 %v541, %v637
  %v639 = vpop.f32.mrb[0].mxu0
  %640 = vmatprep.mubr.bf16.mxu0 %v133
  %641 = vmatmul.mubr.bf16.gmra.mrb[0].mxu0 %v132
  %v642 = vpop.f32.mrb[0].mxu0
  %v643 = vadd.f32 %v546, %v642
  %v644 = vpop.f32.mrb[0].mxu0
  %v645 = vpop.f32.mrb[0].mxu0
  %v646 = vadd.f32 %v549, %v645
  %v647 = vpop.f32.mrb[0].mxu0
  %648 = vdwg.mxu0
  %649 = vmatprep.subr.bf16.mxu0 0
  %650 = vmatpush1.bf16.msra.mxu0 %v390
  %651 = vmatprep.subr.bf16.mxu0 0
  %652 = vmatpush1.bf16.msra.mxu0 %v391
  %653 = vmatprep.subr.bf16.mxu0 0
  %654 = vmatpush1.bf16.msra.mxu0 %v392
  %655 = vmatprep.subr.bf16.mxu0 0
  %656 = vmatpush1.bf16.msra.mxu0 %v393
  %657 = vmatprep.subr.bf16.mxu0 0
  %658 = vmatpush1.bf16.msra.mxu0 0
  %659 = vmatprep.subr.bf16.mxu0 0
  %660 = vmatpush1.bf16.msra.mxu0 0
  %661 = vmatprep.subr.bf16.mxu0 0
  %662 = vmatpush1.bf16.msra.mxu0 0
  %663 = vmatprep.subr.bf16.mxu0 0
  %664 = vmatpush1.bf16.msra.mxu0 0
  %665 = vmatprep.subr.bf16.mxu0 0
  %666 = vmatpush1.bf16.msra.mxu0 0
  %667 = vmatprep.subr.bf16.mxu0 0
  %668 = vmatpush1.bf16.msra.mxu0 0
  %669 = vmatprep.subr.bf16.mxu0 0
  %670 = vmatpush1.bf16.msra.mxu0 0
  %671 = vmatprep.subr.bf16.mxu0 0
  %672 = vmatpush1.bf16.msra.mxu0 0
  %673 = vmatprep.subr.bf16.mxu0 0
  %674 = vmatpush1.bf16.msra.mxu0 0
  %675 = vmatprep.subr.bf16.mxu0 0
  %676 = vmatpush1.bf16.msra.mxu0 0
  %677 = vmatprep.subr.bf16.mxu0 0
  %678 = vmatpush1.bf16.msra.mxu0 0
  %679 = vmatprep.subr.bf16.mxu0 0
  %680 = vmatpush1.bf16.msra.mxu0 0
  %681 = vmatprep.mubr.bf16.mxu0 0
  %682 = vmatmul.mubr.bf16.gmra.mrb[0].mxu0 %v432
  %v683 = vpop.f32.mrb[0].mxu0
  %v684 = vadd.f32 %v587, %v683
  %v685 = vpop.f32.mrb[0].mxu0
  %v686 = vpop.f32.mrb[0].mxu0
  %v687 = vadd.f32 %v590, %v686
  %v688 = vpop.f32.mrb[0].mxu0
  %689 = vmatprep.mubr.bf16.mxu0 0
  %690 = vmatmul.mubr.bf16.gmra.mrb[0].mxu0 %v435
  %v691 = vpop.f32.mrb[0].mxu0
  %v692 = vadd.f32 %v595, %v691
  %v693 = vpop.f32.mrb[0].mxu0
  %v694 = vpop.f32.mrb[0].mxu0
  %v695 = vadd.f32 %v598, %v694
  %v696 = vpop.f32.mrb[0].mxu0
  %697 = vmatprep.mubr.bf16.mxu0 0
  %698 = vmatmul.mubr.bf16.gmra.mrb[0].mxu0 %v438
  %v699 = vpop.f32.mrb[0].mxu0
  %v700 = vadd.f32 %v603, %v699
  %v701 = vpop.f32.mrb[0].mxu0
  %v702 = vpop.f32.mrb[0].mxu0
  %v703 = vadd.f32 %v606, %v702
  %v704 = vpop.f32.mrb[0].mxu0
  %705 = vmatprep.mubr.bf16.mxu0 0
  %706 = vmatmul.mubr.bf16.gmra.mrb[0].mxu0 %v441
  %v707 = vpop.f32.mrb[0].mxu0
  %v708 = vadd.f32 %v611, %v707
  %v709 = vpop.f32.mrb[0].mxu0
  %v710 = vpop.f32.mrb[0].mxu0
  %v711 = vadd.f32 %v614, %v710
  %v712 = vpop.f32.mrb[0].mxu0
  %713 = vmatprep.mubr.bf16.mxu0 0
  %714 = vmatmul.mubr.bf16.gmra.mrb[0].mxu0 %v444
  %v715 = vpop.f32.mrb[0].mxu0
  %v716 = vadd.f32 %v619, %v715
  %v717 = vpop.f32.mrb[0].mxu0
  %v718 = vpop.f32.mrb[0].mxu0
  %v719 = vadd.f32 %v622, %v718
  %v720 = vpop.f32.mrb[0].mxu0
  %721 = vmatprep.mubr.bf16.mxu0 0
  %722 = vmatmul.mubr.bf16.gmra.mrb[0].mxu0 %v447
  %v723 = vpop.f32.mrb[0].mxu0
  %v724 = vadd.f32 %v627, %v723
  %v725 = vpop.f32.mrb[0].mxu0
  %v726 = vpop.f32.mrb[0].mxu0
  %v727 = vadd.f32 %v630, %v726
  %v728 = vpop.f32.mrb[0].mxu0
  %729 = vmatprep.mubr.bf16.mxu0 0
  %730 = vmatmul.mubr.bf16.gmra.mrb[0].mxu0 %v450
  %v731 = vpop.f32.mrb[0].mxu0
  %v732 = vadd.f32 %v635, %v731
  %v733 = vpop.f32.mrb[0].mxu0
  %v734 = vpop.f32.mrb[0].mxu0
  %v735 = vadd.f32 %v638, %v734
  %v736 = vpop.f32.mrb[0].mxu0
  %737 = vmatprep.mubr.bf16.mxu0 0
  %738 = vmatmul.mubr.bf16.gmra.mrb[0].mxu0 %v453
  %v739 = vpop.f32.mrb[0].mxu0
  %v740 = vadd.f32 %v643, %v739
  %v741 = vpop.f32.mrb[0].mxu0
  %v742 = vpop.f32.mrb[0].mxu0
  %v743 = vadd.f32 %v646, %v742
  %v744 = vpop.f32.mrb[0].mxu0
  %745 = vdwg.mxu0
  %v746 = vmax.f32 %v684, 0.0
  %v747 = vmax.f32 %v687, 0.0
  %v748 = vmax.f32 %v692, 0.0
  %v749 = vmax.f32 %v695, 0.0
  %v750 = vmax.f32 %v700, 0.0
  %v751 = vmax.f32 %v703, 0.0
  %v752 = vmax.f32 %v708, 0.0
  %v753 = vmax.f32 %v711, 0.0
  %v754 = vmax.f32 %v716, 0.0
  %v755 = vmax.f32 %v719, 0.0
  %v756 = vmax.f32 %v724, 0.0
  %v757 = vmax.f32 %v727, 0.0
  %v758 = vmax.f32 %v732, 0.0
  %v759 = vmax.f32 %v735, 0.0
  %v760 = vmax.f32 %v740, 0.0
  %v761 = vmax.f32 %v743, 0.0
  %762 = vst.msk [vmem:[%s3] sm:$0xff] %vm430, %v746
  %763 = vst.msk [vmem:[%s3 + $0x8] sm:$0xff] %vm430, %v747
  %764 = vst.msk [vmem:[%s3 + $0x10] sm:$0xff] %vm430, %v748
  %765 = vst.msk [vmem:[%s3 + $0x18] sm:$0xff] %vm430, %v749
  %766 = vst.msk [vmem:[%s3 + $0x20] sm:$0xff] %vm430, %v750
  %767 = vst.msk [vmem:[%s3 + $0x28] sm:$0xff] %vm430, %v751
  %768 = vst.msk [vmem:[%s3 + $0x30] sm:$0xff] %vm430, %v752
  %769 = vst.msk [vmem:[%s3 + $0x38] sm:$0xff] %vm430, %v753
  %770 = vst.msk [vmem:[%s3 + $0x40] sm:$0xff] %vm430, %v754
  %771 = vst.msk [vmem:[%s3 + $0x48] sm:$0xff] %vm430, %v755
  %772 = vst.msk [vmem:[%s3 + $0x50] sm:$0xff] %vm430, %v756
  %773 = vst.msk [vmem:[%s3 + $0x58] sm:$0xff] %vm430, %v757
  %774 = vst.msk [vmem:[%s3 + $0x60] sm:$0xff] %vm430, %v758
  %775 = vst.msk [vmem:[%s3 + $0x68] sm:$0xff] %vm430, %v759
  %776 = vst.msk [vmem:[%s3 + $0x70] sm:$0xff] %vm430, %v760
  %777 = vst.msk [vmem:[%s3 + $0x78] sm:$0xff] %vm430, %v761
  // Predicated region
  $region14: #{fluentnet_forward.130} parent=0 // pred_check
    _
  $region15: #{fluentnet_forward.130} parent=0 // pred_check_branch
    %779 = sbr.rel (0) target = $region17
  $region16: #{fluentnet_forward.130} parent=0 // pred_region
    _
  $region17: #{fluentnet_forward.130} parent=0 // pred_fallthru
    _
  // Predicated region
  $region18: #{fluentnet_forward.130} parent=0 // pred_check
    _
  $region19: #{fluentnet_forward.130} parent=0 // pred_check_branch
    %781 = sbr.rel (0) target = $region21
  $region20: #{fluentnet_forward.130} parent=0 // pred_region
    _
  $region21: #{fluentnet_forward.130} parent=0 // pred_fallthru
    _

// kernel: fluentnet_forward.142
$region0: #{fluentnet_forward.142}
  #allocation0 [shape = 'u32[]', space=smem, size = 0x4, offset = 0x4, fixed_abs, tag = 'smem constant byte address 0x4 - core index']
  #allocation1 [shape = 'u32[144,128]{1,0:T(1,128)}', space=vmem, size = 0x12000, scoped, tag = 'internal scratch']
  #allocation2 [shape = 'f32[64,32]{1,0:T(8,128)}', space=vmem, size = 0x8000, scoped, tag = 'scratch operand']
  #allocation3 [shape = 'f32[64,32]{1,0:T(8,128)}', space=vmem, size = 0x8000, scoped, tag = 'scratch operand']
  %s0 = inlined_call_operand.vmem [shape: f32[2,64,64], index: 0, kind: input, shape index: {}]
  %s1 = inlined_call_operand.vmem [shape: f32[2,64,128], index: 1, kind: input, shape index: {}]
  %s2 = inlined_call_operand.vmem [shape: f32[2,32,128], index: 2, kind: input, shape index: {}]
  %s3 = inlined_call_operand.vmem [shape: f32[2,1,128], index: 3, kind: input, shape index: {}]
  %s4 = inlined_call_operand.vmem [shape: f32[2,2,64,32], index: 4, kind: output, shape index: {}]
  %s5 = sld [smem:[#allocation0]]
  $region53: #{fluentnet_forward.142} parent=0
    _
  %s7 = ssub.s32 1, %s5
  %s8 = scalar_select 0, %s7, %s5
  loop: start=0, step=1, limit=6
  $region2: #{fluentnet_forward.142} parent=0 // loop_pre_header
    _
  $region3: #{fluentnet_forward.142} parent=0 // loop_header
    %s10 = sphi 0, %s14
    %p11 = scmp.ge.s32.totalorder %s10, 6
    %s17 = sphi 0, %s29
    %s18 = sphi 0, %s25
    %s19 = sphi 0, %s17
    %s20 = sphi 0, %s18
    %s21 = sphi 0, %s19
    %s22 = sphi 0, %s20
    %s40 = sphi 0, %s42
    %s43 = sphi 0, %s40
    %s44 = sphi 0, %s43
    %s60 = sphi 0, %s44
    %s66 = sphi 0, %s68
    %s69 = sphi 0, %s66
    %s70 = sphi 0, %s69
    %s86 = sphi 0, %s70
    %s92 = sphi 0, %s94
    %s95 = sphi 0, %s92
    %s96 = sphi 0, %s95
    %s112 = sphi 0, %s96
    %s118 = sphi 0, %s120
    %s121 = sphi 0, %s118
    %s122 = sphi 0, %s121
    %s138 = sphi 0, %s122
    %s154 = sphi 0, %s156
    %s157 = sphi 0, %s154
    %s158 = sphi 0, %s157
    %s174 = sphi 0, %s158
  $region4: #{fluentnet_forward.142} parent=0 // loop_header_branch
    %13 = sbr.rel (%p11) target = $region8
  $region5: #{fluentnet_forward.142} parent=0 // loop_body
    %s15 = ssub.s32 %s10, 1
    %s16 = ssub.s32 %s10, 2
    %s23 = sadd.s32 1, %s18
    %p24 = scmp.ge.s32.totalorder %s23, 2
    %s25 = scalar_select %p24, 0, %s23
    %s26 = sadd.s32 1, %s17
    %s27 = scalar_select %p24, %s26, %s17
    %p28 = scmp.ge.s32.totalorder %s27, 2
    %s29 = scalar_select %p28, 0, %s27
    %s30 = smul.u32 %s18, 2
    %s31 = ssub.s32 1, %s30
    %s32 = smul.u32 %s17, %s31
    %s33 = sadd.s32 %s18, %s32
    %s34 = smul.u32 %s25, 2
    %s35 = ssub.s32 1, %s34
    %s36 = smul.u32 %s29, %s35
    %s37 = sadd.s32 %s25, %s36
    %s38 = ssub.s32 %s33, %s37
    %p39 = scmp.eq.s32.totalorder %s38, 0
    %s41 = sadd.s32 %s40, 1
    %s42 = scalar_select %p39, %s40, %s41
    %p45 = pneg %p39
    %p46 = scmp.eq.s32.totalorder %s10, 3
    %p47 = por %p45, %p46
    %p48 = scmp.ne.s32.totalorder %s40, %s43
    %p49 = scmp.eq.s32.totalorder %s10, 0
    %p50 = por %p48, %p49
    %p51 = scmp.ne.s32.totalorder %s40, %s43
    %p52 = scmp.eq.s32.totalorder %s15, 3
    %p53 = por %p51, %p52
    %p54 = scmp.ne.s32.totalorder %s43, %s44
    %p55 = scmp.eq.s32.totalorder %s15, 0
    %p56 = por %p54, %p55
    %p57 = scmp.ne.s32.totalorder %s43, %s44
    %p58 = scmp.eq.s32.totalorder %s16, 3
    %p59 = por %p57, %p58
    %p61 = scmp.ne.s32.totalorder %s44, %s60
    %p62 = scmp.eq.s32.totalorder %s16, 0
    %p63 = por %p61, %p62
    %s64 = ssub.s32 %s17, %s29
    %p65 = scmp.eq.s32.totalorder %s64, 0
    %s67 = sadd.s32 %s66, 1
    %s68 = scalar_select %p65, %s66, %s67
    %p71 = pneg %p65
    %p72 = scmp.eq.s32.totalorder %s10, 3
    %p73 = por %p71, %p72
    %p74 = scmp.ne.s32.totalorder %s66, %s69
    %p75 = scmp.eq.s32.totalorder %s10, 0
    %p76 = por %p74, %p75
    %p77 = scmp.ne.s32.totalorder %s66, %s69
    %p78 = scmp.eq.s32.totalorder %s15, 3
    %p79 = por %p77, %p78
    %p80 = scmp.ne.s32.totalorder %s69, %s70
    %p81 = scmp.eq.s32.totalorder %s15, 0
    %p82 = por %p80, %p81
    %p83 = scmp.ne.s32.totalorder %s69, %s70
    %p84 = scmp.eq.s32.totalorder %s16, 3
    %p85 = por %p83, %p84
    %p87 = scmp.ne.s32.totalorder %s70, %s86
    %p88 = scmp.eq.s32.totalorder %s16, 0
    %p89 = por %p87, %p88
    %s90 = ssub.s32 %s17, %s29
    %p91 = scmp.eq.s32.totalorder %s90, 0
    %s93 = sadd.s32 %s92, 1
    %s94 = scalar_select %p91, %s92, %s93
    %p97 = pneg %p91
    %p98 = scmp.eq.s32.totalorder %s10, 3
    %p99 = por %p97, %p98
    %p100 = scmp.ne.s32.totalorder %s92, %s95
    %p101 = scmp.eq.s32.totalorder %s10, 0
    %p102 = por %p100, %p101
    %p103 = scmp.ne.s32.totalorder %s92, %s95
    %p104 = scmp.eq.s32.totalorder %s15, 3
    %p105 = por %p103, %p104
    %p106 = scmp.ne.s32.totalorder %s95, %s96
    %p107 = scmp.eq.s32.totalorder %s15, 0
    %p108 = por %p106, %p107
    %p109 = scmp.ne.s32.totalorder %s95, %s96
    %p110 = scmp.eq.s32.totalorder %s16, 3
    %p111 = por %p109, %p110
    %p113 = scmp.ne.s32.totalorder %s96, %s112
    %p114 = scmp.eq.s32.totalorder %s16, 0
    %p115 = por %p113, %p114
    %s116 = ssub.s32 %s17, %s29
    %p117 = scmp.eq.s32.totalorder %s116, 0
    %s119 = sadd.s32 %s118, 1
    %s120 = scalar_select %p117, %s118, %s119
    %p123 = pneg %p117
    %p124 = scmp.eq.s32.totalorder %s10, 3
    %p125 = por %p123, %p124
    %p126 = scmp.ne.s32.totalorder %s118, %s121
    %p127 = scmp.eq.s32.totalorder %s10, 0
    %p128 = por %p126, %p127
    %p129 = scmp.ne.s32.totalorder %s118, %s121
    %p130 = scmp.eq.s32.totalorder %s15, 3
    %p131 = por %p129, %p130
    %p132 = scmp.ne.s32.totalorder %s121, %s122
    %p133 = scmp.eq.s32.totalorder %s15, 0
    %p134 = por %p132, %p133
    %p135 = scmp.ne.s32.totalorder %s121, %s122
    %p136 = scmp.eq.s32.totalorder %s16, 3
    %p137 = por %p135, %p136
    %p139 = scmp.ne.s32.totalorder %s122, %s138
    %p140 = scmp.eq.s32.totalorder %s16, 0
    %p141 = por %p139, %p140
    %s142 = smul.u32 %s18, 2
    %s143 = ssub.s32 1, %s142
    %s144 = smul.u32 %s17, %s143
    %s145 = sadd.s32 %s18, %s144
    %s146 = smul.u32 %s25, 2
    %s147 = ssub.s32 1, %s146
    %s148 = smul.u32 %s29, %s147
    %s149 = sadd.s32 %s25, %s148
    %s150 = ssub.s32 %s17, %s29
    %s151 = ssub.s32 %s145, %s149
    %s152 = sor.u32 %s150, %s151
    %p153 = scmp.eq.s32.totalorder %s152, 0
    %s155 = sadd.s32 %s154, 1
    %s156 = scalar_select %p153, %s154, %s155
    %p159 = pneg %p153
    %p160 = scmp.eq.s32.totalorder %s10, 3
    %p161 = por %p159, %p160
    %p162 = scmp.ne.s32.totalorder %s154, %s157
    %p163 = scmp.eq.s32.totalorder %s10, 0
    %p164 = por %p162, %p163
    %p165 = scmp.ne.s32.totalorder %s154, %s157
    %p166 = scmp.eq.s32.totalorder %s15, 3
    %p167 = por %p165, %p166
    %p168 = scmp.ne.s32.totalorder %s157, %s158
    %p169 = scmp.eq.s32.totalorder %s15, 0
    %p170 = por %p168, %p169
    %p171 = scmp.ne.s32.totalorder %s157, %s158
    %p172 = scmp.eq.s32.totalorder %s16, 3
    %p173 = por %p171, %p172
    %p175 = scmp.ne.s32.totalorder %s158, %s174
    %p176 = scmp.eq.s32.totalorder %s16, 0
    %p177 = por %p175, %p176
    %p178 = scmp.le.s32.totalorder 1, %s10
    %p179 = scmp.lt.s32.totalorder %s10, 5
    %p180 = pnand %p178, %p179
    %p181 = pneg %p180
    // Predicated region
    $region9: #{fluentnet_forward.142} parent=5 // pred_check
      _
    $region10: #{fluentnet_forward.142} parent=5 // pred_check_branch
      %183 = sbr.rel (%p180) target = $region12
    $region11: #{fluentnet_forward.142} parent=5 // pred_region
      %s184 = ssub.s32 %s10, 1
    $region12: #{fluentnet_forward.142} parent=5 // pred_fallthru
      _
    %p185 = scmp.lt.s32.totalorder %s10, 4
    // Predicated region
    $region13: #{fluentnet_forward.142} parent=5 // pred_check
      %p186 = pneg %p185
    $region14: #{fluentnet_forward.142} parent=5 // pred_check_branch
      %188 = sbr.rel (%p186) target = $region16
    $region15: #{fluentnet_forward.142} parent=5 // pred_region
      // Predicated region
      $region17: #{fluentnet_forward.142} parent=15 // pred_check
        %p189 = pneg %p50
      $region18: #{fluentnet_forward.142} parent=15 // pred_check_branch
        %191 = sbr.rel (%p189) target = $region20
      $region19: #{fluentnet_forward.142} parent=15 // pred_region
        %s192 = smul.u32 %s18, 2
        %s193 = ssub.s32 1, %s192
        %s194 = smul.u32 %s17, %s193
        %s195 = sadd.s32 %s18, %s194
        %p196 = scmp.lt.s32.totalorder %s195, 1
        %s197 = scalar_select %p196, %s195, 1
        %s198 = smul.addr %s197, 8
        %s199 = smul.addr %s198, 8
        %s200 = scalar_lea.vmem %s0, %s199
        %s201 = smul.u32 %s18, 2
        %s202 = ssub.s32 1, %s201
        %s203 = smul.u32 %s17, %s202
        %s204 = sadd.s32 %s18, %s203
      $region20: #{fluentnet_forward.142} parent=15 // pred_fallthru
        _
      // Predicated region
      $region21: #{fluentnet_forward.142} parent=15 // pred_check
        %p205 = pneg %p76
      $region22: #{fluentnet_forward.142} parent=15 // pred_check_branch
        %207 = sbr.rel (%p205) target = $region24
      $region23: #{fluentnet_forward.142} parent=15 // pred_region
        %p208 = scmp.lt.s32.totalorder %s17, 1
        %s209 = scalar_select %p208, %s17, 1
        %s210 = smul.addr %s209, 8
        %s211 = smul.addr %s210, 8
        %s212 = scalar_lea.vmem %s1, %s211
      $region24: #{fluentnet_forward.142} parent=15 // pred_fallthru
        _
      // Predicated region
      $region25: #{fluentnet_forward.142} parent=15 // pred_check
        %p213 = pneg %p102
      $region26: #{fluentnet_forward.142} parent=15 // pred_check_branch
        %215 = sbr.rel (%p213) target = $region28
      $region27: #{fluentnet_forward.142} parent=15 // pred_region
        %p216 = scmp.lt.s32.totalorder %s17, 1
        %s217 = scalar_select %p216, %s17, 1
        %s218 = smul.addr %s217, 4
        %s219 = smul.addr %s218, 8
        %s220 = scalar_lea.vmem %s2, %s219
      $region28: #{fluentnet_forward.142} parent=15 // pred_fallthru
        _
      // Predicated region
      $region29: #{fluentnet_forward.142} parent=15 // pred_check
        %p221 = pneg %p128
      $region30: #{fluentnet_forward.142} parent=15 // pred_check_branch
        %223 = sbr.rel (%p221) target = $region32
      $region31: #{fluentnet_forward.142} parent=15 // pred_region
        %p224 = scmp.lt.s32.totalorder %s17, 1
        %s225 = scalar_select %p224, %s17, 1
        %s226 = scalar_lea.vmem %s3, %s225
      $region32: #{fluentnet_forward.142} parent=15 // pred_fallthru
        _
    $region16: #{fluentnet_forward.142} parent=5 // pred_fallthru
      _
    %p227 = scmp.le.s32.totalorder 1, %s10
    %p228 = scmp.lt.s32.totalorder %s10, 5
    %p229 = pnand %p227, %p228
    %p230 = pneg %p229
    // Predicated region
    $region33: #{fluentnet_forward.142} parent=5 // pred_check
      _
    $region34: #{fluentnet_forward.142} parent=5 // pred_check_branch
      %232 = sbr.rel (%p229) target = $region36
    $region35: #{fluentnet_forward.142} parent=5 // pred_region
      %s233 = ssub.s32 %s10, 1
      %s234 = smul.u32 %s20, 2
      %s235 = ssub.s32 1, %s234
      %s236 = smul.u32 %s19, %s235
      %s237 = sadd.s32 %s20, %s236
      %p238 = scmp.lt.s32.totalorder %s237, 1
      %s239 = scalar_select %p238, %s237, 1
      %s240 = smul.addr %s239, 8
      %s241 = smul.addr %s240, 8
      %s242 = scalar_lea.vmem %s0, %s241
      %p243 = pneg %p56
      %p244 = pneg %p53
      %p245 = scmp.lt.s32.totalorder %s19, 1
      %s246 = scalar_select %p245, %s19, 1
      %s247 = smul.addr %s246, 8
      %s248 = smul.addr %s247, 8
      %s249 = scalar_lea.vmem %s1, %s248
      %p250 = pneg %p82
      %p251 = pneg %p79
      %p252 = scmp.lt.s32.totalorder %s19, 1
      %s253 = scalar_select %p252, %s19, 1
      %s254 = smul.addr %s253, 4
      %s255 = smul.addr %s254, 8
      %s256 = scalar_lea.vmem %s2, %s255
      %p257 = pneg %p108
      %p258 = pneg %p105
      %p259 = scmp.lt.s32.totalorder %s19, 1
      %s260 = scalar_select %p259, %s19, 1
      %s261 = scalar_lea.vmem %s3, %s260
      %p262 = pneg %p134
      %p263 = pneg %p131
      %p264 = pneg %p170
      %p265 = pneg %p167
      %s266 = smul.u32 %s20, 2
      %s267 = ssub.s32 1, %s266
      %s268 = smul.u32 %s19, %s267
      %s269 = sadd.s32 %s20, %s268
      %p270 = scmp.lt.s32.totalorder %s19, 1
      %s271 = scalar_select %p270, %s19, 1
      %p272 = scmp.lt.s32.totalorder %s269, 1
      %s273 = scalar_select %p272, %s269, 1
      %s274 = smul.addr %s273, 8
      %s275 = smul.addr %s271, 16
      %s276 = sadd.s32 %s274, %s275
      %s277 = smul.addr %s276, 8
      %s278 = scalar_lea.vmem %s4, %s277
      %s279 = smul.u32 %s20, 2
      %s280 = ssub.s32 1, %s279
      %s281 = smul.u32 %s19, %s280
      %s282 = sadd.s32 %s20, %s281
      %p283 = scmp.lt.s32.totalorder %s282, 1
      %s284 = scalar_select %p283, %s282, 1
      %s285 = smul.addr %s284, 8
      %s286 = smul.addr %s285, 8
      %s287 = scalar_lea.vmem %s0, %s286
      %s288 = smul.u32 %s20, 2
      %s289 = ssub.s32 1, %s288
      %s290 = smul.u32 %s19, %s289
      %s291 = sadd.s32 %s20, %s290
      %p292 = scmp.lt.s32.totalorder %s19, 1
      %s293 = scalar_select %p292, %s19, 1
      %s294 = smul.addr %s293, 8
      %s295 = smul.addr %s294, 8
      %s296 = scalar_lea.vmem %s1, %s295
      %p297 = scmp.lt.s32.totalorder %s19, 1
      %s298 = scalar_select %p297, %s19, 1
      %s299 = smul.addr %s298, 4
      %s300 = smul.addr %s299, 8
      %s301 = scalar_lea.vmem %s2, %s300
      %p302 = scmp.lt.s32.totalorder %s19, 1
      %s303 = scalar_select %p302, %s19, 1
      %s304 = scalar_lea.vmem %s3, %s303
      %s305 = smul.u32 %s20, 2
      %s306 = ssub.s32 1, %s305
      %s307 = smul.u32 %s19, %s306
      %s308 = sadd.s32 %s20, %s307
      %p309 = scmp.lt.s32.totalorder %s19, 1
      %s310 = scalar_select %p309, %s19, 1
      %p311 = scmp.lt.s32.totalorder %s308, 1
      %s312 = scalar_select %p311, %s308, 1
      %s313 = smul.addr %s312, 8
      %s314 = smul.addr %s310, 16
      %s315 = sadd.s32 %s313, %s314
      %s316 = smul.addr %s315, 8
      %s317 = scalar_lea.vmem %s4, %s316
      %s318 = smul.u32 %s20, 2
      %s319 = ssub.s32 1, %s318
      %s320 = smul.u32 %s19, %s319
      %s321 = sadd.s32 %s20, %s320
      %p322 = scmp.eq.s32.totalorder %s20, 0
      // Predicated region
      $region37: #{fluentnet_forward.142} parent=35 // pred_check
        %p323 = pneg %p322
      $region38: #{fluentnet_forward.142} parent=35 // pred_check_branch
        %325 = sbr.rel (%p323) target = $region40
      $region39: #{fluentnet_forward.142} parent=35 // pred_region
        %vm326 = vcmask 261120
        %327 = vst.msk [vmem:[#allocation2] sm:$0xff] %vm326, 0.0
        %328 = vst.msk [vmem:[#allocation2 + $0x8] sm:$0xff] %vm326, 0.0
        %329 = vst.msk [vmem:[#allocation2 + $0x10] sm:$0xff] %vm326, 0.0
        %330 = vst.msk [vmem:[#allocation2 + $0x18] sm:$0xff] %vm326, 0.0
        %331 = vst.msk [vmem:[#allocation2 + $0x20] sm:$0xff] %vm326, 0.0
        %332 = vst.msk [vmem:[#allocation2 + $0x28] sm:$0xff] %vm326, 0.0
        %333 = vst.msk [vmem:[#allocation2 + $0x30] sm:$0xff] %vm326, 0.0
        %334 = vst.msk [vmem:[#allocation2 + $0x38] sm:$0xff] %vm326, 0.0
        %335 = vst.msk [vmem:[#allocation3] sm:$0xff] %vm326, 0.0
        %336 = vst.msk [vmem:[#allocation3 + $0x8] sm:$0xff] %vm326, 0.0
        %337 = vst.msk [vmem:[#allocation3 + $0x10] sm:$0xff] %vm326, 0.0
        %338 = vst.msk [vmem:[#allocation3 + $0x18] sm:$0xff] %vm326, 0.0
        %339 = vst.msk [vmem:[#allocation3 + $0x20] sm:$0xff] %vm326, 0.0
        %340 = vst.msk [vmem:[#allocation3 + $0x28] sm:$0xff] %vm326, 0.0
        %341 = vst.msk [vmem:[#allocation3 + $0x30] sm:$0xff] %vm326, 0.0
        %342 = vst.msk [vmem:[#allocation3 + $0x38] sm:$0xff] %vm326, 0.0
      $region40: #{fluentnet_forward.142} parent=35 // pred_fallthru
        _
      %v343 = vld [vmem:[%s287] sm:$0xff]
      %v344 = vld [vmem:[%s287 + $0x8] sm:$0xff]
      %v345 = vld [vmem:[%s287 + $0x10] sm:$0xff]
      %v346 = vld [vmem:[%s287 + $0x18] sm:$0xff]
      %v347 = vld [vmem:[%s287 + $0x20] sm:$0xff]
      %v348 = vld [vmem:[%s287 + $0x28] sm:$0xff]
      %v349 = vld [vmem:[%s287 + $0x30] sm:$0xff]
      %v350 = vld [vmem:[%s287 + $0x38] sm:$0xff]
      %v351 = vld [vmem:[%s296] sm:$0xff]
      %v352 = vld [vmem:[%s296 + $0x8] sm:$0xff]
      %v353 = vld [vmem:[%s296 + $0x10] sm:$0xff]
      %v354 = vld [vmem:[%s296 + $0x18] sm:$0xff]
      %v355 = vld [vmem:[%s296 + $0x20] sm:$0xff]
      %v356 = vld [vmem:[%s296 + $0x28] sm:$0xff]
      %v357 = vld [vmem:[%s296 + $0x30] sm:$0xff]
      %v358 = vld [vmem:[%s296 + $0x38] sm:$0xff]
      %v359 = vld [vmem:[#allocation2] sm:$0xff]
      %v360 = vld [vmem:[#allocation2 + $0x8] sm:$0xff]
      %v361 = vld [vmem:[#allocation2 + $0x10] sm:$0xff]
      %v362 = vld [vmem:[#allocation2 + $0x18] sm:$0xff]
      %v363 = vld [vmem:[#allocation2 + $0x20] sm:$0xff]
      %v364 = vld [vmem:[#allocation2 + $0x28] sm:$0xff]
      %v365 = vld [vmem:[#allocation2 + $0x30] sm:$0xff]
      %v366 = vld [vmem:[#allocation2 + $0x38] sm:$0xff]
      %v367 = vld [vmem:[%s301] sm:$0xff]
      %v368 = vld [vmem:[%s301 + $0x8] sm:$0xff]
      %v369 = vld [vmem:[%s301 + $0x10] sm:$0xff]
      %v370 = vld [vmem:[%s301 + $0x18] sm:$0xff]
      %vm371 = vcmask 261120
      %v373 = vsel %vm371, %v359, 0
      %v376 = vsel %vm371, %v360, 0
      %v379 = vsel %vm371, %v361, 0
      %v382 = vsel %vm371, %v362, 0
      %v385 = vsel %vm371, %v363, 0
      %v388 = vsel %vm371, %v364, 0
      %v391 = vsel %vm371, %v365, 0
      %v394 = vsel %vm371, %v366, 0
      %396 = vmatprep.subr.mxu0 0.0
      %397 = vmatpush1.msra.mxu0 %v367
      %398 = vmatprep.subr.mxu0 0.0
      %399 = vmatpush1.msra.mxu0 %v368
      %400 = vmatprep.subr.mxu0 0.0
      %401 = vmatpush1.msra.mxu0 %v369
      %402 = vmatprep.subr.mxu0 0.0
      %403 = vmatpush1.msra.mxu0 %v370
      %404 = vmatprep.subr.mxu0 0.0
      %405 = vmatpush1.msra.mxu0 0.0
      %406 = vmatprep.subr.mxu0 0.0
      %407 = vmatpush1.msra.mxu0 0.0
      %408 = vmatprep.subr.mxu0 0.0
      %409 = vmatpush1.msra.mxu0 0.0
      %410 = vmatprep.subr.mxu0 0.0
      %411 = vmatpush1.msra.mxu0 0.0
      %412 = vmatprep.subr.mxu0 0.0
      %413 = vmatpush1.msra.mxu0 0.0
      %414 = vmatprep.subr.mxu0 0.0
      %415 = vmatpush1.msra.mxu0 0.0
      %416 = vmatprep.subr.mxu0 0.0
      %417 = vmatpush1.msra.mxu0 0.0
      %418 = vmatprep.subr.mxu0 0.0
      %419 = vmatpush1.msra.mxu0 0.0
      %420 = vmatprep.subr.mxu0 0.0
      %421 = vmatpush1.msra.mxu0 0.0
      %422 = vmatprep.subr.mxu0 0.0
      %423 = vmatpush1.msra.mxu0 0.0
      %424 = vmatprep.subr.mxu0 0.0
      %425 = vmatpush1.msra.mxu0 0.0
      %426 = vmatprep.subr.mxu0 0.0
      %427 = vmatpush1.msra.mxu0 0.0
      %428 = vmatprep.subr.mxu0 0.0
      %429 = vmatpush1.msra.mxu0 0.0
      %430 = vmatprep.subr.mxu0 0.0
      %431 = vmatpush1.msra.mxu0 0.0
      %432 = vmatprep.subr.mxu0 0.0
      %433 = vmatpush1.msra.mxu0 0.0
      %434 = vmatprep.subr.mxu0 0.0
      %435 = vmatpush1.msra.mxu0 0.0
      %436 = vmatprep.subr.mxu0 0.0
      %437 = vmatpush1.msra.mxu0 0.0
      %438 = vmatprep.subr.mxu0 0.0
      %439 = vmatpush1.msra.mxu0 0.0
      %440 = vmatprep.subr.mxu0 0.0
      %441 = vmatpush1.msra.mxu0 0.0
      %442 = vmatprep.subr.mxu0 0.0
      %443 = vmatpush1.msra.mxu0 0.0
      %444 = vmatprep.subr.mxu0 0.0
      %445 = vmatpush1.msra.mxu0 0.0
      %446 = vmatprep.subr.mxu0 0.0
      %447 = vmatpush1.msra.mxu0 0.0
      %448 = vmatprep.subr.mxu0 0.0
      %449 = vmatpush1.msra.mxu0 0.0
      %450 = vmatprep.subr.mxu0 0.0
      %451 = vmatpush1.msra.mxu0 0.0
      %452 = vmatprep.subr.mxu0 0.0
      %453 = vmatpush1.msra.mxu0 0.0
      %454 = vmatprep.subr.mxu0 0.0
      %455 = vmatpush1.msra.mxu0 0.0
      %456 = vmatprep.subr.mxu0 0.0
      %457 = vmatpush1.msra.mxu0 0.0
      %458 = vmatprep.subr.mxu0 0.0
      %459 = vmatpush1.msra.mxu0 0.0
      %460 = vmatprep.mubr.f32.mxu0 0.0
      %461 = vmatmul.mubr.f32.gmra.mrb[0].mxu0 %v373
      %v462 = vpop.f32.mrb[0].mxu0
      %v463 = vadd.f32 0.0, %v462
      %v464 = vpop.f32.mrb[0].mxu0
      %465 = vmatprep.mubr.f32.mxu0 0.0
      %466 = vmatmul.mubr.f32.gmra.mrb[0].mxu0 %v376
      %v467 = vpop.f32.mrb[0].mxu0
      %v468 = vadd.f32 0.0, %v467
      %v469 = vpop.f32.mrb[0].mxu0
      %470 = vmatprep.mubr.f32.mxu0 0.0
      %471 = vmatmul.mubr.f32.gmra.mrb[0].mxu0 %v379
      %v472 = vpop.f32.mrb[0].mxu0
      %v473 = vadd.f32 0.0, %v472
      %v474 = vpop.f32.mrb[0].mxu0
      %475 = vmatprep.mubr.f32.mxu0 0.0
      %476 = vmatmul.mubr.f32.gmra.mrb[0].mxu0 %v382
      %v477 = vpop.f32.mrb[0].mxu0
      %v478 = vadd.f32 0.0, %v477
      %v479 = vpop.f32.mrb[0].mxu0
      %480 = vmatprep.mubr.f32.mxu0 0.0
      %481 = vmatmul.mubr.f32.gmra.mrb[0].mxu0 %v385
      %v482 = vpop.f32.mrb[0].mxu0
      %v483 = vadd.f32 0.0, %v482
      %v484 = vpop.f32.mrb[0].mxu0
      %485 = vmatprep.mubr.f32.mxu0 0.0
      %486 = vmatmul.mubr.f32.gmra.mrb[0].mxu0 %v388
      %v487 = vpop.f32.mrb[0].mxu0
      %v488 = vadd.f32 0.0, %v487
      %v489 = vpop.f32.mrb[0].mxu0
      %490 = vmatprep.mubr.f32.mxu0 0.0
      %491 = vmatmul.mubr.f32.gmra.mrb[0].mxu0 %v391
      %v492 = vpop.f32.mrb[0].mxu0
      %v493 = vadd.f32 0.0, %v492
      %v494 = vpop.f32.mrb[0].mxu0
      %495 = vmatprep.mubr.f32.mxu0 0.0
      %496 = vmatmul.mubr.f32.gmra.mrb[0].mxu0 %v394
      %v497 = vpop.f32.mrb[0].mxu0
      %v498 = vadd.f32 0.0, %v497
      %v499 = vpop.f32.mrb[0].mxu0
      %500 = vdwg.mxu0
      %vm501 = vcmask 523264
      %v503 = vsel %vm501, %v343, 0
      %v506 = vsel %vm501, %v344, 0
      %v509 = vsel %vm501, %v345, 0
      %v512 = vsel %vm501, %v346, 0
      %v515 = vsel %vm501, %v347, 0
      %v518 = vsel %vm501, %v348, 0
      %v521 = vsel %vm501, %v349, 0
      %v524 = vsel %vm501, %v350, 0
      %526 = vmatprep.subr.mxu0 0.0
      %527 = vmatpush1.msra.mxu0 %v351
      %528 = vmatprep.subr.mxu0 0.0
      %529 = vmatpush1.msra.mxu0 %v352
      %530 = vmatprep.subr.mxu0 0.0
      %531 = vmatpush1.msra.mxu0 %v353
      %532 = vmatprep.subr.mxu0 0.0
      %533 = vmatpush1.msra.mxu0 %v354
      %534 = vmatprep.subr.mxu0 0.0
      %535 = vmatpush1.msra.mxu0 %v355
      %536 = vmatprep.subr.mxu0 0.0
      %537 = vmatpush1.msra.mxu0 %v356
      %538 = vmatprep.subr.mxu0 0.0
      %539 = vmatpush1.msra.mxu0 %v357
      %540 = vmatprep.subr.mxu0 0.0
      %541 = vmatpush1.msra.mxu0 %v358
      %542 = vmatprep.subr.mxu0 0.0
      %543 = vmatpush1.msra.mxu0 0.0
      %544 = vmatprep.subr.mxu0 0.0
      %545 = vmatpush1.msra.mxu0 0.0
      %546 = vmatprep.subr.mxu0 0.0
      %547 = vmatpush1.msra.mxu0 0.0
      %548 = vmatprep.subr.mxu0 0.0
      %549 = vmatpush1.msra.mxu0 0.0
      %550 = vmatprep.subr.mxu0 0.0
      %551 = vmatpush1.msra.mxu0 0.0
      %552 = vmatprep.subr.mxu0 0.0
      %553 = vmatpush1.msra.mxu0 0.0
      %554 = vmatprep.subr.mxu0 0.0
      %555 = vmatpush1.msra.mxu0 0.0
      %556 = vmatprep.subr.mxu0 0.0
      %557 = vmatpush1.msra.mxu0 0.0
      %558 = vmatprep.subr.mxu0 0.0
      %559 = vmatpush1.msra.mxu0 0.0
      %560 = vmatprep.subr.mxu0 0.0
      %561 = vmatpush1.msra.mxu0 0.0
      %562 = vmatprep.subr.mxu0 0.0
      %563 = vmatpush1.msra.mxu0 0.0
      %564 = vmatprep.subr.mxu0 0.0
      %565 = vmatpush1.msra.mxu0 0.0
      %566 = vmatprep.subr.mxu0 0.0
      %567 = vmatpush1.msra.mxu0 0.0
      %568 = vmatprep.subr.mxu0 0.0
      %569 = vmatpush1.msra.mxu0 0.0
      %570 = vmatprep.subr.mxu0 0.0
      %571 = vmatpush1.msra.mxu0 0.0
      %572 = vmatprep.subr.mxu0 0.0
      %573 = vmatpush1.msra.mxu0 0.0
      %574 = vmatprep.subr.mxu0 0.0
      %575 = vmatpush1.msra.mxu0 0.0
      %576 = vmatprep.subr.mxu0 0.0
      %577 = vmatpush1.msra.mxu0 0.0
      %578 = vmatprep.subr.mxu0 0.0
      %579 = vmatpush1.msra.mxu0 0.0
      %580 = vmatprep.subr.mxu0 0.0
      %581 = vmatpush1.msra.mxu0 0.0
      %582 = vmatprep.subr.mxu0 0.0
      %583 = vmatpush1.msra.mxu0 0.0
      %584 = vmatprep.subr.mxu0 0.0
      %585 = vmatpush1.msra.mxu0 0.0
      %586 = vmatprep.subr.mxu0 0.0
      %587 = vmatpush1.msra.mxu0 0.0
      %588 = vmatprep.subr.mxu0 0.0
      %589 = vmatpush1.msra.mxu0 0.0
      %590 = vmatprep.mubr.f32.mxu0 0.0
      %591 = vmatmul.mubr.f32.gmra.mrb[0].mxu0 %v503
      %v592 = vpop.f32.mrb[0].mxu0
      %v593 = vadd.f32 %v463, %v592
      %v594 = vpop.f32.mrb[0].mxu0
      %595 = vmatprep.mubr.f32.mxu0 0.0
      %596 = vmatmul.mubr.f32.gmra.mrb[0].mxu0 %v506
      %v597 = vpop.f32.mrb[0].mxu0
      %v598 = vadd.f32 %v468, %v597
      %v599 = vpop.f32.mrb[0].mxu0
      %600 = vmatprep.mubr.f32.mxu0 0.0
      %601 = vmatmul.mubr.f32.gmra.mrb[0].mxu0 %v509
      %v602 = vpop.f32.mrb[0].mxu0
      %v603 = vadd.f32 %v473, %v602
      %v604 = vpop.f32.mrb[0].mxu0
      %605 = vmatprep.mubr.f32.mxu0 0.0
      %606 = vmatmul.mubr.f32.gmra.mrb[0].mxu0 %v512
      %v607 = vpop.f32.mrb[0].mxu0
      %v608 = vadd.f32 %v478, %v607
      %v609 = vpop.f32.mrb[0].mxu0
      %610 = vmatprep.mubr.f32.mxu0 0.0
      %611 = vmatmul.mubr.f32.gmra.mrb[0].mxu0 %v515
      %v612 = vpop.f32.mrb[0].mxu0
      %v613 = vadd.f32 %v483, %v612
      %v614 = vpop.f32.mrb[0].mxu0
      %615 = vmatprep.mubr.f32.mxu0 0.0
      %616 = vmatmul.mubr.f32.gmra.mrb[0].mxu0 %v518
      %v617 = vpop.f32.mrb[0].mxu0
      %v618 = vadd.f32 %v488, %v617
      %v619 = vpop.f32.mrb[0].mxu0
      %620 = vmatprep.mubr.f32.mxu0 0.0
      %621 = vmatmul.mubr.f32.gmra.mrb[0].mxu0 %v521
      %v622 = vpop.f32.mrb[0].mxu0
      %v623 = vadd.f32 %v493, %v622
      %v624 = vpop.f32.mrb[0].mxu0
      %625 = vmatprep.mubr.f32.mxu0 0.0
      %626 = vmatmul.mubr.f32.gmra.mrb[0].mxu0 %v524
      %v627 = vpop.f32.mrb[0].mxu0
      %v628 = vadd.f32 %v498, %v627
      %v629 = vpop.f32.mrb[0].mxu0
      %630 = vdwg.mxu0
      %v631 = vld [vmem:[%s304] sm:$0x1]
      %v633 = vlaneseq
      %v634 = vshrl.u32 %v633, 7
      %v635 = vsub.s32 0, %v634
      %v636 = vrot.slane %v631, %v635
      %v638 = vadd.f32 %v593, %v636
      %v639 = vadd.f32 %v598, %v636
      %v640 = vadd.f32 %v603, %v636
      %v641 = vadd.f32 %v608, %v636
      %v642 = vadd.f32 %v613, %v636
      %v643 = vadd.f32 %v618, %v636
      %v644 = vadd.f32 %v623, %v636
      %v645 = vadd.f32 %v628, %v636
      %v646 = vxor.u32 %v638, 2147483648
      %v647 = vxor.u32 %v639, 2147483648
      %v648 = vxor.u32 %v640, 2147483648
      %v649 = vxor.u32 %v641, 2147483648
      %v650 = vxor.u32 %v642, 2147483648
      %v651 = vxor.u32 %v643, 2147483648
      %v652 = vxor.u32 %v644, 2147483648
      %v653 = vxor.u32 %v645, 2147483648
      %v654 = vmul.f32 %v646, 1.442695
      %v655 = vpow.pop %v654
      %v656 = vmul.f32 %v647, 1.442695
      %v657 = vpow.pop %v656
      %v658 = vmul.f32 %v648, 1.442695
      %v659 = vpow.pop %v658
      %v660 = vmul.f32 %v649, 1.442695
      %v661 = vpow.pop %v660
      %v662 = vmul.f32 %v650, 1.442695
      %v663 = vpow.pop %v662
      %v664 = vmul.f32 %v651, 1.442695
      %v665 = vpow.pop %v664
      %v666 = vmul.f32 %v652, 1.442695
      %v667 = vpow.pop %v666
      %v668 = vmul.f32 %v653, 1.442695
      %v669 = vpow.pop %v668
      %v670 = vadd.f32 %v655, 1.0
      %v671 = vadd.f32 %v657, 1.0
      %v672 = vadd.f32 %v659, 1.0
      %v673 = vadd.f32 %v661, 1.0
      %v674 = vadd.f32 %v663, 1.0
      %v675 = vadd.f32 %v665, 1.0
      %v676 = vadd.f32 %v667, 1.0
      %v677 = vadd.f32 %v669, 1.0
      %v678 = vrcp.pop %v670
      %v679 = vmul.f32 1.0, %v678
      %v680 = vrcp.pop %v671
      %v681 = vmul.f32 1.0, %v680
      %v682 = vrcp.pop %v672
      %v683 = vmul.f32 1.0, %v682
      %v684 = vrcp.pop %v673
      %v685 = vmul.f32 1.0, %v684
      %v686 = vrcp.pop %v674
      %v687 = vmul.f32 1.0, %v686
      %v688 = vrcp.pop %v675
      %v689 = vmul.f32 1.0, %v688
      %v690 = vrcp.pop %v676
      %v691 = vmul.f32 1.0, %v690
      %v692 = vrcp.pop %v677
      %v693 = vmul.f32 1.0, %v692
      %v694 = vtanh.pop %v638
      %v695 = vtanh.pop %v639
      %v696 = vtanh.pop %v640
      %v697 = vtanh.pop %v641
      %v698 = vtanh.pop %v642
      %v699 = vtanh.pop %v643
      %v700 = vtanh.pop %v644
      %v701 = vtanh.pop %v645
      %v702 = vld [vmem:[#allocation3] sm:$0xff]
      %v703 = vld [vmem:[#allocation3 + $0x8] sm:$0xff]
      %v704 = vld [vmem:[#allocation3 + $0x10] sm:$0xff]
      %v705 = vld [vmem:[#allocation3 + $0x18] sm:$0xff]
      %v706 = vld [vmem:[#allocation3 + $0x20] sm:$0xff]
      %v707 = vld [vmem:[#allocation3 + $0x28] sm:$0xff]
      %v708 = vld [vmem:[#allocation3 + $0x30] sm:$0xff]
      %v709 = vld [vmem:[#allocation3 + $0x38] sm:$0xff]
      %718 = vrot.lane.b32.xlu0 %v702, 32
      %v719 = vpop.permute.xlu0 %718
      %720 = vrot.lane.b32.xlu0 %v703, 32
      %v721 = vpop.permute.xlu0 %720
      %722 = vrot.lane.b32.xlu0 %v704, 32
      %v723 = vpop.permute.xlu0 %722
      %724 = vrot.lane.b32.xlu0 %v705, 32
      %v725 = vpop.permute.xlu0 %724
      %726 = vrot.lane.b32.xlu0 %v706, 32
      %v727 = vpop.permute.xlu0 %726
      %728 = vrot.lane.b32.xlu0 %v707, 32
      %v729 = vpop.permute.xlu0 %728
      %730 = vrot.lane.b32.xlu0 %v708, 32
      %v731 = vpop.permute.xlu0 %730
      %732 = vrot.lane.b32.xlu0 %v709, 32
      %v733 = vpop.permute.xlu0 %732
      %v742 = vmul.f32 %v679, %v719
      %v743 = vmul.f32 %v681, %v721
      %v744 = vmul.f32 %v683, %v723
      %v745 = vmul.f32 %v685, %v725
      %v746 = vmul.f32 %v687, %v727
      %v747 = vmul.f32 %v689, %v729
      %v748 = vmul.f32 %v691, %v731
      %v749 = vmul.f32 %v693, %v733
      %758 = vrot.lane.b32.xlu0 %v694, 64
      %v759 = vpop.permute.xlu0 %758
      %760 = vrot.lane.b32.xlu0 %v695, 64
      %v761 = vpop.permute.xlu0 %760
      %762 = vrot.lane.b32.xlu0 %v696, 64
      %v763 = vpop.permute.xlu0 %762
      %764 = vrot.lane.b32.xlu0 %v697, 64
      %v765 = vpop.permute.xlu0 %764
      %766 = vrot.lane.b32.xlu0 %v698, 64
      %v767 = vpop.permute.xlu0 %766
      %768 = vrot.lane.b32.xlu0 %v699, 64
      %v769 = vpop.permute.xlu0 %768
      %770 = vrot.lane.b32.xlu0 %v700, 64
      %v771 = vpop.permute.xlu0 %770
      %772 = vrot.lane.b32.xlu0 %v701, 64
      %v773 = vpop.permute.xlu0 %772
      %v782 = vmul.f32 %v679, %v759
      %v783 = vmul.f32 %v681, %v761
      %v784 = vmul.f32 %v683, %v763
      %v785 = vmul.f32 %v685, %v765
      %v786 = vmul.f32 %v687, %v767
      %v787 = vmul.f32 %v689, %v769
      %v788 = vmul.f32 %v691, %v771
      %v789 = vmul.f32 %v693, %v773
      %798 = vrot.lane.b32.xlu0 %v782, 32
      %v799 = vpop.permute.xlu0 %798
      %800 = vrot.lane.b32.xlu0 %v783, 32
      %v801 = vpop.permute.xlu0 %800
      %802 = vrot.lane.b32.xlu0 %v784, 32
      %v803 = vpop.permute.xlu0 %802
      %804 = vrot.lane.b32.xlu0 %v785, 32
      %v805 = vpop.permute.xlu0 %804
      %806 = vrot.lane.b32.xlu0 %v786, 32
      %v807 = vpop.permute.xlu0 %806
      %808 = vrot.lane.b32.xlu0 %v787, 32
      %v809 = vpop.permute.xlu0 %808
      %810 = vrot.lane.b32.xlu0 %v788, 32
      %v811 = vpop.permute.xlu0 %810
      %812 = vrot.lane.b32.xlu0 %v789, 32
      %v813 = vpop.permute.xlu0 %812
      %v822 = vadd.f32 %v742, %v799
      %v823 = vadd.f32 %v743, %v801
      %v824 = vadd.f32 %v744, %v803
      %v825 = vadd.f32 %v745, %v805
      %v826 = vadd.f32 %v746, %v807
      %v827 = vadd.f32 %v747, %v809
      %v828 = vadd.f32 %v748, %v811
      %v829 = vadd.f32 %v749, %v813
      %v830 = vtanh.pop %v822
      %v831 = vtanh.pop %v823
      %v832 = vtanh.pop %v824
      %v833 = vtanh.pop %v825
      %v834 = vtanh.pop %v826
      %v835 = vtanh.pop %v827
      %v836 = vtanh.pop %v828
      %v837 = vtanh.pop %v829
      %846 = vrot.lane.b32.xlu0 %v830, 64
      %v847 = vpop.permute.xlu0 %846
      %848 = vrot.lane.b32.xlu0 %v831, 64
      %v849 = vpop.permute.xlu0 %848
      %850 = vrot.lane.b32.xlu0 %v832, 64
      %v851 = vpop.permute.xlu0 %850
      %852 = vrot.lane.b32.xlu0 %v833, 64
      %v853 = vpop.permute.xlu0 %852
      %854 = vrot.lane.b32.xlu0 %v834, 64
      %v855 = vpop.permute.xlu0 %854
      %856 = vrot.lane.b32.xlu0 %v835, 64
      %v857 = vpop.permute.xlu0 %856
      %858 = vrot.lane.b32.xlu0 %v836, 64
      %v859 = vpop.permute.xlu0 %858
      %860 = vrot.lane.b32.xlu0 %v837, 64
      %v861 = vpop.permute.xlu0 %860
      %v870 = vmul.f32 %v679, %v847
      %v871 = vmul.f32 %v681, %v849
      %v872 = vmul.f32 %v683, %v851
      %v873 = vmul.f32 %v685, %v853
      %v874 = vmul.f32 %v687, %v855
      %v875 = vmul.f32 %v689, %v857
      %v876 = vmul.f32 %v691, %v859
      %v877 = vmul.f32 %v693, %v861
      %886 = vrot.lane.b32.xlu0 %v822, 96
      %v887 = vpop.permute.xlu0 %886
      %888 = vrot.lane.b32.xlu0 %v823, 96
      %v889 = vpop.permute.xlu0 %888
      %890 = vrot.lane.b32.xlu0 %v824, 96
      %v891 = vpop.permute.xlu0 %890
      %892 = vrot.lane.b32.xlu0 %v825, 96
      %v893 = vpop.permute.xlu0 %892
      %894 = vrot.lane.b32.xlu0 %v826, 96
      %v895 = vpop.permute.xlu0 %894
      %896 = vrot.lane.b32.xlu0 %v827, 96
      %v897 = vpop.permute.xlu0 %896
      %898 = vrot.lane.b32.xlu0 %v828, 96
      %v899 = vpop.permute.xlu0 %898
      %900 = vrot.lane.b32.xlu0 %v829, 96
      %v901 = vpop.permute.xlu0 %900
      %910 = vst.msk [vmem:[#allocation3] sm:$0xff] %vm371, %v887
      %911 = vst.msk [vmem:[#allocation3 + $0x8] sm:$0xff] %vm371, %v889
      %912 = vst.msk [vmem:[#allocation3 + $0x10] sm:$0xff] %vm371, %v891
      %913 = vst.msk [vmem:[#allocation3 + $0x18] sm:$0xff] %vm371, %v893
      %914 = vst.msk [vmem:[#allocation3 + $0x20] sm:$0xff] %vm371, %v895
      %915 = vst.msk [vmem:[#allocation3 + $0x28] sm:$0xff] %vm371, %v897
      %916 = vst.msk [vmem:[#allocation3 + $0x30] sm:$0xff] %vm371, %v899
      %917 = vst.msk [vmem:[#allocation3 + $0x38] sm:$0xff] %vm371, %v901
      %926 = vrot.lane.b32.xlu0 %v870, 32
      %v927 = vpop.permute.xlu0 %926
      %928 = vrot.lane.b32.xlu0 %v871, 32
      %v929 = vpop.permute.xlu0 %928
      %930 = vrot.lane.b32.xlu0 %v872, 32
      %v931 = vpop.permute.xlu0 %930
      %932 = vrot.lane.b32.xlu0 %v873, 32
      %v933 = vpop.permute.xlu0 %932
      %934 = vrot.lane.b32.xlu0 %v874, 32
      %v935 = vpop.permute.xlu0 %934
      %936 = vrot.lane.b32.xlu0 %v875, 32
      %v937 = vpop.permute.xlu0 %936
      %938 = vrot.lane.b32.xlu0 %v876, 32
      %v939 = vpop.permute.xlu0 %938
      %940 = vrot.lane.b32.xlu0 %v877, 32
      %v941 = vpop.permute.xlu0 %940
      %950 = vst.msk [vmem:[#allocation2] sm:$0xff] %vm371, %v927
      %951 = vst.msk [vmem:[#allocation2 + $0x8] sm:$0xff] %vm371, %v929
      %952 = vst.msk [vmem:[#allocation2 + $0x10] sm:$0xff] %vm371, %v931
      %953 = vst.msk [vmem:[#allocation2 + $0x18] sm:$0xff] %vm371, %v933
      %954 = vst.msk [vmem:[#allocation2 + $0x20] sm:$0xff] %vm371, %v935
      %955 = vst.msk [vmem:[#allocation2 + $0x28] sm:$0xff] %vm371, %v937
      %956 = vst.msk [vmem:[#allocation2 + $0x30] sm:$0xff] %vm371, %v939
      %957 = vst.msk [vmem:[#allocation2 + $0x38] sm:$0xff] %vm371, %v941
      %958 = vst.msk [vmem:[%s317] sm:$0xff] %vm371, %v927
      %959 = vst.msk [vmem:[%s317 + $0x8] sm:$0xff] %vm371, %v929
      %960 = vst.msk [vmem:[%s317 + $0x10] sm:$0xff] %vm371, %v931
      %961 = vst.msk [vmem:[%s317 + $0x18] sm:$0xff] %vm371, %v933
      %962 = vst.msk [vmem:[%s317 + $0x20] sm:$0xff] %vm371, %v935
      %963 = vst.msk [vmem:[%s317 + $0x28] sm:$0xff] %vm371, %v937
      %964 = vst.msk [vmem:[%s317 + $0x30] sm:$0xff] %vm371, %v939
      %965 = vst.msk [vmem:[%s317 + $0x38] sm:$0xff] %vm371, %v941
      %s966 = smul.u32 %s20, 2
      %s967 = ssub.s32 1, %s966
      %s968 = smul.u32 %s19, %s967
      %s969 = sadd.s32 %s20, %s968
      %p970 = scmp.lt.s32.totalorder %s19, 1
      %s971 = scalar_select %p970, %s19, 1
      %p972 = scmp.lt.s32.totalorder %s969, 1
      %s973 = scalar_select %p972, %s969, 1
      %s974 = smul.addr %s973, 8
      %s975 = smul.addr %s971, 16
      %s976 = sadd.s32 %s974, %s975
      %s977 = smul.addr %s976, 8
      %s978 = scalar_lea.vmem %s4, %s977
      // Predicated region
      $region41: #{fluentnet_forward.142} parent=35 // pred_check
        %p979 = pneg %p167
      $region42: #{fluentnet_forward.142} parent=35 // pred_check_branch
        %981 = sbr.rel (%p979) target = $region44
      $region43: #{fluentnet_forward.142} parent=35 // pred_region
        %s982 = smul.u32 %s20, 2
        %s983 = ssub.s32 1, %s982
        %s984 = smul.u32 %s19, %s983
        %s985 = sadd.s32 %s20, %s984
      $region44: #{fluentnet_forward.142} parent=35 // pred_fallthru
        _
    $region36: #{fluentnet_forward.142} parent=5 // pred_fallthru
      _
    %p986 = scmp.le.s32.totalorder 2, %s10
    // Predicated region
    $region45: #{fluentnet_forward.142} parent=5 // pred_check
      %p987 = pneg %p986
    $region46: #{fluentnet_forward.142} parent=5 // pred_check_branch
      %989 = sbr.rel (%p987) target = $region48
    $region47: #{fluentnet_forward.142} parent=5 // pred_region
      %s990 = ssub.s32 %s10, 2
      // Predicated region
      $region49: #{fluentnet_forward.142} parent=47 // pred_check
        %p991 = pneg %p173
      $region50: #{fluentnet_forward.142} parent=47 // pred_check_branch
        %993 = sbr.rel (%p991) target = $region52
      $region51: #{fluentnet_forward.142} parent=47 // pred_region
        %s994 = smul.u32 %s22, 2
        %s995 = ssub.s32 1, %s994
        %s996 = smul.u32 %s21, %s995
        %s997 = sadd.s32 %s22, %s996
        %p998 = scmp.lt.s32.totalorder %s21, 1
        %s999 = scalar_select %p998, %s21, 1
        %p1000 = scmp.lt.s32.totalorder %s997, 1
        %s1001 = scalar_select %p1000, %s997, 1
        %s1002 = smul.addr %s1001, 8
        %s1003 = smul.addr %s999, 16
        %s1004 = sadd.s32 %s1002, %s1003
        %s1005 = smul.addr %s1004, 8
        %s1006 = scalar_lea.vmem %s4, %s1005
      $region52: #{fluentnet_forward.142} parent=47 // pred_fallthru
        _
    $region48: #{fluentnet_forward.142} parent=5 // pred_fallthru
      _
  $region6: #{fluentnet_forward.142} parent=0 // loop_footer
    %s14 = sadd.s32 1, %s10
  $region7: #{fluentnet_forward.142} parent=0 // loop_footer_branch
    %9 = sbr.rel target = $region3
  $region8: #{fluentnet_forward.142} parent=0 // loop_exit
    _

// kernel: fluentnet_forward.144
$region0: #{fluentnet_forward.144}
  #allocation0 [shape = 'u32[]', space=smem, size = 0x4, offset = 0x4, fixed_abs, tag = 'smem constant byte address 0x4 - core index']
  #allocation1 [shape = 'u32[144,128]{1,0:T(1,128)}', space=vmem, size = 0x12000, scoped, tag = 'internal scratch']
  %s0 = inlined_call_operand.vmem [shape: f32[2,64,64], index: 0, kind: input, shape index: {}]
  %s1 = inlined_call_operand.vmem [shape: f32[64,48], index: 1, kind: input, shape index: {}]
  %s2 = inlined_call_operand.vmem [shape: f32[16,64], index: 2, kind: input, shape index: {}]
  %s3 = inlined_call_operand.vmem [shape: f32[1,64], index: 3, kind: input, shape index: {}]
  %s4 = inlined_call_operand.vmem [shape: f32[2,64,64], index: 4, kind: output, shape index: {}]
  %s5 = sld [smem:[#allocation0]]
  $region49: #{fluentnet_forward.144} parent=0
    _
  %s7 = ssub.s32 1, %s5
  %s8 = scalar_select 0, %s7, %s5
  loop: start=0, step=1, limit=4
  $region2: #{fluentnet_forward.144} parent=0 // loop_pre_header
    _
  $region3: #{fluentnet_forward.144} parent=0 // loop_header
    %s10 = sphi 0, %s14
    %p11 = scmp.ge.s32.totalorder %s10, 4
    %s20 = sphi 0, %s22
    %s23 = sphi 0, %s20
    %s24 = sphi 0, %s23
    %s40 = sphi 0, %s24
    %s44 = sphi 0, %s44
    %s46 = sphi 0, %s44
    %s47 = sphi 0, %s46
    %s61 = sphi 0, %s47
    %s65 = sphi 0, %s65
    %s67 = sphi 0, %s65
    %s68 = sphi 0, %s67
    %s82 = sphi 0, %s68
    %s86 = sphi 0, %s86
    %s88 = sphi 0, %s86
    %s89 = sphi 0, %s88
    %s103 = sphi 0, %s89
    %s109 = sphi 0, %s111
    %s112 = sphi 0, %s109
    %s113 = sphi 0, %s112
    %s129 = sphi 0, %s113
  $region4: #{fluentnet_forward.144} parent=0 // loop_header_branch
    %13 = sbr.rel (%p11) target = $region8
  $region5: #{fluentnet_forward.144} parent=0 // loop_body
    %s15 = ssub.s32 %s10, 1
    %s16 = ssub.s32 %s10, 2
    %s17 = sadd.s32 %s10, 1
    %s18 = ssub.s32 %s10, %s17
    %p19 = scmp.eq.s32.totalorder %s18, 0
    %s21 = sadd.s32 %s20, 1
    %s22 = scalar_select %p19, %s20, %s21
    %p25 = pneg %p19
    %p26 = scmp.eq.s32.totalorder %s10, 1
    %p27 = por %p25, %p26
    %p28 = scmp.ne.s32.totalorder %s20, %s23
    %p29 = scmp.eq.s32.totalorder %s10, 0
    %p30 = por %p28, %p29
    %p31 = scmp.ne.s32.totalorder %s20, %s23
    %p32 = scmp.eq.s32.totalorder %s15, 1
    %p33 = por %p31, %p32
    %p34 = scmp.ne.s32.totalorder %s23, %s24
    %p35 = scmp.eq.s32.totalorder %s15, 0
    %p36 = por %p34, %p35
    %p37 = scmp.ne.s32.totalorder %s23, %s24
    %p38 = scmp.eq.s32.totalorder %s16, 1
    %p39 = por %p37, %p38
    %p41 = scmp.ne.s32.totalorder %s24, %s40
    %p42 = scmp.eq.s32.totalorder %s16, 0
    %p43 = por %p41, %p42
    %s45 = sadd.s32 %s44, 1
    %p48 = scmp.eq.s32.totalorder %s10, 1
    %p49 = scmp.ne.s32.totalorder %s44, %s46
    %p50 = scmp.eq.s32.totalorder %s10, 0
    %p51 = por %p49, %p50
    %p52 = scmp.ne.s32.totalorder %s44, %s46
    %p53 = scmp.eq.s32.totalorder %s15, 1
    %p54 = por %p52, %p53
    %p55 = scmp.ne.s32.totalorder %s46, %s47
    %p56 = scmp.eq.s32.totalorder %s15, 0
    %p57 = por %p55, %p56
    %p58 = scmp.ne.s32.totalorder %s46, %s47
    %p59 = scmp.eq.s32.totalorder %s16, 1
    %p60 = por %p58, %p59
    %p62 = scmp.ne.s32.totalorder %s47, %s61
    %p63 = scmp.eq.s32.totalorder %s16, 0
    %p64 = por %p62, %p63
    %s66 = sadd.s32 %s65, 1
    %p69 = scmp.eq.s32.totalorder %s10, 1
    %p70 = scmp.ne.s32.totalorder %s65, %s67
    %p71 = scmp.eq.s32.totalorder %s10, 0
    %p72 = por %p70, %p71
    %p73 = scmp.ne.s32.totalorder %s65, %s67
    %p74 = scmp.eq.s32.totalorder %s15, 1
    %p75 = por %p73, %p74
    %p76 = scmp.ne.s32.totalorder %s67, %s68
    %p77 = scmp.eq.s32.totalorder %s15, 0
    %p78 = por %p76, %p77
    %p79 = scmp.ne.s32.totalorder %s67, %s68
    %p80 = scmp.eq.s32.totalorder %s16, 1
    %p81 = por %p79, %p80
    %p83 = scmp.ne.s32.totalorder %s68, %s82
    %p84 = scmp.eq.s32.totalorder %s16, 0
    %p85 = por %p83, %p84
    %s87 = sadd.s32 %s86, 1
    %p90 = scmp.eq.s32.totalorder %s10, 1
    %p91 = scmp.ne.s32.totalorder %s86, %s88
    %p92 = scmp.eq.s32.totalorder %s10, 0
    %p93 = por %p91, %p92
    %p94 = scmp.ne.s32.totalorder %s86, %s88
    %p95 = scmp.eq.s32.totalorder %s15, 1
    %p96 = por %p94, %p95
    %p97 = scmp.ne.s32.totalorder %s88, %s89
    %p98 = scmp.eq.s32.totalorder %s15, 0
    %p99 = por %p97, %p98
    %p100 = scmp.ne.s32.totalorder %s88, %s89
    %p101 = scmp.eq.s32.totalorder %s16, 1
    %p102 = por %p100, %p101
    %p104 = scmp.ne.s32.totalorder %s89, %s103
    %p105 = scmp.eq.s32.totalorder %s16, 0
    %p106 = por %p104, %p105
    %s107 = ssub.s32 %s10, %s17
    %p108 = scmp.eq.s32.totalorder %s107, 0
    %s110 = sadd.s32 %s109, 1
    %s111 = scalar_select %p108, %s109, %s110
    %p114 = pneg %p108
    %p115 = scmp.eq.s32.totalorder %s10, 1
    %p116 = por %p114, %p115
    %p117 = scmp.ne.s32.totalorder %s109, %s112
    %p118 = scmp.eq.s32.totalorder %s10, 0
    %p119 = por %p117, %p118
    %p120 = scmp.ne.s32.totalorder %s109, %s112
    %p121 = scmp.eq.s32.totalorder %s15, 1
    %p122 = por %p120, %p121
    %p123 = scmp.ne.s32.totalorder %s112, %s113
    %p124 = scmp.eq.s32.totalorder %s15, 0
    %p125 = por %p123, %p124
    %p126 = scmp.ne.s32.totalorder %s112, %s113
    %p127 = scmp.eq.s32.totalorder %s16, 1
    %p128 = por %p126, %p127
    %p130 = scmp.ne.s32.totalorder %s113, %s129
    %p131 = scmp.eq.s32.totalorder %s16, 0
    %p132 = por %p130, %p131
    %p133 = scmp.le.s32.totalorder 1, %s10
    %p134 = scmp.lt.s32.totalorder %s10, 3
    %p135 = pnand %p133, %p134
    %p136 = pneg %p135
    // Predicated region
    $region9: #{fluentnet_forward.144} parent=5 // pred_check
      _
    $region10: #{fluentnet_forward.144} parent=5 // pred_check_branch
      %138 = sbr.rel (%p135) target = $region12
    $region11: #{fluentnet_forward.144} parent=5 // pred_region
      %s139 = ssub.s32 %s10, 1
      // Predicated region
      $region13: #{fluentnet_forward.144} parent=11 // pred_check
        %p140 = pneg %p57
      $region14: #{fluentnet_forward.144} parent=11 // pred_check_branch
        %142 = sbr.rel (%p140) target = $region16
      $region15: #{fluentnet_forward.144} parent=11 // pred_region
        _
      $region16: #{fluentnet_forward.144} parent=11 // pred_fallthru
        _
      // Predicated region
      $region17: #{fluentnet_forward.144} parent=11 // pred_check
        %p143 = pneg %p78
      $region18: #{fluentnet_forward.144} parent=11 // pred_check_branch
        %145 = sbr.rel (%p143) target = $region20
      $region19: #{fluentnet_forward.144} parent=11 // pred_region
        _
      $region20: #{fluentnet_forward.144} parent=11 // pred_fallthru
        _
      // Predicated region
      $region21: #{fluentnet_forward.144} parent=11 // pred_check
        %p146 = pneg %p99
      $region22: #{fluentnet_forward.144} parent=11 // pred_check_branch
        %148 = sbr.rel (%p146) target = $region24
      $region23: #{fluentnet_forward.144} parent=11 // pred_region
        _
      $region24: #{fluentnet_forward.144} parent=11 // pred_fallthru
        _
    $region12: #{fluentnet_forward.144} parent=5 // pred_fallthru
      _
    %p149 = scmp.lt.s32.totalorder %s10, 2
    // Predicated region
    $region25: #{fluentnet_forward.144} parent=5 // pred_check
      %p150 = pneg %p149
    $region26: #{fluentnet_forward.144} parent=5 // pred_check_branch
      %152 = sbr.rel (%p150) target = $region28
    $region27: #{fluentnet_forward.144} parent=5 // pred_region
      // Predicated region
      $region29: #{fluentnet_forward.144} parent=27 // pred_check
        %p153 = pneg %p30
      $region30: #{fluentnet_forward.144} parent=27 // pred_check_branch
        %155 = sbr.rel (%p153) target = $region32
      $region31: #{fluentnet_forward.144} parent=27 // pred_region
        %p156 = scmp.lt.s32.totalorder %s10, 1
        %s157 = scalar_select %p156, %s10, 1
        %s158 = smul.addr %s157, 8
        %s159 = smul.addr %s158, 8
        %s160 = scalar_lea.vmem %s0, %s159
      $region32: #{fluentnet_forward.144} parent=27 // pred_fallthru
        _
    $region28: #{fluentnet_forward.144} parent=5 // pred_fallthru
      _
    %p161 = scmp.le.s32.totalorder 1, %s10
    %p162 = scmp.lt.s32.totalorder %s10, 3
    %p163 = pnand %p161, %p162
    %p164 = pneg %p163
    // Predicated region
    $region33: #{fluentnet_forward.144} parent=5 // pred_check
      _
    $region34: #{fluentnet_forward.144} parent=5 // pred_check_branch
      %166 = sbr.rel (%p163) target = $region36
    $region35: #{fluentnet_forward.144} parent=5 // pred_region
      %s167 = ssub.s32 %s10, 1
      %p168 = scmp.lt.s32.totalorder %s15, 1
      %s169 = scalar_select %p168, %s15, 1
      %s170 = smul.addr %s169, 8
      %s171 = smul.addr %s170, 8
      %s172 = scalar_lea.vmem %s0, %s171
      %p173 = pneg %p36
      %p174 = pneg %p33
      %p175 = pneg %p57
      %p176 = pneg %p54
      %p177 = pneg %p78
      %p178 = pneg %p75
      %p179 = pneg %p99
      %p180 = pneg %p96
      %p181 = pneg %p125
      %p182 = pneg %p122
      %p183 = scmp.lt.s32.totalorder %s15, 1
      %s184 = scalar_select %p183, %s15, 1
      %s185 = smul.addr %s184, 8
      %s186 = smul.addr %s185, 8
      %s187 = scalar_lea.vmem %s4, %s186
      %p188 = scmp.lt.s32.totalorder %s15, 1
      %s189 = scalar_select %p188, %s15, 1
      %s190 = smul.addr %s189, 8
      %s191 = smul.addr %s190, 8
      %s192 = scalar_lea.vmem %s0, %s191
      %p193 = scmp.lt.s32.totalorder %s15, 1
      %s194 = scalar_select %p193, %s15, 1
      %s195 = smul.addr %s194, 8
      %s196 = smul.addr %s195, 8
      %s197 = scalar_lea.vmem %s4, %s196
      %v198 = vld [vmem:[%s192] sm:$0xff]
      %v199 = vld [vmem:[%s192 + $0x8] sm:$0xff]
      %v200 = vld [vmem:[%s192 + $0x10] sm:$0xff]
      %v201 = vld [vmem:[%s192 + $0x18] sm:$0xff]
      %v202 = vld [vmem:[%s192 + $0x20] sm:$0xff]
      %v203 = vld [vmem:[%s192 + $0x28] sm:$0xff]
      %v204 = vld [vmem:[%s192 + $0x30] sm:$0xff]
      %v205 = vld [vmem:[%s192 + $0x38] sm:$0xff]
      %v206 = vld [vmem:[%s1] sm:$0xff]
      %v207 = vld [vmem:[%s1 + $0x8] sm:$0xff]
      %v208 = vld [vmem:[%s1 + $0x10] sm:$0xff]
      %v209 = vld [vmem:[%s1 + $0x18] sm:$0xff]
      %v210 = vld [vmem:[%s1 + $0x20] sm:$0xff]
      %v211 = vld [vmem:[%s1 + $0x28] sm:$0xff]
      %v212 = vld [vmem:[%s1 + $0x30] sm:$0xff]
      %v213 = vld [vmem:[%s1 + $0x38] sm:$0xff]
      %vm214 = vcmask 523264
      %v216 = vsel %vm214, %v198, 0
      %v219 = vsel %vm214, %v199, 0
      %v222 = vsel %vm214, %v200, 0
      %v225 = vsel %vm214, %v201, 0
      %v228 = vsel %vm214, %v202, 0
      %v231 = vsel %vm214, %v203, 0
      %v234 = vsel %vm214, %v204, 0
      %v237 = vsel %vm214, %v205, 0
      %239 = vmatprep.subr.mxu0 0.0
      %240 = vmatpush1.msra.mxu0 %v206
      %241 = vmatprep.subr.mxu0 0.0
      %242 = vmatpush1.msra.mxu0 %v207
      %243 = vmatprep.subr.mxu0 0.0
      %244 = vmatpush1.msra.mxu0 %v208
      %245 = vmatprep.subr.mxu0 0.0
      %246 = vmatpush1.msra.mxu0 %v209
      %247 = vmatprep.subr.mxu0 0.0
      %248 = vmatpush1.msra.mxu0 %v210
      %249 = vmatprep.subr.mxu0 0.0
      %250 = vmatpush1.msra.mxu0 %v211
      %251 = vmatprep.subr.mxu0 0.0
      %252 = vmatpush1.msra.mxu0 %v212
      %253 = vmatprep.subr.mxu0 0.0
      %254 = vmatpush1.msra.mxu0 %v213
      %255 = vmatprep.subr.mxu0 0.0
      %256 = vmatpush1.msra.mxu0 0.0
      %257 = vmatprep.subr.mxu0 0.0
      %258 = vmatpush1.msra.mxu0 0.0
      %259 = vmatprep.subr.mxu0 0.0
      %260 = vmatpush1.msra.mxu0 0.0
      %261 = vmatprep.subr.mxu0 0.0
      %262 = vmatpush1.msra.mxu0 0.0
      %263 = vmatprep.subr.mxu0 0.0
      %264 = vmatpush1.msra.mxu0 0.0
      %265 = vmatprep.subr.mxu0 0.0
      %266 = vmatpush1.msra.mxu0 0.0
      %267 = vmatprep.subr.mxu0 0.0
      %268 = vmatpush1.msra.mxu0 0.0
      %269 = vmatprep.subr.mxu0 0.0
      %270 = vmatpush1.msra.mxu0 0.0
      %271 = vmatprep.subr.mxu0 0.0
      %272 = vmatpush1.msra.mxu0 0.0
      %273 = vmatprep.subr.mxu0 0.0
      %274 = vmatpush1.msra.mxu0 0.0
      %275 = vmatprep.subr.mxu0 0.0
      %276 = vmatpush1.msra.mxu0 0.0
      %277 = vmatprep.subr.mxu0 0.0
      %278 = vmatpush1.msra.mxu0 0.0
      %279 = vmatprep.subr.mxu0 0.0
      %280 = vmatpush1.msra.mxu0 0.0
      %281 = vmatprep.subr.mxu0 0.0
      %282 = vmatpush1.msra.mxu0 0.0
      %283 = vmatprep.subr.mxu0 0.0
      %284 = vmatpush1.msra.mxu0 0.0
      %285 = vmatprep.subr.mxu0 0.0
      %286 = vmatpush1.msra.mxu0 0.0
      %287 = vmatprep.subr.mxu0 0.0
      %288 = vmatpush1.msra.mxu0 0.0
      %289 = vmatprep.subr.mxu0 0.0
      %290 = vmatpush1.msra.mxu0 0.0
      %291 = vmatprep.subr.mxu0 0.0
      %292 = vmatpush1.msra.mxu0 0.0
      %293 = vmatprep.subr.mxu0 0.0
      %294 = vmatpush1.msra.mxu0 0.0
      %295 = vmatprep.subr.mxu0 0.0
      %296 = vmatpush1.msra.mxu0 0.0
      %297 = vmatprep.subr.mxu0 0.0
      %298 = vmatpush1.msra.mxu0 0.0
      %299 = vmatprep.subr.mxu0 0.0
      %300 = vmatpush1.msra.mxu0 0.0
      %301 = vmatprep.subr.mxu0 0.0
      %302 = vmatpush1.msra.mxu0 0.0
      %303 = vmatprep.mubr.f32.mxu0 0.0
      %304 = vmatmul.mubr.f32.gmra.mrb[0].mxu0 %v216
      %v305 = vpop.f32.mrb[0].mxu0
      %v306 = vadd.f32 0.0, %v305
      %v307 = vpop.f32.mrb[0].mxu0
      %308 = vmatprep.mubr.f32.mxu0 0.0
      %309 = vmatmul.mubr.f32.gmra.mrb[0].mxu0 %v219
      %v310 = vpop.f32.mrb[0].mxu0
      %v311 = vadd.f32 0.0, %v310
      %v312 = vpop.f32.mrb[0].mxu0
      %313 = vmatprep.mubr.f32.mxu0 0.0
      %314 = vmatmul.mubr.f32.gmra.mrb[0].mxu0 %v222
      %v315 = vpop.f32.mrb[0].mxu0
      %v316 = vadd.f32 0.0, %v315
      %v317 = vpop.f32.mrb[0].mxu0
      %318 = vmatprep.mubr.f32.mxu0 0.0
      %319 = vmatmul.mubr.f32.gmra.mrb[0].mxu0 %v225
      %v320 = vpop.f32.mrb[0].mxu0
      %v321 = vadd.f32 0.0, %v320
      %v322 = vpop.f32.mrb[0].mxu0
      %323 = vmatprep.mubr.f32.mxu0 0.0
      %324 = vmatmul.mubr.f32.gmra.mrb[0].mxu0 %v228
      %v325 = vpop.f32.mrb[0].mxu0
      %v326 = vadd.f32 0.0, %v325
      %v327 = vpop.f32.mrb[0].mxu0
      %328 = vmatprep.mubr.f32.mxu0 0.0
      %329 = vmatmul.mubr.f32.gmra.mrb[0].mxu0 %v231
      %v330 = vpop.f32.mrb[0].mxu0
      %v331 = vadd.f32 0.0, %v330
      %v332 = vpop.f32.mrb[0].mxu0
      %333 = vmatprep.mubr.f32.mxu0 0.0
      %334 = vmatmul.mubr.f32.gmra.mrb[0].mxu0 %v234
      %v335 = vpop.f32.mrb[0].mxu0
      %v336 = vadd.f32 0.0, %v335
      %v337 = vpop.f32.mrb[0].mxu0
      %338 = vmatprep.mubr.f32.mxu0 0.0
      %339 = vmatmul.mubr.f32.gmra.mrb[0].mxu0 %v237
      %v340 = vpop.f32.mrb[0].mxu0
      %v341 = vadd.f32 0.0, %v340
      %v342 = vpop.f32.mrb[0].mxu0
      %343 = vdwg.mxu0
      %352 = vrot.lane.b32.xlu0 %v306, 112
      %v353 = vpop.permute.xlu0 %352
      %354 = vrot.lane.b32.xlu0 %v311, 112
      %v355 = vpop.permute.xlu0 %354
      %356 = vrot.lane.b32.xlu0 %v316, 112
      %v357 = vpop.permute.xlu0 %356
      %358 = vrot.lane.b32.xlu0 %v321, 112
      %v359 = vpop.permute.xlu0 %358
      %360 = vrot.lane.b32.xlu0 %v326, 112
      %v361 = vpop.permute.xlu0 %360
      %362 = vrot.lane.b32.xlu0 %v331, 112
      %v363 = vpop.permute.xlu0 %362
      %364 = vrot.lane.b32.xlu0 %v336, 112
      %v365 = vpop.permute.xlu0 %364
      %366 = vrot.lane.b32.xlu0 %v341, 112
      %v367 = vpop.permute.xlu0 %366
      %vm368 = vcmask 130048
      %v369 = vsel %vm368, %v306, 0
      %v371 = vsel %vm368, %v311, 0
      %v373 = vsel %vm368, %v316, 0
      %v375 = vsel %vm368, %v321, 0
      %v377 = vsel %vm368, %v326, 0
      %v379 = vsel %vm368, %v331, 0
      %v381 = vsel %vm368, %v336, 0
      %v383 = vsel %vm368, %v341, 0
      %v385 = vsel %vm368, %v353, 0
      %v387 = vsel %vm368, %v355, 0
      %v389 = vsel %vm368, %v357, 0
      %v391 = vsel %vm368, %v359, 0
      %v393 = vsel %vm368, %v361, 0
      %v395 = vsel %vm368, %v363, 0
      %v397 = vsel %vm368, %v365, 0
      %v399 = vsel %vm368, %v367, 0
      %401 = vmatprep.subr.mxu0 0.0
      %402 = vmatpush1.xpose.msra.mxu0 %v385
      %403 = vmatprep.subr.mxu0 0.0
      %404 = vmatpush1.xpose.msra.mxu0 %v387
      %405 = vmatprep.subr.mxu0 0.0
      %406 = vmatpush1.xpose.msra.mxu0 %v389
      %407 = vmatprep.subr.mxu0 0.0
      %408 = vmatpush1.xpose.msra.mxu0 %v391
      %409 = vmatprep.subr.mxu0 0.0
      %410 = vmatpush1.xpose.msra.mxu0 %v393
      %411 = vmatprep.subr.mxu0 0.0
      %412 = vmatpush1.xpose.msra.mxu0 %v395
      %413 = vmatprep.subr.mxu0 0.0
      %414 = vmatpush1.xpose.msra.mxu0 %v397
      %415 = vmatprep.subr.mxu0 0.0
      %416 = vmatpush1.xpose.msra.mxu0 %v399
      %417 = vmatprep.subr.mxu0 0.0
      %418 = vmatpush1.xpose.msra.mxu0 0.0
      %419 = vmatprep.subr.mxu0 0.0
      %420 = vmatpush1.xpose.msra.mxu0 0.0
      %421 = vmatprep.subr.mxu0 0.0
      %422 = vmatpush1.xpose.msra.mxu0 0.0
      %423 = vmatprep.subr.mxu0 0.0
      %424 = vmatpush1.xpose.msra.mxu0 0.0
      %425 = vmatprep.subr.mxu0 0.0
      %426 = vmatpush1.xpose.msra.mxu0 0.0
      %427 = vmatprep.subr.mxu0 0.0
      %428 = vmatpush1.xpose.msra.mxu0 0.0
      %429 = vmatprep.subr.mxu0 0.0
      %430 = vmatpush1.xpose.msra.mxu0 0.0
      %431 = vmatprep.subr.mxu0 0.0
      %432 = vmatpush1.xpose.msra.mxu0 0.0
      %433 = vmatprep.subr.mxu0 0.0
      %434 = vmatpush1.xpose.msra.mxu0 0.0
      %435 = vmatprep.subr.mxu0 0.0
      %436 = vmatpush1.xpose.msra.mxu0 0.0
      %437 = vmatprep.subr.mxu0 0.0
      %438 = vmatpush1.xpose.msra.mxu0 0.0
      %439 = vmatprep.subr.mxu0 0.0
      %440 = vmatpush1.xpose.msra.mxu0 0.0
      %441 = vmatprep.subr.mxu0 0.0
      %442 = vmatpush1.xpose.msra.mxu0 0.0
      %443 = vmatprep.subr.mxu0 0.0
      %444 = vmatpush1.xpose.msra.mxu0 0.0
      %445 = vmatprep.subr.mxu0 0.0
      %446 = vmatpush1.xpose.msra.mxu0 0.0
      %447 = vmatprep.subr.mxu0 0.0
      %448 = vmatpush1.xpose.msra.mxu0 0.0
      %449 = vmatprep.subr.mxu0 0.0
      %450 = vmatpush1.xpose.msra.mxu0 0.0
      %451 = vmatprep.subr.mxu0 0.0
      %452 = vmatpush1.xpose.msra.mxu0 0.0
      %453 = vmatprep.subr.mxu0 0.0
      %454 = vmatpush1.xpose.msra.mxu0 0.0
      %455 = vmatprep.subr.mxu0 0.0
      %456 = vmatpush1.xpose.msra.mxu0 0.0
      %457 = vmatprep.subr.mxu0 0.0
      %458 = vmatpush1.xpose.msra.mxu0 0.0
      %459 = vmatprep.subr.mxu0 0.0
      %460 = vmatpush1.xpose.msra.mxu0 0.0
      %461 = vmatprep.subr.mxu0 0.0
      %462 = vmatpush1.xpose.msra.mxu0 0.0
      %463 = vmatprep.subr.mxu0 0.0
      %464 = vmatpush1.xpose.msra.mxu0 0.0
      %465 = vmatprep.mubr.f32.mxu0 0.0
      %466 = vmatmul.mubr.f32.gmra.mrb[0].mxu0 %v369
      %v467 = vpop.f32.mrb[0].mxu0
      %v468 = vadd.f32 0.0, %v467
      %v469 = vpop.f32.mrb[0].mxu0
      %470 = vmatprep.mubr.f32.mxu0 0.0
      %471 = vmatmul.mubr.f32.gmra.mrb[0].mxu0 %v371
      %v472 = vpop.f32.mrb[0].mxu0
      %v473 = vadd.f32 0.0, %v472
      %v474 = vpop.f32.mrb[0].mxu0
      %475 = vmatprep.mubr.f32.mxu0 0.0
      %476 = vmatmul.mubr.f32.gmra.mrb[0].mxu0 %v373
      %v477 = vpop.f32.mrb[0].mxu0
      %v478 = vadd.f32 0.0, %v477
      %v479 = vpop.f32.mrb[0].mxu0
      %480 = vmatprep.mubr.f32.mxu0 0.0
      %481 = vmatmul.mubr.f32.gmra.mrb[0].mxu0 %v375
      %v482 = vpop.f32.mrb[0].mxu0
      %v483 = vadd.f32 0.0, %v482
      %v484 = vpop.f32.mrb[0].mxu0
      %485 = vmatprep.mubr.f32.mxu0 0.0
      %486 = vmatmul.mubr.f32.gmra.mrb[0].mxu0 %v377
      %v487 = vpop.f32.mrb[0].mxu0
      %v488 = vadd.f32 0.0, %v487
      %v489 = vpop.f32.mrb[0].mxu0
      %490 = vmatprep.mubr.f32.mxu0 0.0
      %491 = vmatmul.mubr.f32.gmra.mrb[0].mxu0 %v379
      %v492 = vpop.f32.mrb[0].mxu0
      %v493 = vadd.f32 0.0, %v492
      %v494 = vpop.f32.mrb[0].mxu0
      %495 = vmatprep.mubr.f32.mxu0 0.0
      %496 = vmatmul.mubr.f32.gmra.mrb[0].mxu0 %v381
      %v497 = vpop.f32.mrb[0].mxu0
      %v498 = vadd.f32 0.0, %v497
      %v499 = vpop.f32.mrb[0].mxu0
      %500 = vmatprep.mubr.f32.mxu0 0.0
      %501 = vmatmul.mubr.f32.gmra.mrb[0].mxu0 %v383
      %v502 = vpop.f32.mrb[0].mxu0
      %v503 = vadd.f32 0.0, %v502
      %v504 = vpop.f32.mrb[0].mxu0
      %505 = vdwg.mxu0
      %v506 = vmul.f32 %v468, 0.25
      %v507 = vmul.f32 %v473, 0.25
      %v508 = vmul.f32 %v478, 0.25
      %v509 = vmul.f32 %v483, 0.25
      %v510 = vmul.f32 %v488, 0.25
      %v511 = vmul.f32 %v493, 0.25
      %v512 = vmul.f32 %v498, 0.25
      %v513 = vmul.f32 %v503, 0.25
      %v514 = vsel %vm214, %v506, -inf
      %515 = vmax.xlane.f32.xlu0 %v514
      %v516 = vpop.xlane.xlu0 %515
      %v517 = vsel %vm214, %v507, -inf
      %518 = vmax.xlane.f32.xlu0 %v517
      %v519 = vpop.xlane.xlu0 %518
      %v520 = vsel %vm214, %v508, -inf
      %521 = vmax.xlane.f32.xlu0 %v520
      %v522 = vpop.xlane.xlu0 %521
      %v523 = vsel %vm214, %v509, -inf
      %524 = vmax.xlane.f32.xlu0 %v523
      %v525 = vpop.xlane.xlu0 %524
      %v526 = vsel %vm214, %v510, -inf
      %527 = vmax.xlane.f32.xlu0 %v526
      %v528 = vpop.xlane.xlu0 %527
      %v529 = vsel %vm214, %v511, -inf
      %530 = vmax.xlane.f32.xlu0 %v529
      %v531 = vpop.xlane.xlu0 %530
      %v532 = vsel %vm214, %v512, -inf
      %533 = vmax.xlane.f32.xlu0 %v532
      %v534 = vpop.xlane.xlu0 %533
      %v535 = vsel %vm214, %v513, -inf
      %536 = vmax.xlane.f32.xlu0 %v535
      %v537 = vpop.xlane.xlu0 %536
      %v538 = vsub.f32 %v506, %v516
      %v539 = vsub.f32 %v507, %v519
      %v540 = vsub.f32 %v508, %v522
      %v541 = vsub.f32 %v509, %v525
      %v542 = vsub.f32 %v510, %v528
      %v543 = vsub.f32 %v511, %v531
      %v544 = vsub.f32 %v512, %v534
      %v545 = vsub.f32 %v513, %v537
      %v546 = vmul.f32 %v538, 1.442695
      %v547 = vpow.pop %v546
      %v548 = vmul.f32 %v539, 1.442695
      %v549 = vpow.pop %v548
      %v550 = vmul.f32 %v540, 1.442695
      %v551 = vpow.pop %v550
      %v552 = vmul.f32 %v541, 1.442695
      %v553 = vpow.pop %v552
      %v554 = vmul.f32 %v542, 1.442695
      %v555 = vpow.pop %v554
      %v556 = vmul.f32 %v543, 1.442695
      %v557 = vpow.pop %v556
      %v558 = vmul.f32 %v544, 1.442695
      %v559 = vpow.pop %v558
      %v560 = vmul.f32 %v545, 1.442695
      %v561 = vpow.pop %v560
      %v562 = vsel %vm214, %v547, 0.0
      %563 = vadd.xlane.f32.xlu0 %v562
      %v564 = vpop.xlane.xlu0 %563
      %v565 = vsel %vm214, %v549, 0.0
      %566 = vadd.xlane.f32.xlu0 %v565
      %v567 = vpop.xlane.xlu0 %566
      %v568 = vsel %vm214, %v551, 0.0
      %569 = vadd.xlane.f32.xlu0 %v568
      %v570 = vpop.xlane.xlu0 %569
      %v571 = vsel %vm214, %v553, 0.0
      %572 = vadd.xlane.f32.xlu0 %v571
      %v573 = vpop.xlane.xlu0 %572
      %v574 = vsel %vm214, %v555, 0.0
      %575 = vadd.xlane.f32.xlu0 %v574
      %v576 = vpop.xlane.xlu0 %575
      %v577 = vsel %vm214, %v557, 0.0
      %578 = vadd.xlane.f32.xlu0 %v577
      %v579 = vpop.xlane.xlu0 %578
      %v580 = vsel %vm214, %v559, 0.0
      %581 = vadd.xlane.f32.xlu0 %v580
      %v582 = vpop.xlane.xlu0 %581
      %v583 = vsel %vm214, %v561, 0.0
      %584 = vadd.xlane.f32.xlu0 %v583
      %v585 = vpop.xlane.xlu0 %584
      %v586 = vrcp.pop %v564
      %v587 = vrcp.pop %v567
      %v588 = vrcp.pop %v570
      %v589 = vrcp.pop %v573
      %v590 = vrcp.pop %v576
      %v591 = vrcp.pop %v579
      %v592 = vrcp.pop %v582
      %v593 = vrcp.pop %v585
      %v594 = vmul.f32 %v547, %v586
      %v595 = vmul.f32 %v549, %v587
      %v596 = vmul.f32 %v551, %v588
      %v597 = vmul.f32 %v553, %v589
      %v598 = vmul.f32 %v555, %v590
      %v599 = vmul.f32 %v557, %v591
      %v600 = vmul.f32 %v559, %v592
      %v601 = vmul.f32 %v561, %v593
      %602 = vrot.lane.b32.xlu0 %v306, 96
      %v603 = vpop.permute.xlu0 %602
      %604 = vrot.lane.b32.xlu0 %v311, 96
      %v605 = vpop.permute.xlu0 %604
      %606 = vrot.lane.b32.xlu0 %v316, 96
      %v607 = vpop.permute.xlu0 %606
      %608 = vrot.lane.b32.xlu0 %v321, 96
      %v609 = vpop.permute.xlu0 %608
      %610 = vrot.lane.b32.xlu0 %v326, 96
      %v611 = vpop.permute.xlu0 %610
      %612 = vrot.lane.b32.xlu0 %v331, 96
      %v613 = vpop.permute.xlu0 %612
      %614 = vrot.lane.b32.xlu0 %v336, 96
      %v615 = vpop.permute.xlu0 %614
      %616 = vrot.lane.b32.xlu0 %v341, 96
      %v617 = vpop.permute.xlu0 %616
      %v627 = vsel %vm214, %v594, 0
      %v630 = vsel %vm214, %v595, 0
      %v633 = vsel %vm214, %v596, 0
      %v636 = vsel %vm214, %v597, 0
      %v639 = vsel %vm214, %v598, 0
      %v642 = vsel %vm214, %v599, 0
      %v645 = vsel %vm214, %v600, 0
      %v648 = vsel %vm214, %v601, 0
      %650 = vmatprep.subr.mxu0 0.0
      %651 = vmatpush1.msra.mxu0 %v603
      %652 = vmatprep.subr.mxu0 0.0
      %653 = vmatpush1.msra.mxu0 %v605
      %654 = vmatprep.subr.mxu0 0.0
      %655 = vmatpush1.msra.mxu0 %v607
      %656 = vmatprep.subr.mxu0 0.0
      %657 = vmatpush1.msra.mxu0 %v609
      %658 = vmatprep.subr.mxu0 0.0
      %659 = vmatpush1.msra.mxu0 %v611
      %660 = vmatprep.subr.mxu0 0.0
      %661 = vmatpush1.msra.mxu0 %v613
      %662 = vmatprep.subr.mxu0 0.0
      %663 = vmatpush1.msra.mxu0 %v615
      %664 = vmatprep.subr.mxu0 0.0
      %665 = vmatpush1.msra.mxu0 %v617
      %666 = vmatprep.subr.mxu0 0.0
      %667 = vmatpush1.msra.mxu0 0.0
      %668 = vmatprep.subr.mxu0 0.0
      %669 = vmatpush1.msra.mxu0 0.0
      %670 = vmatprep.subr.mxu0 0.0
      %671 = vmatpush1.msra.mxu0 0.0
      %672 = vmatprep.subr.mxu0 0.0
      %673 = vmatpush1.msra.mxu0 0.0
      %674 = vmatprep.subr.mxu0 0.0
      %675 = vmatpush1.msra.mxu0 0.0
      %676 = vmatprep.subr.mxu0 0.0
      %677 = vmatpush1.msra.mxu0 0.0
      %678 = vmatprep.subr.mxu0 0.0
      %679 = vmatpush1.msra.mxu0 0.0
      %680 = vmatprep.subr.mxu0 0.0
      %681 = vmatpush1.msra.mxu0 0.0
      %682 = vmatprep.subr.mxu0 0.0
      %683 = vmatpush1.msra.mxu0 0.0
      %684 = vmatprep.subr.mxu0 0.0
      %685 = vmatpush1.msra.mxu0 0.0
      %686 = vmatprep.subr.mxu0 0.0
      %687 = vmatpush1.msra.mxu0 0.0
      %688 = vmatprep.subr.mxu0 0.0
      %689 = vmatpush1.msra.mxu0 0.0
      %690 = vmatprep.subr.mxu0 0.0
      %691 = vmatpush1.msra.mxu0 0.0
      %692 = vmatprep.subr.mxu0 0.0
      %693 = vmatpush1.msra.mxu0 0.0
      %694 = vmatprep.subr.mxu0 0.0
      %695 = vmatpush1.msra.mxu0 0.0
      %696 = vmatprep.subr.mxu0 0.0
      %697 = vmatpush1.msra.mxu0 0.0
      %698 = vmatprep.subr.mxu0 0.0
      %699 = vmatpush1.msra.mxu0 0.0
      %700 = vmatprep.subr.mxu0 0.0
      %701 = vmatpush1.msra.mxu0 0.0
      %702 = vmatprep.subr.mxu0 0.0
      %703 = vmatpush1.msra.mxu0 0.0
      %704 = vmatprep.subr.mxu0 0.0
      %705 = vmatpush1.msra.mxu0 0.0
      %706 = vmatprep.subr.mxu0 0.0
      %707 = vmatpush1.msra.mxu0 0.0
      %708 = vmatprep.subr.mxu0 0.0
      %709 = vmatpush1.msra.mxu0 0.0
      %710 = vmatprep.subr.mxu0 0.0
      %711 = vmatpush1.msra.mxu0 0.0
      %712 = vmatprep.subr.mxu0 0.0
      %713 = vmatpush1.msra.mxu0 0.0
      %714 = vmatprep.mubr.f32.mxu0 0.0
      %715 = vmatmul.mubr.f32.gmra.mrb[0].mxu0 %v627
      %v716 = vpop.f32.mrb[0].mxu0
      %v717 = vadd.f32 0.0, %v716
      %v718 = vpop.f32.mrb[0].mxu0
      %719 = vmatprep.mubr.f32.mxu0 0.0
      %720 = vmatmul.mubr.f32.gmra.mrb[0].mxu0 %v630
      %v721 = vpop.f32.mrb[0].mxu0
      %v722 = vadd.f32 0.0, %v721
      %v723 = vpop.f32.mrb[0].mxu0
      %724 = vmatprep.mubr.f32.mxu0 0.0
      %725 = vmatmul.mubr.f32.gmra.mrb[0].mxu0 %v633
      %v726 = vpop.f32.mrb[0].mxu0
      %v727 = vadd.f32 0.0, %v726
      %v728 = vpop.f32.mrb[0].mxu0
      %729 = vmatprep.mubr.f32.mxu0 0.0
      %730 = vmatmul.mubr.f32.gmra.mrb[0].mxu0 %v636
      %v731 = vpop.f32.mrb[0].mxu0
      %v732 = vadd.f32 0.0, %v731
      %v733 = vpop.f32.mrb[0].mxu0
      %734 = vmatprep.mubr.f32.mxu0 0.0
      %735 = vmatmul.mubr.f32.gmra.mrb[0].mxu0 %v639
      %v736 = vpop.f32.mrb[0].mxu0
      %v737 = vadd.f32 0.0, %v736
      %v738 = vpop.f32.mrb[0].mxu0
      %739 = vmatprep.mubr.f32.mxu0 0.0
      %740 = vmatmul.mubr.f32.gmra.mrb[0].mxu0 %v642
      %v741 = vpop.f32.mrb[0].mxu0
      %v742 = vadd.f32 0.0, %v741
      %v743 = vpop.f32.mrb[0].mxu0
      %744 = vmatprep.mubr.f32.mxu0 0.0
      %745 = vmatmul.mubr.f32.gmra.mrb[0].mxu0 %v645
      %v746 = vpop.f32.mrb[0].mxu0
      %v747 = vadd.f32 0.0, %v746
      %v748 = vpop.f32.mrb[0].mxu0
      %749 = vmatprep.mubr.f32.mxu0 0.0
      %750 = vmatmul.mubr.f32.gmra.mrb[0].mxu0 %v648
      %v751 = vpop.f32.mrb[0].mxu0
      %v752 = vadd.f32 0.0, %v751
      %v753 = vpop.f32.mrb[0].mxu0
      %754 = vdwg.mxu0
      %v755 = vld [vmem:[%s2] sm:$0xff]
      %v756 = vld [vmem:[%s2 + $0x8] sm:$0xff]
      %v757 = vld [vmem:[%s3] sm:$0x1]
      %v759 = vlaneseq
      %v760 = vshrl.u32 %v759, 7
      %v761 = vsub.s32 0, %v760
      %v762 = vrot.slane %v757, %v761
      %v765 = vsel %vm368, %v717, 0
      %v768 = vsel %vm368, %v722, 0
      %v771 = vsel %vm368, %v727, 0
      %v774 = vsel %vm368, %v732, 0
      %v777 = vsel %vm368, %v737, 0
      %v780 = vsel %vm368, %v742, 0
      %v783 = vsel %vm368, %v747, 0
      %v786 = vsel %vm368, %v752, 0
      %788 = vmatprep.subr.mxu0 0.0
      %789 = vmatpush1.msra.mxu0 %v755
      %790 = vmatprep.subr.mxu0 0.0
      %791 = vmatpush1.msra.mxu0 %v756
      %792 = vmatprep.subr.mxu0 0.0
      %793 = vmatpush1.msra.mxu0 0.0
      %794 = vmatprep.subr.mxu0 0.0
      %795 = vmatpush1.msra.mxu0 0.0
      %796 = vmatprep.subr.mxu0 0.0
      %797 = vmatpush1.msra.mxu0 0.0
      %798 = vmatprep.subr.mxu0 0.0
      %799 = vmatpush1.msra.mxu0 0.0
      %800 = vmatprep.subr.mxu0 0.0
      %801 = vmatpush1.msra.mxu0 0.0
      %802 = vmatprep.subr.mxu0 0.0
      %803 = vmatpush1.msra.mxu0 0.0
      %804 = vmatprep.subr.mxu0 0.0
      %805 = vmatpush1.msra.mxu0 0.0
      %806 = vmatprep.subr.mxu0 0.0
      %807 = vmatpush1.msra.mxu0 0.0
      %808 = vmatprep.subr.mxu0 0.0
      %809 = vmatpush1.msra.mxu0 0.0
      %810 = vmatprep.subr.mxu0 0.0
      %811 = vmatpush1.msra.mxu0 0.0
      %812 = vmatprep.subr.mxu0 0.0
      %813 = vmatpush1.msra.mxu0 0.0
      %814 = vmatprep.subr.mxu0 0.0
      %815 = vmatpush1.msra.mxu0 0.0
      %816 = vmatprep.subr.mxu0 0.0
      %817 = vmatpush1.msra.mxu0 0.0
      %818 = vmatprep.subr.mxu0 0.0
      %819 = vmatpush1.msra.mxu0 0.0
      %820 = vmatprep.subr.mxu0 0.0
      %821 = vmatpush1.msra.mxu0 0.0
      %822 = vmatprep.subr.mxu0 0.0
      %823 = vmatpush1.msra.mxu0 0.0
      %824 = vmatprep.subr.mxu0 0.0
      %825 = vmatpush1.msra.mxu0 0.0
      %826 = vmatprep.subr.mxu0 0.0
      %827 = vmatpush1.msra.mxu0 0.0
      %828 = vmatprep.subr.mxu0 0.0
      %829 = vmatpush1.msra.mxu0 0.0
      %830 = vmatprep.subr.mxu0 0.0
      %831 = vmatpush1.msra.mxu0 0.0
      %832 = vmatprep.subr.mxu0 0.0
      %833 = vmatpush1.msra.mxu0 0.0
      %834 = vmatprep.subr.mxu0 0.0
      %835 = vmatpush1.msra.mxu0 0.0
      %836 = vmatprep.subr.mxu0 0.0
      %837 = vmatpush1.msra.mxu0 0.0
      %838 = vmatprep.subr.mxu0 0.0
      %839 = vmatpush1.msra.mxu0 0.0
      %840 = vmatprep.subr.mxu0 0.0
      %841 = vmatpush1.msra.mxu0 0.0
      %842 = vmatprep.subr.mxu0 0.0
      %843 = vmatpush1.msra.mxu0 0.0
      %844 = vmatprep.subr.mxu0 0.0
      %845 = vmatpush1.msra.mxu0 0.0
      %846 = vmatprep.subr.mxu0 0.0
      %847 = vmatpush1.msra.mxu0 0.0
      %848 = vmatprep.subr.mxu0 0.0
      %849 = vmatpush1.msra.mxu0 0.0
      %850 = vmatprep.subr.mxu0 0.0
      %851 = vmatpush1.msra.mxu0 0.0
      %852 = vmatprep.mubr.f32.mxu0 0.0
      %853 = vmatmul.mubr.f32.gmra.mrb[0].mxu0 %v765
      %v854 = vpop.f32.mrb[0].mxu0
      %v855 = vadd.f32 %v762, %v854
      %v856 = vpop.f32.mrb[0].mxu0
      %857 = vmatprep.mubr.f32.mxu0 0.0
      %858 = vmatmul.mubr.f32.gmra.mrb[0].mxu0 %v768
      %v859 = vpop.f32.mrb[0].mxu0
      %v860 = vadd.f32 %v762, %v859
      %v861 = vpop.f32.mrb[0].mxu0
      %862 = vmatprep.mubr.f32.mxu0 0.0
      %863 = vmatmul.mubr.f32.gmra.mrb[0].mxu0 %v771
      %v864 = vpop.f32.mrb[0].mxu0
      %v865 = vadd.f32 %v762, %v864
      %v866 = vpop.f32.mrb[0].mxu0
      %867 = vmatprep.mubr.f32.mxu0 0.0
      %868 = vmatmul.mubr.f32.gmra.mrb[0].mxu0 %v774
      %v869 = vpop.f32.mrb[0].mxu0
      %v870 = vadd.f32 %v762, %v869
      %v871 = vpop.f32.mrb[0].mxu0
      %872 = vmatprep.mubr.f32.mxu0 0.0
      %873 = vmatmul.mubr.f32.gmra.mrb[0].mxu0 %v777
      %v874 = vpop.f32.mrb[0].mxu0
      %v875 = vadd.f32 %v762, %v874
      %v876 = vpop.f32.mrb[0].mxu0
      %877 = vmatprep.mubr.f32.mxu0 0.0
      %878 = vmatmul.mubr.f32.gmra.mrb[0].mxu0 %v780
      %v879 = vpop.f32.mrb[0].mxu0
      %v880 = vadd.f32 %v762, %v879
      %v881 = vpop.f32.mrb[0].mxu0
      %882 = vmatprep.mubr.f32.mxu0 0.0
      %883 = vmatmul.mubr.f32.gmra.mrb[0].mxu0 %v783
      %v884 = vpop.f32.mrb[0].mxu0
      %v885 = vadd.f32 %v762, %v884
      %v886 = vpop.f32.mrb[0].mxu0
      %887 = vmatprep.mubr.f32.mxu0 0.0
      %888 = vmatmul.mubr.f32.gmra.mrb[0].mxu0 %v786
      %v889 = vpop.f32.mrb[0].mxu0
      %v890 = vadd.f32 %v762, %v889
      %v891 = vpop.f32.mrb[0].mxu0
      %892 = vdwg.mxu0
      %893 = vst.msk [vmem:[%s197] sm:$0xff] %vm214, %v855
      %894 = vst.msk [vmem:[%s197 + $0x8] sm:$0xff] %vm214, %v860
      %895 = vst.msk [vmem:[%s197 + $0x10] sm:$0xff] %vm214, %v865
      %896 = vst.msk [vmem:[%s197 + $0x18] sm:$0xff] %vm214, %v870
      %897 = vst.msk [vmem:[%s197 + $0x20] sm:$0xff] %vm214, %v875
      %898 = vst.msk [vmem:[%s197 + $0x28] sm:$0xff] %vm214, %v880
      %899 = vst.msk [vmem:[%s197 + $0x30] sm:$0xff] %vm214, %v885
      %900 = vst.msk [vmem:[%s197 + $0x38] sm:$0xff] %vm214, %v890
      %p901 = scmp.lt.s32.totalorder %s15, 1
      %s902 = scalar_select %p901, %s15, 1
      %s903 = smul.addr %s902, 8
      %s904 = smul.addr %s903, 8
      %s905 = scalar_lea.vmem %s4, %s904
      // Predicated region
      $region37: #{fluentnet_forward.144} parent=35 // pred_check
        %p906 = pneg %p122
      $region38: #{fluentnet_forward.144} parent=35 // pred_check_branch
        %908 = sbr.rel (%p906) target = $region40
      $region39: #{fluentnet_forward.144} parent=35 // pred_region
        _
      $region40: #{fluentnet_forward.144} parent=35 // pred_fallthru
        _
    $region36: #{fluentnet_forward.144} parent=5 // pred_fallthru
      _
    %p909 = scmp.le.s32.totalorder 2, %s10
    // Predicated region
    $region41: #{fluentnet_forward.144} parent=5 // pred_check
      %p910 = pneg %p909
    $region42: #{fluentnet_forward.144} parent=5 // pred_check_branch
      %912 = sbr.rel (%p910) target = $region44
    $region43: #{fluentnet_forward.144} parent=5 // pred_region
      %s913 = ssub.s32 %s10, 2
      // Predicated region
      $region45: #{fluentnet_forward.144} parent=43 // pred_check
        %p914 = pneg %p128
      $region46: #{fluentnet_forward.144} parent=43 // pred_check_branch
        %916 = sbr.rel (%p914) target = $region48
      $region47: #{fluentnet_forward.144} parent=43 // pred_region
        %p917 = scmp.lt.s32.totalorder %s16, 1
        %s918 = scalar_select %p917, %s16, 1
        %s919 = smul.addr %s918, 8
        %s920 = smul.addr %s919, 8
        %s921 = scalar_lea.vmem %s4, %s920
      $region48: #{fluentnet_forward.144} parent=43 // pred_fallthru
        _
    $region44: #{fluentnet_forward.144} parent=5 // pred_fallthru
      _
  $region6: #{fluentnet_forward.144} parent=0 // loop_footer
    %s14 = sadd.s32 1, %s10
  $region7: #{fluentnet_forward.144} parent=0 // loop_footer_branch
    %9 = sbr.rel target = $region3
  $region8: #{fluentnet_forward.144} parent=0 // loop_exit
    _

// kernel: fluentnet_forward.145
$region0: #{fluentnet_forward.145}
  #allocation0 [shape = 'u32[]', space=smem, size = 0x4, offset = 0x4, fixed_abs, tag = 'smem constant byte address 0x4 - core index']
  #allocation1 [shape = 'u32[144,128]{1,0:T(1,128)}', space=vmem, size = 0x12000, scoped, tag = 'internal scratch']
  #allocation2 [shape = 'f32[2,1]{1,0:T(2,128)}', space=vmem, size = 0x400, scoped, tag = 'scratch operand']
  #allocation3 [shape = 'f32[1,1]{1,0:T(1,128)S(1)}', space=vmem, size = 0x200, scoped, tag = 'scoped memory for fluentnet_forward.145']
  %s0 = inlined_call_operand.vmem [shape: f32[2,4096], index: 0, kind: input, shape index: {}]
  %s1 = inlined_call_operand.vmem [shape: f32[1,4096], index: 1, kind: input, shape index: {}]
  %s2 = inlined_call_operand.<no memory space> [shape: f32[1,1], index: 2, kind: input, shape index: {}]
  %s3 = inlined_call_operand.vmem [shape: f32[2,1], index: 3, kind: output, shape index: {}]
  %s4 = sld [smem:[#allocation0]]
  $region30: #{fluentnet_forward.145} parent=0
    _
  %s6 = ssub.s32 1, %s4
  %s7 = scalar_select 0, %s6, %s4
  %v8 = vstv %s2
  %9 = vst [vmem:[#allocation3] sm:$0x1] %v8
  // Predicated region
  $region2: #{fluentnet_forward.145} parent=0 // pred_check
    _
  $region3: #{fluentnet_forward.145} parent=0 // pred_check_branch
    %11 = sbr.rel (0) target = $region5
  $region4: #{fluentnet_forward.145} parent=0 // pred_region
    _
  $region5: #{fluentnet_forward.145} parent=0 // pred_fallthru
    _
  // Predicated region
  $region6: #{fluentnet_forward.145} parent=0 // pred_check
    _
  $region7: #{fluentnet_forward.145} parent=0 // pred_check_branch
    %13 = sbr.rel (0) target = $region9
  $region8: #{fluentnet_forward.145} parent=0 // pred_region
    _
  $region9: #{fluentnet_forward.145} parent=0 // pred_fallthru
    _
  // Predicated region
  $region10: #{fluentnet_forward.145} parent=0 // pred_check
    _
  $region11: #{fluentnet_forward.145} parent=0 // pred_check_branch
    %15 = sbr.rel (0) target = $region13
  $region12: #{fluentnet_forward.145} parent=0 // pred_region
    _
  $region13: #{fluentnet_forward.145} parent=0 // pred_fallthru
    _
  %p16 = scmp.eq.s32.totalorder 0, 0
  // Predicated region
  $region14: #{fluentnet_forward.145} parent=0 // pred_check
    %p17 = pneg %p16
  $region15: #{fluentnet_forward.145} parent=0 // pred_check_branch
    %19 = sbr.rel (%p17) target = $region17
  $region16: #{fluentnet_forward.145} parent=0 // pred_region
    %vm20 = vcmask 1024
    %21 = vst.msk [vmem:[#allocation2] sm:$0x3] %vm20, 0.0
  $region17: #{fluentnet_forward.145} parent=0 // pred_fallthru
    _
  %v22 = vld [vmem:[#allocation2] sm:$0x3]
  %v23 = vld [vmem:[%s0] sm:$0xff]
  %v24 = vld [vmem:[%s0 + $0x8] sm:$0xff]
  %v25 = vld [vmem:[%s0 + $0x10] sm:$0xff]
  %v26 = vld [vmem:[%s0 + $0x18] sm:$0xff]
  %v27 = vld [vmem:[%s0 + $0x20] sm:$0xff]
  %v28 = vld [vmem:[%s0 + $0x28] sm:$0xff]
  %v29 = vld [vmem:[%s0 + $0x30] sm:$0xff]
  %v30 = vld [vmem:[%s0 + $0x38] sm:$0xff]
  %v31 = vld [vmem:[%s1] sm:$0xff]
  %v32 = vld [vmem:[%s1 + $0x8] sm:$0xff]
  %v33 = vld [vmem:[%s1 + $0x10] sm:$0xff]
  %v34 = vld [vmem:[%s1 + $0x18] sm:$0xff]
  %v39 = vlaneseq
  %v40 = vshrl.u32 %v39, 7
  %v41 = vsub.s32 0, %v40
  %v42 = vrot.slane %v31, %v41
  %v43 = vlaneseq
  %v44 = vshrl.u32 %v43, 7
  %v45 = vsub.s32 1, %v44
  %v46 = vrot.slane %v31, %v45
  %v47 = vlaneseq
  %v48 = vshrl.u32 %v47, 7
  %v49 = vsub.s32 2, %v48
  %v50 = vrot.slane %v31, %v49
  %v51 = vlaneseq
  %v52 = vshrl.u32 %v51, 7
  %v53 = vsub.s32 3, %v52
  %v54 = vrot.slane %v31, %v53
  %v55 = vlaneseq
  %v56 = vshrl.u32 %v55, 7
  %v57 = vsub.s32 4, %v56
  %v58 = vrot.slane %v31, %v57
  %v59 = vlaneseq
  %v60 = vshrl.u32 %v59, 7
  %v61 = vsub.s32 5, %v60
  %v62 = vrot.slane %v31, %v61
  %v63 = vlaneseq
  %v64 = vshrl.u32 %v63, 7
  %v65 = vsub.s32 6, %v64
  %v66 = vrot.slane %v31, %v65
  %v67 = vlaneseq
  %v68 = vshrl.u32 %v67, 7
  %v69 = vsub.s32 7, %v68
  %v70 = vrot.slane %v31, %v69
  %v71 = vlaneseq
  %v72 = vshrl.u32 %v71, 7
  %v73 = vsub.s32 0, %v72
  %v74 = vrot.slane %v32, %v73
  %v75 = vlaneseq
  %v76 = vshrl.u32 %v75, 7
  %v77 = vsub.s32 1, %v76
  %v78 = vrot.slane %v32, %v77
  %v79 = vlaneseq
  %v80 = vshrl.u32 %v79, 7
  %v81 = vsub.s32 2, %v80
  %v82 = vrot.slane %v32, %v81
  %v83 = vlaneseq
  %v84 = vshrl.u32 %v83, 7
  %v85 = vsub.s32 3, %v84
  %v86 = vrot.slane %v32, %v85
  %v87 = vlaneseq
  %v88 = vshrl.u32 %v87, 7
  %v89 = vsub.s32 4, %v88
  %v90 = vrot.slane %v32, %v89
  %v91 = vlaneseq
  %v92 = vshrl.u32 %v91, 7
  %v93 = vsub.s32 5, %v92
  %v94 = vrot.slane %v32, %v93
  %v95 = vlaneseq
  %v96 = vshrl.u32 %v95, 7
  %v97 = vsub.s32 6, %v96
  %v98 = vrot.slane %v32, %v97
  %v99 = vlaneseq
  %v100 = vshrl.u32 %v99, 7
  %v101 = vsub.s32 7, %v100
  %v102 = vrot.slane %v32, %v101
  %v103 = vlaneseq
  %v104 = vshrl.u32 %v103, 7
  %v105 = vsub.s32 0, %v104
  %v106 = vrot.slane %v33, %v105
  %v107 = vlaneseq
  %v108 = vshrl.u32 %v107, 7
  %v109 = vsub.s32 1, %v108
  %v110 = vrot.slane %v33, %v109
  %v111 = vlaneseq
  %v112 = vshrl.u32 %v111, 7
  %v113 = vsub.s32 2, %v112
  %v114 = vrot.slane %v33, %v113
  %v115 = vlaneseq
  %v116 = vshrl.u32 %v115, 7
  %v117 = vsub.s32 3, %v116
  %v118 = vrot.slane %v33, %v117
  %v119 = vlaneseq
  %v120 = vshrl.u32 %v119, 7
  %v121 = vsub.s32 4, %v120
  %v122 = vrot.slane %v33, %v121
  %v123 = vlaneseq
  %v124 = vshrl.u32 %v123, 7
  %v125 = vsub.s32 5, %v124
  %v126 = vrot.slane %v33, %v125
  %v127 = vlaneseq
  %v128 = vshrl.u32 %v127, 7
  %v129 = vsub.s32 6, %v128
  %v130 = vrot.slane %v33, %v129
  %v131 = vlaneseq
  %v132 = vshrl.u32 %v131, 7
  %v133 = vsub.s32 7, %v132
  %v134 = vrot.slane %v33, %v133
  %v135 = vlaneseq
  %v136 = vshrl.u32 %v135, 7
  %v137 = vsub.s32 0, %v136
  %v138 = vrot.slane %v34, %v137
  %v139 = vlaneseq
  %v140 = vshrl.u32 %v139, 7
  %v141 = vsub.s32 1, %v140
  %v142 = vrot.slane %v34, %v141
  %v143 = vlaneseq
  %v144 = vshrl.u32 %v143, 7
  %v145 = vsub.s32 2, %v144
  %v146 = vrot.slane %v34, %v145
  %v147 = vlaneseq
  %v148 = vshrl.u32 %v147, 7
  %v149 = vsub.s32 3, %v148
  %v150 = vrot.slane %v34, %v149
  %v151 = vlaneseq
  %v152 = vshrl.u32 %v151, 7
  %v153 = vsub.s32 4, %v152
  %v154 = vrot.slane %v34, %v153
  %v155 = vlaneseq
  %v156 = vshrl.u32 %v155, 7
  %v157 = vsub.s32 5, %v156
  %v158 = vrot.slane %v34, %v157
  %v159 = vlaneseq
  %v160 = vshrl.u32 %v159, 7
  %v161 = vsub.s32 6, %v160
  %v162 = vrot.slane %v34, %v161
  %v163 = vlaneseq
  %v164 = vshrl.u32 %v163, 7
  %v165 = vsub.s32 7, %v164
  %v166 = vrot.slane %v34, %v165
  %v167 = vcombine.low %v42, %v46
  %v168 = vcombine.low %v50, %v54
  %v170 = vunpack.c.l.s4 1983009808
  %v171 = vunpack.c.0.s8 %v170
  %v172 = vlaneseq
  %v173 = vshrl.u32 %v172, 7
  %v174 = vsub.s32 %v171, %v173
  %v175 = vrot.slane %v167, %v174
  %v177 = vunpack.c.l.s4 1983009808
  %v178 = vunpack.c.0.s8 %v177
  %v179 = vlaneseq
  %v180 = vshrl.u32 %v179, 7
  %v181 = vsub.s32 %v178, %v180
  %v182 = vrot.slane %v168, %v181
  %v183 = vcombine.low %v175, %v182
  %v184 = vcombine.low %v58, %v62
  %v185 = vcombine.low %v66, %v70
  %v187 = vunpack.c.l.s4 1983009808
  %v188 = vunpack.c.0.s8 %v187
  %v189 = vlaneseq
  %v190 = vshrl.u32 %v189, 7
  %v191 = vsub.s32 %v188, %v190
  %v192 = vrot.slane %v184, %v191
  %v194 = vunpack.c.l.s4 1983009808
  %v195 = vunpack.c.0.s8 %v194
  %v196 = vlaneseq
  %v197 = vshrl.u32 %v196, 7
  %v198 = vsub.s32 %v195, %v197
  %v199 = vrot.slane %v185, %v198
  %v200 = vcombine.low %v192, %v199
  %v201 = vcombine.low %v74, %v78
  %v202 = vcombine.low %v82, %v86
  %v204 = vunpack.c.l.s4 1983009808
  %v205 = vunpack.c.0.s8 %v204
  %v206 = vlaneseq
  %v207 = vshrl.u32 %v206, 7
  %v208 = vsub.s32 %v205, %v207
  %v209 = vrot.slane %v201, %v208
  %v211 = vunpack.c.l.s4 1983009808
  %v212 = vunpack.c.0.s8 %v211
  %v213 = vlaneseq
  %v214 = vshrl.u32 %v213, 7
  %v215 = vsub.s32 %v212, %v214
  %v216 = vrot.slane %v202, %v215
  %v217 = vcombine.low %v209, %v216
  %v218 = vcombine.low %v90, %v94
  %v219 = vcombine.low %v98, %v102
  %v221 = vunpack.c.l.s4 1983009808
  %v222 = vunpack.c.0.s8 %v221
  %v223 = vlaneseq
  %v224 = vshrl.u32 %v223, 7
  %v225 = vsub.s32 %v222, %v224
  %v226 = vrot.slane %v218, %v225
  %v228 = vunpack.c.l.s4 1983009808
  %v229 = vunpack.c.0.s8 %v228
  %v230 = vlaneseq
  %v231 = vshrl.u32 %v230, 7
  %v232 = vsub.s32 %v229, %v231
  %v233 = vrot.slane %v219, %v232
  %v234 = vcombine.low %v226, %v233
  %v235 = vcombine.low %v106, %v110
  %v236 = vcombine.low %v114, %v118
  %v238 = vunpack.c.l.s4 1983009808
  %v239 = vunpack.c.0.s8 %v238
  %v240 = vlaneseq
  %v241 = vshrl.u32 %v240, 7
  %v242 = vsub.s32 %v239, %v241
  %v243 = vrot.slane %v235, %v242
  %v245 = vunpack.c.l.s4 1983009808
  %v246 = vunpack.c.0.s8 %v245
  %v247 = vlaneseq
  %v248 = vshrl.u32 %v247, 7
  %v249 = vsub.s32 %v246, %v248
  %v250 = vrot.slane %v236, %v249
  %v251 = vcombine.low %v243, %v250
  %v252 = vcombine.low %v122, %v126
  %v253 = vcombine.low %v130, %v134
  %v255 = vunpack.c.l.s4 1983009808
  %v256 = vunpack.c.0.s8 %v255
  %v257 = vlaneseq
  %v258 = vshrl.u32 %v257, 7
  %v259 = vsub.s32 %v256, %v258
  %v260 = vrot.slane %v252, %v259
  %v262 = vunpack.c.l.s4 1983009808
  %v263 = vunpack.c.0.s8 %v262
  %v264 = vlaneseq
  %v265 = vshrl.u32 %v264, 7
  %v266 = vsub.s32 %v263, %v265
  %v267 = vrot.slane %v253, %v266
  %v268 = vcombine.low %v260, %v267
  %v269 = vcombine.low %v138, %v142
  %v270 = vcombine.low %v146, %v150
  %v272 = vunpack.c.l.s4 1983009808
  %v273 = vunpack.c.0.s8 %v272
  %v274 = vlaneseq
  %v275 = vshrl.u32 %v274, 7
  %v276 = vsub.s32 %v273, %v275
  %v277 = vrot.slane %v269, %v276
  %v279 = vunpack.c.l.s4 1983009808
  %v280 = vunpack.c.0.s8 %v279
  %v281 = vlaneseq
  %v282 = vshrl.u32 %v281, 7
  %v283 = vsub.s32 %v280, %v282
  %v284 = vrot.slane %v270, %v283
  %v285 = vcombine.low %v277, %v284
  %v286 = vcombine.low %v154, %v158
  %v287 = vcombine.low %v162, %v166
  %v289 = vunpack.c.l.s4 1983009808
  %v290 = vunpack.c.0.s8 %v289
  %v291 = vlaneseq
  %v292 = vshrl.u32 %v291, 7
  %v293 = vsub.s32 %v290, %v292
  %v294 = vrot.slane %v286, %v293
  %v296 = vunpack.c.l.s4 1983009808
  %v297 = vunpack.c.0.s8 %v296
  %v298 = vlaneseq
  %v299 = vshrl.u32 %v298, 7
  %v300 = vsub.s32 %v297, %v299
  %v301 = vrot.slane %v287, %v300
  %v302 = vcombine.low %v294, %v301
  %v311 = vmul.f32 %v23, %v183
  %v312 = vmul.f32 %v24, %v200
  %v313 = vmul.f32 %v25, %v217
  %v314 = vmul.f32 %v26, %v234
  %v315 = vmul.f32 %v27, %v251
  %v316 = vmul.f32 %v28, %v268
  %v317 = vmul.f32 %v29, %v285
  %v318 = vmul.f32 %v30, %v302
  %v327 = vcombine.high %v311, %v311
  %v329 = vunpack.c.l.s4 1983009808
  %v330 = vunpack.c.0.s8 %v329
  %v331 = vlaneseq
  %v332 = vshrl.u32 %v331, 7
  %v333 = vsub.s32 %v330, %v332
  %v334 = vrot.slane %v311, %v333
  %v336 = vunpack.c.l.s4 1983009808
  %v337 = vunpack.c.0.s8 %v336
  %v338 = vlaneseq
  %v339 = vshrl.u32 %v338, 7
  %v340 = vsub.s32 %v337, %v339
  %v341 = vrot.slane %v327, %v340
  %v342 = vcombine.high %v334, %v334
  %v343 = vcombine.high %v341, %v341
  %v344 = vcombine.high %v312, %v312
  %v346 = vunpack.c.l.s4 1983009808
  %v347 = vunpack.c.0.s8 %v346
  %v348 = vlaneseq
  %v349 = vshrl.u32 %v348, 7
  %v350 = vsub.s32 %v347, %v349
  %v351 = vrot.slane %v312, %v350
  %v353 = vunpack.c.l.s4 1983009808
  %v354 = vunpack.c.0.s8 %v353
  %v355 = vlaneseq
  %v356 = vshrl.u32 %v355, 7
  %v357 = vsub.s32 %v354, %v356
  %v358 = vrot.slane %v344, %v357
  %v359 = vcombine.high %v351, %v351
  %v360 = vcombine.high %v358, %v358
  %v361 = vcombine.high %v313, %v313
  %v363 = vunpack.c.l.s4 1983009808
  %v364 = vunpack.c.0.s8 %v363
  %v365 = vlaneseq
  %v366 = vshrl.u32 %v365, 7
  %v367 = vsub.s32 %v364, %v366
  %v368 = vrot.slane %v313, %v367
  %v370 = vunpack.c.l.s4 1983009808
  %v371 = vunpack.c.0.s8 %v370
  %v372 = vlaneseq
  %v373 = vshrl.u32 %v372, 7
  %v374 = vsub.s32 %v371, %v373
  %v375 = vrot.slane %v361, %v374
  %v376 = vcombine.high %v368, %v368
  %v377 = vcombine.high %v375, %v375
  %v378 = vcombine.high %v314, %v314
  %v380 = vunpack.c.l.s4 1983009808
  %v381 = vunpack.c.0.s8 %v380
  %v382 = vlaneseq
  %v383 = vshrl.u32 %v382, 7
  %v384 = vsub.s32 %v381, %v383
  %v385 = vrot.slane %v314, %v384
  %v387 = vunpack.c.l.s4 1983009808
  %v388 = vunpack.c.0.s8 %v387
  %v389 = vlaneseq
  %v390 = vshrl.u32 %v389, 7
  %v391 = vsub.s32 %v388, %v390
  %v392 = vrot.slane %v378, %v391
  %v393 = vcombine.high %v385, %v385
  %v394 = vcombine.high %v392, %v392
  %v395 = vcombine.high %v315, %v315
  %v397 = vunpack.c.l.s4 1983009808
  %v398 = vunpack.c.0.s8 %v397
  %v399 = vlaneseq
  %v400 = vshrl.u32 %v399, 7
  %v401 = vsub.s32 %v398, %v400
  %v402 = vrot.slane %v315, %v401
  %v404 = vunpack.c.l.s4 1983009808
  %v405 = vunpack.c.0.s8 %v404
  %v406 = vlaneseq
  %v407 = vshrl.u32 %v406, 7
  %v408 = vsub.s32 %v405, %v407
  %v409 = vrot.slane %v395, %v408
  %v410 = vcombine.high %v402, %v402
  %v411 = vcombine.high %v409, %v409
  %v412 = vcombine.high %v316, %v316
  %v414 = vunpack.c.l.s4 1983009808
  %v415 = vunpack.c.0.s8 %v414
  %v416 = vlaneseq
  %v417 = vshrl.u32 %v416, 7
  %v418 = vsub.s32 %v415, %v417
  %v419 = vrot.slane %v316, %v418
  %v421 = vunpack.c.l.s4 1983009808
  %v422 = vunpack.c.0.s8 %v421
  %v423 = vlaneseq
  %v424 = vshrl.u32 %v423, 7
  %v425 = vsub.s32 %v422, %v424
  %v426 = vrot.slane %v412, %v425
  %v427 = vcombine.high %v419, %v419
  %v428 = vcombine.high %v426, %v426
  %v429 = vcombine.high %v317, %v317
  %v431 = vunpack.c.l.s4 1983009808
  %v432 = vunpack.c.0.s8 %v431
  %v433 = vlaneseq
  %v434 = vshrl.u32 %v433, 7
  %v435 = vsub.s32 %v432, %v434
  %v436 = vrot.slane %v317, %v435
  %v438 = vunpack.c.l.s4 1983009808
  %v439 = vunpack.c.0.s8 %v438
  %v440 = vlaneseq
  %v441 = vshrl.u32 %v440, 7
  %v442 = vsub.s32 %v439, %v441
  %v443 = vrot.slane %v429, %v442
  %v444 = vcombine.high %v436, %v436
  %v445 = vcombine.high %v443, %v443
  %v446 = vcombine.high %v318, %v318
  %v448 = vunpack.c.l.s4 1983009808
  %v449 = vunpack.c.0.s8 %v448
  %v450 = vlaneseq
  %v451 = vshrl.u32 %v450, 7
  %v452 = vsub.s32 %v449, %v451
  %v453 = vrot.slane %v318, %v452
  %v455 = vunpack.c.l.s4 1983009808
  %v456 = vunpack.c.0.s8 %v455
  %v457 = vlaneseq
  %v458 = vshrl.u32 %v457, 7
  %v459 = vsub.s32 %v456, %v458
  %v460 = vrot.slane %v446, %v459
  %v461 = vcombine.high %v453, %v453
  %v462 = vcombine.high %v460, %v460
  %vm495 = vcmask 1041408
  %v496 = vsel %vm495, %v334, 0.0
  %v497 = vsel %vm495, %v342, 0.0
  %v498 = vadd.f32 %v496, %v497
  %v499 = vsel %vm495, %v341, 0.0
  %v500 = vadd.f32 %v498, %v499
  %v501 = vsel %vm495, %v343, 0.0
  %v502 = vadd.f32 %v500, %v501
  %v503 = vsel %vm495, %v351, 0.0
  %v504 = vadd.f32 %v502, %v503
  %v505 = vsel %vm495, %v359, 0.0
  %v506 = vadd.f32 %v504, %v505
  %v507 = vsel %vm495, %v358, 0.0
  %v508 = vadd.f32 %v506, %v507
  %v509 = vsel %vm495, %v360, 0.0
  %v510 = vadd.f32 %v508, %v509
  %v511 = vsel %vm495, %v368, 0.0
  %v512 = vadd.f32 %v510, %v511
  %v513 = vsel %vm495, %v376, 0.0
  %v514 = vadd.f32 %v512, %v513
  %v515 = vsel %vm495, %v375, 0.0
  %v516 = vadd.f32 %v514, %v515
  %v517 = vsel %vm495, %v377, 0.0
  %v518 = vadd.f32 %v516, %v517
  %v519 = vsel %vm495, %v385, 0.0
  %v520 = vadd.f32 %v518, %v519
  %v521 = vsel %vm495, %v393, 0.0
  %v522 = vadd.f32 %v520, %v521
  %v523 = vsel %vm495, %v392, 0.0
  %v524 = vadd.f32 %v522, %v523
  %v525 = vsel %vm495, %v394, 0.0
  %v526 = vadd.f32 %v524, %v525
  %v527 = vsel %vm495, %v402, 0.0
  %v528 = vadd.f32 %v526, %v527
  %v529 = vsel %vm495, %v410, 0.0
  %v530 = vadd.f32 %v528, %v529
  %v531 = vsel %vm495, %v409, 0.0
  %v532 = vadd.f32 %v530, %v531
  %v533 = vsel %vm495, %v411, 0.0
  %v534 = vadd.f32 %v532, %v533
  %v535 = vsel %vm495, %v419, 0.0
  %v536 = vadd.f32 %v534, %v535
  %v537 = vsel %vm495, %v427, 0.0
  %v538 = vadd.f32 %v536, %v537
  %v539 = vsel %vm495, %v426, 0.0
  %v540 = vadd.f32 %v538, %v539
  %v541 = vsel %vm495, %v428, 0.0
  %v542 = vadd.f32 %v540, %v541
  %v543 = vsel %vm495, %v436, 0.0
  %v544 = vadd.f32 %v542, %v543
  %v545 = vsel %vm495, %v444, 0.0
  %v546 = vadd.f32 %v544, %v545
  %v547 = vsel %vm495, %v443, 0.0
  %v548 = vadd.f32 %v546, %v547
  %v549 = vsel %vm495, %v445, 0.0
  %v550 = vadd.f32 %v548, %v549
  %v551 = vsel %vm495, %v453, 0.0
  %v552 = vadd.f32 %v550, %v551
  %v553 = vsel %vm495, %v461, 0.0
  %v554 = vadd.f32 %v552, %v553
  %v555 = vsel %vm495, %v460, 0.0
  %v556 = vadd.f32 %v554, %v555
  %v557 = vsel %vm495, %v462, 0.0
  %v558 = vadd.f32 %v556, %v557
  %559 = vadd.xlane.f32.xlu0 %v558
  %v560 = vpop.xlane.xlu0 %559
  %v561 = vadd.f32 %v22, %v560
  %vm562 = vcmask 1024
  %563 = vst.msk [vmem:[#allocation2] sm:$0x3] %vm562, %v561
  // Predicated region
  $region18: #{fluentnet_forward.145} parent=0 // pred_check
    %p564 = pneg %p16
  $region19: #{fluentnet_forward.145} parent=0 // pred_check_branch
    %566 = sbr.rel (%p564) target = $region21
  $region20: #{fluentnet_forward.145} parent=0 // pred_region
    %v567 = vld [vmem:[#allocation2] sm:$0x3]
    %v568 = vld [vmem:[#allocation3] sm:$0x1]
    %v570 = vlaneseq
    %v571 = vshrl.u32 %v570, 7
    %v572 = vsub.s32 0, %v571
    %v573 = vrot.slane %v568, %v572
    %v575 = vadd.f32 %v567, %v573
    %v576 = vxor.u32 %v575, 2147483648
    %v577 = vmul.f32 %v576, 1.442695
    %v578 = vpow.pop %v577
    %v579 = vadd.f32 %v578, 1.0
    %v580 = vrcp.pop %v579
    %v581 = vmul.f32 1.0, %v580
    %582 = vst.msk [vmem:[%s3] sm:$0x3] %vm562, %v581
  $region21: #{fluentnet_forward.145} parent=0 // pred_fallthru
    _
  // Predicated region
  $region22: #{fluentnet_forward.145} parent=0 // pred_check
    _
  $region23: #{fluentnet_forward.145} parent=0 // pred_check_branch
    %584 = sbr.rel (0) target = $region25
  $region24: #{fluentnet_forward.145} parent=0 // pred_region
    _
  $region25: #{fluentnet_forward.145} parent=0 // pred_fallthru
    _
  // Predicated region
  $region26: #{fluentnet_forward.145} parent=0 // pred_check
    _
  $region27: #{fluentnet_forward.145} parent=0 // pred_check_branch
    %586 = sbr.rel (0) target = $region29
  $region28: #{fluentnet_forward.145} parent=0 // pred_region
    _
  $region29: #{fluentnet_forward.145} parent=0 // pred_fallthru
    _

</llo_original>
